<compile_context>
chip_gen: v7x
topology: tpu7x:2x2x1
jax: 0.10.0
libtpu: 0.0.40
codegen_flags: <defaults>
</compile_context>

<pallas_src>
import functools

import jax
import jax.numpy as jnp
from jax import lax
from jax.experimental import pallas as pl
from jax.experimental.pallas import tpu as pltpu

GROUPS = 16
C_TOTAL = 768
C_GROUP = C_TOTAL // GROUPS      # 48 channels per group
KSIZE = 128                      # conv kernel size
PAD = 64                         # conv padding
KB = 8                           # taps batched per MXU call (im2col factor)
NUM_KBLK = KSIZE // KB           # 16 tap blocks
SLAB_W = KB * C_GROUP            # 384 = 3 * 128 (lane-dense contraction width)
T_BLOCK_MAX = 128                # output time positions per grid step


def _round_up(a, b):
    return ((a + b - 1) // b) * b


def _gelu_erf(x):
    """erf-based GELU (torch.nn.GELU() default).

    Uses the Abramowitz & Stegun 7.1.26 rational approximation; the divide runs on the
    EUP via pl.reciprocal(approx=True). Accuracy is well inside the bf16-input error budget.
    """
    inv_sqrt2 = jnp.float32(0.7071067811865476)
    z = x * inv_sqrt2
    s = jnp.where(z >= 0, jnp.float32(1.0), jnp.float32(-1.0))
    a = jnp.abs(z)
    t = pl.reciprocal(jnp.float32(1.0) + jnp.float32(0.3275911) * a, approx=True)
    poly = ((((jnp.float32(1.061405429) * t + jnp.float32(-1.453152027)) * t
              + jnp.float32(1.421413741)) * t + jnp.float32(-0.284496736)) * t
            + jnp.float32(0.254829592)) * t
    erf_z = s * (1.0 - poly * jnp.exp(-a * a))
    return 0.5 * x * (1.0 + erf_z)


def _posemb_kernel(x_ref, w_ref, b_ref, o_ref, *, t_sub):
    # x_ref: (GROUPS, t_sub + KSIZE, 384) bf16  8-tap im2col slab window for this (batch, t-block)
    # w_ref: (GROUPS, NUM_KBLK, 384, 48)  bf16  all-group weights, resident across the grid
    # b_ref: (GROUPS, 1, 48)              f32
    # o_ref: (t_sub, 768)                       lane-dense output block
    for g in range(GROUPS):                      # static: lane offsets below stay static

        def tap_block(j, acc, g=g):
            # start is always a multiple of 8 -> sublane-friendly, lane-dense load.
            start = pl.multiple_of(j * KB, KB)
            slab = x_ref[g, pl.ds(start, t_sub), :]            # (t_sub, 384) bf16
            return acc + jnp.dot(slab, w_ref[g, j],            # (384, 48) bf16
                                 preferred_element_type=jnp.float32)

        # unroll=1: acc (t_sub,48)f32 + one slab + one weight tile already ~64 vregs at t_sub=128.
        acc = lax.fori_loop(0, NUM_KBLK, tap_block,
                            jnp.zeros((t_sub, C_GROUP), jnp.float32))
        y = acc + b_ref[g]                                      # (t_sub, 48) f32
        o_ref[:, g * C_GROUP:(g + 1) * C_GROUP] = _gelu_erf(y).astype(o_ref.dtype)


def pos_emb_forward(x, v, g, bias, out_dtype=None):
    """x: (B, 768, T) float32 (PyTorch NCW).  Returns (B, T, 768)."""
    B, C, T = x.shape
    assert C == C_TOTAL
    out_dtype = x.dtype if out_dtype is None else out_dtype    # bf16 OK if downstream tolerates

    # ---- weight norm (dim=2): per-tap normalization over (out_ch, in_ch) ----
    norm = jnp.sqrt(jnp.sum(v * v, axis=(0, 1), keepdims=True))      # (1, 1, K)
    w = g * v / norm                                                 # (768, 48, K) f32

    # im2col weights: w2[gr, j, kb*48+ci, co] = w[48*gr+co, ci, 8*j+kb]
    w_r = w.reshape(GROUPS, C_GROUP, C_GROUP, NUM_KBLK, KB)          # (gr, co, ci, j, kb)
    w2 = jnp.transpose(w_r, (0, 3, 4, 2, 1)).reshape(
        GROUPS, NUM_KBLK, SLAB_W, C_GROUP).astype(jnp.bfloat16)      # (16, 16, 384, 48)
    b_k = bias.reshape(GROUPS, 1, C_GROUP).astype(jnp.float32)       # (16, 1, 48)

    # ---- time tiling: each grid step handles t_blk output positions ----
    t_blk = min(T_BLOCK_MAX, _round_up(T, 8))
    t_out = _round_up(T, t_blk)
    nt = t_out // t_blk
    l_blk = t_blk + KSIZE                 # per-step input window (includes the 128-tap halo)

    # ---- 8-tap im2col of the zero-padded, channels-last, per-group input (bf16 first) ----
    # x_im[b, gr, s, kb*48+ci] = x_pad[b, 48*gr+ci, s+kb]
    l_need = t_out + KSIZE                # im2col rows the kernel may touch
    lx = l_need + KB - 1                  # padded input length so all KB shifts exist
    x_pad = jnp.pad(x, ((0, 0), (0, 0), (PAD, lx - PAD - T)))        # (B, 768, lx)
    x_gt = jnp.transpose(x_pad.reshape(B, GROUPS, C_GROUP, lx),
                         (0, 1, 3, 2)).astype(jnp.bfloat16)          # (B, G, lx, 48) bf16
    x_im = jnp.concatenate([x_gt[:, :, kb:kb + l_need, :] for kb in range(KB)],
                           axis=-1)                                  # (B, G, l_need, 384) bf16

    # ---- input spec: overlapping time windows (t-block + halo) ----
    if nt == 1:
        # block equals the full time extent; plain Blocked indexing.
        x_spec = pl.BlockSpec((None, GROUPS, l_need, SLAB_W),
                              lambda bi, ti: (bi, 0, 0, 0))
    else:
        # element-offset indexing for the halo'd window at ti * t_blk.
        x_spec = pl.BlockSpec((None, GROUPS, pl.Element(l_blk), SLAB_W),
                              lambda bi, ti: (bi, 0, ti * t_blk, 0))

    # ---- VMEM budget from actual block sizes (double-buffered) + slack ----
    vmem_bytes = 2 * (GROUPS * l_blk * SLAB_W * 2                    # x_im window (bf16)
                      + t_blk * C_TOTAL * jnp.dtype(out_dtype).itemsize
                      + int(w2.size) * 2)                            # resident weights
    vmem_limit = int(min(vmem_bytes + (4 << 20), 96 * 1024 * 1024))

    kernel = functools.partial(_posemb_kernel, t_sub=t_blk)

    # Conv1d would give T+1 outputs; the module drops the last one ([:, :, :-1]), so the
    # kernel computes exactly output positions t = 0..t_out-1 (>= T, cropped below).
    out = pl.pallas_call(
        kernel,
        out_shape=jax.ShapeDtypeStruct((B, t_out, C_TOTAL), out_dtype),
        grid=(B, nt),
        in_specs=[
            x_spec,
            pl.BlockSpec((GROUPS, NUM_KBLK, SLAB_W, C_GROUP),        # constant index ->
                         lambda bi, ti: (0, 0, 0, 0)),               # weights DMA'd once
            pl.BlockSpec((GROUPS, 1, C_GROUP), lambda bi, ti: (0, 0, 0)),
        ],
        out_specs=pl.BlockSpec((None, t_blk, C_TOTAL), lambda bi, ti: (bi, ti, 0)),
        compiler_params=pltpu.CompilerParams(
            dimension_semantics=("parallel", "parallel"),
            vmem_limit_bytes=vmem_limit),
    )(x_im, w2, b_k)

    return out[:, :T, :] if t_out != T else out


def _reference(x, v, g, bias):
    """Pure-JAX reference of the PyTorch forward."""
    norm = jnp.sqrt(jnp.sum(v * v, axis=(0, 1), keepdims=True))
    w = g * v / norm
    y = lax.conv_general_dilated(
        x, w, window_strides=(1,), padding=[(PAD, PAD)],
        dimension_numbers=("NCH", "OIH", "NCH"),
        feature_group_count=GROUPS,
        precision=lax.Precision.HIGHEST)
    y = y + bias[None, :, None]
    y = y[:, :, :-1]
    return jnp.transpose(jax.nn.gelu(y, approximate=False), (0, 2, 1))


if __name__ == "__main__":
    B, T = 2, 8
    key = jax.random.PRNGKey(0)
    kx, kv, kg, kb = jax.random.split(key, 4)

    # module-implied parameter shapes: Conv1d(768, 768, k=128, groups=16) + weight_norm(dim=2)
    x = jax.random.normal(kx, (B, C_TOTAL, T), jnp.float32)              # (B, 768, T)
    v = jax.random.normal(kv, (C_TOTAL, C_GROUP, KSIZE), jnp.float32)    # weight "v"
    g = jax.random.uniform(kg, (1, 1, KSIZE), jnp.float32, 0.5, 1.5)     # weight-norm "g"
    bias = 0.1 * jax.random.normal(kb, (C_TOTAL,), jnp.float32)          # conv bias

    out = jax.jit(pos_emb_forward)(x, v, g, bias)
    out = jax.block_until_ready(out)

    ref = _reference(x, v, g, bias)
    assert out.shape == (B, T, C_TOTAL), out.shape
    max_diff = float(jnp.max(jnp.abs(out - ref)))
    scale = float(jnp.max(jnp.abs(ref)))
    assert max_diff <= 2e-3 + 2e-2 * scale, (max_diff, scale)
    print("KERNEL_OK")
</pallas_src>

<mosaic_0001>
module attributes {stable_mosaic.version = 11 : i64} {
  func.func @_posemb_kernel(%arg0: i32, %arg1: i32, %arg2: memref<1x16x136x384xbf16, #tpu.memory_space<vmem>>, %arg3: memref<16x16x384x48xbf16, #tpu.memory_space<vmem>>, %arg4: memref<16x1x48xf32, #tpu.memory_space<vmem>>, %arg5: memref<1x8x768xf32, #tpu.memory_space<vmem>>) attributes {dimension_semantics = [#tpu.dimension_semantics<parallel>, #tpu.dimension_semantics<parallel>], iteration_bounds = array<i64: 2, 1>, scalar_prefetch = 0 : i64, scratch_operands = 0 : i64, tpu.core_type = #tpu.core_type<tc>, window_params = [{transform_indices = @transform_0, window_bounds = array<i64: 1, 16, 136, 384>}, {pipeline_mode = #tpu.pipeline_mode<synchronous>, transform_indices = @transform_1, window_bounds = array<i64: 16, 16, 384, 48>}, {pipeline_mode = #tpu.pipeline_mode<synchronous>, transform_indices = @transform_2, window_bounds = array<i64: 16, 1, 48>}, {transform_indices = @transform_3, window_bounds = array<i64: 1, 8, 768>}]} {
    %cst = arith.constant 0.000000e+00 : f32
    %0 = vector.broadcast %cst : f32 to vector<8x48xf32>
    %c0_i32 = arith.constant 0 : i32
    %c16_i32 = arith.constant 16 : i32
    %1 = arith.addi %c0_i32, %c16_i32 : i32
    %c1_i32 = arith.constant 1 : i32
    %2 = scf.for %arg6 = %c0_i32 to %1 step %c1_i32 iter_args(%arg7 = %0) -> (vector<8x48xf32>)  : i32 {
      %c8_i32 = arith.constant 8 : i32
      %800 = arith.muli %arg6, %c8_i32 : i32
      %801 = tpu.assume_multiple %800, 8 : i32
      %c0_381 = arith.constant 0 : index
      %c0_382 = arith.constant 0 : index
      %802 = arith.index_cast %801 : i32 to index
      %c0_383 = arith.constant 0 : index
      %803 = vector.load %arg2[%c0_381, %c0_382, %802, %c0_383] : memref<1x16x136x384xbf16, #tpu.memory_space<vmem>>, vector<1x1x8x384xbf16>
      %804 = vector.shape_cast %803 : vector<1x1x8x384xbf16> to vector<8x384xbf16>
      %c0_384 = arith.constant 0 : index
      %805 = arith.index_cast %arg6 : i32 to index
      %c0_385 = arith.constant 0 : index
      %c0_386 = arith.constant 0 : index
      %806 = vector.load %arg3[%c0_384, %805, %c0_385, %c0_386] : memref<16x16x384x48xbf16, #tpu.memory_space<vmem>>, vector<1x1x384x48xbf16>
      %807 = vector.shape_cast %806 : vector<1x1x384x48xbf16> to vector<384x48xbf16>
      %cst_387 = arith.constant dense<0.000000e+00> : vector<8x48xf32>
      %808 = tpu.matmul %804, %807, %cst_387 {dimension_numbers = #tpu.dot_dimension_numbers<[1], [0], [0], [1], [0, 0, 1, 1], [], []>} : vector<8x384xbf16>, vector<384x48xbf16>, vector<8x48xf32> -> vector<8x48xf32>
      %809 = arith.addf %arg7, %808 : vector<8x48xf32>
      scf.yield %809 : vector<8x48xf32>
    }
    %c16_i32_0 = arith.constant 16 : i32
    %c0 = arith.constant 0 : index
    %c0_1 = arith.constant 0 : index
    %c0_2 = arith.constant 0 : index
    %3 = vector.load %arg4[%c0, %c0_1, %c0_2] : memref<16x1x48xf32, #tpu.memory_space<vmem>>, vector<1x1x48xf32>
    %4 = vector.shape_cast %3 : vector<1x1x48xf32> to vector<1x48xf32>
    %5 = vector.broadcast %4 : vector<1x48xf32> to vector<8x48xf32>
    %6 = arith.addf %2, %5 : vector<8x48xf32>
    %cst_3 = arith.constant 0.707106769 : f32
    %7 = vector.broadcast %cst_3 : f32 to vector<8x48xf32>
    %8 = arith.mulf %6, %7 : vector<8x48xf32>
    %cst_4 = arith.constant 0.000000e+00 : f32
    %9 = vector.broadcast %cst_4 : f32 to vector<8x48xf32>
    %10 = arith.cmpf oge, %8, %9 : vector<8x48xf32>
    %cst_5 = arith.constant 1.000000e+00 : f32
    %cst_6 = arith.constant -1.000000e+00 : f32
    %11 = vector.broadcast %cst_5 : f32 to vector<8x48xf32>
    %12 = vector.broadcast %cst_6 : f32 to vector<8x48xf32>
    %13 = arith.select %10, %11, %12 : vector<8x48xi1>, vector<8x48xf32>
    %14 = math.absf %8 : vector<8x48xf32>
    %cst_7 = arith.constant 0.327591091 : f32
    %15 = vector.broadcast %cst_7 : f32 to vector<8x48xf32>
    %16 = arith.mulf %15, %14 : vector<8x48xf32>
    %cst_8 = arith.constant 1.000000e+00 : f32
    %17 = vector.broadcast %cst_8 : f32 to vector<8x48xf32>
    %18 = arith.addf %17, %16 : vector<8x48xf32>
    %19 = tpu.reciprocal %18 {approx = true} : vector<8x48xf32> -> vector<8x48xf32>
    %cst_9 = arith.constant 1.06140542 : f32
    %20 = vector.broadcast %cst_9 : f32 to vector<8x48xf32>
    %21 = arith.mulf %20, %19 : vector<8x48xf32>
    %cst_10 = arith.constant -1.45315206 : f32
    %22 = vector.broadcast %cst_10 : f32 to vector<8x48xf32>
    %23 = arith.addf %21, %22 : vector<8x48xf32>
    %24 = arith.mulf %23, %19 : vector<8x48xf32>
    %cst_11 = arith.constant 1.42141378 : f32
    %25 = vector.broadcast %cst_11 : f32 to vector<8x48xf32>
    %26 = arith.addf %24, %25 : vector<8x48xf32>
    %27 = arith.mulf %26, %19 : vector<8x48xf32>
    %cst_12 = arith.constant -0.284496725 : f32
    %28 = vector.broadcast %cst_12 : f32 to vector<8x48xf32>
    %29 = arith.addf %27, %28 : vector<8x48xf32>
    %30 = arith.mulf %29, %19 : vector<8x48xf32>
    %cst_13 = arith.constant 0.254829586 : f32
    %31 = vector.broadcast %cst_13 : f32 to vector<8x48xf32>
    %32 = arith.addf %30, %31 : vector<8x48xf32>
    %33 = arith.mulf %32, %19 : vector<8x48xf32>
    %cst_14 = arith.constant 0.000000e+00 : f32
    %34 = vector.broadcast %cst_14 : f32 to vector<8x48xf32>
    %35 = arith.subf %34, %14 : vector<8x48xf32>
    %36 = arith.mulf %35, %14 : vector<8x48xf32>
    %37 = math.exp %36 : vector<8x48xf32>
    %38 = arith.mulf %33, %37 : vector<8x48xf32>
    %cst_15 = arith.constant 1.000000e+00 : f32
    %39 = vector.broadcast %cst_15 : f32 to vector<8x48xf32>
    %40 = arith.subf %39, %38 : vector<8x48xf32>
    %41 = arith.mulf %13, %40 : vector<8x48xf32>
    %cst_16 = arith.constant 5.000000e-01 : f32
    %42 = vector.broadcast %cst_16 : f32 to vector<8x48xf32>
    %43 = arith.mulf %42, %6 : vector<8x48xf32>
    %cst_17 = arith.constant 1.000000e+00 : f32
    %44 = vector.broadcast %cst_17 : f32 to vector<8x48xf32>
    %45 = arith.addf %44, %41 : vector<8x48xf32>
    %46 = arith.mulf %43, %45 : vector<8x48xf32>
    %c0_18 = arith.constant 0 : index
    %c0_19 = arith.constant 0 : index
    %c0_20 = arith.constant 0 : index
    %47 = vector.load %arg5[%c0_18, %c0_19, %c0_20] : memref<1x8x768xf32, #tpu.memory_space<vmem>>, vector<1x8x48xf32>
    %48 = vector.shape_cast %47 : vector<1x8x48xf32> to vector<8x48xf32>
    %49 = vector.shape_cast %46 : vector<8x48xf32> to vector<1x8x48xf32>
    tpu.vector_store %arg5[%c0_18, %c0_19, %c0_20], %49 {strides = array<i32>} : memref<1x8x768xf32, #tpu.memory_space<vmem>>, vector<1x8x48xf32>,
    %cst_21 = arith.constant 0.000000e+00 : f32
    %50 = vector.broadcast %cst_21 : f32 to vector<8x48xf32>
    %c0_i32_22 = arith.constant 0 : i32
    %c16_i32_23 = arith.constant 16 : i32
    %51 = arith.addi %c0_i32_22, %c16_i32_23 : i32
    %c1_i32_24 = arith.constant 1 : i32
    %52 = scf.for %arg6 = %c0_i32_22 to %51 step %c1_i32_24 iter_args(%arg7 = %50) -> (vector<8x48xf32>)  : i32 {
      %c8_i32 = arith.constant 8 : i32
      %800 = arith.muli %arg6, %c8_i32 : i32
      %801 = tpu.assume_multiple %800, 8 : i32
      %c0_381 = arith.constant 0 : index
      %c1_382 = arith.constant 1 : index
      %802 = arith.index_cast %801 : i32 to index
      %c0_383 = arith.constant 0 : index
      %803 = vector.load %arg2[%c0_381, %c1_382, %802, %c0_383] : memref<1x16x136x384xbf16, #tpu.memory_space<vmem>>, vector<1x1x8x384xbf16>
      %804 = vector.shape_cast %803 : vector<1x1x8x384xbf16> to vector<8x384xbf16>
      %c1_384 = arith.constant 1 : index
      %805 = arith.index_cast %arg6 : i32 to index
      %c0_385 = arith.constant 0 : index
      %c0_386 = arith.constant 0 : index
      %806 = vector.load %arg3[%c1_384, %805, %c0_385, %c0_386] : memref<16x16x384x48xbf16, #tpu.memory_space<vmem>>, vector<1x1x384x48xbf16>
      %807 = vector.shape_cast %806 : vector<1x1x384x48xbf16> to vector<384x48xbf16>
      %cst_387 = arith.constant dense<0.000000e+00> : vector<8x48xf32>
      %808 = tpu.matmul %804, %807, %cst_387 {dimension_numbers = #tpu.dot_dimension_numbers<[1], [0], [0], [1], [0, 0, 1, 1], [], []>} : vector<8x384xbf16>, vector<384x48xbf16>, vector<8x48xf32> -> vector<8x48xf32>
      %809 = arith.addf %arg7, %808 : vector<8x48xf32>
      scf.yield %809 : vector<8x48xf32>
    }
    %c16_i32_25 = arith.constant 16 : i32
    %c1 = arith.constant 1 : index
    %c0_26 = arith.constant 0 : index
    %c0_27 = arith.constant 0 : index
    %53 = vector.load %arg4[%c1, %c0_26, %c0_27] : memref<16x1x48xf32, #tpu.memory_space<vmem>>, vector<1x1x48xf32>
    %54 = vector.shape_cast %53 : vector<1x1x48xf32> to vector<1x48xf32>
    %55 = vector.broadcast %54 : vector<1x48xf32> to vector<8x48xf32>
    %56 = arith.addf %52, %55 : vector<8x48xf32>
    %cst_28 = arith.constant 0.707106769 : f32
    %57 = vector.broadcast %cst_28 : f32 to vector<8x48xf32>
    %58 = arith.mulf %56, %57 : vector<8x48xf32>
    %cst_29 = arith.constant 0.000000e+00 : f32
    %59 = vector.broadcast %cst_29 : f32 to vector<8x48xf32>
    %60 = arith.cmpf oge, %58, %59 : vector<8x48xf32>
    %cst_30 = arith.constant 1.000000e+00 : f32
    %cst_31 = arith.constant -1.000000e+00 : f32
    %61 = vector.broadcast %cst_30 : f32 to vector<8x48xf32>
    %62 = vector.broadcast %cst_31 : f32 to vector<8x48xf32>
    %63 = arith.select %60, %61, %62 : vector<8x48xi1>, vector<8x48xf32>
    %64 = math.absf %58 : vector<8x48xf32>
    %cst_32 = arith.constant 0.327591091 : f32
    %65 = vector.broadcast %cst_32 : f32 to vector<8x48xf32>
    %66 = arith.mulf %65, %64 : vector<8x48xf32>
    %cst_33 = arith.constant 1.000000e+00 : f32
    %67 = vector.broadcast %cst_33 : f32 to vector<8x48xf32>
    %68 = arith.addf %67, %66 : vector<8x48xf32>
    %69 = tpu.reciprocal %68 {approx = true} : vector<8x48xf32> -> vector<8x48xf32>
    %cst_34 = arith.constant 1.06140542 : f32
    %70 = vector.broadcast %cst_34 : f32 to vector<8x48xf32>
    %71 = arith.mulf %70, %69 : vector<8x48xf32>
    %cst_35 = arith.constant -1.45315206 : f32
    %72 = vector.broadcast %cst_35 : f32 to vector<8x48xf32>
    %73 = arith.addf %71, %72 : vector<8x48xf32>
    %74 = arith.mulf %73, %69 : vector<8x48xf32>
    %cst_36 = arith.constant 1.42141378 : f32
    %75 = vector.broadcast %cst_36 : f32 to vector<8x48xf32>
    %76 = arith.addf %74, %75 : vector<8x48xf32>
    %77 = arith.mulf %76, %69 : vector<8x48xf32>
    %cst_37 = arith.constant -0.284496725 : f32
    %78 = vector.broadcast %cst_37 : f32 to vector<8x48xf32>
    %79 = arith.addf %77, %78 : vector<8x48xf32>
    %80 = arith.mulf %79, %69 : vector<8x48xf32>
    %cst_38 = arith.constant 0.254829586 : f32
    %81 = vector.broadcast %cst_38 : f32 to vector<8x48xf32>
    %82 = arith.addf %80, %81 : vector<8x48xf32>
    %83 = arith.mulf %82, %69 : vector<8x48xf32>
    %cst_39 = arith.constant 0.000000e+00 : f32
    %84 = vector.broadcast %cst_39 : f32 to vector<8x48xf32>
    %85 = arith.subf %84, %64 : vector<8x48xf32>
    %86 = arith.mulf %85, %64 : vector<8x48xf32>
    %87 = math.exp %86 : vector<8x48xf32>
    %88 = arith.mulf %83, %87 : vector<8x48xf32>
    %cst_40 = arith.constant 1.000000e+00 : f32
    %89 = vector.broadcast %cst_40 : f32 to vector<8x48xf32>
    %90 = arith.subf %89, %88 : vector<8x48xf32>
    %91 = arith.mulf %63, %90 : vector<8x48xf32>
    %cst_41 = arith.constant 5.000000e-01 : f32
    %92 = vector.broadcast %cst_41 : f32 to vector<8x48xf32>
    %93 = arith.mulf %92, %56 : vector<8x48xf32>
    %cst_42 = arith.constant 1.000000e+00 : f32
    %94 = vector.broadcast %cst_42 : f32 to vector<8x48xf32>
    %95 = arith.addf %94, %91 : vector<8x48xf32>
    %96 = arith.mulf %93, %95 : vector<8x48xf32>
    %c0_43 = arith.constant 0 : index
    %c0_44 = arith.constant 0 : index
    %c48 = arith.constant 48 : index
    %97 = vector.load %arg5[%c0_43, %c0_44, %c48] : memref<1x8x768xf32, #tpu.memory_space<vmem>>, vector<1x8x48xf32>
    %98 = vector.shape_cast %97 : vector<1x8x48xf32> to vector<8x48xf32>
    %99 = vector.shape_cast %96 : vector<8x48xf32> to vector<1x8x48xf32>
    tpu.vector_store %arg5[%c0_43, %c0_44, %c48], %99 {strides = array<i32>} : memref<1x8x768xf32, #tpu.memory_space<vmem>>, vector<1x8x48xf32>,
    %cst_45 = arith.constant 0.000000e+00 : f32
    %100 = vector.broadcast %cst_45 : f32 to vector<8x48xf32>
    %c0_i32_46 = arith.constant 0 : i32
    %c16_i32_47 = arith.constant 16 : i32
    %101 = arith.addi %c0_i32_46, %c16_i32_47 : i32
    %c1_i32_48 = arith.constant 1 : i32
    %102 = scf.for %arg6 = %c0_i32_46 to %101 step %c1_i32_48 iter_args(%arg7 = %100) -> (vector<8x48xf32>)  : i32 {
      %c8_i32 = arith.constant 8 : i32
      %800 = arith.muli %arg6, %c8_i32 : i32
      %801 = tpu.assume_multiple %800, 8 : i32
      %c0_381 = arith.constant 0 : index
      %c2_382 = arith.constant 2 : index
      %802 = arith.index_cast %801 : i32 to index
      %c0_383 = arith.constant 0 : index
      %803 = vector.load %arg2[%c0_381, %c2_382, %802, %c0_383] : memref<1x16x136x384xbf16, #tpu.memory_space<vmem>>, vector<1x1x8x384xbf16>
      %804 = vector.shape_cast %803 : vector<1x1x8x384xbf16> to vector<8x384xbf16>
      %c2_384 = arith.constant 2 : index
      %805 = arith.index_cast %arg6 : i32 to index
      %c0_385 = arith.constant 0 : index
      %c0_386 = arith.constant 0 : index
      %806 = vector.load %arg3[%c2_384, %805, %c0_385, %c0_386] : memref<16x16x384x48xbf16, #tpu.memory_space<vmem>>, vector<1x1x384x48xbf16>
      %807 = vector.shape_cast %806 : vector<1x1x384x48xbf16> to vector<384x48xbf16>
      %cst_387 = arith.constant dense<0.000000e+00> : vector<8x48xf32>
      %808 = tpu.matmul %804, %807, %cst_387 {dimension_numbers = #tpu.dot_dimension_numbers<[1], [0], [0], [1], [0, 0, 1, 1], [], []>} : vector<8x384xbf16>, vector<384x48xbf16>, vector<8x48xf32> -> vector<8x48xf32>
      %809 = arith.addf %arg7, %808 : vector<8x48xf32>
      scf.yield %809 : vector<8x48xf32>
    }
    %c16_i32_49 = arith.constant 16 : i32
    %c2 = arith.constant 2 : index
    %c0_50 = arith.constant 0 : index
    %c0_51 = arith.constant 0 : index
    %103 = vector.load %arg4[%c2, %c0_50, %c0_51] : memref<16x1x48xf32, #tpu.memory_space<vmem>>, vector<1x1x48xf32>
    %104 = vector.shape_cast %103 : vector<1x1x48xf32> to vector<1x48xf32>
    %105 = vector.broadcast %104 : vector<1x48xf32> to vector<8x48xf32>
    %106 = arith.addf %102, %105 : vector<8x48xf32>
    %cst_52 = arith.constant 0.707106769 : f32
    %107 = vector.broadcast %cst_52 : f32 to vector<8x48xf32>
    %108 = arith.mulf %106, %107 : vector<8x48xf32>
    %cst_53 = arith.constant 0.000000e+00 : f32
    %109 = vector.broadcast %cst_53 : f32 to vector<8x48xf32>
    %110 = arith.cmpf oge, %108, %109 : vector<8x48xf32>
    %cst_54 = arith.constant 1.000000e+00 : f32
    %cst_55 = arith.constant -1.000000e+00 : f32
    %111 = vector.broadcast %cst_54 : f32 to vector<8x48xf32>
    %112 = vector.broadcast %cst_55 : f32 to vector<8x48xf32>
    %113 = arith.select %110, %111, %112 : vector<8x48xi1>, vector<8x48xf32>
    %114 = math.absf %108 : vector<8x48xf32>
    %cst_56 = arith.constant 0.327591091 : f32
    %115 = vector.broadcast %cst_56 : f32 to vector<8x48xf32>
    %116 = arith.mulf %115, %114 : vector<8x48xf32>
    %cst_57 = arith.constant 1.000000e+00 : f32
    %117 = vector.broadcast %cst_57 : f32 to vector<8x48xf32>
    %118 = arith.addf %117, %116 : vector<8x48xf32>
    %119 = tpu.reciprocal %118 {approx = true} : vector<8x48xf32> -> vector<8x48xf32>
    %cst_58 = arith.constant 1.06140542 : f32
    %120 = vector.broadcast %cst_58 : f32 to vector<8x48xf32>
    %121 = arith.mulf %120, %119 : vector<8x48xf32>
    %cst_59 = arith.constant -1.45315206 : f32
    %122 = vector.broadcast %cst_59 : f32 to vector<8x48xf32>
    %123 = arith.addf %121, %122 : vector<8x48xf32>
    %124 = arith.mulf %123, %119 : vector<8x48xf32>
    %cst_60 = arith.constant 1.42141378 : f32
    %125 = vector.broadcast %cst_60 : f32 to vector<8x48xf32>
    %126 = arith.addf %124, %125 : vector<8x48xf32>
    %127 = arith.mulf %126, %119 : vector<8x48xf32>
    %cst_61 = arith.constant -0.284496725 : f32
    %128 = vector.broadcast %cst_61 : f32 to vector<8x48xf32>
    %129 = arith.addf %127, %128 : vector<8x48xf32>
    %130 = arith.mulf %129, %119 : vector<8x48xf32>
    %cst_62 = arith.constant 0.254829586 : f32
    %131 = vector.broadcast %cst_62 : f32 to vector<8x48xf32>
    %132 = arith.addf %130, %131 : vector<8x48xf32>
    %133 = arith.mulf %132, %119 : vector<8x48xf32>
    %cst_63 = arith.constant 0.000000e+00 : f32
    %134 = vector.broadcast %cst_63 : f32 to vector<8x48xf32>
    %135 = arith.subf %134, %114 : vector<8x48xf32>
    %136 = arith.mulf %135, %114 : vector<8x48xf32>
    %137 = math.exp %136 : vector<8x48xf32>
    %138 = arith.mulf %133, %137 : vector<8x48xf32>
    %cst_64 = arith.constant 1.000000e+00 : f32
    %139 = vector.broadcast %cst_64 : f32 to vector<8x48xf32>
    %140 = arith.subf %139, %138 : vector<8x48xf32>
    %141 = arith.mulf %113, %140 : vector<8x48xf32>
    %cst_65 = arith.constant 5.000000e-01 : f32
    %142 = vector.broadcast %cst_65 : f32 to vector<8x48xf32>
    %143 = arith.mulf %142, %106 : vector<8x48xf32>
    %cst_66 = arith.constant 1.000000e+00 : f32
    %144 = vector.broadcast %cst_66 : f32 to vector<8x48xf32>
    %145 = arith.addf %144, %141 : vector<8x48xf32>
    %146 = arith.mulf %143, %145 : vector<8x48xf32>
    %c0_67 = arith.constant 0 : index
    %c0_68 = arith.constant 0 : index
    %c96 = arith.constant 96 : index
    %147 = vector.load %arg5[%c0_67, %c0_68, %c96] : memref<1x8x768xf32, #tpu.memory_space<vmem>>, vector<1x8x48xf32>
    %148 = vector.shape_cast %147 : vector<1x8x48xf32> to vector<8x48xf32>
    %149 = vector.shape_cast %146 : vector<8x48xf32> to vector<1x8x48xf32>
    tpu.vector_store %arg5[%c0_67, %c0_68, %c96], %149 {strides = array<i32>} : memref<1x8x768xf32, #tpu.memory_space<vmem>>, vector<1x8x48xf32>,
    %cst_69 = arith.constant 0.000000e+00 : f32
    %150 = vector.broadcast %cst_69 : f32 to vector<8x48xf32>
    %c0_i32_70 = arith.constant 0 : i32
    %c16_i32_71 = arith.constant 16 : i32
    %151 = arith.addi %c0_i32_70, %c16_i32_71 : i32
    %c1_i32_72 = arith.constant 1 : i32
    %152 = scf.for %arg6 = %c0_i32_70 to %151 step %c1_i32_72 iter_args(%arg7 = %150) -> (vector<8x48xf32>)  : i32 {
      %c8_i32 = arith.constant 8 : i32
      %800 = arith.muli %arg6, %c8_i32 : i32
      %801 = tpu.assume_multiple %800, 8 : i32
      %c0_381 = arith.constant 0 : index
      %c3_382 = arith.constant 3 : index
      %802 = arith.index_cast %801 : i32 to index
      %c0_383 = arith.constant 0 : index
      %803 = vector.load %arg2[%c0_381, %c3_382, %802, %c0_383] : memref<1x16x136x384xbf16, #tpu.memory_space<vmem>>, vector<1x1x8x384xbf16>
      %804 = vector.shape_cast %803 : vector<1x1x8x384xbf16> to vector<8x384xbf16>
      %c3_384 = arith.constant 3 : index
      %805 = arith.index_cast %arg6 : i32 to index
      %c0_385 = arith.constant 0 : index
      %c0_386 = arith.constant 0 : index
      %806 = vector.load %arg3[%c3_384, %805, %c0_385, %c0_386] : memref<16x16x384x48xbf16, #tpu.memory_space<vmem>>, vector<1x1x384x48xbf16>
      %807 = vector.shape_cast %806 : vector<1x1x384x48xbf16> to vector<384x48xbf16>
      %cst_387 = arith.constant dense<0.000000e+00> : vector<8x48xf32>
      %808 = tpu.matmul %804, %807, %cst_387 {dimension_numbers = #tpu.dot_dimension_numbers<[1], [0], [0], [1], [0, 0, 1, 1], [], []>} : vector<8x384xbf16>, vector<384x48xbf16>, vector<8x48xf32> -> vector<8x48xf32>
      %809 = arith.addf %arg7, %808 : vector<8x48xf32>
      scf.yield %809 : vector<8x48xf32>
    }
    %c16_i32_73 = arith.constant 16 : i32
    %c3 = arith.constant 3 : index
    %c0_74 = arith.constant 0 : index
    %c0_75 = arith.constant 0 : index
    %153 = vector.load %arg4[%c3, %c0_74, %c0_75] : memref<16x1x48xf32, #tpu.memory_space<vmem>>, vector<1x1x48xf32>
    %154 = vector.shape_cast %153 : vector<1x1x48xf32> to vector<1x48xf32>
    %155 = vector.broadcast %154 : vector<1x48xf32> to vector<8x48xf32>
    %156 = arith.addf %152, %155 : vector<8x48xf32>
    %cst_76 = arith.constant 0.707106769 : f32
    %157 = vector.broadcast %cst_76 : f32 to vector<8x48xf32>
    %158 = arith.mulf %156, %157 : vector<8x48xf32>
    %cst_77 = arith.constant 0.000000e+00 : f32
    %159 = vector.broadcast %cst_77 : f32 to vector<8x48xf32>
    %160 = arith.cmpf oge, %158, %159 : vector<8x48xf32>
    %cst_78 = arith.constant 1.000000e+00 : f32
    %cst_79 = arith.constant -1.000000e+00 : f32
    %161 = vector.broadcast %cst_78 : f32 to vector<8x48xf32>
    %162 = vector.broadcast %cst_79 : f32 to vector<8x48xf32>
    %163 = arith.select %160, %161, %162 : vector<8x48xi1>, vector<8x48xf32>
    %164 = math.absf %158 : vector<8x48xf32>
    %cst_80 = arith.constant 0.327591091 : f32
    %165 = vector.broadcast %cst_80 : f32 to vector<8x48xf32>
    %166 = arith.mulf %165, %164 : vector<8x48xf32>
    %cst_81 = arith.constant 1.000000e+00 : f32
    %167 = vector.broadcast %cst_81 : f32 to vector<8x48xf32>
    %168 = arith.addf %167, %166 : vector<8x48xf32>
    %169 = tpu.reciprocal %168 {approx = true} : vector<8x48xf32> -> vector<8x48xf32>
    %cst_82 = arith.constant 1.06140542 : f32
    %170 = vector.broadcast %cst_82 : f32 to vector<8x48xf32>
    %171 = arith.mulf %170, %169 : vector<8x48xf32>
    %cst_83 = arith.constant -1.45315206 : f32
    %172 = vector.broadcast %cst_83 : f32 to vector<8x48xf32>
    %173 = arith.addf %171, %172 : vector<8x48xf32>
    %174 = arith.mulf %173, %169 : vector<8x48xf32>
    %cst_84 = arith.constant 1.42141378 : f32
    %175 = vector.broadcast %cst_84 : f32 to vector<8x48xf32>
    %176 = arith.addf %174, %175 : vector<8x48xf32>
    %177 = arith.mulf %176, %169 : vector<8x48xf32>
    %cst_85 = arith.constant -0.284496725 : f32
    %178 = vector.broadcast %cst_85 : f32 to vector<8x48xf32>
    %179 = arith.addf %177, %178 : vector<8x48xf32>
    %180 = arith.mulf %179, %169 : vector<8x48xf32>
    %cst_86 = arith.constant 0.254829586 : f32
    %181 = vector.broadcast %cst_86 : f32 to vector<8x48xf32>
    %182 = arith.addf %180, %181 : vector<8x48xf32>
    %183 = arith.mulf %182, %169 : vector<8x48xf32>
    %cst_87 = arith.constant 0.000000e+00 : f32
    %184 = vector.broadcast %cst_87 : f32 to vector<8x48xf32>
    %185 = arith.subf %184, %164 : vector<8x48xf32>
    %186 = arith.mulf %185, %164 : vector<8x48xf32>
    %187 = math.exp %186 : vector<8x48xf32>
    %188 = arith.mulf %183, %187 : vector<8x48xf32>
    %cst_88 = arith.constant 1.000000e+00 : f32
    %189 = vector.broadcast %cst_88 : f32 to vector<8x48xf32>
    %190 = arith.subf %189, %188 : vector<8x48xf32>
    %191 = arith.mulf %163, %190 : vector<8x48xf32>
    %cst_89 = arith.constant 5.000000e-01 : f32
    %192 = vector.broadcast %cst_89 : f32 to vector<8x48xf32>
    %193 = arith.mulf %192, %156 : vector<8x48xf32>
    %cst_90 = arith.constant 1.000000e+00 : f32
    %194 = vector.broadcast %cst_90 : f32 to vector<8x48xf32>
    %195 = arith.addf %194, %191 : vector<8x48xf32>
    %196 = arith.mulf %193, %195 : vector<8x48xf32>
    %c0_91 = arith.constant 0 : index
    %c0_92 = arith.constant 0 : index
    %c144 = arith.constant 144 : index
    %197 = vector.load %arg5[%c0_91, %c0_92, %c144] : memref<1x8x768xf32, #tpu.memory_space<vmem>>, vector<1x8x48xf32>
    %198 = vector.shape_cast %197 : vector<1x8x48xf32> to vector<8x48xf32>
    %199 = vector.shape_cast %196 : vector<8x48xf32> to vector<1x8x48xf32>
    tpu.vector_store %arg5[%c0_91, %c0_92, %c144], %199 {strides = array<i32>} : memref<1x8x768xf32, #tpu.memory_space<vmem>>, vector<1x8x48xf32>,
    %cst_93 = arith.constant 0.000000e+00 : f32
    %200 = vector.broadcast %cst_93 : f32 to vector<8x48xf32>
    %c0_i32_94 = arith.constant 0 : i32
    %c16_i32_95 = arith.constant 16 : i32
    %201 = arith.addi %c0_i32_94, %c16_i32_95 : i32
    %c1_i32_96 = arith.constant 1 : i32
    %202 = scf.for %arg6 = %c0_i32_94 to %201 step %c1_i32_96 iter_args(%arg7 = %200) -> (vector<8x48xf32>)  : i32 {
      %c8_i32 = arith.constant 8 : i32
      %800 = arith.muli %arg6, %c8_i32 : i32
      %801 = tpu.assume_multiple %800, 8 : i32
      %c0_381 = arith.constant 0 : index
      %c4_382 = arith.constant 4 : index
      %802 = arith.index_cast %801 : i32 to index
      %c0_383 = arith.constant 0 : index
      %803 = vector.load %arg2[%c0_381, %c4_382, %802, %c0_383] : memref<1x16x136x384xbf16, #tpu.memory_space<vmem>>, vector<1x1x8x384xbf16>
      %804 = vector.shape_cast %803 : vector<1x1x8x384xbf16> to vector<8x384xbf16>
      %c4_384 = arith.constant 4 : index
      %805 = arith.index_cast %arg6 : i32 to index
      %c0_385 = arith.constant 0 : index
      %c0_386 = arith.constant 0 : index
      %806 = vector.load %arg3[%c4_384, %805, %c0_385, %c0_386] : memref<16x16x384x48xbf16, #tpu.memory_space<vmem>>, vector<1x1x384x48xbf16>
      %807 = vector.shape_cast %806 : vector<1x1x384x48xbf16> to vector<384x48xbf16>
      %cst_387 = arith.constant dense<0.000000e+00> : vector<8x48xf32>
      %808 = tpu.matmul %804, %807, %cst_387 {dimension_numbers = #tpu.dot_dimension_numbers<[1], [0], [0], [1], [0, 0, 1, 1], [], []>} : vector<8x384xbf16>, vector<384x48xbf16>, vector<8x48xf32> -> vector<8x48xf32>
      %809 = arith.addf %arg7, %808 : vector<8x48xf32>
      scf.yield %809 : vector<8x48xf32>
    }
    %c16_i32_97 = arith.constant 16 : i32
    %c4 = arith.constant 4 : index
    %c0_98 = arith.constant 0 : index
    %c0_99 = arith.constant 0 : index
    %203 = vector.load %arg4[%c4, %c0_98, %c0_99] : memref<16x1x48xf32, #tpu.memory_space<vmem>>, vector<1x1x48xf32>
    %204 = vector.shape_cast %203 : vector<1x1x48xf32> to vector<1x48xf32>
    %205 = vector.broadcast %204 : vector<1x48xf32> to vector<8x48xf32>
    %206 = arith.addf %202, %205 : vector<8x48xf32>
    %cst_100 = arith.constant 0.707106769 : f32
    %207 = vector.broadcast %cst_100 : f32 to vector<8x48xf32>
    %208 = arith.mulf %206, %207 : vector<8x48xf32>
    %cst_101 = arith.constant 0.000000e+00 : f32
    %209 = vector.broadcast %cst_101 : f32 to vector<8x48xf32>
    %210 = arith.cmpf oge, %208, %209 : vector<8x48xf32>
    %cst_102 = arith.constant 1.000000e+00 : f32
    %cst_103 = arith.constant -1.000000e+00 : f32
    %211 = vector.broadcast %cst_102 : f32 to vector<8x48xf32>
    %212 = vector.broadcast %cst_103 : f32 to vector<8x48xf32>
    %213 = arith.select %210, %211, %212 : vector<8x48xi1>, vector<8x48xf32>
    %214 = math.absf %208 : vector<8x48xf32>
    %cst_104 = arith.constant 0.327591091 : f32
    %215 = vector.broadcast %cst_104 : f32 to vector<8x48xf32>
    %216 = arith.mulf %215, %214 : vector<8x48xf32>
    %cst_105 = arith.constant 1.000000e+00 : f32
    %217 = vector.broadcast %cst_105 : f32 to vector<8x48xf32>
    %218 = arith.addf %217, %216 : vector<8x48xf32>
    %219 = tpu.reciprocal %218 {approx = true} : vector<8x48xf32> -> vector<8x48xf32>
    %cst_106 = arith.constant 1.06140542 : f32
    %220 = vector.broadcast %cst_106 : f32 to vector<8x48xf32>
    %221 = arith.mulf %220, %219 : vector<8x48xf32>
    %cst_107 = arith.constant -1.45315206 : f32
    %222 = vector.broadcast %cst_107 : f32 to vector<8x48xf32>
    %223 = arith.addf %221, %222 : vector<8x48xf32>
    %224 = arith.mulf %223, %219 : vector<8x48xf32>
    %cst_108 = arith.constant 1.42141378 : f32
    %225 = vector.broadcast %cst_108 : f32 to vector<8x48xf32>
    %226 = arith.addf %224, %225 : vector<8x48xf32>
    %227 = arith.mulf %226, %219 : vector<8x48xf32>
    %cst_109 = arith.constant -0.284496725 : f32
    %228 = vector.broadcast %cst_109 : f32 to vector<8x48xf32>
    %229 = arith.addf %227, %228 : vector<8x48xf32>
    %230 = arith.mulf %229, %219 : vector<8x48xf32>
    %cst_110 = arith.constant 0.254829586 : f32
    %231 = vector.broadcast %cst_110 : f32 to vector<8x48xf32>
    %232 = arith.addf %230, %231 : vector<8x48xf32>
    %233 = arith.mulf %232, %219 : vector<8x48xf32>
    %cst_111 = arith.constant 0.000000e+00 : f32
    %234 = vector.broadcast %cst_111 : f32 to vector<8x48xf32>
    %235 = arith.subf %234, %214 : vector<8x48xf32>
    %236 = arith.mulf %235, %214 : vector<8x48xf32>
    %237 = math.exp %236 : vector<8x48xf32>
    %238 = arith.mulf %233, %237 : vector<8x48xf32>
    %cst_112 = arith.constant 1.000000e+00 : f32
    %239 = vector.broadcast %cst_112 : f32 to vector<8x48xf32>
    %240 = arith.subf %239, %238 : vector<8x48xf32>
    %241 = arith.mulf %213, %240 : vector<8x48xf32>
    %cst_113 = arith.constant 5.000000e-01 : f32
    %242 = vector.broadcast %cst_113 : f32 to vector<8x48xf32>
    %243 = arith.mulf %242, %206 : vector<8x48xf32>
    %cst_114 = arith.constant 1.000000e+00 : f32
    %244 = vector.broadcast %cst_114 : f32 to vector<8x48xf32>
    %245 = arith.addf %244, %241 : vector<8x48xf32>
    %246 = arith.mulf %243, %245 : vector<8x48xf32>
    %c0_115 = arith.constant 0 : index
    %c0_116 = arith.constant 0 : index
    %c192 = arith.constant 192 : index
    %247 = vector.load %arg5[%c0_115, %c0_116, %c192] : memref<1x8x768xf32, #tpu.memory_space<vmem>>, vector<1x8x48xf32>
    %248 = vector.shape_cast %247 : vector<1x8x48xf32> to vector<8x48xf32>
    %249 = vector.shape_cast %246 : vector<8x48xf32> to vector<1x8x48xf32>
    tpu.vector_store %arg5[%c0_115, %c0_116, %c192], %249 {strides = array<i32>} : memref<1x8x768xf32, #tpu.memory_space<vmem>>, vector<1x8x48xf32>,
    %cst_117 = arith.constant 0.000000e+00 : f32
    %250 = vector.broadcast %cst_117 : f32 to vector<8x48xf32>
    %c0_i32_118 = arith.constant 0 : i32
    %c16_i32_119 = arith.constant 16 : i32
    %251 = arith.addi %c0_i32_118, %c16_i32_119 : i32
    %c1_i32_120 = arith.constant 1 : i32
    %252 = scf.for %arg6 = %c0_i32_118 to %251 step %c1_i32_120 iter_args(%arg7 = %250) -> (vector<8x48xf32>)  : i32 {
      %c8_i32 = arith.constant 8 : i32
      %800 = arith.muli %arg6, %c8_i32 : i32
      %801 = tpu.assume_multiple %800, 8 : i32
      %c0_381 = arith.constant 0 : index
      %c5_382 = arith.constant 5 : index
      %802 = arith.index_cast %801 : i32 to index
      %c0_383 = arith.constant 0 : index
      %803 = vector.load %arg2[%c0_381, %c5_382, %802, %c0_383] : memref<1x16x136x384xbf16, #tpu.memory_space<vmem>>, vector<1x1x8x384xbf16>
      %804 = vector.shape_cast %803 : vector<1x1x8x384xbf16> to vector<8x384xbf16>
      %c5_384 = arith.constant 5 : index
      %805 = arith.index_cast %arg6 : i32 to index
      %c0_385 = arith.constant 0 : index
      %c0_386 = arith.constant 0 : index
      %806 = vector.load %arg3[%c5_384, %805, %c0_385, %c0_386] : memref<16x16x384x48xbf16, #tpu.memory_space<vmem>>, vector<1x1x384x48xbf16>
      %807 = vector.shape_cast %806 : vector<1x1x384x48xbf16> to vector<384x48xbf16>
      %cst_387 = arith.constant dense<0.000000e+00> : vector<8x48xf32>
      %808 = tpu.matmul %804, %807, %cst_387 {dimension_numbers = #tpu.dot_dimension_numbers<[1], [0], [0], [1], [0, 0, 1, 1], [], []>} : vector<8x384xbf16>, vector<384x48xbf16>, vector<8x48xf32> -> vector<8x48xf32>
      %809 = arith.addf %arg7, %808 : vector<8x48xf32>
      scf.yield %809 : vector<8x48xf32>
    }
    %c16_i32_121 = arith.constant 16 : i32
    %c5 = arith.constant 5 : index
    %c0_122 = arith.constant 0 : index
    %c0_123 = arith.constant 0 : index
    %253 = vector.load %arg4[%c5, %c0_122, %c0_123] : memref<16x1x48xf32, #tpu.memory_space<vmem>>, vector<1x1x48xf32>
    %254 = vector.shape_cast %253 : vector<1x1x48xf32> to vector<1x48xf32>
    %255 = vector.broadcast %254 : vector<1x48xf32> to vector<8x48xf32>
    %256 = arith.addf %252, %255 : vector<8x48xf32>
    %cst_124 = arith.constant 0.707106769 : f32
    %257 = vector.broadcast %cst_124 : f32 to vector<8x48xf32>
    %258 = arith.mulf %256, %257 : vector<8x48xf32>
    %cst_125 = arith.constant 0.000000e+00 : f32
    %259 = vector.broadcast %cst_125 : f32 to vector<8x48xf32>
    %260 = arith.cmpf oge, %258, %259 : vector<8x48xf32>
    %cst_126 = arith.constant 1.000000e+00 : f32
    %cst_127 = arith.constant -1.000000e+00 : f32
    %261 = vector.broadcast %cst_126 : f32 to vector<8x48xf32>
    %262 = vector.broadcast %cst_127 : f32 to vector<8x48xf32>
    %263 = arith.select %260, %261, %262 : vector<8x48xi1>, vector<8x48xf32>
    %264 = math.absf %258 : vector<8x48xf32>
    %cst_128 = arith.constant 0.327591091 : f32
    %265 = vector.broadcast %cst_128 : f32 to vector<8x48xf32>
    %266 = arith.mulf %265, %264 : vector<8x48xf32>
    %cst_129 = arith.constant 1.000000e+00 : f32
    %267 = vector.broadcast %cst_129 : f32 to vector<8x48xf32>
    %268 = arith.addf %267, %266 : vector<8x48xf32>
    %269 = tpu.reciprocal %268 {approx = true} : vector<8x48xf32> -> vector<8x48xf32>
    %cst_130 = arith.constant 1.06140542 : f32
    %270 = vector.broadcast %cst_130 : f32 to vector<8x48xf32>
    %271 = arith.mulf %270, %269 : vector<8x48xf32>
    %cst_131 = arith.constant -1.45315206 : f32
    %272 = vector.broadcast %cst_131 : f32 to vector<8x48xf32>
    %273 = arith.addf %271, %272 : vector<8x48xf32>
    %274 = arith.mulf %273, %269 : vector<8x48xf32>
    %cst_132 = arith.constant 1.42141378 : f32
    %275 = vector.broadcast %cst_132 : f32 to vector<8x48xf32>
    %276 = arith.addf %274, %275 : vector<8x48xf32>
    %277 = arith.mulf %276, %269 : vector<8x48xf32>
    %cst_133 = arith.constant -0.284496725 : f32
    %278 = vector.broadcast %cst_133 : f32 to vector<8x48xf32>
    %279 = arith.addf %277, %278 : vector<8x48xf32>
    %280 = arith.mulf %279, %269 : vector<8x48xf32>
    %cst_134 = arith.constant 0.254829586 : f32
    %281 = vector.broadcast %cst_134 : f32 to vector<8x48xf32>
    %282 = arith.addf %280, %281 : vector<8x48xf32>
    %283 = arith.mulf %282, %269 : vector<8x48xf32>
    %cst_135 = arith.constant 0.000000e+00 : f32
    %284 = vector.broadcast %cst_135 : f32 to vector<8x48xf32>
    %285 = arith.subf %284, %264 : vector<8x48xf32>
    %286 = arith.mulf %285, %264 : vector<8x48xf32>
    %287 = math.exp %286 : vector<8x48xf32>
    %288 = arith.mulf %283, %287 : vector<8x48xf32>
    %cst_136 = arith.constant 1.000000e+00 : f32
    %289 = vector.broadcast %cst_136 : f32 to vector<8x48xf32>
    %290 = arith.subf %289, %288 : vector<8x48xf32>
    %291 = arith.mulf %263, %290 : vector<8x48xf32>
    %cst_137 = arith.constant 5.000000e-01 : f32
    %292 = vector.broadcast %cst_137 : f32 to vector<8x48xf32>
    %293 = arith.mulf %292, %256 : vector<8x48xf32>
    %cst_138 = arith.constant 1.000000e+00 : f32
    %294 = vector.broadcast %cst_138 : f32 to vector<8x48xf32>
    %295 = arith.addf %294, %291 : vector<8x48xf32>
    %296 = arith.mulf %293, %295 : vector<8x48xf32>
    %c0_139 = arith.constant 0 : index
    %c0_140 = arith.constant 0 : index
    %c240 = arith.constant 240 : index
    %297 = vector.load %arg5[%c0_139, %c0_140, %c240] : memref<1x8x768xf32, #tpu.memory_space<vmem>>, vector<1x8x48xf32>
    %298 = vector.shape_cast %297 : vector<1x8x48xf32> to vector<8x48xf32>
    %299 = vector.shape_cast %296 : vector<8x48xf32> to vector<1x8x48xf32>
    tpu.vector_store %arg5[%c0_139, %c0_140, %c240], %299 {strides = array<i32>} : memref<1x8x768xf32, #tpu.memory_space<vmem>>, vector<1x8x48xf32>,
    %cst_141 = arith.constant 0.000000e+00 : f32
    %300 = vector.broadcast %cst_141 : f32 to vector<8x48xf32>
    %c0_i32_142 = arith.constant 0 : i32
    %c16_i32_143 = arith.constant 16 : i32
    %301 = arith.addi %c0_i32_142, %c16_i32_143 : i32
    %c1_i32_144 = arith.constant 1 : i32
    %302 = scf.for %arg6 = %c0_i32_142 to %301 step %c1_i32_144 iter_args(%arg7 = %300) -> (vector<8x48xf32>)  : i32 {
      %c8_i32 = arith.constant 8 : i32
      %800 = arith.muli %arg6, %c8_i32 : i32
      %801 = tpu.assume_multiple %800, 8 : i32
      %c0_381 = arith.constant 0 : index
      %c6_382 = arith.constant 6 : index
      %802 = arith.index_cast %801 : i32 to index
      %c0_383 = arith.constant 0 : index
      %803 = vector.load %arg2[%c0_381, %c6_382, %802, %c0_383] : memref<1x16x136x384xbf16, #tpu.memory_space<vmem>>, vector<1x1x8x384xbf16>
      %804 = vector.shape_cast %803 : vector<1x1x8x384xbf16> to vector<8x384xbf16>
      %c6_384 = arith.constant 6 : index
      %805 = arith.index_cast %arg6 : i32 to index
      %c0_385 = arith.constant 0 : index
      %c0_386 = arith.constant 0 : index
      %806 = vector.load %arg3[%c6_384, %805, %c0_385, %c0_386] : memref<16x16x384x48xbf16, #tpu.memory_space<vmem>>, vector<1x1x384x48xbf16>
      %807 = vector.shape_cast %806 : vector<1x1x384x48xbf16> to vector<384x48xbf16>
      %cst_387 = arith.constant dense<0.000000e+00> : vector<8x48xf32>
      %808 = tpu.matmul %804, %807, %cst_387 {dimension_numbers = #tpu.dot_dimension_numbers<[1], [0], [0], [1], [0, 0, 1, 1], [], []>} : vector<8x384xbf16>, vector<384x48xbf16>, vector<8x48xf32> -> vector<8x48xf32>
      %809 = arith.addf %arg7, %808 : vector<8x48xf32>
      scf.yield %809 : vector<8x48xf32>
    }
    %c16_i32_145 = arith.constant 16 : i32
    %c6 = arith.constant 6 : index
    %c0_146 = arith.constant 0 : index
    %c0_147 = arith.constant 0 : index
    %303 = vector.load %arg4[%c6, %c0_146, %c0_147] : memref<16x1x48xf32, #tpu.memory_space<vmem>>, vector<1x1x48xf32>
    %304 = vector.shape_cast %303 : vector<1x1x48xf32> to vector<1x48xf32>
    %305 = vector.broadcast %304 : vector<1x48xf32> to vector<8x48xf32>
    %306 = arith.addf %302, %305 : vector<8x48xf32>
    %cst_148 = arith.constant 0.707106769 : f32
    %307 = vector.broadcast %cst_148 : f32 to vector<8x48xf32>
    %308 = arith.mulf %306, %307 : vector<8x48xf32>
    %cst_149 = arith.constant 0.000000e+00 : f32
    %309 = vector.broadcast %cst_149 : f32 to vector<8x48xf32>
    %310 = arith.cmpf oge, %308, %309 : vector<8x48xf32>
    %cst_150 = arith.constant 1.000000e+00 : f32
    %cst_151 = arith.constant -1.000000e+00 : f32
    %311 = vector.broadcast %cst_150 : f32 to vector<8x48xf32>
    %312 = vector.broadcast %cst_151 : f32 to vector<8x48xf32>
    %313 = arith.select %310, %311, %312 : vector<8x48xi1>, vector<8x48xf32>
    %314 = math.absf %308 : vector<8x48xf32>
    %cst_152 = arith.constant 0.327591091 : f32
    %315 = vector.broadcast %cst_152 : f32 to vector<8x48xf32>
    %316 = arith.mulf %315, %314 : vector<8x48xf32>
    %cst_153 = arith.constant 1.000000e+00 : f32
    %317 = vector.broadcast %cst_153 : f32 to vector<8x48xf32>
    %318 = arith.addf %317, %316 : vector<8x48xf32>
    %319 = tpu.reciprocal %318 {approx = true} : vector<8x48xf32> -> vector<8x48xf32>
    %cst_154 = arith.constant 1.06140542 : f32
    %320 = vector.broadcast %cst_154 : f32 to vector<8x48xf32>
    %321 = arith.mulf %320, %319 : vector<8x48xf32>
    %cst_155 = arith.constant -1.45315206 : f32
    %322 = vector.broadcast %cst_155 : f32 to vector<8x48xf32>
    %323 = arith.addf %321, %322 : vector<8x48xf32>
    %324 = arith.mulf %323, %319 : vector<8x48xf32>
    %cst_156 = arith.constant 1.42141378 : f32
    %325 = vector.broadcast %cst_156 : f32 to vector<8x48xf32>
    %326 = arith.addf %324, %325 : vector<8x48xf32>
    %327 = arith.mulf %326, %319 : vector<8x48xf32>
    %cst_157 = arith.constant -0.284496725 : f32
    %328 = vector.broadcast %cst_157 : f32 to vector<8x48xf32>
    %329 = arith.addf %327, %328 : vector<8x48xf32>
    %330 = arith.mulf %329, %319 : vector<8x48xf32>
    %cst_158 = arith.constant 0.254829586 : f32
    %331 = vector.broadcast %cst_158 : f32 to vector<8x48xf32>
    %332 = arith.addf %330, %331 : vector<8x48xf32>
    %333 = arith.mulf %332, %319 : vector<8x48xf32>
    %cst_159 = arith.constant 0.000000e+00 : f32
    %334 = vector.broadcast %cst_159 : f32 to vector<8x48xf32>
    %335 = arith.subf %334, %314 : vector<8x48xf32>
    %336 = arith.mulf %335, %314 : vector<8x48xf32>
    %337 = math.exp %336 : vector<8x48xf32>
    %338 = arith.mulf %333, %337 : vector<8x48xf32>
    %cst_160 = arith.constant 1.000000e+00 : f32
    %339 = vector.broadcast %cst_160 : f32 to vector<8x48xf32>
    %340 = arith.subf %339, %338 : vector<8x48xf32>
    %341 = arith.mulf %313, %340 : vector<8x48xf32>
    %cst_161 = arith.constant 5.000000e-01 : f32
    %342 = vector.broadcast %cst_161 : f32 to vector<8x48xf32>
    %343 = arith.mulf %342, %306 : vector<8x48xf32>
    %cst_162 = arith.constant 1.000000e+00 : f32
    %344 = vector.broadcast %cst_162 : f32 to vector<8x48xf32>
    %345 = arith.addf %344, %341 : vector<8x48xf32>
    %346 = arith.mulf %343, %345 : vector<8x48xf32>
    %c0_163 = arith.constant 0 : index
    %c0_164 = arith.constant 0 : index
    %c288 = arith.constant 288 : index
    %347 = vector.load %arg5[%c0_163, %c0_164, %c288] : memref<1x8x768xf32, #tpu.memory_space<vmem>>, vector<1x8x48xf32>
    %348 = vector.shape_cast %347 : vector<1x8x48xf32> to vector<8x48xf32>
    %349 = vector.shape_cast %346 : vector<8x48xf32> to vector<1x8x48xf32>
    tpu.vector_store %arg5[%c0_163, %c0_164, %c288], %349 {strides = array<i32>} : memref<1x8x768xf32, #tpu.memory_space<vmem>>, vector<1x8x48xf32>,
    %cst_165 = arith.constant 0.000000e+00 : f32
    %350 = vector.broadcast %cst_165 : f32 to vector<8x48xf32>
    %c0_i32_166 = arith.constant 0 : i32
    %c16_i32_167 = arith.constant 16 : i32
    %351 = arith.addi %c0_i32_166, %c16_i32_167 : i32
    %c1_i32_168 = arith.constant 1 : i32
    %352 = scf.for %arg6 = %c0_i32_166 to %351 step %c1_i32_168 iter_args(%arg7 = %350) -> (vector<8x48xf32>)  : i32 {
      %c8_i32 = arith.constant 8 : i32
      %800 = arith.muli %arg6, %c8_i32 : i32
      %801 = tpu.assume_multiple %800, 8 : i32
      %c0_381 = arith.constant 0 : index
      %c7_382 = arith.constant 7 : index
      %802 = arith.index_cast %801 : i32 to index
      %c0_383 = arith.constant 0 : index
      %803 = vector.load %arg2[%c0_381, %c7_382, %802, %c0_383] : memref<1x16x136x384xbf16, #tpu.memory_space<vmem>>, vector<1x1x8x384xbf16>
      %804 = vector.shape_cast %803 : vector<1x1x8x384xbf16> to vector<8x384xbf16>
      %c7_384 = arith.constant 7 : index
      %805 = arith.index_cast %arg6 : i32 to index
      %c0_385 = arith.constant 0 : index
      %c0_386 = arith.constant 0 : index
      %806 = vector.load %arg3[%c7_384, %805, %c0_385, %c0_386] : memref<16x16x384x48xbf16, #tpu.memory_space<vmem>>, vector<1x1x384x48xbf16>
      %807 = vector.shape_cast %806 : vector<1x1x384x48xbf16> to vector<384x48xbf16>
      %cst_387 = arith.constant dense<0.000000e+00> : vector<8x48xf32>
      %808 = tpu.matmul %804, %807, %cst_387 {dimension_numbers = #tpu.dot_dimension_numbers<[1], [0], [0], [1], [0, 0, 1, 1], [], []>} : vector<8x384xbf16>, vector<384x48xbf16>, vector<8x48xf32> -> vector<8x48xf32>
      %809 = arith.addf %arg7, %808 : vector<8x48xf32>
      scf.yield %809 : vector<8x48xf32>
    }
    %c16_i32_169 = arith.constant 16 : i32
    %c7 = arith.constant 7 : index
    %c0_170 = arith.constant 0 : index
    %c0_171 = arith.constant 0 : index
    %353 = vector.load %arg4[%c7, %c0_170, %c0_171] : memref<16x1x48xf32, #tpu.memory_space<vmem>>, vector<1x1x48xf32>
    %354 = vector.shape_cast %353 : vector<1x1x48xf32> to vector<1x48xf32>
    %355 = vector.broadcast %354 : vector<1x48xf32> to vector<8x48xf32>
    %356 = arith.addf %352, %355 : vector<8x48xf32>
    %cst_172 = arith.constant 0.707106769 : f32
    %357 = vector.broadcast %cst_172 : f32 to vector<8x48xf32>
    %358 = arith.mulf %356, %357 : vector<8x48xf32>
    %cst_173 = arith.constant 0.000000e+00 : f32
    %359 = vector.broadcast %cst_173 : f32 to vector<8x48xf32>
    %360 = arith.cmpf oge, %358, %359 : vector<8x48xf32>
    %cst_174 = arith.constant 1.000000e+00 : f32
    %cst_175 = arith.constant -1.000000e+00 : f32
    %361 = vector.broadcast %cst_174 : f32 to vector<8x48xf32>
    %362 = vector.broadcast %cst_175 : f32 to vector<8x48xf32>
    %363 = arith.select %360, %361, %362 : vector<8x48xi1>, vector<8x48xf32>
    %364 = math.absf %358 : vector<8x48xf32>
    %cst_176 = arith.constant 0.327591091 : f32
    %365 = vector.broadcast %cst_176 : f32 to vector<8x48xf32>
    %366 = arith.mulf %365, %364 : vector<8x48xf32>
    %cst_177 = arith.constant 1.000000e+00 : f32
    %367 = vector.broadcast %cst_177 : f32 to vector<8x48xf32>
    %368 = arith.addf %367, %366 : vector<8x48xf32>
    %369 = tpu.reciprocal %368 {approx = true} : vector<8x48xf32> -> vector<8x48xf32>
    %cst_178 = arith.constant 1.06140542 : f32
    %370 = vector.broadcast %cst_178 : f32 to vector<8x48xf32>
    %371 = arith.mulf %370, %369 : vector<8x48xf32>
    %cst_179 = arith.constant -1.45315206 : f32
    %372 = vector.broadcast %cst_179 : f32 to vector<8x48xf32>
    %373 = arith.addf %371, %372 : vector<8x48xf32>
    %374 = arith.mulf %373, %369 : vector<8x48xf32>
    %cst_180 = arith.constant 1.42141378 : f32
    %375 = vector.broadcast %cst_180 : f32 to vector<8x48xf32>
    %376 = arith.addf %374, %375 : vector<8x48xf32>
    %377 = arith.mulf %376, %369 : vector<8x48xf32>
    %cst_181 = arith.constant -0.284496725 : f32
    %378 = vector.broadcast %cst_181 : f32 to vector<8x48xf32>
    %379 = arith.addf %377, %378 : vector<8x48xf32>
    %380 = arith.mulf %379, %369 : vector<8x48xf32>
    %cst_182 = arith.constant 0.254829586 : f32
    %381 = vector.broadcast %cst_182 : f32 to vector<8x48xf32>
    %382 = arith.addf %380, %381 : vector<8x48xf32>
    %383 = arith.mulf %382, %369 : vector<8x48xf32>
    %cst_183 = arith.constant 0.000000e+00 : f32
    %384 = vector.broadcast %cst_183 : f32 to vector<8x48xf32>
    %385 = arith.subf %384, %364 : vector<8x48xf32>
    %386 = arith.mulf %385, %364 : vector<8x48xf32>
    %387 = math.exp %386 : vector<8x48xf32>
    %388 = arith.mulf %383, %387 : vector<8x48xf32>
    %cst_184 = arith.constant 1.000000e+00 : f32
    %389 = vector.broadcast %cst_184 : f32 to vector<8x48xf32>
    %390 = arith.subf %389, %388 : vector<8x48xf32>
    %391 = arith.mulf %363, %390 : vector<8x48xf32>
    %cst_185 = arith.constant 5.000000e-01 : f32
    %392 = vector.broadcast %cst_185 : f32 to vector<8x48xf32>
    %393 = arith.mulf %392, %356 : vector<8x48xf32>
    %cst_186 = arith.constant 1.000000e+00 : f32
    %394 = vector.broadcast %cst_186 : f32 to vector<8x48xf32>
    %395 = arith.addf %394, %391 : vector<8x48xf32>
    %396 = arith.mulf %393, %395 : vector<8x48xf32>
    %c0_187 = arith.constant 0 : index
    %c0_188 = arith.constant 0 : index
    %c336 = arith.constant 336 : index
    %397 = vector.load %arg5[%c0_187, %c0_188, %c336] : memref<1x8x768xf32, #tpu.memory_space<vmem>>, vector<1x8x48xf32>
    %398 = vector.shape_cast %397 : vector<1x8x48xf32> to vector<8x48xf32>
    %399 = vector.shape_cast %396 : vector<8x48xf32> to vector<1x8x48xf32>
    tpu.vector_store %arg5[%c0_187, %c0_188, %c336], %399 {strides = array<i32>} : memref<1x8x768xf32, #tpu.memory_space<vmem>>, vector<1x8x48xf32>,
    %cst_189 = arith.constant 0.000000e+00 : f32
    %400 = vector.broadcast %cst_189 : f32 to vector<8x48xf32>
    %c0_i32_190 = arith.constant 0 : i32
    %c16_i32_191 = arith.constant 16 : i32
    %401 = arith.addi %c0_i32_190, %c16_i32_191 : i32
    %c1_i32_192 = arith.constant 1 : i32
    %402 = scf.for %arg6 = %c0_i32_190 to %401 step %c1_i32_192 iter_args(%arg7 = %400) -> (vector<8x48xf32>)  : i32 {
      %c8_i32 = arith.constant 8 : i32
      %800 = arith.muli %arg6, %c8_i32 : i32
      %801 = tpu.assume_multiple %800, 8 : i32
      %c0_381 = arith.constant 0 : index
      %c8_382 = arith.constant 8 : index
      %802 = arith.index_cast %801 : i32 to index
      %c0_383 = arith.constant 0 : index
      %803 = vector.load %arg2[%c0_381, %c8_382, %802, %c0_383] : memref<1x16x136x384xbf16, #tpu.memory_space<vmem>>, vector<1x1x8x384xbf16>
      %804 = vector.shape_cast %803 : vector<1x1x8x384xbf16> to vector<8x384xbf16>
      %c8_384 = arith.constant 8 : index
      %805 = arith.index_cast %arg6 : i32 to index
      %c0_385 = arith.constant 0 : index
      %c0_386 = arith.constant 0 : index
      %806 = vector.load %arg3[%c8_384, %805, %c0_385, %c0_386] : memref<16x16x384x48xbf16, #tpu.memory_space<vmem>>, vector<1x1x384x48xbf16>
      %807 = vector.shape_cast %806 : vector<1x1x384x48xbf16> to vector<384x48xbf16>
      %cst_387 = arith.constant dense<0.000000e+00> : vector<8x48xf32>
      %808 = tpu.matmul %804, %807, %cst_387 {dimension_numbers = #tpu.dot_dimension_numbers<[1], [0], [0], [1], [0, 0, 1, 1], [], []>} : vector<8x384xbf16>, vector<384x48xbf16>, vector<8x48xf32> -> vector<8x48xf32>
      %809 = arith.addf %arg7, %808 : vector<8x48xf32>
      scf.yield %809 : vector<8x48xf32>
    }
    %c16_i32_193 = arith.constant 16 : i32
    %c8 = arith.constant 8 : index
    %c0_194 = arith.constant 0 : index
    %c0_195 = arith.constant 0 : index
    %403 = vector.load %arg4[%c8, %c0_194, %c0_195] : memref<16x1x48xf32, #tpu.memory_space<vmem>>, vector<1x1x48xf32>
    %404 = vector.shape_cast %403 : vector<1x1x48xf32> to vector<1x48xf32>
    %405 = vector.broadcast %404 : vector<1x48xf32> to vector<8x48xf32>
    %406 = arith.addf %402, %405 : vector<8x48xf32>
    %cst_196 = arith.constant 0.707106769 : f32
    %407 = vector.broadcast %cst_196 : f32 to vector<8x48xf32>
    %408 = arith.mulf %406, %407 : vector<8x48xf32>
    %cst_197 = arith.constant 0.000000e+00 : f32
    %409 = vector.broadcast %cst_197 : f32 to vector<8x48xf32>
    %410 = arith.cmpf oge, %408, %409 : vector<8x48xf32>
    %cst_198 = arith.constant 1.000000e+00 : f32
    %cst_199 = arith.constant -1.000000e+00 : f32
    %411 = vector.broadcast %cst_198 : f32 to vector<8x48xf32>
    %412 = vector.broadcast %cst_199 : f32 to vector<8x48xf32>
    %413 = arith.select %410, %411, %412 : vector<8x48xi1>, vector<8x48xf32>
    %414 = math.absf %408 : vector<8x48xf32>
    %cst_200 = arith.constant 0.327591091 : f32
    %415 = vector.broadcast %cst_200 : f32 to vector<8x48xf32>
    %416 = arith.mulf %415, %414 : vector<8x48xf32>
    %cst_201 = arith.constant 1.000000e+00 : f32
    %417 = vector.broadcast %cst_201 : f32 to vector<8x48xf32>
    %418 = arith.addf %417, %416 : vector<8x48xf32>
    %419 = tpu.reciprocal %418 {approx = true} : vector<8x48xf32> -> vector<8x48xf32>
    %cst_202 = arith.constant 1.06140542 : f32
    %420 = vector.broadcast %cst_202 : f32 to vector<8x48xf32>
    %421 = arith.mulf %420, %419 : vector<8x48xf32>
    %cst_203 = arith.constant -1.45315206 : f32
    %422 = vector.broadcast %cst_203 : f32 to vector<8x48xf32>
    %423 = arith.addf %421, %422 : vector<8x48xf32>
    %424 = arith.mulf %423, %419 : vector<8x48xf32>
    %cst_204 = arith.constant 1.42141378 : f32
    %425 = vector.broadcast %cst_204 : f32 to vector<8x48xf32>
    %426 = arith.addf %424, %425 : vector<8x48xf32>
    %427 = arith.mulf %426, %419 : vector<8x48xf32>
    %cst_205 = arith.constant -0.284496725 : f32
    %428 = vector.broadcast %cst_205 : f32 to vector<8x48xf32>
    %429 = arith.addf %427, %428 : vector<8x48xf32>
    %430 = arith.mulf %429, %419 : vector<8x48xf32>
    %cst_206 = arith.constant 0.254829586 : f32
    %431 = vector.broadcast %cst_206 : f32 to vector<8x48xf32>
    %432 = arith.addf %430, %431 : vector<8x48xf32>
    %433 = arith.mulf %432, %419 : vector<8x48xf32>
    %cst_207 = arith.constant 0.000000e+00 : f32
    %434 = vector.broadcast %cst_207 : f32 to vector<8x48xf32>
    %435 = arith.subf %434, %414 : vector<8x48xf32>
    %436 = arith.mulf %435, %414 : vector<8x48xf32>
    %437 = math.exp %436 : vector<8x48xf32>
    %438 = arith.mulf %433, %437 : vector<8x48xf32>
    %cst_208 = arith.constant 1.000000e+00 : f32
    %439 = vector.broadcast %cst_208 : f32 to vector<8x48xf32>
    %440 = arith.subf %439, %438 : vector<8x48xf32>
    %441 = arith.mulf %413, %440 : vector<8x48xf32>
    %cst_209 = arith.constant 5.000000e-01 : f32
    %442 = vector.broadcast %cst_209 : f32 to vector<8x48xf32>
    %443 = arith.mulf %442, %406 : vector<8x48xf32>
    %cst_210 = arith.constant 1.000000e+00 : f32
    %444 = vector.broadcast %cst_210 : f32 to vector<8x48xf32>
    %445 = arith.addf %444, %441 : vector<8x48xf32>
    %446 = arith.mulf %443, %445 : vector<8x48xf32>
    %c0_211 = arith.constant 0 : index
    %c0_212 = arith.constant 0 : index
    %c384 = arith.constant 384 : index
    %447 = vector.load %arg5[%c0_211, %c0_212, %c384] : memref<1x8x768xf32, #tpu.memory_space<vmem>>, vector<1x8x48xf32>
    %448 = vector.shape_cast %447 : vector<1x8x48xf32> to vector<8x48xf32>
    %449 = vector.shape_cast %446 : vector<8x48xf32> to vector<1x8x48xf32>
    tpu.vector_store %arg5[%c0_211, %c0_212, %c384], %449 {strides = array<i32>} : memref<1x8x768xf32, #tpu.memory_space<vmem>>, vector<1x8x48xf32>,
    %cst_213 = arith.constant 0.000000e+00 : f32
    %450 = vector.broadcast %cst_213 : f32 to vector<8x48xf32>
    %c0_i32_214 = arith.constant 0 : i32
    %c16_i32_215 = arith.constant 16 : i32
    %451 = arith.addi %c0_i32_214, %c16_i32_215 : i32
    %c1_i32_216 = arith.constant 1 : i32
    %452 = scf.for %arg6 = %c0_i32_214 to %451 step %c1_i32_216 iter_args(%arg7 = %450) -> (vector<8x48xf32>)  : i32 {
      %c8_i32 = arith.constant 8 : i32
      %800 = arith.muli %arg6, %c8_i32 : i32
      %801 = tpu.assume_multiple %800, 8 : i32
      %c0_381 = arith.constant 0 : index
      %c9_382 = arith.constant 9 : index
      %802 = arith.index_cast %801 : i32 to index
      %c0_383 = arith.constant 0 : index
      %803 = vector.load %arg2[%c0_381, %c9_382, %802, %c0_383] : memref<1x16x136x384xbf16, #tpu.memory_space<vmem>>, vector<1x1x8x384xbf16>
      %804 = vector.shape_cast %803 : vector<1x1x8x384xbf16> to vector<8x384xbf16>
      %c9_384 = arith.constant 9 : index
      %805 = arith.index_cast %arg6 : i32 to index
      %c0_385 = arith.constant 0 : index
      %c0_386 = arith.constant 0 : index
      %806 = vector.load %arg3[%c9_384, %805, %c0_385, %c0_386] : memref<16x16x384x48xbf16, #tpu.memory_space<vmem>>, vector<1x1x384x48xbf16>
      %807 = vector.shape_cast %806 : vector<1x1x384x48xbf16> to vector<384x48xbf16>
      %cst_387 = arith.constant dense<0.000000e+00> : vector<8x48xf32>
      %808 = tpu.matmul %804, %807, %cst_387 {dimension_numbers = #tpu.dot_dimension_numbers<[1], [0], [0], [1], [0, 0, 1, 1], [], []>} : vector<8x384xbf16>, vector<384x48xbf16>, vector<8x48xf32> -> vector<8x48xf32>
      %809 = arith.addf %arg7, %808 : vector<8x48xf32>
      scf.yield %809 : vector<8x48xf32>
    }
    %c16_i32_217 = arith.constant 16 : i32
    %c9 = arith.constant 9 : index
    %c0_218 = arith.constant 0 : index
    %c0_219 = arith.constant 0 : index
    %453 = vector.load %arg4[%c9, %c0_218, %c0_219] : memref<16x1x48xf32, #tpu.memory_space<vmem>>, vector<1x1x48xf32>
    %454 = vector.shape_cast %453 : vector<1x1x48xf32> to vector<1x48xf32>
    %455 = vector.broadcast %454 : vector<1x48xf32> to vector<8x48xf32>
    %456 = arith.addf %452, %455 : vector<8x48xf32>
    %cst_220 = arith.constant 0.707106769 : f32
    %457 = vector.broadcast %cst_220 : f32 to vector<8x48xf32>
    %458 = arith.mulf %456, %457 : vector<8x48xf32>
    %cst_221 = arith.constant 0.000000e+00 : f32
    %459 = vector.broadcast %cst_221 : f32 to vector<8x48xf32>
    %460 = arith.cmpf oge, %458, %459 : vector<8x48xf32>
    %cst_222 = arith.constant 1.000000e+00 : f32
    %cst_223 = arith.constant -1.000000e+00 : f32
    %461 = vector.broadcast %cst_222 : f32 to vector<8x48xf32>
    %462 = vector.broadcast %cst_223 : f32 to vector<8x48xf32>
    %463 = arith.select %460, %461, %462 : vector<8x48xi1>, vector<8x48xf32>
    %464 = math.absf %458 : vector<8x48xf32>
    %cst_224 = arith.constant 0.327591091 : f32
    %465 = vector.broadcast %cst_224 : f32 to vector<8x48xf32>
    %466 = arith.mulf %465, %464 : vector<8x48xf32>
    %cst_225 = arith.constant 1.000000e+00 : f32
    %467 = vector.broadcast %cst_225 : f32 to vector<8x48xf32>
    %468 = arith.addf %467, %466 : vector<8x48xf32>
    %469 = tpu.reciprocal %468 {approx = true} : vector<8x48xf32> -> vector<8x48xf32>
    %cst_226 = arith.constant 1.06140542 : f32
    %470 = vector.broadcast %cst_226 : f32 to vector<8x48xf32>
    %471 = arith.mulf %470, %469 : vector<8x48xf32>
    %cst_227 = arith.constant -1.45315206 : f32
    %472 = vector.broadcast %cst_227 : f32 to vector<8x48xf32>
    %473 = arith.addf %471, %472 : vector<8x48xf32>
    %474 = arith.mulf %473, %469 : vector<8x48xf32>
    %cst_228 = arith.constant 1.42141378 : f32
    %475 = vector.broadcast %cst_228 : f32 to vector<8x48xf32>
    %476 = arith.addf %474, %475 : vector<8x48xf32>
    %477 = arith.mulf %476, %469 : vector<8x48xf32>
    %cst_229 = arith.constant -0.284496725 : f32
    %478 = vector.broadcast %cst_229 : f32 to vector<8x48xf32>
    %479 = arith.addf %477, %478 : vector<8x48xf32>
    %480 = arith.mulf %479, %469 : vector<8x48xf32>
    %cst_230 = arith.constant 0.254829586 : f32
    %481 = vector.broadcast %cst_230 : f32 to vector<8x48xf32>
    %482 = arith.addf %480, %481 : vector<8x48xf32>
    %483 = arith.mulf %482, %469 : vector<8x48xf32>
    %cst_231 = arith.constant 0.000000e+00 : f32
    %484 = vector.broadcast %cst_231 : f32 to vector<8x48xf32>
    %485 = arith.subf %484, %464 : vector<8x48xf32>
    %486 = arith.mulf %485, %464 : vector<8x48xf32>
    %487 = math.exp %486 : vector<8x48xf32>
    %488 = arith.mulf %483, %487 : vector<8x48xf32>
    %cst_232 = arith.constant 1.000000e+00 : f32
    %489 = vector.broadcast %cst_232 : f32 to vector<8x48xf32>
    %490 = arith.subf %489, %488 : vector<8x48xf32>
    %491 = arith.mulf %463, %490 : vector<8x48xf32>
    %cst_233 = arith.constant 5.000000e-01 : f32
    %492 = vector.broadcast %cst_233 : f32 to vector<8x48xf32>
    %493 = arith.mulf %492, %456 : vector<8x48xf32>
    %cst_234 = arith.constant 1.000000e+00 : f32
    %494 = vector.broadcast %cst_234 : f32 to vector<8x48xf32>
    %495 = arith.addf %494, %491 : vector<8x48xf32>
    %496 = arith.mulf %493, %495 : vector<8x48xf32>
    %c0_235 = arith.constant 0 : index
    %c0_236 = arith.constant 0 : index
    %c432 = arith.constant 432 : index
    %497 = vector.load %arg5[%c0_235, %c0_236, %c432] : memref<1x8x768xf32, #tpu.memory_space<vmem>>, vector<1x8x48xf32>
    %498 = vector.shape_cast %497 : vector<1x8x48xf32> to vector<8x48xf32>
    %499 = vector.shape_cast %496 : vector<8x48xf32> to vector<1x8x48xf32>
    tpu.vector_store %arg5[%c0_235, %c0_236, %c432], %499 {strides = array<i32>} : memref<1x8x768xf32, #tpu.memory_space<vmem>>, vector<1x8x48xf32>,
    %cst_237 = arith.constant 0.000000e+00 : f32
    %500 = vector.broadcast %cst_237 : f32 to vector<8x48xf32>
    %c0_i32_238 = arith.constant 0 : i32
    %c16_i32_239 = arith.constant 16 : i32
    %501 = arith.addi %c0_i32_238, %c16_i32_239 : i32
    %c1_i32_240 = arith.constant 1 : i32
    %502 = scf.for %arg6 = %c0_i32_238 to %501 step %c1_i32_240 iter_args(%arg7 = %500) -> (vector<8x48xf32>)  : i32 {
      %c8_i32 = arith.constant 8 : i32
      %800 = arith.muli %arg6, %c8_i32 : i32
      %801 = tpu.assume_multiple %800, 8 : i32
      %c0_381 = arith.constant 0 : index
      %c10_382 = arith.constant 10 : index
      %802 = arith.index_cast %801 : i32 to index
      %c0_383 = arith.constant 0 : index
      %803 = vector.load %arg2[%c0_381, %c10_382, %802, %c0_383] : memref<1x16x136x384xbf16, #tpu.memory_space<vmem>>, vector<1x1x8x384xbf16>
      %804 = vector.shape_cast %803 : vector<1x1x8x384xbf16> to vector<8x384xbf16>
      %c10_384 = arith.constant 10 : index
      %805 = arith.index_cast %arg6 : i32 to index
      %c0_385 = arith.constant 0 : index
      %c0_386 = arith.constant 0 : index
      %806 = vector.load %arg3[%c10_384, %805, %c0_385, %c0_386] : memref<16x16x384x48xbf16, #tpu.memory_space<vmem>>, vector<1x1x384x48xbf16>
      %807 = vector.shape_cast %806 : vector<1x1x384x48xbf16> to vector<384x48xbf16>
      %cst_387 = arith.constant dense<0.000000e+00> : vector<8x48xf32>
      %808 = tpu.matmul %804, %807, %cst_387 {dimension_numbers = #tpu.dot_dimension_numbers<[1], [0], [0], [1], [0, 0, 1, 1], [], []>} : vector<8x384xbf16>, vector<384x48xbf16>, vector<8x48xf32> -> vector<8x48xf32>
      %809 = arith.addf %arg7, %808 : vector<8x48xf32>
      scf.yield %809 : vector<8x48xf32>
    }
    %c16_i32_241 = arith.constant 16 : i32
    %c10 = arith.constant 10 : index
    %c0_242 = arith.constant 0 : index
    %c0_243 = arith.constant 0 : index
    %503 = vector.load %arg4[%c10, %c0_242, %c0_243] : memref<16x1x48xf32, #tpu.memory_space<vmem>>, vector<1x1x48xf32>
    %504 = vector.shape_cast %503 : vector<1x1x48xf32> to vector<1x48xf32>
    %505 = vector.broadcast %504 : vector<1x48xf32> to vector<8x48xf32>
    %506 = arith.addf %502, %505 : vector<8x48xf32>
    %cst_244 = arith.constant 0.707106769 : f32
    %507 = vector.broadcast %cst_244 : f32 to vector<8x48xf32>
    %508 = arith.mulf %506, %507 : vector<8x48xf32>
    %cst_245 = arith.constant 0.000000e+00 : f32
    %509 = vector.broadcast %cst_245 : f32 to vector<8x48xf32>
    %510 = arith.cmpf oge, %508, %509 : vector<8x48xf32>
    %cst_246 = arith.constant 1.000000e+00 : f32
    %cst_247 = arith.constant -1.000000e+00 : f32
    %511 = vector.broadcast %cst_246 : f32 to vector<8x48xf32>
    %512 = vector.broadcast %cst_247 : f32 to vector<8x48xf32>
    %513 = arith.select %510, %511, %512 : vector<8x48xi1>, vector<8x48xf32>
    %514 = math.absf %508 : vector<8x48xf32>
    %cst_248 = arith.constant 0.327591091 : f32
    %515 = vector.broadcast %cst_248 : f32 to vector<8x48xf32>
    %516 = arith.mulf %515, %514 : vector<8x48xf32>
    %cst_249 = arith.constant 1.000000e+00 : f32
    %517 = vector.broadcast %cst_249 : f32 to vector<8x48xf32>
    %518 = arith.addf %517, %516 : vector<8x48xf32>
    %519 = tpu.reciprocal %518 {approx = true} : vector<8x48xf32> -> vector<8x48xf32>
    %cst_250 = arith.constant 1.06140542 : f32
    %520 = vector.broadcast %cst_250 : f32 to vector<8x48xf32>
    %521 = arith.mulf %520, %519 : vector<8x48xf32>
    %cst_251 = arith.constant -1.45315206 : f32
    %522 = vector.broadcast %cst_251 : f32 to vector<8x48xf32>
    %523 = arith.addf %521, %522 : vector<8x48xf32>
    %524 = arith.mulf %523, %519 : vector<8x48xf32>
    %cst_252 = arith.constant 1.42141378 : f32
    %525 = vector.broadcast %cst_252 : f32 to vector<8x48xf32>
    %526 = arith.addf %524, %525 : vector<8x48xf32>
    %527 = arith.mulf %526, %519 : vector<8x48xf32>
    %cst_253 = arith.constant -0.284496725 : f32
    %528 = vector.broadcast %cst_253 : f32 to vector<8x48xf32>
    %529 = arith.addf %527, %528 : vector<8x48xf32>
    %530 = arith.mulf %529, %519 : vector<8x48xf32>
    %cst_254 = arith.constant 0.254829586 : f32
    %531 = vector.broadcast %cst_254 : f32 to vector<8x48xf32>
    %532 = arith.addf %530, %531 : vector<8x48xf32>
    %533 = arith.mulf %532, %519 : vector<8x48xf32>
    %cst_255 = arith.constant 0.000000e+00 : f32
    %534 = vector.broadcast %cst_255 : f32 to vector<8x48xf32>
    %535 = arith.subf %534, %514 : vector<8x48xf32>
    %536 = arith.mulf %535, %514 : vector<8x48xf32>
    %537 = math.exp %536 : vector<8x48xf32>
    %538 = arith.mulf %533, %537 : vector<8x48xf32>
    %cst_256 = arith.constant 1.000000e+00 : f32
    %539 = vector.broadcast %cst_256 : f32 to vector<8x48xf32>
    %540 = arith.subf %539, %538 : vector<8x48xf32>
    %541 = arith.mulf %513, %540 : vector<8x48xf32>
    %cst_257 = arith.constant 5.000000e-01 : f32
    %542 = vector.broadcast %cst_257 : f32 to vector<8x48xf32>
    %543 = arith.mulf %542, %506 : vector<8x48xf32>
    %cst_258 = arith.constant 1.000000e+00 : f32
    %544 = vector.broadcast %cst_258 : f32 to vector<8x48xf32>
    %545 = arith.addf %544, %541 : vector<8x48xf32>
    %546 = arith.mulf %543, %545 : vector<8x48xf32>
    %c0_259 = arith.constant 0 : index
    %c0_260 = arith.constant 0 : index
    %c480 = arith.constant 480 : index
    %547 = vector.load %arg5[%c0_259, %c0_260, %c480] : memref<1x8x768xf32, #tpu.memory_space<vmem>>, vector<1x8x48xf32>
    %548 = vector.shape_cast %547 : vector<1x8x48xf32> to vector<8x48xf32>
    %549 = vector.shape_cast %546 : vector<8x48xf32> to vector<1x8x48xf32>
    tpu.vector_store %arg5[%c0_259, %c0_260, %c480], %549 {strides = array<i32>} : memref<1x8x768xf32, #tpu.memory_space<vmem>>, vector<1x8x48xf32>,
    %cst_261 = arith.constant 0.000000e+00 : f32
    %550 = vector.broadcast %cst_261 : f32 to vector<8x48xf32>
    %c0_i32_262 = arith.constant 0 : i32
    %c16_i32_263 = arith.constant 16 : i32
    %551 = arith.addi %c0_i32_262, %c16_i32_263 : i32
    %c1_i32_264 = arith.constant 1 : i32
    %552 = scf.for %arg6 = %c0_i32_262 to %551 step %c1_i32_264 iter_args(%arg7 = %550) -> (vector<8x48xf32>)  : i32 {
      %c8_i32 = arith.constant 8 : i32
      %800 = arith.muli %arg6, %c8_i32 : i32
      %801 = tpu.assume_multiple %800, 8 : i32
      %c0_381 = arith.constant 0 : index
      %c11_382 = arith.constant 11 : index
      %802 = arith.index_cast %801 : i32 to index
      %c0_383 = arith.constant 0 : index
      %803 = vector.load %arg2[%c0_381, %c11_382, %802, %c0_383] : memref<1x16x136x384xbf16, #tpu.memory_space<vmem>>, vector<1x1x8x384xbf16>
      %804 = vector.shape_cast %803 : vector<1x1x8x384xbf16> to vector<8x384xbf16>
      %c11_384 = arith.constant 11 : index
      %805 = arith.index_cast %arg6 : i32 to index
      %c0_385 = arith.constant 0 : index
      %c0_386 = arith.constant 0 : index
      %806 = vector.load %arg3[%c11_384, %805, %c0_385, %c0_386] : memref<16x16x384x48xbf16, #tpu.memory_space<vmem>>, vector<1x1x384x48xbf16>
      %807 = vector.shape_cast %806 : vector<1x1x384x48xbf16> to vector<384x48xbf16>
      %cst_387 = arith.constant dense<0.000000e+00> : vector<8x48xf32>
      %808 = tpu.matmul %804, %807, %cst_387 {dimension_numbers = #tpu.dot_dimension_numbers<[1], [0], [0], [1], [0, 0, 1, 1], [], []>} : vector<8x384xbf16>, vector<384x48xbf16>, vector<8x48xf32> -> vector<8x48xf32>
      %809 = arith.addf %arg7, %808 : vector<8x48xf32>
      scf.yield %809 : vector<8x48xf32>
    }
    %c16_i32_265 = arith.constant 16 : i32
    %c11 = arith.constant 11 : index
    %c0_266 = arith.constant 0 : index
    %c0_267 = arith.constant 0 : index
    %553 = vector.load %arg4[%c11, %c0_266, %c0_267] : memref<16x1x48xf32, #tpu.memory_space<vmem>>, vector<1x1x48xf32>
    %554 = vector.shape_cast %553 : vector<1x1x48xf32> to vector<1x48xf32>
    %555 = vector.broadcast %554 : vector<1x48xf32> to vector<8x48xf32>
    %556 = arith.addf %552, %555 : vector<8x48xf32>
    %cst_268 = arith.constant 0.707106769 : f32
    %557 = vector.broadcast %cst_268 : f32 to vector<8x48xf32>
    %558 = arith.mulf %556, %557 : vector<8x48xf32>
    %cst_269 = arith.constant 0.000000e+00 : f32
    %559 = vector.broadcast %cst_269 : f32 to vector<8x48xf32>
    %560 = arith.cmpf oge, %558, %559 : vector<8x48xf32>
    %cst_270 = arith.constant 1.000000e+00 : f32
    %cst_271 = arith.constant -1.000000e+00 : f32
    %561 = vector.broadcast %cst_270 : f32 to vector<8x48xf32>
    %562 = vector.broadcast %cst_271 : f32 to vector<8x48xf32>
    %563 = arith.select %560, %561, %562 : vector<8x48xi1>, vector<8x48xf32>
    %564 = math.absf %558 : vector<8x48xf32>
    %cst_272 = arith.constant 0.327591091 : f32
    %565 = vector.broadcast %cst_272 : f32 to vector<8x48xf32>
    %566 = arith.mulf %565, %564 : vector<8x48xf32>
    %cst_273 = arith.constant 1.000000e+00 : f32
    %567 = vector.broadcast %cst_273 : f32 to vector<8x48xf32>
    %568 = arith.addf %567, %566 : vector<8x48xf32>
    %569 = tpu.reciprocal %568 {approx = true} : vector<8x48xf32> -> vector<8x48xf32>
    %cst_274 = arith.constant 1.06140542 : f32
    %570 = vector.broadcast %cst_274 : f32 to vector<8x48xf32>
    %571 = arith.mulf %570, %569 : vector<8x48xf32>
    %cst_275 = arith.constant -1.45315206 : f32
    %572 = vector.broadcast %cst_275 : f32 to vector<8x48xf32>
    %573 = arith.addf %571, %572 : vector<8x48xf32>
    %574 = arith.mulf %573, %569 : vector<8x48xf32>
    %cst_276 = arith.constant 1.42141378 : f32
    %575 = vector.broadcast %cst_276 : f32 to vector<8x48xf32>
    %576 = arith.addf %574, %575 : vector<8x48xf32>
    %577 = arith.mulf %576, %569 : vector<8x48xf32>
    %cst_277 = arith.constant -0.284496725 : f32
    %578 = vector.broadcast %cst_277 : f32 to vector<8x48xf32>
    %579 = arith.addf %577, %578 : vector<8x48xf32>
    %580 = arith.mulf %579, %569 : vector<8x48xf32>
    %cst_278 = arith.constant 0.254829586 : f32
    %581 = vector.broadcast %cst_278 : f32 to vector<8x48xf32>
    %582 = arith.addf %580, %581 : vector<8x48xf32>
    %583 = arith.mulf %582, %569 : vector<8x48xf32>
    %cst_279 = arith.constant 0.000000e+00 : f32
    %584 = vector.broadcast %cst_279 : f32 to vector<8x48xf32>
    %585 = arith.subf %584, %564 : vector<8x48xf32>
    %586 = arith.mulf %585, %564 : vector<8x48xf32>
    %587 = math.exp %586 : vector<8x48xf32>
    %588 = arith.mulf %583, %587 : vector<8x48xf32>
    %cst_280 = arith.constant 1.000000e+00 : f32
    %589 = vector.broadcast %cst_280 : f32 to vector<8x48xf32>
    %590 = arith.subf %589, %588 : vector<8x48xf32>
    %591 = arith.mulf %563, %590 : vector<8x48xf32>
    %cst_281 = arith.constant 5.000000e-01 : f32
    %592 = vector.broadcast %cst_281 : f32 to vector<8x48xf32>
    %593 = arith.mulf %592, %556 : vector<8x48xf32>
    %cst_282 = arith.constant 1.000000e+00 : f32
    %594 = vector.broadcast %cst_282 : f32 to vector<8x48xf32>
    %595 = arith.addf %594, %591 : vector<8x48xf32>
    %596 = arith.mulf %593, %595 : vector<8x48xf32>
    %c0_283 = arith.constant 0 : index
    %c0_284 = arith.constant 0 : index
    %c528 = arith.constant 528 : index
    %597 = vector.load %arg5[%c0_283, %c0_284, %c528] : memref<1x8x768xf32, #tpu.memory_space<vmem>>, vector<1x8x48xf32>
    %598 = vector.shape_cast %597 : vector<1x8x48xf32> to vector<8x48xf32>
    %599 = vector.shape_cast %596 : vector<8x48xf32> to vector<1x8x48xf32>
    tpu.vector_store %arg5[%c0_283, %c0_284, %c528], %599 {strides = array<i32>} : memref<1x8x768xf32, #tpu.memory_space<vmem>>, vector<1x8x48xf32>,
    %cst_285 = arith.constant 0.000000e+00 : f32
    %600 = vector.broadcast %cst_285 : f32 to vector<8x48xf32>
    %c0_i32_286 = arith.constant 0 : i32
    %c16_i32_287 = arith.constant 16 : i32
    %601 = arith.addi %c0_i32_286, %c16_i32_287 : i32
    %c1_i32_288 = arith.constant 1 : i32
    %602 = scf.for %arg6 = %c0_i32_286 to %601 step %c1_i32_288 iter_args(%arg7 = %600) -> (vector<8x48xf32>)  : i32 {
      %c8_i32 = arith.constant 8 : i32
      %800 = arith.muli %arg6, %c8_i32 : i32
      %801 = tpu.assume_multiple %800, 8 : i32
      %c0_381 = arith.constant 0 : index
      %c12_382 = arith.constant 12 : index
      %802 = arith.index_cast %801 : i32 to index
      %c0_383 = arith.constant 0 : index
      %803 = vector.load %arg2[%c0_381, %c12_382, %802, %c0_383] : memref<1x16x136x384xbf16, #tpu.memory_space<vmem>>, vector<1x1x8x384xbf16>
      %804 = vector.shape_cast %803 : vector<1x1x8x384xbf16> to vector<8x384xbf16>
      %c12_384 = arith.constant 12 : index
      %805 = arith.index_cast %arg6 : i32 to index
      %c0_385 = arith.constant 0 : index
      %c0_386 = arith.constant 0 : index
      %806 = vector.load %arg3[%c12_384, %805, %c0_385, %c0_386] : memref<16x16x384x48xbf16, #tpu.memory_space<vmem>>, vector<1x1x384x48xbf16>
      %807 = vector.shape_cast %806 : vector<1x1x384x48xbf16> to vector<384x48xbf16>
      %cst_387 = arith.constant dense<0.000000e+00> : vector<8x48xf32>
      %808 = tpu.matmul %804, %807, %cst_387 {dimension_numbers = #tpu.dot_dimension_numbers<[1], [0], [0], [1], [0, 0, 1, 1], [], []>} : vector<8x384xbf16>, vector<384x48xbf16>, vector<8x48xf32> -> vector<8x48xf32>
      %809 = arith.addf %arg7, %808 : vector<8x48xf32>
      scf.yield %809 : vector<8x48xf32>
    }
    %c16_i32_289 = arith.constant 16 : i32
    %c12 = arith.constant 12 : index
    %c0_290 = arith.constant 0 : index
    %c0_291 = arith.constant 0 : index
    %603 = vector.load %arg4[%c12, %c0_290, %c0_291] : memref<16x1x48xf32, #tpu.memory_space<vmem>>, vector<1x1x48xf32>
    %604 = vector.shape_cast %603 : vector<1x1x48xf32> to vector<1x48xf32>
    %605 = vector.broadcast %604 : vector<1x48xf32> to vector<8x48xf32>
    %606 = arith.addf %602, %605 : vector<8x48xf32>
    %cst_292 = arith.constant 0.707106769 : f32
    %607 = vector.broadcast %cst_292 : f32 to vector<8x48xf32>
    %608 = arith.mulf %606, %607 : vector<8x48xf32>
    %cst_293 = arith.constant 0.000000e+00 : f32
    %609 = vector.broadcast %cst_293 : f32 to vector<8x48xf32>
    %610 = arith.cmpf oge, %608, %609 : vector<8x48xf32>
    %cst_294 = arith.constant 1.000000e+00 : f32
    %cst_295 = arith.constant -1.000000e+00 : f32
    %611 = vector.broadcast %cst_294 : f32 to vector<8x48xf32>
    %612 = vector.broadcast %cst_295 : f32 to vector<8x48xf32>
    %613 = arith.select %610, %611, %612 : vector<8x48xi1>, vector<8x48xf32>
    %614 = math.absf %608 : vector<8x48xf32>
    %cst_296 = arith.constant 0.327591091 : f32
    %615 = vector.broadcast %cst_296 : f32 to vector<8x48xf32>
    %616 = arith.mulf %615, %614 : vector<8x48xf32>
    %cst_297 = arith.constant 1.000000e+00 : f32
    %617 = vector.broadcast %cst_297 : f32 to vector<8x48xf32>
    %618 = arith.addf %617, %616 : vector<8x48xf32>
    %619 = tpu.reciprocal %618 {approx = true} : vector<8x48xf32> -> vector<8x48xf32>
    %cst_298 = arith.constant 1.06140542 : f32
    %620 = vector.broadcast %cst_298 : f32 to vector<8x48xf32>
    %621 = arith.mulf %620, %619 : vector<8x48xf32>
    %cst_299 = arith.constant -1.45315206 : f32
    %622 = vector.broadcast %cst_299 : f32 to vector<8x48xf32>
    %623 = arith.addf %621, %622 : vector<8x48xf32>
    %624 = arith.mulf %623, %619 : vector<8x48xf32>
    %cst_300 = arith.constant 1.42141378 : f32
    %625 = vector.broadcast %cst_300 : f32 to vector<8x48xf32>
    %626 = arith.addf %624, %625 : vector<8x48xf32>
    %627 = arith.mulf %626, %619 : vector<8x48xf32>
    %cst_301 = arith.constant -0.284496725 : f32
    %628 = vector.broadcast %cst_301 : f32 to vector<8x48xf32>
    %629 = arith.addf %627, %628 : vector<8x48xf32>
    %630 = arith.mulf %629, %619 : vector<8x48xf32>
    %cst_302 = arith.constant 0.254829586 : f32
    %631 = vector.broadcast %cst_302 : f32 to vector<8x48xf32>
    %632 = arith.addf %630, %631 : vector<8x48xf32>
    %633 = arith.mulf %632, %619 : vector<8x48xf32>
    %cst_303 = arith.constant 0.000000e+00 : f32
    %634 = vector.broadcast %cst_303 : f32 to vector<8x48xf32>
    %635 = arith.subf %634, %614 : vector<8x48xf32>
    %636 = arith.mulf %635, %614 : vector<8x48xf32>
    %637 = math.exp %636 : vector<8x48xf32>
    %638 = arith.mulf %633, %637 : vector<8x48xf32>
    %cst_304 = arith.constant 1.000000e+00 : f32
    %639 = vector.broadcast %cst_304 : f32 to vector<8x48xf32>
    %640 = arith.subf %639, %638 : vector<8x48xf32>
    %641 = arith.mulf %613, %640 : vector<8x48xf32>
    %cst_305 = arith.constant 5.000000e-01 : f32
    %642 = vector.broadcast %cst_305 : f32 to vector<8x48xf32>
    %643 = arith.mulf %642, %606 : vector<8x48xf32>
    %cst_306 = arith.constant 1.000000e+00 : f32
    %644 = vector.broadcast %cst_306 : f32 to vector<8x48xf32>
    %645 = arith.addf %644, %641 : vector<8x48xf32>
    %646 = arith.mulf %643, %645 : vector<8x48xf32>
    %c0_307 = arith.constant 0 : index
    %c0_308 = arith.constant 0 : index
    %c576 = arith.constant 576 : index
    %647 = vector.load %arg5[%c0_307, %c0_308, %c576] : memref<1x8x768xf32, #tpu.memory_space<vmem>>, vector<1x8x48xf32>
    %648 = vector.shape_cast %647 : vector<1x8x48xf32> to vector<8x48xf32>
    %649 = vector.shape_cast %646 : vector<8x48xf32> to vector<1x8x48xf32>
    tpu.vector_store %arg5[%c0_307, %c0_308, %c576], %649 {strides = array<i32>} : memref<1x8x768xf32, #tpu.memory_space<vmem>>, vector<1x8x48xf32>,
    %cst_309 = arith.constant 0.000000e+00 : f32
    %650 = vector.broadcast %cst_309 : f32 to vector<8x48xf32>
    %c0_i32_310 = arith.constant 0 : i32
    %c16_i32_311 = arith.constant 16 : i32
    %651 = arith.addi %c0_i32_310, %c16_i32_311 : i32
    %c1_i32_312 = arith.constant 1 : i32
    %652 = scf.for %arg6 = %c0_i32_310 to %651 step %c1_i32_312 iter_args(%arg7 = %650) -> (vector<8x48xf32>)  : i32 {
      %c8_i32 = arith.constant 8 : i32
      %800 = arith.muli %arg6, %c8_i32 : i32
      %801 = tpu.assume_multiple %800, 8 : i32
      %c0_381 = arith.constant 0 : index
      %c13_382 = arith.constant 13 : index
      %802 = arith.index_cast %801 : i32 to index
      %c0_383 = arith.constant 0 : index
      %803 = vector.load %arg2[%c0_381, %c13_382, %802, %c0_383] : memref<1x16x136x384xbf16, #tpu.memory_space<vmem>>, vector<1x1x8x384xbf16>
      %804 = vector.shape_cast %803 : vector<1x1x8x384xbf16> to vector<8x384xbf16>
      %c13_384 = arith.constant 13 : index
      %805 = arith.index_cast %arg6 : i32 to index
      %c0_385 = arith.constant 0 : index
      %c0_386 = arith.constant 0 : index
      %806 = vector.load %arg3[%c13_384, %805, %c0_385, %c0_386] : memref<16x16x384x48xbf16, #tpu.memory_space<vmem>>, vector<1x1x384x48xbf16>
      %807 = vector.shape_cast %806 : vector<1x1x384x48xbf16> to vector<384x48xbf16>
      %cst_387 = arith.constant dense<0.000000e+00> : vector<8x48xf32>
      %808 = tpu.matmul %804, %807, %cst_387 {dimension_numbers = #tpu.dot_dimension_numbers<[1], [0], [0], [1], [0, 0, 1, 1], [], []>} : vector<8x384xbf16>, vector<384x48xbf16>, vector<8x48xf32> -> vector<8x48xf32>
      %809 = arith.addf %arg7, %808 : vector<8x48xf32>
      scf.yield %809 : vector<8x48xf32>
    }
    %c16_i32_313 = arith.constant 16 : i32
    %c13 = arith.constant 13 : index
    %c0_314 = arith.constant 0 : index
    %c0_315 = arith.constant 0 : index
    %653 = vector.load %arg4[%c13, %c0_314, %c0_315] : memref<16x1x48xf32, #tpu.memory_space<vmem>>, vector<1x1x48xf32>
    %654 = vector.shape_cast %653 : vector<1x1x48xf32> to vector<1x48xf32>
    %655 = vector.broadcast %654 : vector<1x48xf32> to vector<8x48xf32>
    %656 = arith.addf %652, %655 : vector<8x48xf32>
    %cst_316 = arith.constant 0.707106769 : f32
    %657 = vector.broadcast %cst_316 : f32 to vector<8x48xf32>
    %658 = arith.mulf %656, %657 : vector<8x48xf32>
    %cst_317 = arith.constant 0.000000e+00 : f32
    %659 = vector.broadcast %cst_317 : f32 to vector<8x48xf32>
    %660 = arith.cmpf oge, %658, %659 : vector<8x48xf32>
    %cst_318 = arith.constant 1.000000e+00 : f32
    %cst_319 = arith.constant -1.000000e+00 : f32
    %661 = vector.broadcast %cst_318 : f32 to vector<8x48xf32>
    %662 = vector.broadcast %cst_319 : f32 to vector<8x48xf32>
    %663 = arith.select %660, %661, %662 : vector<8x48xi1>, vector<8x48xf32>
    %664 = math.absf %658 : vector<8x48xf32>
    %cst_320 = arith.constant 0.327591091 : f32
    %665 = vector.broadcast %cst_320 : f32 to vector<8x48xf32>
    %666 = arith.mulf %665, %664 : vector<8x48xf32>
    %cst_321 = arith.constant 1.000000e+00 : f32
    %667 = vector.broadcast %cst_321 : f32 to vector<8x48xf32>
    %668 = arith.addf %667, %666 : vector<8x48xf32>
    %669 = tpu.reciprocal %668 {approx = true} : vector<8x48xf32> -> vector<8x48xf32>
    %cst_322 = arith.constant 1.06140542 : f32
    %670 = vector.broadcast %cst_322 : f32 to vector<8x48xf32>
    %671 = arith.mulf %670, %669 : vector<8x48xf32>
    %cst_323 = arith.constant -1.45315206 : f32
    %672 = vector.broadcast %cst_323 : f32 to vector<8x48xf32>
    %673 = arith.addf %671, %672 : vector<8x48xf32>
    %674 = arith.mulf %673, %669 : vector<8x48xf32>
    %cst_324 = arith.constant 1.42141378 : f32
    %675 = vector.broadcast %cst_324 : f32 to vector<8x48xf32>
    %676 = arith.addf %674, %675 : vector<8x48xf32>
    %677 = arith.mulf %676, %669 : vector<8x48xf32>
    %cst_325 = arith.constant -0.284496725 : f32
    %678 = vector.broadcast %cst_325 : f32 to vector<8x48xf32>
    %679 = arith.addf %677, %678 : vector<8x48xf32>
    %680 = arith.mulf %679, %669 : vector<8x48xf32>
    %cst_326 = arith.constant 0.254829586 : f32
    %681 = vector.broadcast %cst_326 : f32 to vector<8x48xf32>
    %682 = arith.addf %680, %681 : vector<8x48xf32>
    %683 = arith.mulf %682, %669 : vector<8x48xf32>
    %cst_327 = arith.constant 0.000000e+00 : f32
    %684 = vector.broadcast %cst_327 : f32 to vector<8x48xf32>
    %685 = arith.subf %684, %664 : vector<8x48xf32>
    %686 = arith.mulf %685, %664 : vector<8x48xf32>
    %687 = math.exp %686 : vector<8x48xf32>
    %688 = arith.mulf %683, %687 : vector<8x48xf32>
    %cst_328 = arith.constant 1.000000e+00 : f32
    %689 = vector.broadcast %cst_328 : f32 to vector<8x48xf32>
    %690 = arith.subf %689, %688 : vector<8x48xf32>
    %691 = arith.mulf %663, %690 : vector<8x48xf32>
    %cst_329 = arith.constant 5.000000e-01 : f32
    %692 = vector.broadcast %cst_329 : f32 to vector<8x48xf32>
    %693 = arith.mulf %692, %656 : vector<8x48xf32>
    %cst_330 = arith.constant 1.000000e+00 : f32
    %694 = vector.broadcast %cst_330 : f32 to vector<8x48xf32>
    %695 = arith.addf %694, %691 : vector<8x48xf32>
    %696 = arith.mulf %693, %695 : vector<8x48xf32>
    %c0_331 = arith.constant 0 : index
    %c0_332 = arith.constant 0 : index
    %c624 = arith.constant 624 : index
    %697 = vector.load %arg5[%c0_331, %c0_332, %c624] : memref<1x8x768xf32, #tpu.memory_space<vmem>>, vector<1x8x48xf32>
    %698 = vector.shape_cast %697 : vector<1x8x48xf32> to vector<8x48xf32>
    %699 = vector.shape_cast %696 : vector<8x48xf32> to vector<1x8x48xf32>
    tpu.vector_store %arg5[%c0_331, %c0_332, %c624], %699 {strides = array<i32>} : memref<1x8x768xf32, #tpu.memory_space<vmem>>, vector<1x8x48xf32>,
    %cst_333 = arith.constant 0.000000e+00 : f32
    %700 = vector.broadcast %cst_333 : f32 to vector<8x48xf32>
    %c0_i32_334 = arith.constant 0 : i32
    %c16_i32_335 = arith.constant 16 : i32
    %701 = arith.addi %c0_i32_334, %c16_i32_335 : i32
    %c1_i32_336 = arith.constant 1 : i32
    %702 = scf.for %arg6 = %c0_i32_334 to %701 step %c1_i32_336 iter_args(%arg7 = %700) -> (vector<8x48xf32>)  : i32 {
      %c8_i32 = arith.constant 8 : i32
      %800 = arith.muli %arg6, %c8_i32 : i32
      %801 = tpu.assume_multiple %800, 8 : i32
      %c0_381 = arith.constant 0 : index
      %c14_382 = arith.constant 14 : index
      %802 = arith.index_cast %801 : i32 to index
      %c0_383 = arith.constant 0 : index
      %803 = vector.load %arg2[%c0_381, %c14_382, %802, %c0_383] : memref<1x16x136x384xbf16, #tpu.memory_space<vmem>>, vector<1x1x8x384xbf16>
      %804 = vector.shape_cast %803 : vector<1x1x8x384xbf16> to vector<8x384xbf16>
      %c14_384 = arith.constant 14 : index
      %805 = arith.index_cast %arg6 : i32 to index
      %c0_385 = arith.constant 0 : index
      %c0_386 = arith.constant 0 : index
      %806 = vector.load %arg3[%c14_384, %805, %c0_385, %c0_386] : memref<16x16x384x48xbf16, #tpu.memory_space<vmem>>, vector<1x1x384x48xbf16>
      %807 = vector.shape_cast %806 : vector<1x1x384x48xbf16> to vector<384x48xbf16>
      %cst_387 = arith.constant dense<0.000000e+00> : vector<8x48xf32>
      %808 = tpu.matmul %804, %807, %cst_387 {dimension_numbers = #tpu.dot_dimension_numbers<[1], [0], [0], [1], [0, 0, 1, 1], [], []>} : vector<8x384xbf16>, vector<384x48xbf16>, vector<8x48xf32> -> vector<8x48xf32>
      %809 = arith.addf %arg7, %808 : vector<8x48xf32>
      scf.yield %809 : vector<8x48xf32>
    }
    %c16_i32_337 = arith.constant 16 : i32
    %c14 = arith.constant 14 : index
    %c0_338 = arith.constant 0 : index
    %c0_339 = arith.constant 0 : index
    %703 = vector.load %arg4[%c14, %c0_338, %c0_339] : memref<16x1x48xf32, #tpu.memory_space<vmem>>, vector<1x1x48xf32>
    %704 = vector.shape_cast %703 : vector<1x1x48xf32> to vector<1x48xf32>
    %705 = vector.broadcast %704 : vector<1x48xf32> to vector<8x48xf32>
    %706 = arith.addf %702, %705 : vector<8x48xf32>
    %cst_340 = arith.constant 0.707106769 : f32
    %707 = vector.broadcast %cst_340 : f32 to vector<8x48xf32>
    %708 = arith.mulf %706, %707 : vector<8x48xf32>
    %cst_341 = arith.constant 0.000000e+00 : f32
    %709 = vector.broadcast %cst_341 : f32 to vector<8x48xf32>
    %710 = arith.cmpf oge, %708, %709 : vector<8x48xf32>
    %cst_342 = arith.constant 1.000000e+00 : f32
    %cst_343 = arith.constant -1.000000e+00 : f32
    %711 = vector.broadcast %cst_342 : f32 to vector<8x48xf32>
    %712 = vector.broadcast %cst_343 : f32 to vector<8x48xf32>
    %713 = arith.select %710, %711, %712 : vector<8x48xi1>, vector<8x48xf32>
    %714 = math.absf %708 : vector<8x48xf32>
    %cst_344 = arith.constant 0.327591091 : f32
    %715 = vector.broadcast %cst_344 : f32 to vector<8x48xf32>
    %716 = arith.mulf %715, %714 : vector<8x48xf32>
    %cst_345 = arith.constant 1.000000e+00 : f32
    %717 = vector.broadcast %cst_345 : f32 to vector<8x48xf32>
    %718 = arith.addf %717, %716 : vector<8x48xf32>
    %719 = tpu.reciprocal %718 {approx = true} : vector<8x48xf32> -> vector<8x48xf32>
    %cst_346 = arith.constant 1.06140542 : f32
    %720 = vector.broadcast %cst_346 : f32 to vector<8x48xf32>
    %721 = arith.mulf %720, %719 : vector<8x48xf32>
    %cst_347 = arith.constant -1.45315206 : f32
    %722 = vector.broadcast %cst_347 : f32 to vector<8x48xf32>
    %723 = arith.addf %721, %722 : vector<8x48xf32>
    %724 = arith.mulf %723, %719 : vector<8x48xf32>
    %cst_348 = arith.constant 1.42141378 : f32
    %725 = vector.broadcast %cst_348 : f32 to vector<8x48xf32>
    %726 = arith.addf %724, %725 : vector<8x48xf32>
    %727 = arith.mulf %726, %719 : vector<8x48xf32>
    %cst_349 = arith.constant -0.284496725 : f32
    %728 = vector.broadcast %cst_349 : f32 to vector<8x48xf32>
    %729 = arith.addf %727, %728 : vector<8x48xf32>
    %730 = arith.mulf %729, %719 : vector<8x48xf32>
    %cst_350 = arith.constant 0.254829586 : f32
    %731 = vector.broadcast %cst_350 : f32 to vector<8x48xf32>
    %732 = arith.addf %730, %731 : vector<8x48xf32>
    %733 = arith.mulf %732, %719 : vector<8x48xf32>
    %cst_351 = arith.constant 0.000000e+00 : f32
    %734 = vector.broadcast %cst_351 : f32 to vector<8x48xf32>
    %735 = arith.subf %734, %714 : vector<8x48xf32>
    %736 = arith.mulf %735, %714 : vector<8x48xf32>
    %737 = math.exp %736 : vector<8x48xf32>
    %738 = arith.mulf %733, %737 : vector<8x48xf32>
    %cst_352 = arith.constant 1.000000e+00 : f32
    %739 = vector.broadcast %cst_352 : f32 to vector<8x48xf32>
    %740 = arith.subf %739, %738 : vector<8x48xf32>
    %741 = arith.mulf %713, %740 : vector<8x48xf32>
    %cst_353 = arith.constant 5.000000e-01 : f32
    %742 = vector.broadcast %cst_353 : f32 to vector<8x48xf32>
    %743 = arith.mulf %742, %706 : vector<8x48xf32>
    %cst_354 = arith.constant 1.000000e+00 : f32
    %744 = vector.broadcast %cst_354 : f32 to vector<8x48xf32>
    %745 = arith.addf %744, %741 : vector<8x48xf32>
    %746 = arith.mulf %743, %745 : vector<8x48xf32>
    %c0_355 = arith.constant 0 : index
    %c0_356 = arith.constant 0 : index
    %c672 = arith.constant 672 : index
    %747 = vector.load %arg5[%c0_355, %c0_356, %c672] : memref<1x8x768xf32, #tpu.memory_space<vmem>>, vector<1x8x48xf32>
    %748 = vector.shape_cast %747 : vector<1x8x48xf32> to vector<8x48xf32>
    %749 = vector.shape_cast %746 : vector<8x48xf32> to vector<1x8x48xf32>
    tpu.vector_store %arg5[%c0_355, %c0_356, %c672], %749 {strides = array<i32>} : memref<1x8x768xf32, #tpu.memory_space<vmem>>, vector<1x8x48xf32>,
    %cst_357 = arith.constant 0.000000e+00 : f32
    %750 = vector.broadcast %cst_357 : f32 to vector<8x48xf32>
    %c0_i32_358 = arith.constant 0 : i32
    %c16_i32_359 = arith.constant 16 : i32
    %751 = arith.addi %c0_i32_358, %c16_i32_359 : i32
    %c1_i32_360 = arith.constant 1 : i32
    %752 = scf.for %arg6 = %c0_i32_358 to %751 step %c1_i32_360 iter_args(%arg7 = %750) -> (vector<8x48xf32>)  : i32 {
      %c8_i32 = arith.constant 8 : i32
      %800 = arith.muli %arg6, %c8_i32 : i32
      %801 = tpu.assume_multiple %800, 8 : i32
      %c0_381 = arith.constant 0 : index
      %c15_382 = arith.constant 15 : index
      %802 = arith.index_cast %801 : i32 to index
      %c0_383 = arith.constant 0 : index
      %803 = vector.load %arg2[%c0_381, %c15_382, %802, %c0_383] : memref<1x16x136x384xbf16, #tpu.memory_space<vmem>>, vector<1x1x8x384xbf16>
      %804 = vector.shape_cast %803 : vector<1x1x8x384xbf16> to vector<8x384xbf16>
      %c15_384 = arith.constant 15 : index
      %805 = arith.index_cast %arg6 : i32 to index
      %c0_385 = arith.constant 0 : index
      %c0_386 = arith.constant 0 : index
      %806 = vector.load %arg3[%c15_384, %805, %c0_385, %c0_386] : memref<16x16x384x48xbf16, #tpu.memory_space<vmem>>, vector<1x1x384x48xbf16>
      %807 = vector.shape_cast %806 : vector<1x1x384x48xbf16> to vector<384x48xbf16>
      %cst_387 = arith.constant dense<0.000000e+00> : vector<8x48xf32>
      %808 = tpu.matmul %804, %807, %cst_387 {dimension_numbers = #tpu.dot_dimension_numbers<[1], [0], [0], [1], [0, 0, 1, 1], [], []>} : vector<8x384xbf16>, vector<384x48xbf16>, vector<8x48xf32> -> vector<8x48xf32>
      %809 = arith.addf %arg7, %808 : vector<8x48xf32>
      scf.yield %809 : vector<8x48xf32>
    }
    %c16_i32_361 = arith.constant 16 : i32
    %c15 = arith.constant 15 : index
    %c0_362 = arith.constant 0 : index
    %c0_363 = arith.constant 0 : index
    %753 = vector.load %arg4[%c15, %c0_362, %c0_363] : memref<16x1x48xf32, #tpu.memory_space<vmem>>, vector<1x1x48xf32>
    %754 = vector.shape_cast %753 : vector<1x1x48xf32> to vector<1x48xf32>
    %755 = vector.broadcast %754 : vector<1x48xf32> to vector<8x48xf32>
    %756 = arith.addf %752, %755 : vector<8x48xf32>
    %cst_364 = arith.constant 0.707106769 : f32
    %757 = vector.broadcast %cst_364 : f32 to vector<8x48xf32>
    %758 = arith.mulf %756, %757 : vector<8x48xf32>
    %cst_365 = arith.constant 0.000000e+00 : f32
    %759 = vector.broadcast %cst_365 : f32 to vector<8x48xf32>
    %760 = arith.cmpf oge, %758, %759 : vector<8x48xf32>
    %cst_366 = arith.constant 1.000000e+00 : f32
    %cst_367 = arith.constant -1.000000e+00 : f32
    %761 = vector.broadcast %cst_366 : f32 to vector<8x48xf32>
    %762 = vector.broadcast %cst_367 : f32 to vector<8x48xf32>
    %763 = arith.select %760, %761, %762 : vector<8x48xi1>, vector<8x48xf32>
    %764 = math.absf %758 : vector<8x48xf32>
    %cst_368 = arith.constant 0.327591091 : f32
    %765 = vector.broadcast %cst_368 : f32 to vector<8x48xf32>
    %766 = arith.mulf %765, %764 : vector<8x48xf32>
    %cst_369 = arith.constant 1.000000e+00 : f32
    %767 = vector.broadcast %cst_369 : f32 to vector<8x48xf32>
    %768 = arith.addf %767, %766 : vector<8x48xf32>
    %769 = tpu.reciprocal %768 {approx = true} : vector<8x48xf32> -> vector<8x48xf32>
    %cst_370 = arith.constant 1.06140542 : f32
    %770 = vector.broadcast %cst_370 : f32 to vector<8x48xf32>
    %771 = arith.mulf %770, %769 : vector<8x48xf32>
    %cst_371 = arith.constant -1.45315206 : f32
    %772 = vector.broadcast %cst_371 : f32 to vector<8x48xf32>
    %773 = arith.addf %771, %772 : vector<8x48xf32>
    %774 = arith.mulf %773, %769 : vector<8x48xf32>
    %cst_372 = arith.constant 1.42141378 : f32
    %775 = vector.broadcast %cst_372 : f32 to vector<8x48xf32>
    %776 = arith.addf %774, %775 : vector<8x48xf32>
    %777 = arith.mulf %776, %769 : vector<8x48xf32>
    %cst_373 = arith.constant -0.284496725 : f32
    %778 = vector.broadcast %cst_373 : f32 to vector<8x48xf32>
    %779 = arith.addf %777, %778 : vector<8x48xf32>
    %780 = arith.mulf %779, %769 : vector<8x48xf32>
    %cst_374 = arith.constant 0.254829586 : f32
    %781 = vector.broadcast %cst_374 : f32 to vector<8x48xf32>
    %782 = arith.addf %780, %781 : vector<8x48xf32>
    %783 = arith.mulf %782, %769 : vector<8x48xf32>
    %cst_375 = arith.constant 0.000000e+00 : f32
    %784 = vector.broadcast %cst_375 : f32 to vector<8x48xf32>
    %785 = arith.subf %784, %764 : vector<8x48xf32>
    %786 = arith.mulf %785, %764 : vector<8x48xf32>
    %787 = math.exp %786 : vector<8x48xf32>
    %788 = arith.mulf %783, %787 : vector<8x48xf32>
    %cst_376 = arith.constant 1.000000e+00 : f32
    %789 = vector.broadcast %cst_376 : f32 to vector<8x48xf32>
    %790 = arith.subf %789, %788 : vector<8x48xf32>
    %791 = arith.mulf %763, %790 : vector<8x48xf32>
    %cst_377 = arith.constant 5.000000e-01 : f32
    %792 = vector.broadcast %cst_377 : f32 to vector<8x48xf32>
    %793 = arith.mulf %792, %756 : vector<8x48xf32>
    %cst_378 = arith.constant 1.000000e+00 : f32
    %794 = vector.broadcast %cst_378 : f32 to vector<8x48xf32>
    %795 = arith.addf %794, %791 : vector<8x48xf32>
    %796 = arith.mulf %793, %795 : vector<8x48xf32>
    %c0_379 = arith.constant 0 : index
    %c0_380 = arith.constant 0 : index
    %c720 = arith.constant 720 : index
    %797 = vector.load %arg5[%c0_379, %c0_380, %c720] : memref<1x8x768xf32, #tpu.memory_space<vmem>>, vector<1x8x48xf32>
    %798 = vector.shape_cast %797 : vector<1x8x48xf32> to vector<8x48xf32>
    %799 = vector.shape_cast %796 : vector<8x48xf32> to vector<1x8x48xf32>
    tpu.vector_store %arg5[%c0_379, %c0_380, %c720], %799 {strides = array<i32>} : memref<1x8x768xf32, #tpu.memory_space<vmem>>, vector<1x8x48xf32>,
    return
  }
  func.func @transform_0(%arg0: i32, %arg1: i32) -> (i32, i32, i32, i32) {
    %c0_i32 = arith.constant 0 : i32
    %c0_i32_0 = arith.constant 0 : i32
    %c0_i32_1 = arith.constant 0 : i32
    %c0_i32_2 = arith.constant 0 : i32
    return %arg0, %c0_i32, %c0_i32_0, %c0_i32_1 : i32, i32, i32, i32
  }
  func.func @transform_1(%arg0: i32, %arg1: i32) -> (i32, i32, i32, i32) {
    %c0_i32 = arith.constant 0 : i32
    %c0_i32_0 = arith.constant 0 : i32
    %c0_i32_1 = arith.constant 0 : i32
    %c0_i32_2 = arith.constant 0 : i32
    %c0_i32_3 = arith.constant 0 : i32
    return %c0_i32, %c0_i32_0, %c0_i32_1, %c0_i32_2 : i32, i32, i32, i32
  }
  func.func @transform_2(%arg0: i32, %arg1: i32) -> (i32, i32, i32) {
    %c0_i32 = arith.constant 0 : i32
    %c0_i32_0 = arith.constant 0 : i32
    %c0_i32_1 = arith.constant 0 : i32
    %c0_i32_2 = arith.constant 0 : i32
    return %c0_i32, %c0_i32_0, %c0_i32_1 : i32, i32, i32
  }
  func.func @transform_3(%arg0: i32, %arg1: i32) -> (i32, i32, i32) {
    %c0_i32 = arith.constant 0 : i32
    %c0_i32_0 = arith.constant 0 : i32
    return %arg0, %arg1, %c0_i32 : i32, i32, i32
  }
}

</mosaic_0001>

<llo_original>
// kernel: pos_emb_forward.1
$region0: #{pos_emb_forward.1}
  #allocation0 [shape = 'u32[]', space=smem, size = 0x4, offset = 0x4, fixed_abs, tag = 'smem constant byte address 0x4 - core index']
  #allocation1 [shape = 'u32[144,128]{1,0:T(1,128)}', space=vmem, size = 0x12000, scoped, tag = 'internal scratch']
  %s0 = inlined_call_operand.vmem [shape: bf16[2,16,136,384], index: 0, kind: input, shape index: {}]
  %s1 = inlined_call_operand.vmem [shape: bf16[16,16,384,48], index: 1, kind: input, shape index: {}]
  %s2 = inlined_call_operand.vmem [shape: f32[16,1,48], index: 2, kind: input, shape index: {}]
  %s3 = inlined_call_operand.hbm [shape: f32[2,8,768], index: 3, kind: output, shape index: {}]
  %s4 = sld [smem:[#allocation0]]
  $region157: #{pos_emb_forward.1} parent=0
    _
  %s6 = ssub.s32 1, %s4
  %s7 = scalar_select 0, %s6, %s4
  $region1: #{pos_emb_forward.1} parent=0
    #allocation2 [shape = 'u8[49152]{0}', space=vmem, size = 0xc000, scoped, tag = 'output window, operand 0']
    #allocation3 [shape = 's32[2]{0}', space=sflag, size = 0x8, scoped, tag = 'scoped memory for pos_emb_forward.1']
    %8 = vsyncpa [#allocation3], 0
    %s9 = scalar_lea.sflag [#allocation3], 1
    %10 = vsyncpa %s9, 0
    loop: start=0, step=1, limit=4
    $region2: #{pos_emb_forward.1} parent=1 // loop_pre_header
      _
    $region3: #{pos_emb_forward.1} parent=1 // loop_header
      %s12 = sphi 0, %s16
      %p13 = scmp.ge.s32.totalorder %s12, 4
      %s19 = sphi 0, %s31
      %s20 = sphi 0, %s27
      %s21 = sphi 0, %s19
      %s22 = sphi 0, %s20
      %s23 = sphi 0, %s21
      %s24 = sphi 0, %s22
      %s34 = sphi 0, %s36
      %s37 = sphi 0, %s34
      %s38 = sphi 0, %s37
      %s54 = sphi 0, %s38
      %s58 = sphi 0, %s58
      %s60 = sphi 0, %s58
      %s61 = sphi 0, %s60
      %s75 = sphi 0, %s61
      %s79 = sphi 0, %s79
      %s81 = sphi 0, %s79
      %s82 = sphi 0, %s81
      %s96 = sphi 0, %s82
      %s104 = sphi 0, %s106
      %s107 = sphi 0, %s104
      %s108 = sphi 0, %s107
      %s124 = sphi 0, %s108
    $region4: #{pos_emb_forward.1} parent=1 // loop_header_branch
      %15 = sbr.rel (%p13) target = $region8
    $region5: #{pos_emb_forward.1} parent=1 // loop_body
      %s17 = ssub.s32 %s12, 1
      %s18 = ssub.s32 %s12, 2
      %s25 = sadd.s32 1, %s20
      %p26 = scmp.ge.s32.totalorder %s25, 1
      %s27 = scalar_select %p26, 0, %s25
      %s28 = sadd.s32 1, %s19
      %s29 = scalar_select %p26, %s28, %s19
      %p30 = scmp.ge.s32.totalorder %s29, 2
      %s31 = scalar_select %p30, 0, %s29
      %s32 = ssub.s32 %s19, %s31
      %p33 = scmp.eq.s32.totalorder %s32, 0
      %s35 = sadd.s32 %s34, 1
      %s36 = scalar_select %p33, %s34, %s35
      %p39 = pneg %p33
      %p40 = scmp.eq.s32.totalorder %s12, 1
      %p41 = por %p39, %p40
      %p42 = scmp.ne.s32.totalorder %s34, %s37
      %p43 = scmp.eq.s32.totalorder %s12, 0
      %p44 = por %p42, %p43
      %p45 = scmp.ne.s32.totalorder %s34, %s37
      %p46 = scmp.eq.s32.totalorder %s17, 1
      %p47 = por %p45, %p46
      %p48 = scmp.ne.s32.totalorder %s37, %s38
      %p49 = scmp.eq.s32.totalorder %s17, 0
      %p50 = por %p48, %p49
      %p51 = scmp.ne.s32.totalorder %s37, %s38
      %p52 = scmp.eq.s32.totalorder %s18, 1
      %p53 = por %p51, %p52
      %p55 = scmp.ne.s32.totalorder %s38, %s54
      %p56 = scmp.eq.s32.totalorder %s18, 0
      %p57 = por %p55, %p56
      %s59 = sadd.s32 %s58, 1
      %p62 = scmp.eq.s32.totalorder %s12, 1
      %p63 = scmp.ne.s32.totalorder %s58, %s60
      %p64 = scmp.eq.s32.totalorder %s12, 0
      %p65 = por %p63, %p64
      %p66 = scmp.ne.s32.totalorder %s58, %s60
      %p67 = scmp.eq.s32.totalorder %s17, 1
      %p68 = por %p66, %p67
      %p69 = scmp.ne.s32.totalorder %s60, %s61
      %p70 = scmp.eq.s32.totalorder %s17, 0
      %p71 = por %p69, %p70
      %p72 = scmp.ne.s32.totalorder %s60, %s61
      %p73 = scmp.eq.s32.totalorder %s18, 1
      %p74 = por %p72, %p73
      %p76 = scmp.ne.s32.totalorder %s61, %s75
      %p77 = scmp.eq.s32.totalorder %s18, 0
      %p78 = por %p76, %p77
      %s80 = sadd.s32 %s79, 1
      %p83 = scmp.eq.s32.totalorder %s12, 1
      %p84 = scmp.ne.s32.totalorder %s79, %s81
      %p85 = scmp.eq.s32.totalorder %s12, 0
      %p86 = por %p84, %p85
      %p87 = scmp.ne.s32.totalorder %s79, %s81
      %p88 = scmp.eq.s32.totalorder %s17, 1
      %p89 = por %p87, %p88
      %p90 = scmp.ne.s32.totalorder %s81, %s82
      %p91 = scmp.eq.s32.totalorder %s17, 0
      %p92 = por %p90, %p91
      %p93 = scmp.ne.s32.totalorder %s81, %s82
      %p94 = scmp.eq.s32.totalorder %s18, 1
      %p95 = por %p93, %p94
      %p97 = scmp.ne.s32.totalorder %s82, %s96
      %p98 = scmp.eq.s32.totalorder %s18, 0
      %p99 = por %p97, %p98
      %s100 = ssub.s32 %s19, %s31
      %s101 = ssub.s32 %s20, %s27
      %s102 = sor.u32 %s100, %s101
      %p103 = scmp.eq.s32.totalorder %s102, 0
      %s105 = sadd.s32 %s104, 1
      %s106 = scalar_select %p103, %s104, %s105
      %p109 = pneg %p103
      %p110 = scmp.eq.s32.totalorder %s12, 1
      %p111 = por %p109, %p110
      %p112 = scmp.ne.s32.totalorder %s104, %s107
      %p113 = scmp.eq.s32.totalorder %s12, 0
      %p114 = por %p112, %p113
      %p115 = scmp.ne.s32.totalorder %s104, %s107
      %p116 = scmp.eq.s32.totalorder %s17, 1
      %p117 = por %p115, %p116
      %p118 = scmp.ne.s32.totalorder %s107, %s108
      %p119 = scmp.eq.s32.totalorder %s17, 0
      %p120 = por %p118, %p119
      %p121 = scmp.ne.s32.totalorder %s107, %s108
      %p122 = scmp.eq.s32.totalorder %s18, 1
      %p123 = por %p121, %p122
      %p125 = scmp.ne.s32.totalorder %s108, %s124
      %p126 = scmp.eq.s32.totalorder %s18, 0
      %p127 = por %p125, %p126
      %p128 = scmp.le.s32.totalorder 1, %s12
      %p129 = scmp.lt.s32.totalorder %s12, 3
      %p130 = pnand %p128, %p129
      %p131 = pneg %p130
      // Predicated region
      $region9: #{pos_emb_forward.1} parent=5 // pred_check
        _
      $region10: #{pos_emb_forward.1} parent=5 // pred_check_branch
        %133 = sbr.rel (%p130) target = $region12
      $region11: #{pos_emb_forward.1} parent=5 // pred_region
        %s134 = ssub.s32 %s12, 1
        // Predicated region
        $region13: #{pos_emb_forward.1} parent=11 // pred_check
          %p135 = pneg %p71
        $region14: #{pos_emb_forward.1} parent=11 // pred_check_branch
          %137 = sbr.rel (%p135) target = $region16
        $region15: #{pos_emb_forward.1} parent=11 // pred_region
          _
        $region16: #{pos_emb_forward.1} parent=11 // pred_fallthru
          _
        // Predicated region
        $region17: #{pos_emb_forward.1} parent=11 // pred_check
          %p138 = pneg %p92
        $region18: #{pos_emb_forward.1} parent=11 // pred_check_branch
          %140 = sbr.rel (%p138) target = $region20
        $region19: #{pos_emb_forward.1} parent=11 // pred_region
          _
        $region20: #{pos_emb_forward.1} parent=11 // pred_fallthru
          _
      $region12: #{pos_emb_forward.1} parent=5 // pred_fallthru
        _
      %p141 = scmp.lt.s32.totalorder %s12, 2
      // Predicated region
      $region21: #{pos_emb_forward.1} parent=5 // pred_check
        %p142 = pneg %p141
      $region22: #{pos_emb_forward.1} parent=5 // pred_check_branch
        %144 = sbr.rel (%p142) target = $region24
      $region23: #{pos_emb_forward.1} parent=5 // pred_region
        // Predicated region
        $region25: #{pos_emb_forward.1} parent=23 // pred_check
          %p145 = pneg %p44
        $region26: #{pos_emb_forward.1} parent=23 // pred_check_branch
          %147 = sbr.rel (%p145) target = $region28
        $region27: #{pos_emb_forward.1} parent=23 // pred_region
          %p148 = scmp.lt.s32.totalorder %s19, 1
          %s149 = scalar_select %p148, %s19, 1
          %s150 = smul.addr %s149, 816
          %s151 = smul.addr %s150, 4
          %s152 = scalar_lea.vmem %s0, %s151
        $region28: #{pos_emb_forward.1} parent=23 // pred_fallthru
          _
      $region24: #{pos_emb_forward.1} parent=5 // pred_fallthru
        _
      %p153 = scmp.le.s32.totalorder 1, %s12
      %p154 = scmp.lt.s32.totalorder %s12, 3
      %p155 = pnand %p153, %p154
      %p156 = pneg %p155
      // Predicated region
      $region29: #{pos_emb_forward.1} parent=5 // pred_check
        _
      $region30: #{pos_emb_forward.1} parent=5 // pred_check_branch
        %158 = sbr.rel (%p155) target = $region32
      $region31: #{pos_emb_forward.1} parent=5 // pred_region
        %s159 = ssub.s32 %s12, 1
        %p160 = scmp.lt.s32.totalorder %s21, 1
        %s161 = scalar_select %p160, %s21, 1
        %s162 = smul.addr %s161, 816
        %s163 = smul.addr %s162, 4
        %s164 = scalar_lea.vmem %s0, %s163
        %p165 = pneg %p50
        %p166 = pneg %p47
        %p167 = pneg %p71
        %p168 = pneg %p68
        %p169 = pneg %p92
        %p170 = pneg %p89
        %p171 = pneg %p120
        %p172 = pneg %p117
        %s173 = sand.u32 %s107, 1
        %s174 = scalar_lea.sflag [#allocation3], %s173
        %s175 = sand.u32 %s107, 1
        %s176 = smul.addr %s175, 48
        %s177 = scalar_lea.vmem [#allocation2], %s176
        %p178 = scmp.lt.s32.totalorder %s21, 1
        %s179 = scalar_select %p178, %s21, 1
        %s180 = smul.addr %s179, 816
        %s181 = smul.addr %s180, 4
        %s182 = scalar_lea.vmem %s0, %s181
        loop: start=0, step=1, limit=16
        $region33: #{pos_emb_forward.1} parent=31 // loop_pre_header
          _
        $region34: #{pos_emb_forward.1} parent=31 // loop_header
          %s185 = sphi 0, %s189
          %p186 = scmp.ge.s32.totalorder %s185, 16
          %v190 = vphi 0.0, %v485
        $region35: #{pos_emb_forward.1} parent=31 // loop_header_branch
          %188 = sbr.rel (%p186) target = $region39
        $region36: #{pos_emb_forward.1} parent=31 // loop_body
          %s191 = smul.u32 %s185, 8
          %s192 = sshra.s32 %s191, 3
          %s193 = sand.u32 %s191, 7
          %s194 = smul.u32 %s192, 3
          %s195 = smul.addr %s194, 4
          %s196 = scalar_lea.vmem %s182, %s195
          %v197 = vld [vmem:[%s196] sm:$0xff]
          %v198 = vld [vmem:[%s196 + $0x8] sm:$0xf]
          %s199 = smul.u32 %s185, 48
          %s200 = smul.addr %s199, 4
          %s201 = scalar_lea.vmem %s1, %s200
          %v202 = vld [vmem:[%s201] sm:$0xf]
          %v203 = vld [vmem:[%s201 + $0x4] sm:$0xf]
          %v204 = vld [vmem:[%s201 + $0x8] sm:$0xf]
          %v205 = vld [vmem:[%s201 + $0xc] sm:$0xf]
          %v206 = vld [vmem:[%s201 + $0x10] sm:$0xf]
          %v207 = vld [vmem:[%s201 + $0x14] sm:$0xf]
          %v208 = vld [vmem:[%s201 + $0x18] sm:$0xf]
          %v209 = vld [vmem:[%s201 + $0x1c] sm:$0xf]
          %v210 = vld [vmem:[%s201 + $0x20] sm:$0xf]
          %v211 = vld [vmem:[%s201 + $0x24] sm:$0xf]
          %v212 = vld [vmem:[%s201 + $0x28] sm:$0xf]
          %v213 = vld [vmem:[%s201 + $0x2c] sm:$0xf]
          %v214 = vld [vmem:[%s201 + $0x30] sm:$0xf]
          %v215 = vld [vmem:[%s201 + $0x34] sm:$0xf]
          %v216 = vld [vmem:[%s201 + $0x38] sm:$0xf]
          %v217 = vld [vmem:[%s201 + $0x3c] sm:$0xf]
          %v218 = vld [vmem:[%s201 + $0x40] sm:$0xf]
          %v219 = vld [vmem:[%s201 + $0x44] sm:$0xf]
          %v220 = vld [vmem:[%s201 + $0x48] sm:$0xf]
          %v221 = vld [vmem:[%s201 + $0x4c] sm:$0xf]
          %v222 = vld [vmem:[%s201 + $0x50] sm:$0xf]
          %v223 = vld [vmem:[%s201 + $0x54] sm:$0xf]
          %v224 = vld [vmem:[%s201 + $0x58] sm:$0xf]
          %v225 = vld [vmem:[%s201 + $0x5c] sm:$0xf]
          %v226 = vld [vmem:[%s201 + $0x60] sm:$0xf]
          %v227 = vld [vmem:[%s201 + $0x64] sm:$0xf]
          %v228 = vld [vmem:[%s201 + $0x68] sm:$0xf]
          %v229 = vld [vmem:[%s201 + $0x6c] sm:$0xf]
          %v230 = vld [vmem:[%s201 + $0x70] sm:$0xf]
          %v231 = vld [vmem:[%s201 + $0x74] sm:$0xf]
          %v232 = vld [vmem:[%s201 + $0x78] sm:$0xf]
          %v233 = vld [vmem:[%s201 + $0x7c] sm:$0xf]
          %v234 = vld [vmem:[%s201 + $0x80] sm:$0xf]
          %v235 = vld [vmem:[%s201 + $0x84] sm:$0xf]
          %v236 = vld [vmem:[%s201 + $0x88] sm:$0xf]
          %v237 = vld [vmem:[%s201 + $0x8c] sm:$0xf]
          %v238 = vld [vmem:[%s201 + $0x90] sm:$0xf]
          %v239 = vld [vmem:[%s201 + $0x94] sm:$0xf]
          %v240 = vld [vmem:[%s201 + $0x98] sm:$0xf]
          %v241 = vld [vmem:[%s201 + $0x9c] sm:$0xf]
          %v242 = vld [vmem:[%s201 + $0xa0] sm:$0xf]
          %v243 = vld [vmem:[%s201 + $0xa4] sm:$0xf]
          %v244 = vld [vmem:[%s201 + $0xa8] sm:$0xf]
          %v245 = vld [vmem:[%s201 + $0xac] sm:$0xf]
          %v246 = vld [vmem:[%s201 + $0xb0] sm:$0xf]
          %v247 = vld [vmem:[%s201 + $0xb4] sm:$0xf]
          %v248 = vld [vmem:[%s201 + $0xb8] sm:$0xf]
          %v249 = vld [vmem:[%s201 + $0xbc] sm:$0xf]
          %v252 = vunpack.c.l.b16 %v197
          %v253 = vunpack.c.h.b16 %v197
          %v254 = vunpack.c.l.b16 %v198
          %v255 = vpack.c.b16 %v252, %v252
          %v256 = vpack.c.b16 %v253, %v253
          %v257 = vpack.c.b16 %v254, %v254
          %v309 = vunpack.c.l.b16 %v202
          %v310 = vunpack.c.l.b16 %v203
          %v311 = vunpack.c.l.b16 %v204
          %v312 = vunpack.c.l.b16 %v205
          %v313 = vunpack.c.l.b16 %v206
          %v314 = vunpack.c.l.b16 %v207
          %v315 = vunpack.c.l.b16 %v208
          %v316 = vunpack.c.l.b16 %v209
          %v317 = vunpack.c.l.b16 %v210
          %v318 = vunpack.c.l.b16 %v211
          %v319 = vunpack.c.l.b16 %v212
          %v320 = vunpack.c.l.b16 %v213
          %v321 = vunpack.c.l.b16 %v214
          %v322 = vunpack.c.l.b16 %v215
          %v323 = vunpack.c.l.b16 %v216
          %v324 = vunpack.c.l.b16 %v217
          %v325 = vunpack.c.l.b16 %v218
          %v326 = vunpack.c.l.b16 %v219
          %v327 = vunpack.c.l.b16 %v220
          %v328 = vunpack.c.l.b16 %v221
          %v329 = vunpack.c.l.b16 %v222
          %v330 = vunpack.c.l.b16 %v223
          %v331 = vunpack.c.l.b16 %v224
          %v332 = vunpack.c.l.b16 %v225
          %v333 = vunpack.c.l.b16 %v226
          %v334 = vunpack.c.l.b16 %v227
          %v335 = vunpack.c.l.b16 %v228
          %v336 = vunpack.c.l.b16 %v229
          %v337 = vunpack.c.l.b16 %v230
          %v338 = vunpack.c.l.b16 %v231
          %v339 = vunpack.c.l.b16 %v232
          %v340 = vunpack.c.l.b16 %v233
          %v341 = vunpack.c.l.b16 %v234
          %v342 = vunpack.c.l.b16 %v235
          %v343 = vunpack.c.l.b16 %v236
          %v344 = vunpack.c.l.b16 %v237
          %v345 = vunpack.c.l.b16 %v238
          %v346 = vunpack.c.l.b16 %v239
          %v347 = vunpack.c.l.b16 %v240
          %v348 = vunpack.c.l.b16 %v241
          %v349 = vunpack.c.l.b16 %v242
          %v350 = vunpack.c.l.b16 %v243
          %v351 = vunpack.c.l.b16 %v244
          %v352 = vunpack.c.l.b16 %v245
          %v353 = vunpack.c.l.b16 %v246
          %v354 = vunpack.c.l.b16 %v247
          %v355 = vunpack.c.l.b16 %v248
          %v356 = vunpack.c.l.b16 %v249
          %v357 = vpack.c.b16 %v310, %v309
          %v358 = vpack.c.b16 %v312, %v311
          %v359 = vpack.c.b16 %v314, %v313
          %v360 = vpack.c.b16 %v316, %v315
          %v361 = vpack.c.b16 %v318, %v317
          %v362 = vpack.c.b16 %v320, %v319
          %v363 = vpack.c.b16 %v322, %v321
          %v364 = vpack.c.b16 %v324, %v323
          %v365 = vpack.c.b16 %v326, %v325
          %v366 = vpack.c.b16 %v328, %v327
          %v367 = vpack.c.b16 %v330, %v329
          %v368 = vpack.c.b16 %v332, %v331
          %v369 = vpack.c.b16 %v334, %v333
          %v370 = vpack.c.b16 %v336, %v335
          %v371 = vpack.c.b16 %v338, %v337
          %v372 = vpack.c.b16 %v340, %v339
          %v373 = vpack.c.b16 %v342, %v341
          %v374 = vpack.c.b16 %v344, %v343
          %v375 = vpack.c.b16 %v346, %v345
          %v376 = vpack.c.b16 %v348, %v347
          %v377 = vpack.c.b16 %v350, %v349
          %v378 = vpack.c.b16 %v352, %v351
          %v379 = vpack.c.b16 %v354, %v353
          %v380 = vpack.c.b16 %v356, %v355
          %405 = vmatprep.subr.bf16.mxu0 0
          %406 = vmatpush1.bf16.msra.mxu0 %v357
          %407 = vmatprep.subr.bf16.mxu0 0
          %408 = vmatpush1.bf16.msra.mxu0 %v358
          %409 = vmatprep.subr.bf16.mxu0 0
          %410 = vmatpush1.bf16.msra.mxu0 %v359
          %411 = vmatprep.subr.bf16.mxu0 0
          %412 = vmatpush1.bf16.msra.mxu0 %v360
          %413 = vmatprep.subr.bf16.mxu0 0
          %414 = vmatpush1.bf16.msra.mxu0 %v361
          %415 = vmatprep.subr.bf16.mxu0 0
          %416 = vmatpush1.bf16.msra.mxu0 %v362
          %417 = vmatprep.subr.bf16.mxu0 0
          %418 = vmatpush1.bf16.msra.mxu0 %v363
          %419 = vmatprep.subr.bf16.mxu0 0
          %420 = vmatpush1.bf16.msra.mxu0 %v364
          %421 = vmatprep.subr.bf16.mxu0 0
          %422 = vmatpush1.bf16.msra.mxu0 %v365
          %423 = vmatprep.subr.bf16.mxu0 0
          %424 = vmatpush1.bf16.msra.mxu0 %v366
          %425 = vmatprep.subr.bf16.mxu0 0
          %426 = vmatpush1.bf16.msra.mxu0 %v367
          %427 = vmatprep.subr.bf16.mxu0 0
          %428 = vmatpush1.bf16.msra.mxu0 %v368
          %429 = vmatprep.subr.bf16.mxu0 0
          %430 = vmatpush1.bf16.msra.mxu0 %v369
          %431 = vmatprep.subr.bf16.mxu0 0
          %432 = vmatpush1.bf16.msra.mxu0 %v370
          %433 = vmatprep.subr.bf16.mxu0 0
          %434 = vmatpush1.bf16.msra.mxu0 %v371
          %435 = vmatprep.subr.bf16.mxu0 0
          %436 = vmatpush1.bf16.msra.mxu0 %v372
          %437 = vmatprep.mubr.bf16.mxu0 %v256
          %438 = vmatmul.mubr.bf16.gmra.mrb[0].mxu0 %v255
          %v439 = vpop.f32.mrb[0].mxu0
          %v440 = vadd.f32 0.0, %v439
          %v441 = vpop.f32.mrb[0].mxu0
          %v442 = vpop.f32.mrb[0].mxu0
          %v443 = vpop.f32.mrb[0].mxu0
          %444 = vdwg.mxu0
          %445 = vmatprep.subr.bf16.mxu0 0
          %446 = vmatpush1.bf16.msra.mxu0 %v373
          %447 = vmatprep.subr.bf16.mxu0 0
          %448 = vmatpush1.bf16.msra.mxu0 %v374
          %449 = vmatprep.subr.bf16.mxu0 0
          %450 = vmatpush1.bf16.msra.mxu0 %v375
          %451 = vmatprep.subr.bf16.mxu0 0
          %452 = vmatpush1.bf16.msra.mxu0 %v376
          %453 = vmatprep.subr.bf16.mxu0 0
          %454 = vmatpush1.bf16.msra.mxu0 %v377
          %455 = vmatprep.subr.bf16.mxu0 0
          %456 = vmatpush1.bf16.msra.mxu0 %v378
          %457 = vmatprep.subr.bf16.mxu0 0
          %458 = vmatpush1.bf16.msra.mxu0 %v379
          %459 = vmatprep.subr.bf16.mxu0 0
          %460 = vmatpush1.bf16.msra.mxu0 %v380
          %461 = vmatprep.subr.bf16.mxu0 0
          %462 = vmatpush1.bf16.msra.mxu0 0
          %463 = vmatprep.subr.bf16.mxu0 0
          %464 = vmatpush1.bf16.msra.mxu0 0
          %465 = vmatprep.subr.bf16.mxu0 0
          %466 = vmatpush1.bf16.msra.mxu0 0
          %467 = vmatprep.subr.bf16.mxu0 0
          %468 = vmatpush1.bf16.msra.mxu0 0
          %469 = vmatprep.subr.bf16.mxu0 0
          %470 = vmatpush1.bf16.msra.mxu0 0
          %471 = vmatprep.subr.bf16.mxu0 0
          %472 = vmatpush1.bf16.msra.mxu0 0
          %473 = vmatprep.subr.bf16.mxu0 0
          %474 = vmatpush1.bf16.msra.mxu0 0
          %475 = vmatprep.subr.bf16.mxu0 0
          %476 = vmatpush1.bf16.msra.mxu0 0
          %477 = vmatprep.mubr.bf16.mxu0 0
          %478 = vmatmul.mubr.bf16.gmra.mrb[0].mxu0 %v257
          %v479 = vpop.f32.mrb[0].mxu0
          %v480 = vadd.f32 %v440, %v479
          %v481 = vpop.f32.mrb[0].mxu0
          %v482 = vpop.f32.mrb[0].mxu0
          %v483 = vpop.f32.mrb[0].mxu0
          %484 = vdwg.mxu0
          %v485 = vadd.f32 %v190, %v480
        $region37: #{pos_emb_forward.1} parent=31 // loop_footer
          %s189 = sadd.s32 1, %s185
        $region38: #{pos_emb_forward.1} parent=31 // loop_footer_branch
          %184 = sbr.rel target = $region34
        $region39: #{pos_emb_forward.1} parent=31 // loop_exit
          _
        %v486 = vld [vmem:[%s2] sm:$0x1]
        %v488 = vlaneseq
        %v489 = vshrl.u32 %v488, 7
        %v490 = vsub.s32 0, %v489
        %v491 = vrot.slane %v486, %v490
        %v493 = vadd.f32 %v190, %v491
        %v494 = vmul.f32 %v493, 0.70710677
        %vm495 = vcmp.ge.f32.partialorder %v494, 0.0
        %v496 = vsel %vm495, 1.0, -1.0
        %v497 = vand.u32 2147483647, %v494
        %v498 = vmul.f32 %v497, 0.3275911
        %v499 = vadd.f32 %v498, 1.0
        %v500 = vrcp.pop %v499
        %v501 = vmul.f32 %v500, 1.0614054
        %v502 = vadd.f32 %v501, -1.4531521
        %v503 = vmul.f32 %v502, %v500
        %v504 = vadd.f32 %v503, 1.4214138
        %v505 = vmul.f32 %v504, %v500
        %v506 = vadd.f32 %v505, -0.28449672
        %v507 = vmul.f32 %v506, %v500
        %v508 = vadd.f32 %v507, 0.2548296
        %v509 = vmul.f32 %v508, %v500
        %v510 = vsub.f32 0.0, %v497
        %v511 = vmul.f32 %v510, %v497
        %v512 = vmul.f32 %v511, 1.442695
        %v513 = vpow.pop %v512
        %v514 = vmul.f32 %v509, %v513
        %v515 = vsub.f32 1.0, %v514
        %v516 = vmul.f32 %v496, %v515
        %v517 = vmul.f32 %v493, 0.5
        %v518 = vadd.f32 %v516, 1.0
        %v519 = vmul.f32 %v517, %v518
        %vm520 = vcmask 392192
        %521 = vst.msk [vmem:[%s177] sm:$0xff] %vm520, %v519
        loop: start=0, step=1, limit=16
        $region40: #{pos_emb_forward.1} parent=31 // loop_pre_header
          _
        $region41: #{pos_emb_forward.1} parent=31 // loop_header
          %s523 = sphi 0, %s527
          %p524 = scmp.ge.s32.totalorder %s523, 16
          %v528 = vphi 0.0, %v825
        $region42: #{pos_emb_forward.1} parent=31 // loop_header_branch
          %526 = sbr.rel (%p524) target = $region46
        $region43: #{pos_emb_forward.1} parent=31 // loop_body
          %s529 = smul.u32 %s523, 8
          %s530 = sshra.s32 %s529, 3
          %s531 = sand.u32 %s529, 7
          %s532 = smul.u32 %s530, 3
          %s533 = sadd.s32 %s532, 51
          %s534 = smul.addr %s533, 4
          %s535 = scalar_lea.vmem %s182, %s534
          %v536 = vld [vmem:[%s535] sm:$0xff]
          %v537 = vld [vmem:[%s535 + $0x8] sm:$0xf]
          %s538 = smul.u32 %s523, 48
          %s539 = sadd.s32 %s538, 768
          %s540 = smul.addr %s539, 4
          %s541 = scalar_lea.vmem %s1, %s540
          %v542 = vld [vmem:[%s541] sm:$0xf]
          %v543 = vld [vmem:[%s541 + $0x4] sm:$0xf]
          %v544 = vld [vmem:[%s541 + $0x8] sm:$0xf]
          %v545 = vld [vmem:[%s541 + $0xc] sm:$0xf]
          %v546 = vld [vmem:[%s541 + $0x10] sm:$0xf]
          %v547 = vld [vmem:[%s541 + $0x14] sm:$0xf]
          %v548 = vld [vmem:[%s541 + $0x18] sm:$0xf]
          %v549 = vld [vmem:[%s541 + $0x1c] sm:$0xf]
          %v550 = vld [vmem:[%s541 + $0x20] sm:$0xf]
          %v551 = vld [vmem:[%s541 + $0x24] sm:$0xf]
          %v552 = vld [vmem:[%s541 + $0x28] sm:$0xf]
          %v553 = vld [vmem:[%s541 + $0x2c] sm:$0xf]
          %v554 = vld [vmem:[%s541 + $0x30] sm:$0xf]
          %v555 = vld [vmem:[%s541 + $0x34] sm:$0xf]
          %v556 = vld [vmem:[%s541 + $0x38] sm:$0xf]
          %v557 = vld [vmem:[%s541 + $0x3c] sm:$0xf]
          %v558 = vld [vmem:[%s541 + $0x40] sm:$0xf]
          %v559 = vld [vmem:[%s541 + $0x44] sm:$0xf]
          %v560 = vld [vmem:[%s541 + $0x48] sm:$0xf]
          %v561 = vld [vmem:[%s541 + $0x4c] sm:$0xf]
          %v562 = vld [vmem:[%s541 + $0x50] sm:$0xf]
          %v563 = vld [vmem:[%s541 + $0x54] sm:$0xf]
          %v564 = vld [vmem:[%s541 + $0x58] sm:$0xf]
          %v565 = vld [vmem:[%s541 + $0x5c] sm:$0xf]
          %v566 = vld [vmem:[%s541 + $0x60] sm:$0xf]
          %v567 = vld [vmem:[%s541 + $0x64] sm:$0xf]
          %v568 = vld [vmem:[%s541 + $0x68] sm:$0xf]
          %v569 = vld [vmem:[%s541 + $0x6c] sm:$0xf]
          %v570 = vld [vmem:[%s541 + $0x70] sm:$0xf]
          %v571 = vld [vmem:[%s541 + $0x74] sm:$0xf]
          %v572 = vld [vmem:[%s541 + $0x78] sm:$0xf]
          %v573 = vld [vmem:[%s541 + $0x7c] sm:$0xf]
          %v574 = vld [vmem:[%s541 + $0x80] sm:$0xf]
          %v575 = vld [vmem:[%s541 + $0x84] sm:$0xf]
          %v576 = vld [vmem:[%s541 + $0x88] sm:$0xf]
          %v577 = vld [vmem:[%s541 + $0x8c] sm:$0xf]
          %v578 = vld [vmem:[%s541 + $0x90] sm:$0xf]
          %v579 = vld [vmem:[%s541 + $0x94] sm:$0xf]
          %v580 = vld [vmem:[%s541 + $0x98] sm:$0xf]
          %v581 = vld [vmem:[%s541 + $0x9c] sm:$0xf]
          %v582 = vld [vmem:[%s541 + $0xa0] sm:$0xf]
          %v583 = vld [vmem:[%s541 + $0xa4] sm:$0xf]
          %v584 = vld [vmem:[%s541 + $0xa8] sm:$0xf]
          %v585 = vld [vmem:[%s541 + $0xac] sm:$0xf]
          %v586 = vld [vmem:[%s541 + $0xb0] sm:$0xf]
          %v587 = vld [vmem:[%s541 + $0xb4] sm:$0xf]
          %v588 = vld [vmem:[%s541 + $0xb8] sm:$0xf]
          %v589 = vld [vmem:[%s541 + $0xbc] sm:$0xf]
          %v592 = vunpack.c.l.b16 %v536
          %v593 = vunpack.c.h.b16 %v536
          %v594 = vunpack.c.l.b16 %v537
          %v595 = vpack.c.b16 %v592, %v592
          %v596 = vpack.c.b16 %v593, %v593
          %v597 = vpack.c.b16 %v594, %v594
          %v649 = vunpack.c.l.b16 %v542
          %v650 = vunpack.c.l.b16 %v543
          %v651 = vunpack.c.l.b16 %v544
          %v652 = vunpack.c.l.b16 %v545
          %v653 = vunpack.c.l.b16 %v546
          %v654 = vunpack.c.l.b16 %v547
          %v655 = vunpack.c.l.b16 %v548
          %v656 = vunpack.c.l.b16 %v549
          %v657 = vunpack.c.l.b16 %v550
          %v658 = vunpack.c.l.b16 %v551
          %v659 = vunpack.c.l.b16 %v552
          %v660 = vunpack.c.l.b16 %v553
          %v661 = vunpack.c.l.b16 %v554
          %v662 = vunpack.c.l.b16 %v555
          %v663 = vunpack.c.l.b16 %v556
          %v664 = vunpack.c.l.b16 %v557
          %v665 = vunpack.c.l.b16 %v558
          %v666 = vunpack.c.l.b16 %v559
          %v667 = vunpack.c.l.b16 %v560
          %v668 = vunpack.c.l.b16 %v561
          %v669 = vunpack.c.l.b16 %v562
          %v670 = vunpack.c.l.b16 %v563
          %v671 = vunpack.c.l.b16 %v564
          %v672 = vunpack.c.l.b16 %v565
          %v673 = vunpack.c.l.b16 %v566
          %v674 = vunpack.c.l.b16 %v567
          %v675 = vunpack.c.l.b16 %v568
          %v676 = vunpack.c.l.b16 %v569
          %v677 = vunpack.c.l.b16 %v570
          %v678 = vunpack.c.l.b16 %v571
          %v679 = vunpack.c.l.b16 %v572
          %v680 = vunpack.c.l.b16 %v573
          %v681 = vunpack.c.l.b16 %v574
          %v682 = vunpack.c.l.b16 %v575
          %v683 = vunpack.c.l.b16 %v576
          %v684 = vunpack.c.l.b16 %v577
          %v685 = vunpack.c.l.b16 %v578
          %v686 = vunpack.c.l.b16 %v579
          %v687 = vunpack.c.l.b16 %v580
          %v688 = vunpack.c.l.b16 %v581
          %v689 = vunpack.c.l.b16 %v582
          %v690 = vunpack.c.l.b16 %v583
          %v691 = vunpack.c.l.b16 %v584
          %v692 = vunpack.c.l.b16 %v585
          %v693 = vunpack.c.l.b16 %v586
          %v694 = vunpack.c.l.b16 %v587
          %v695 = vunpack.c.l.b16 %v588
          %v696 = vunpack.c.l.b16 %v589
          %v697 = vpack.c.b16 %v650, %v649
          %v698 = vpack.c.b16 %v652, %v651
          %v699 = vpack.c.b16 %v654, %v653
          %v700 = vpack.c.b16 %v656, %v655
          %v701 = vpack.c.b16 %v658, %v657
          %v702 = vpack.c.b16 %v660, %v659
          %v703 = vpack.c.b16 %v662, %v661
          %v704 = vpack.c.b16 %v664, %v663
          %v705 = vpack.c.b16 %v666, %v665
          %v706 = vpack.c.b16 %v668, %v667
          %v707 = vpack.c.b16 %v670, %v669
          %v708 = vpack.c.b16 %v672, %v671
          %v709 = vpack.c.b16 %v674, %v673
          %v710 = vpack.c.b16 %v676, %v675
          %v711 = vpack.c.b16 %v678, %v677
          %v712 = vpack.c.b16 %v680, %v679
          %v713 = vpack.c.b16 %v682, %v681
          %v714 = vpack.c.b16 %v684, %v683
          %v715 = vpack.c.b16 %v686, %v685
          %v716 = vpack.c.b16 %v688, %v687
          %v717 = vpack.c.b16 %v690, %v689
          %v718 = vpack.c.b16 %v692, %v691
          %v719 = vpack.c.b16 %v694, %v693
          %v720 = vpack.c.b16 %v696, %v695
          %745 = vmatprep.subr.bf16.mxu0 0
          %746 = vmatpush1.bf16.msra.mxu0 %v697
          %747 = vmatprep.subr.bf16.mxu0 0
          %748 = vmatpush1.bf16.msra.mxu0 %v698
          %749 = vmatprep.subr.bf16.mxu0 0
          %750 = vmatpush1.bf16.msra.mxu0 %v699
          %751 = vmatprep.subr.bf16.mxu0 0
          %752 = vmatpush1.bf16.msra.mxu0 %v700
          %753 = vmatprep.subr.bf16.mxu0 0
          %754 = vmatpush1.bf16.msra.mxu0 %v701
          %755 = vmatprep.subr.bf16.mxu0 0
          %756 = vmatpush1.bf16.msra.mxu0 %v702
          %757 = vmatprep.subr.bf16.mxu0 0
          %758 = vmatpush1.bf16.msra.mxu0 %v703
          %759 = vmatprep.subr.bf16.mxu0 0
          %760 = vmatpush1.bf16.msra.mxu0 %v704
          %761 = vmatprep.subr.bf16.mxu0 0
          %762 = vmatpush1.bf16.msra.mxu0 %v705
          %763 = vmatprep.subr.bf16.mxu0 0
          %764 = vmatpush1.bf16.msra.mxu0 %v706
          %765 = vmatprep.subr.bf16.mxu0 0
          %766 = vmatpush1.bf16.msra.mxu0 %v707
          %767 = vmatprep.subr.bf16.mxu0 0
          %768 = vmatpush1.bf16.msra.mxu0 %v708
          %769 = vmatprep.subr.bf16.mxu0 0
          %770 = vmatpush1.bf16.msra.mxu0 %v709
          %771 = vmatprep.subr.bf16.mxu0 0
          %772 = vmatpush1.bf16.msra.mxu0 %v710
          %773 = vmatprep.subr.bf16.mxu0 0
          %774 = vmatpush1.bf16.msra.mxu0 %v711
          %775 = vmatprep.subr.bf16.mxu0 0
          %776 = vmatpush1.bf16.msra.mxu0 %v712
          %777 = vmatprep.mubr.bf16.mxu0 %v596
          %778 = vmatmul.mubr.bf16.gmra.mrb[0].mxu0 %v595
          %v779 = vpop.f32.mrb[0].mxu0
          %v780 = vadd.f32 0.0, %v779
          %v781 = vpop.f32.mrb[0].mxu0
          %v782 = vpop.f32.mrb[0].mxu0
          %v783 = vpop.f32.mrb[0].mxu0
          %784 = vdwg.mxu0
          %785 = vmatprep.subr.bf16.mxu0 0
          %786 = vmatpush1.bf16.msra.mxu0 %v713
          %787 = vmatprep.subr.bf16.mxu0 0
          %788 = vmatpush1.bf16.msra.mxu0 %v714
          %789 = vmatprep.subr.bf16.mxu0 0
          %790 = vmatpush1.bf16.msra.mxu0 %v715
          %791 = vmatprep.subr.bf16.mxu0 0
          %792 = vmatpush1.bf16.msra.mxu0 %v716
          %793 = vmatprep.subr.bf16.mxu0 0
          %794 = vmatpush1.bf16.msra.mxu0 %v717
          %795 = vmatprep.subr.bf16.mxu0 0
          %796 = vmatpush1.bf16.msra.mxu0 %v718
          %797 = vmatprep.subr.bf16.mxu0 0
          %798 = vmatpush1.bf16.msra.mxu0 %v719
          %799 = vmatprep.subr.bf16.mxu0 0
          %800 = vmatpush1.bf16.msra.mxu0 %v720
          %801 = vmatprep.subr.bf16.mxu0 0
          %802 = vmatpush1.bf16.msra.mxu0 0
          %803 = vmatprep.subr.bf16.mxu0 0
          %804 = vmatpush1.bf16.msra.mxu0 0
          %805 = vmatprep.subr.bf16.mxu0 0
          %806 = vmatpush1.bf16.msra.mxu0 0
          %807 = vmatprep.subr.bf16.mxu0 0
          %808 = vmatpush1.bf16.msra.mxu0 0
          %809 = vmatprep.subr.bf16.mxu0 0
          %810 = vmatpush1.bf16.msra.mxu0 0
          %811 = vmatprep.subr.bf16.mxu0 0
          %812 = vmatpush1.bf16.msra.mxu0 0
          %813 = vmatprep.subr.bf16.mxu0 0
          %814 = vmatpush1.bf16.msra.mxu0 0
          %815 = vmatprep.subr.bf16.mxu0 0
          %816 = vmatpush1.bf16.msra.mxu0 0
          %817 = vmatprep.mubr.bf16.mxu0 0
          %818 = vmatmul.mubr.bf16.gmra.mrb[0].mxu0 %v597
          %v819 = vpop.f32.mrb[0].mxu0
          %v820 = vadd.f32 %v780, %v819
          %v821 = vpop.f32.mrb[0].mxu0
          %v822 = vpop.f32.mrb[0].mxu0
          %v823 = vpop.f32.mrb[0].mxu0
          %824 = vdwg.mxu0
          %v825 = vadd.f32 %v528, %v820
        $region44: #{pos_emb_forward.1} parent=31 // loop_footer
          %s527 = sadd.s32 1, %s523
        $region45: #{pos_emb_forward.1} parent=31 // loop_footer_branch
          %522 = sbr.rel target = $region41
        $region46: #{pos_emb_forward.1} parent=31 // loop_exit
          _
        %s826 = scalar_lea.vmem %s2, 1
        %v827 = vld [vmem:[%s826] sm:$0x1]
        %v829 = vlaneseq
        %v830 = vshrl.u32 %v829, 7
        %v831 = vsub.s32 0, %v830
        %v832 = vrot.slane %v827, %v831
        %v834 = vadd.f32 %v528, %v832
        %v835 = vmul.f32 %v834, 0.70710677
        %vm836 = vcmp.ge.f32.partialorder %v835, 0.0
        %v837 = vsel %vm836, 1.0, -1.0
        %v838 = vand.u32 2147483647, %v835
        %v839 = vmul.f32 %v838, 0.3275911
        %v840 = vadd.f32 %v839, 1.0
        %v841 = vrcp.pop %v840
        %v842 = vmul.f32 %v841, 1.0614054
        %v843 = vadd.f32 %v842, -1.4531521
        %v844 = vmul.f32 %v843, %v841
        %v845 = vadd.f32 %v844, 1.4214138
        %v846 = vmul.f32 %v845, %v841
        %v847 = vadd.f32 %v846, -0.28449672
        %v848 = vmul.f32 %v847, %v841
        %v849 = vadd.f32 %v848, 0.2548296
        %v850 = vmul.f32 %v849, %v841
        %v851 = vsub.f32 0.0, %v838
        %v852 = vmul.f32 %v851, %v838
        %v853 = vmul.f32 %v852, 1.442695
        %v854 = vpow.pop %v853
        %v855 = vmul.f32 %v850, %v854
        %v856 = vsub.f32 1.0, %v855
        %v857 = vmul.f32 %v837, %v856
        %v858 = vmul.f32 %v834, 0.5
        %v859 = vadd.f32 %v857, 1.0
        %v860 = vmul.f32 %v858, %v859
        %862 = vrot.lane.b32.xlu0 %v860, 48
        %v863 = vpop.permute.xlu0 %862
        %vm865 = vcmask 785792
        %866 = vst.msk [vmem:[%s177] sm:$0xff] %vm865, %v863
        loop: start=0, step=1, limit=16
        $region47: #{pos_emb_forward.1} parent=31 // loop_pre_header
          _
        $region48: #{pos_emb_forward.1} parent=31 // loop_header
          %s868 = sphi 0, %s872
          %p869 = scmp.ge.s32.totalorder %s868, 16
          %v873 = vphi 0.0, %v1170
        $region49: #{pos_emb_forward.1} parent=31 // loop_header_branch
          %871 = sbr.rel (%p869) target = $region53
        $region50: #{pos_emb_forward.1} parent=31 // loop_body
          %s874 = smul.u32 %s868, 8
          %s875 = sshra.s32 %s874, 3
          %s876 = sand.u32 %s874, 7
          %s877 = smul.u32 %s875, 3
          %s878 = sadd.s32 %s877, 102
          %s879 = smul.addr %s878, 4
          %s880 = scalar_lea.vmem %s182, %s879
          %v881 = vld [vmem:[%s880] sm:$0xff]
          %v882 = vld [vmem:[%s880 + $0x8] sm:$0xf]
          %s883 = smul.u32 %s868, 48
          %s884 = sadd.s32 %s883, 1536
          %s885 = smul.addr %s884, 4
          %s886 = scalar_lea.vmem %s1, %s885
          %v887 = vld [vmem:[%s886] sm:$0xf]
          %v888 = vld [vmem:[%s886 + $0x4] sm:$0xf]
          %v889 = vld [vmem:[%s886 + $0x8] sm:$0xf]
          %v890 = vld [vmem:[%s886 + $0xc] sm:$0xf]
          %v891 = vld [vmem:[%s886 + $0x10] sm:$0xf]
          %v892 = vld [vmem:[%s886 + $0x14] sm:$0xf]
          %v893 = vld [vmem:[%s886 + $0x18] sm:$0xf]
          %v894 = vld [vmem:[%s886 + $0x1c] sm:$0xf]
          %v895 = vld [vmem:[%s886 + $0x20] sm:$0xf]
          %v896 = vld [vmem:[%s886 + $0x24] sm:$0xf]
          %v897 = vld [vmem:[%s886 + $0x28] sm:$0xf]
          %v898 = vld [vmem:[%s886 + $0x2c] sm:$0xf]
          %v899 = vld [vmem:[%s886 + $0x30] sm:$0xf]
          %v900 = vld [vmem:[%s886 + $0x34] sm:$0xf]
          %v901 = vld [vmem:[%s886 + $0x38] sm:$0xf]
          %v902 = vld [vmem:[%s886 + $0x3c] sm:$0xf]
          %v903 = vld [vmem:[%s886 + $0x40] sm:$0xf]
          %v904 = vld [vmem:[%s886 + $0x44] sm:$0xf]
          %v905 = vld [vmem:[%s886 + $0x48] sm:$0xf]
          %v906 = vld [vmem:[%s886 + $0x4c] sm:$0xf]
          %v907 = vld [vmem:[%s886 + $0x50] sm:$0xf]
          %v908 = vld [vmem:[%s886 + $0x54] sm:$0xf]
          %v909 = vld [vmem:[%s886 + $0x58] sm:$0xf]
          %v910 = vld [vmem:[%s886 + $0x5c] sm:$0xf]
          %v911 = vld [vmem:[%s886 + $0x60] sm:$0xf]
          %v912 = vld [vmem:[%s886 + $0x64] sm:$0xf]
          %v913 = vld [vmem:[%s886 + $0x68] sm:$0xf]
          %v914 = vld [vmem:[%s886 + $0x6c] sm:$0xf]
          %v915 = vld [vmem:[%s886 + $0x70] sm:$0xf]
          %v916 = vld [vmem:[%s886 + $0x74] sm:$0xf]
          %v917 = vld [vmem:[%s886 + $0x78] sm:$0xf]
          %v918 = vld [vmem:[%s886 + $0x7c] sm:$0xf]
          %v919 = vld [vmem:[%s886 + $0x80] sm:$0xf]
          %v920 = vld [vmem:[%s886 + $0x84] sm:$0xf]
          %v921 = vld [vmem:[%s886 + $0x88] sm:$0xf]
          %v922 = vld [vmem:[%s886 + $0x8c] sm:$0xf]
          %v923 = vld [vmem:[%s886 + $0x90] sm:$0xf]
          %v924 = vld [vmem:[%s886 + $0x94] sm:$0xf]
          %v925 = vld [vmem:[%s886 + $0x98] sm:$0xf]
          %v926 = vld [vmem:[%s886 + $0x9c] sm:$0xf]
          %v927 = vld [vmem:[%s886 + $0xa0] sm:$0xf]
          %v928 = vld [vmem:[%s886 + $0xa4] sm:$0xf]
          %v929 = vld [vmem:[%s886 + $0xa8] sm:$0xf]
          %v930 = vld [vmem:[%s886 + $0xac] sm:$0xf]
          %v931 = vld [vmem:[%s886 + $0xb0] sm:$0xf]
          %v932 = vld [vmem:[%s886 + $0xb4] sm:$0xf]
          %v933 = vld [vmem:[%s886 + $0xb8] sm:$0xf]
          %v934 = vld [vmem:[%s886 + $0xbc] sm:$0xf]
          %v937 = vunpack.c.l.b16 %v881
          %v938 = vunpack.c.h.b16 %v881
          %v939 = vunpack.c.l.b16 %v882
          %v940 = vpack.c.b16 %v937, %v937
          %v941 = vpack.c.b16 %v938, %v938
          %v942 = vpack.c.b16 %v939, %v939
          %v994 = vunpack.c.l.b16 %v887
          %v995 = vunpack.c.l.b16 %v888
          %v996 = vunpack.c.l.b16 %v889
          %v997 = vunpack.c.l.b16 %v890
          %v998 = vunpack.c.l.b16 %v891
          %v999 = vunpack.c.l.b16 %v892
          %v1000 = vunpack.c.l.b16 %v893
          %v1001 = vunpack.c.l.b16 %v894
          %v1002 = vunpack.c.l.b16 %v895
          %v1003 = vunpack.c.l.b16 %v896
          %v1004 = vunpack.c.l.b16 %v897
          %v1005 = vunpack.c.l.b16 %v898
          %v1006 = vunpack.c.l.b16 %v899
          %v1007 = vunpack.c.l.b16 %v900
          %v1008 = vunpack.c.l.b16 %v901
          %v1009 = vunpack.c.l.b16 %v902
          %v1010 = vunpack.c.l.b16 %v903
          %v1011 = vunpack.c.l.b16 %v904
          %v1012 = vunpack.c.l.b16 %v905
          %v1013 = vunpack.c.l.b16 %v906
          %v1014 = vunpack.c.l.b16 %v907
          %v1015 = vunpack.c.l.b16 %v908
          %v1016 = vunpack.c.l.b16 %v909
          %v1017 = vunpack.c.l.b16 %v910
          %v1018 = vunpack.c.l.b16 %v911
          %v1019 = vunpack.c.l.b16 %v912
          %v1020 = vunpack.c.l.b16 %v913
          %v1021 = vunpack.c.l.b16 %v914
          %v1022 = vunpack.c.l.b16 %v915
          %v1023 = vunpack.c.l.b16 %v916
          %v1024 = vunpack.c.l.b16 %v917
          %v1025 = vunpack.c.l.b16 %v918
          %v1026 = vunpack.c.l.b16 %v919
          %v1027 = vunpack.c.l.b16 %v920
          %v1028 = vunpack.c.l.b16 %v921
          %v1029 = vunpack.c.l.b16 %v922
          %v1030 = vunpack.c.l.b16 %v923
          %v1031 = vunpack.c.l.b16 %v924
          %v1032 = vunpack.c.l.b16 %v925
          %v1033 = vunpack.c.l.b16 %v926
          %v1034 = vunpack.c.l.b16 %v927
          %v1035 = vunpack.c.l.b16 %v928
          %v1036 = vunpack.c.l.b16 %v929
          %v1037 = vunpack.c.l.b16 %v930
          %v1038 = vunpack.c.l.b16 %v931
          %v1039 = vunpack.c.l.b16 %v932
          %v1040 = vunpack.c.l.b16 %v933
          %v1041 = vunpack.c.l.b16 %v934
          %v1042 = vpack.c.b16 %v995, %v994
          %v1043 = vpack.c.b16 %v997, %v996
          %v1044 = vpack.c.b16 %v999, %v998
          %v1045 = vpack.c.b16 %v1001, %v1000
          %v1046 = vpack.c.b16 %v1003, %v1002
          %v1047 = vpack.c.b16 %v1005, %v1004
          %v1048 = vpack.c.b16 %v1007, %v1006
          %v1049 = vpack.c.b16 %v1009, %v1008
          %v1050 = vpack.c.b16 %v1011, %v1010
          %v1051 = vpack.c.b16 %v1013, %v1012
          %v1052 = vpack.c.b16 %v1015, %v1014
          %v1053 = vpack.c.b16 %v1017, %v1016
          %v1054 = vpack.c.b16 %v1019, %v1018
          %v1055 = vpack.c.b16 %v1021, %v1020
          %v1056 = vpack.c.b16 %v1023, %v1022
          %v1057 = vpack.c.b16 %v1025, %v1024
          %v1058 = vpack.c.b16 %v1027, %v1026
          %v1059 = vpack.c.b16 %v1029, %v1028
          %v1060 = vpack.c.b16 %v1031, %v1030
          %v1061 = vpack.c.b16 %v1033, %v1032
          %v1062 = vpack.c.b16 %v1035, %v1034
          %v1063 = vpack.c.b16 %v1037, %v1036
          %v1064 = vpack.c.b16 %v1039, %v1038
          %v1065 = vpack.c.b16 %v1041, %v1040
          %1090 = vmatprep.subr.bf16.mxu0 0
          %1091 = vmatpush1.bf16.msra.mxu0 %v1042
          %1092 = vmatprep.subr.bf16.mxu0 0
          %1093 = vmatpush1.bf16.msra.mxu0 %v1043
          %1094 = vmatprep.subr.bf16.mxu0 0
          %1095 = vmatpush1.bf16.msra.mxu0 %v1044
          %1096 = vmatprep.subr.bf16.mxu0 0
          %1097 = vmatpush1.bf16.msra.mxu0 %v1045
          %1098 = vmatprep.subr.bf16.mxu0 0
          %1099 = vmatpush1.bf16.msra.mxu0 %v1046
          %1100 = vmatprep.subr.bf16.mxu0 0
          %1101 = vmatpush1.bf16.msra.mxu0 %v1047
          %1102 = vmatprep.subr.bf16.mxu0 0
          %1103 = vmatpush1.bf16.msra.mxu0 %v1048
          %1104 = vmatprep.subr.bf16.mxu0 0
          %1105 = vmatpush1.bf16.msra.mxu0 %v1049
          %1106 = vmatprep.subr.bf16.mxu0 0
          %1107 = vmatpush1.bf16.msra.mxu0 %v1050
          %1108 = vmatprep.subr.bf16.mxu0 0
          %1109 = vmatpush1.bf16.msra.mxu0 %v1051
          %1110 = vmatprep.subr.bf16.mxu0 0
          %1111 = vmatpush1.bf16.msra.mxu0 %v1052
          %1112 = vmatprep.subr.bf16.mxu0 0
          %1113 = vmatpush1.bf16.msra.mxu0 %v1053
          %1114 = vmatprep.subr.bf16.mxu0 0
          %1115 = vmatpush1.bf16.msra.mxu0 %v1054
          %1116 = vmatprep.subr.bf16.mxu0 0
          %1117 = vmatpush1.bf16.msra.mxu0 %v1055
          %1118 = vmatprep.subr.bf16.mxu0 0
          %1119 = vmatpush1.bf16.msra.mxu0 %v1056
          %1120 = vmatprep.subr.bf16.mxu0 0
          %1121 = vmatpush1.bf16.msra.mxu0 %v1057
          %1122 = vmatprep.mubr.bf16.mxu0 %v941
          %1123 = vmatmul.mubr.bf16.gmra.mrb[0].mxu0 %v940
          %v1124 = vpop.f32.mrb[0].mxu0
          %v1125 = vadd.f32 0.0, %v1124
          %v1126 = vpop.f32.mrb[0].mxu0
          %v1127 = vpop.f32.mrb[0].mxu0
          %v1128 = vpop.f32.mrb[0].mxu0
          %1129 = vdwg.mxu0
          %1130 = vmatprep.subr.bf16.mxu0 0
          %1131 = vmatpush1.bf16.msra.mxu0 %v1058
          %1132 = vmatprep.subr.bf16.mxu0 0
          %1133 = vmatpush1.bf16.msra.mxu0 %v1059
          %1134 = vmatprep.subr.bf16.mxu0 0
          %1135 = vmatpush1.bf16.msra.mxu0 %v1060
          %1136 = vmatprep.subr.bf16.mxu0 0
          %1137 = vmatpush1.bf16.msra.mxu0 %v1061
          %1138 = vmatprep.subr.bf16.mxu0 0
          %1139 = vmatpush1.bf16.msra.mxu0 %v1062
          %1140 = vmatprep.subr.bf16.mxu0 0
          %1141 = vmatpush1.bf16.msra.mxu0 %v1063
          %1142 = vmatprep.subr.bf16.mxu0 0
          %1143 = vmatpush1.bf16.msra.mxu0 %v1064
          %1144 = vmatprep.subr.bf16.mxu0 0
          %1145 = vmatpush1.bf16.msra.mxu0 %v1065
          %1146 = vmatprep.subr.bf16.mxu0 0
          %1147 = vmatpush1.bf16.msra.mxu0 0
          %1148 = vmatprep.subr.bf16.mxu0 0
          %1149 = vmatpush1.bf16.msra.mxu0 0
          %1150 = vmatprep.subr.bf16.mxu0 0
          %1151 = vmatpush1.bf16.msra.mxu0 0
          %1152 = vmatprep.subr.bf16.mxu0 0
          %1153 = vmatpush1.bf16.msra.mxu0 0
          %1154 = vmatprep.subr.bf16.mxu0 0
          %1155 = vmatpush1.bf16.msra.mxu0 0
          %1156 = vmatprep.subr.bf16.mxu0 0
          %1157 = vmatpush1.bf16.msra.mxu0 0
          %1158 = vmatprep.subr.bf16.mxu0 0
          %1159 = vmatpush1.bf16.msra.mxu0 0
          %1160 = vmatprep.subr.bf16.mxu0 0
          %1161 = vmatpush1.bf16.msra.mxu0 0
          %1162 = vmatprep.mubr.bf16.mxu0 0
          %1163 = vmatmul.mubr.bf16.gmra.mrb[0].mxu0 %v942
          %v1164 = vpop.f32.mrb[0].mxu0
          %v1165 = vadd.f32 %v1125, %v1164
          %v1166 = vpop.f32.mrb[0].mxu0
          %v1167 = vpop.f32.mrb[0].mxu0
          %v1168 = vpop.f32.mrb[0].mxu0
          %1169 = vdwg.mxu0
          %v1170 = vadd.f32 %v873, %v1165
        $region51: #{pos_emb_forward.1} parent=31 // loop_footer
          %s872 = sadd.s32 1, %s868
        $region52: #{pos_emb_forward.1} parent=31 // loop_footer_branch
          %867 = sbr.rel target = $region48
        $region53: #{pos_emb_forward.1} parent=31 // loop_exit
          _
        %s1171 = scalar_lea.vmem %s2, 2
        %v1172 = vld [vmem:[%s1171] sm:$0x1]
        %v1174 = vlaneseq
        %v1175 = vshrl.u32 %v1174, 7
        %v1176 = vsub.s32 0, %v1175
        %v1177 = vrot.slane %v1172, %v1176
        %v1179 = vadd.f32 %v873, %v1177
        %v1180 = vmul.f32 %v1179, 0.70710677
        %vm1181 = vcmp.ge.f32.partialorder %v1180, 0.0
        %v1182 = vsel %vm1181, 1.0, -1.0
        %v1183 = vand.u32 2147483647, %v1180
        %v1184 = vmul.f32 %v1183, 0.3275911
        %v1185 = vadd.f32 %v1184, 1.0
        %v1186 = vrcp.pop %v1185
        %v1187 = vmul.f32 %v1186, 1.0614054
        %v1188 = vadd.f32 %v1187, -1.4531521
        %v1189 = vmul.f32 %v1188, %v1186
        %v1190 = vadd.f32 %v1189, 1.4214138
        %v1191 = vmul.f32 %v1190, %v1186
        %v1192 = vadd.f32 %v1191, -0.28449672
        %v1193 = vmul.f32 %v1192, %v1186
        %v1194 = vadd.f32 %v1193, 0.2548296
        %v1195 = vmul.f32 %v1194, %v1186
        %v1196 = vsub.f32 0.0, %v1183
        %v1197 = vmul.f32 %v1196, %v1183
        %v1198 = vmul.f32 %v1197, 1.442695
        %v1199 = vpow.pop %v1198
        %v1200 = vmul.f32 %v1195, %v1199
        %v1201 = vsub.f32 1.0, %v1200
        %v1202 = vmul.f32 %v1182, %v1201
        %v1203 = vmul.f32 %v1179, 0.5
        %v1204 = vadd.f32 %v1202, 1.0
        %v1205 = vmul.f32 %v1203, %v1204
        %1207 = vrot.lane.b32.xlu0 %v1205, 96
        %v1208 = vpop.permute.xlu0 %1207
        %vm1210 = vcmask 1048320
        %1211 = vst.msk [vmem:[%s177] sm:$0xff] %vm1210, %v1208
        %vm1212 = vcmask 130048
        %1213 = vst.msk [vmem:[%s177 + $0x8] sm:$0xff] %vm1212, %v1208
        loop: start=0, step=1, limit=16
        $region54: #{pos_emb_forward.1} parent=31 // loop_pre_header
          _
        $region55: #{pos_emb_forward.1} parent=31 // loop_header
          %s1215 = sphi 0, %s1219
          %p1216 = scmp.ge.s32.totalorder %s1215, 16
          %v1220 = vphi 0.0, %v1517
        $region56: #{pos_emb_forward.1} parent=31 // loop_header_branch
          %1218 = sbr.rel (%p1216) target = $region60
        $region57: #{pos_emb_forward.1} parent=31 // loop_body
          %s1221 = smul.u32 %s1215, 8
          %s1222 = sshra.s32 %s1221, 3
          %s1223 = sand.u32 %s1221, 7
          %s1224 = smul.u32 %s1222, 3
          %s1225 = sadd.s32 %s1224, 153
          %s1226 = smul.addr %s1225, 4
          %s1227 = scalar_lea.vmem %s182, %s1226
          %v1228 = vld [vmem:[%s1227] sm:$0xff]
          %v1229 = vld [vmem:[%s1227 + $0x8] sm:$0xf]
          %s1230 = smul.u32 %s1215, 48
          %s1231 = sadd.s32 %s1230, 2304
          %s1232 = smul.addr %s1231, 4
          %s1233 = scalar_lea.vmem %s1, %s1232
          %v1234 = vld [vmem:[%s1233] sm:$0xf]
          %v1235 = vld [vmem:[%s1233 + $0x4] sm:$0xf]
          %v1236 = vld [vmem:[%s1233 + $0x8] sm:$0xf]
          %v1237 = vld [vmem:[%s1233 + $0xc] sm:$0xf]
          %v1238 = vld [vmem:[%s1233 + $0x10] sm:$0xf]
          %v1239 = vld [vmem:[%s1233 + $0x14] sm:$0xf]
          %v1240 = vld [vmem:[%s1233 + $0x18] sm:$0xf]
          %v1241 = vld [vmem:[%s1233 + $0x1c] sm:$0xf]
          %v1242 = vld [vmem:[%s1233 + $0x20] sm:$0xf]
          %v1243 = vld [vmem:[%s1233 + $0x24] sm:$0xf]
          %v1244 = vld [vmem:[%s1233 + $0x28] sm:$0xf]
          %v1245 = vld [vmem:[%s1233 + $0x2c] sm:$0xf]
          %v1246 = vld [vmem:[%s1233 + $0x30] sm:$0xf]
          %v1247 = vld [vmem:[%s1233 + $0x34] sm:$0xf]
          %v1248 = vld [vmem:[%s1233 + $0x38] sm:$0xf]
          %v1249 = vld [vmem:[%s1233 + $0x3c] sm:$0xf]
          %v1250 = vld [vmem:[%s1233 + $0x40] sm:$0xf]
          %v1251 = vld [vmem:[%s1233 + $0x44] sm:$0xf]
          %v1252 = vld [vmem:[%s1233 + $0x48] sm:$0xf]
          %v1253 = vld [vmem:[%s1233 + $0x4c] sm:$0xf]
          %v1254 = vld [vmem:[%s1233 + $0x50] sm:$0xf]
          %v1255 = vld [vmem:[%s1233 + $0x54] sm:$0xf]
          %v1256 = vld [vmem:[%s1233 + $0x58] sm:$0xf]
          %v1257 = vld [vmem:[%s1233 + $0x5c] sm:$0xf]
          %v1258 = vld [vmem:[%s1233 + $0x60] sm:$0xf]
          %v1259 = vld [vmem:[%s1233 + $0x64] sm:$0xf]
          %v1260 = vld [vmem:[%s1233 + $0x68] sm:$0xf]
          %v1261 = vld [vmem:[%s1233 + $0x6c] sm:$0xf]
          %v1262 = vld [vmem:[%s1233 + $0x70] sm:$0xf]
          %v1263 = vld [vmem:[%s1233 + $0x74] sm:$0xf]
          %v1264 = vld [vmem:[%s1233 + $0x78] sm:$0xf]
          %v1265 = vld [vmem:[%s1233 + $0x7c] sm:$0xf]
          %v1266 = vld [vmem:[%s1233 + $0x80] sm:$0xf]
          %v1267 = vld [vmem:[%s1233 + $0x84] sm:$0xf]
          %v1268 = vld [vmem:[%s1233 + $0x88] sm:$0xf]
          %v1269 = vld [vmem:[%s1233 + $0x8c] sm:$0xf]
          %v1270 = vld [vmem:[%s1233 + $0x90] sm:$0xf]
          %v1271 = vld [vmem:[%s1233 + $0x94] sm:$0xf]
          %v1272 = vld [vmem:[%s1233 + $0x98] sm:$0xf]
          %v1273 = vld [vmem:[%s1233 + $0x9c] sm:$0xf]
          %v1274 = vld [vmem:[%s1233 + $0xa0] sm:$0xf]
          %v1275 = vld [vmem:[%s1233 + $0xa4] sm:$0xf]
          %v1276 = vld [vmem:[%s1233 + $0xa8] sm:$0xf]
          %v1277 = vld [vmem:[%s1233 + $0xac] sm:$0xf]
          %v1278 = vld [vmem:[%s1233 + $0xb0] sm:$0xf]
          %v1279 = vld [vmem:[%s1233 + $0xb4] sm:$0xf]
          %v1280 = vld [vmem:[%s1233 + $0xb8] sm:$0xf]
          %v1281 = vld [vmem:[%s1233 + $0xbc] sm:$0xf]
          %v1284 = vunpack.c.l.b16 %v1228
          %v1285 = vunpack.c.h.b16 %v1228
          %v1286 = vunpack.c.l.b16 %v1229
          %v1287 = vpack.c.b16 %v1284, %v1284
          %v1288 = vpack.c.b16 %v1285, %v1285
          %v1289 = vpack.c.b16 %v1286, %v1286
          %v1341 = vunpack.c.l.b16 %v1234
          %v1342 = vunpack.c.l.b16 %v1235
          %v1343 = vunpack.c.l.b16 %v1236
          %v1344 = vunpack.c.l.b16 %v1237
          %v1345 = vunpack.c.l.b16 %v1238
          %v1346 = vunpack.c.l.b16 %v1239
          %v1347 = vunpack.c.l.b16 %v1240
          %v1348 = vunpack.c.l.b16 %v1241
          %v1349 = vunpack.c.l.b16 %v1242
          %v1350 = vunpack.c.l.b16 %v1243
          %v1351 = vunpack.c.l.b16 %v1244
          %v1352 = vunpack.c.l.b16 %v1245
          %v1353 = vunpack.c.l.b16 %v1246
          %v1354 = vunpack.c.l.b16 %v1247
          %v1355 = vunpack.c.l.b16 %v1248
          %v1356 = vunpack.c.l.b16 %v1249
          %v1357 = vunpack.c.l.b16 %v1250
          %v1358 = vunpack.c.l.b16 %v1251
          %v1359 = vunpack.c.l.b16 %v1252
          %v1360 = vunpack.c.l.b16 %v1253
          %v1361 = vunpack.c.l.b16 %v1254
          %v1362 = vunpack.c.l.b16 %v1255
          %v1363 = vunpack.c.l.b16 %v1256
          %v1364 = vunpack.c.l.b16 %v1257
          %v1365 = vunpack.c.l.b16 %v1258
          %v1366 = vunpack.c.l.b16 %v1259
          %v1367 = vunpack.c.l.b16 %v1260
          %v1368 = vunpack.c.l.b16 %v1261
          %v1369 = vunpack.c.l.b16 %v1262
          %v1370 = vunpack.c.l.b16 %v1263
          %v1371 = vunpack.c.l.b16 %v1264
          %v1372 = vunpack.c.l.b16 %v1265
          %v1373 = vunpack.c.l.b16 %v1266
          %v1374 = vunpack.c.l.b16 %v1267
          %v1375 = vunpack.c.l.b16 %v1268
          %v1376 = vunpack.c.l.b16 %v1269
          %v1377 = vunpack.c.l.b16 %v1270
          %v1378 = vunpack.c.l.b16 %v1271
          %v1379 = vunpack.c.l.b16 %v1272
          %v1380 = vunpack.c.l.b16 %v1273
          %v1381 = vunpack.c.l.b16 %v1274
          %v1382 = vunpack.c.l.b16 %v1275
          %v1383 = vunpack.c.l.b16 %v1276
          %v1384 = vunpack.c.l.b16 %v1277
          %v1385 = vunpack.c.l.b16 %v1278
          %v1386 = vunpack.c.l.b16 %v1279
          %v1387 = vunpack.c.l.b16 %v1280
          %v1388 = vunpack.c.l.b16 %v1281
          %v1389 = vpack.c.b16 %v1342, %v1341
          %v1390 = vpack.c.b16 %v1344, %v1343
          %v1391 = vpack.c.b16 %v1346, %v1345
          %v1392 = vpack.c.b16 %v1348, %v1347
          %v1393 = vpack.c.b16 %v1350, %v1349
          %v1394 = vpack.c.b16 %v1352, %v1351
          %v1395 = vpack.c.b16 %v1354, %v1353
          %v1396 = vpack.c.b16 %v1356, %v1355
          %v1397 = vpack.c.b16 %v1358, %v1357
          %v1398 = vpack.c.b16 %v1360, %v1359
          %v1399 = vpack.c.b16 %v1362, %v1361
          %v1400 = vpack.c.b16 %v1364, %v1363
          %v1401 = vpack.c.b16 %v1366, %v1365
          %v1402 = vpack.c.b16 %v1368, %v1367
          %v1403 = vpack.c.b16 %v1370, %v1369
          %v1404 = vpack.c.b16 %v1372, %v1371
          %v1405 = vpack.c.b16 %v1374, %v1373
          %v1406 = vpack.c.b16 %v1376, %v1375
          %v1407 = vpack.c.b16 %v1378, %v1377
          %v1408 = vpack.c.b16 %v1380, %v1379
          %v1409 = vpack.c.b16 %v1382, %v1381
          %v1410 = vpack.c.b16 %v1384, %v1383
          %v1411 = vpack.c.b16 %v1386, %v1385
          %v1412 = vpack.c.b16 %v1388, %v1387
          %1437 = vmatprep.subr.bf16.mxu0 0
          %1438 = vmatpush1.bf16.msra.mxu0 %v1389
          %1439 = vmatprep.subr.bf16.mxu0 0
          %1440 = vmatpush1.bf16.msra.mxu0 %v1390
          %1441 = vmatprep.subr.bf16.mxu0 0
          %1442 = vmatpush1.bf16.msra.mxu0 %v1391
          %1443 = vmatprep.subr.bf16.mxu0 0
          %1444 = vmatpush1.bf16.msra.mxu0 %v1392
          %1445 = vmatprep.subr.bf16.mxu0 0
          %1446 = vmatpush1.bf16.msra.mxu0 %v1393
          %1447 = vmatprep.subr.bf16.mxu0 0
          %1448 = vmatpush1.bf16.msra.mxu0 %v1394
          %1449 = vmatprep.subr.bf16.mxu0 0
          %1450 = vmatpush1.bf16.msra.mxu0 %v1395
          %1451 = vmatprep.subr.bf16.mxu0 0
          %1452 = vmatpush1.bf16.msra.mxu0 %v1396
          %1453 = vmatprep.subr.bf16.mxu0 0
          %1454 = vmatpush1.bf16.msra.mxu0 %v1397
          %1455 = vmatprep.subr.bf16.mxu0 0
          %1456 = vmatpush1.bf16.msra.mxu0 %v1398
          %1457 = vmatprep.subr.bf16.mxu0 0
          %1458 = vmatpush1.bf16.msra.mxu0 %v1399
          %1459 = vmatprep.subr.bf16.mxu0 0
          %1460 = vmatpush1.bf16.msra.mxu0 %v1400
          %1461 = vmatprep.subr.bf16.mxu0 0
          %1462 = vmatpush1.bf16.msra.mxu0 %v1401
          %1463 = vmatprep.subr.bf16.mxu0 0
          %1464 = vmatpush1.bf16.msra.mxu0 %v1402
          %1465 = vmatprep.subr.bf16.mxu0 0
          %1466 = vmatpush1.bf16.msra.mxu0 %v1403
          %1467 = vmatprep.subr.bf16.mxu0 0
          %1468 = vmatpush1.bf16.msra.mxu0 %v1404
          %1469 = vmatprep.mubr.bf16.mxu0 %v1288
          %1470 = vmatmul.mubr.bf16.gmra.mrb[0].mxu0 %v1287
          %v1471 = vpop.f32.mrb[0].mxu0
          %v1472 = vadd.f32 0.0, %v1471
          %v1473 = vpop.f32.mrb[0].mxu0
          %v1474 = vpop.f32.mrb[0].mxu0
          %v1475 = vpop.f32.mrb[0].mxu0
          %1476 = vdwg.mxu0
          %1477 = vmatprep.subr.bf16.mxu0 0
          %1478 = vmatpush1.bf16.msra.mxu0 %v1405
          %1479 = vmatprep.subr.bf16.mxu0 0
          %1480 = vmatpush1.bf16.msra.mxu0 %v1406
          %1481 = vmatprep.subr.bf16.mxu0 0
          %1482 = vmatpush1.bf16.msra.mxu0 %v1407
          %1483 = vmatprep.subr.bf16.mxu0 0
          %1484 = vmatpush1.bf16.msra.mxu0 %v1408
          %1485 = vmatprep.subr.bf16.mxu0 0
          %1486 = vmatpush1.bf16.msra.mxu0 %v1409
          %1487 = vmatprep.subr.bf16.mxu0 0
          %1488 = vmatpush1.bf16.msra.mxu0 %v1410
          %1489 = vmatprep.subr.bf16.mxu0 0
          %1490 = vmatpush1.bf16.msra.mxu0 %v1411
          %1491 = vmatprep.subr.bf16.mxu0 0
          %1492 = vmatpush1.bf16.msra.mxu0 %v1412
          %1493 = vmatprep.subr.bf16.mxu0 0
          %1494 = vmatpush1.bf16.msra.mxu0 0
          %1495 = vmatprep.subr.bf16.mxu0 0
          %1496 = vmatpush1.bf16.msra.mxu0 0
          %1497 = vmatprep.subr.bf16.mxu0 0
          %1498 = vmatpush1.bf16.msra.mxu0 0
          %1499 = vmatprep.subr.bf16.mxu0 0
          %1500 = vmatpush1.bf16.msra.mxu0 0
          %1501 = vmatprep.subr.bf16.mxu0 0
          %1502 = vmatpush1.bf16.msra.mxu0 0
          %1503 = vmatprep.subr.bf16.mxu0 0
          %1504 = vmatpush1.bf16.msra.mxu0 0
          %1505 = vmatprep.subr.bf16.mxu0 0
          %1506 = vmatpush1.bf16.msra.mxu0 0
          %1507 = vmatprep.subr.bf16.mxu0 0
          %1508 = vmatpush1.bf16.msra.mxu0 0
          %1509 = vmatprep.mubr.bf16.mxu0 0
          %1510 = vmatmul.mubr.bf16.gmra.mrb[0].mxu0 %v1289
          %v1511 = vpop.f32.mrb[0].mxu0
          %v1512 = vadd.f32 %v1472, %v1511
          %v1513 = vpop.f32.mrb[0].mxu0
          %v1514 = vpop.f32.mrb[0].mxu0
          %v1515 = vpop.f32.mrb[0].mxu0
          %1516 = vdwg.mxu0
          %v1517 = vadd.f32 %v1220, %v1512
        $region58: #{pos_emb_forward.1} parent=31 // loop_footer
          %s1219 = sadd.s32 1, %s1215
        $region59: #{pos_emb_forward.1} parent=31 // loop_footer_branch
          %1214 = sbr.rel target = $region55
        $region60: #{pos_emb_forward.1} parent=31 // loop_exit
          _
        %s1518 = scalar_lea.vmem %s2, 3
        %v1519 = vld [vmem:[%s1518] sm:$0x1]
        %v1521 = vlaneseq
        %v1522 = vshrl.u32 %v1521, 7
        %v1523 = vsub.s32 0, %v1522
        %v1524 = vrot.slane %v1519, %v1523
        %v1526 = vadd.f32 %v1220, %v1524
        %v1527 = vmul.f32 %v1526, 0.70710677
        %vm1528 = vcmp.ge.f32.partialorder %v1527, 0.0
        %v1529 = vsel %vm1528, 1.0, -1.0
        %v1530 = vand.u32 2147483647, %v1527
        %v1531 = vmul.f32 %v1530, 0.3275911
        %v1532 = vadd.f32 %v1531, 1.0
        %v1533 = vrcp.pop %v1532
        %v1534 = vmul.f32 %v1533, 1.0614054
        %v1535 = vadd.f32 %v1534, -1.4531521
        %v1536 = vmul.f32 %v1535, %v1533
        %v1537 = vadd.f32 %v1536, 1.4214138
        %v1538 = vmul.f32 %v1537, %v1533
        %v1539 = vadd.f32 %v1538, -0.28449672
        %v1540 = vmul.f32 %v1539, %v1533
        %v1541 = vadd.f32 %v1540, 0.2548296
        %v1542 = vmul.f32 %v1541, %v1533
        %v1543 = vsub.f32 0.0, %v1530
        %v1544 = vmul.f32 %v1543, %v1530
        %v1545 = vmul.f32 %v1544, 1.442695
        %v1546 = vpow.pop %v1545
        %v1547 = vmul.f32 %v1542, %v1546
        %v1548 = vsub.f32 1.0, %v1547
        %v1549 = vmul.f32 %v1529, %v1548
        %v1550 = vmul.f32 %v1526, 0.5
        %v1551 = vadd.f32 %v1549, 1.0
        %v1552 = vmul.f32 %v1550, %v1551
        %1554 = vrot.lane.b32.xlu0 %v1552, 16
        %v1555 = vpop.permute.xlu0 %1554
        %vm1557 = vcmask 523392
        %1558 = vst.msk [vmem:[%s177 + $0x8] sm:$0xff] %vm1557, %v1555
        loop: start=0, step=1, limit=16
        $region61: #{pos_emb_forward.1} parent=31 // loop_pre_header
          _
        $region62: #{pos_emb_forward.1} parent=31 // loop_header
          %s1560 = sphi 0, %s1564
          %p1561 = scmp.ge.s32.totalorder %s1560, 16
          %v1565 = vphi 0.0, %v1862
        $region63: #{pos_emb_forward.1} parent=31 // loop_header_branch
          %1563 = sbr.rel (%p1561) target = $region67
        $region64: #{pos_emb_forward.1} parent=31 // loop_body
          %s1566 = smul.u32 %s1560, 8
          %s1567 = sshra.s32 %s1566, 3
          %s1568 = sand.u32 %s1566, 7
          %s1569 = smul.u32 %s1567, 3
          %s1570 = sadd.s32 %s1569, 204
          %s1571 = smul.addr %s1570, 4
          %s1572 = scalar_lea.vmem %s182, %s1571
          %v1573 = vld [vmem:[%s1572] sm:$0xff]
          %v1574 = vld [vmem:[%s1572 + $0x8] sm:$0xf]
          %s1575 = smul.u32 %s1560, 48
          %s1576 = sadd.s32 %s1575, 3072
          %s1577 = smul.addr %s1576, 4
          %s1578 = scalar_lea.vmem %s1, %s1577
          %v1579 = vld [vmem:[%s1578] sm:$0xf]
          %v1580 = vld [vmem:[%s1578 + $0x4] sm:$0xf]
          %v1581 = vld [vmem:[%s1578 + $0x8] sm:$0xf]
          %v1582 = vld [vmem:[%s1578 + $0xc] sm:$0xf]
          %v1583 = vld [vmem:[%s1578 + $0x10] sm:$0xf]
          %v1584 = vld [vmem:[%s1578 + $0x14] sm:$0xf]
          %v1585 = vld [vmem:[%s1578 + $0x18] sm:$0xf]
          %v1586 = vld [vmem:[%s1578 + $0x1c] sm:$0xf]
          %v1587 = vld [vmem:[%s1578 + $0x20] sm:$0xf]
          %v1588 = vld [vmem:[%s1578 + $0x24] sm:$0xf]
          %v1589 = vld [vmem:[%s1578 + $0x28] sm:$0xf]
          %v1590 = vld [vmem:[%s1578 + $0x2c] sm:$0xf]
          %v1591 = vld [vmem:[%s1578 + $0x30] sm:$0xf]
          %v1592 = vld [vmem:[%s1578 + $0x34] sm:$0xf]
          %v1593 = vld [vmem:[%s1578 + $0x38] sm:$0xf]
          %v1594 = vld [vmem:[%s1578 + $0x3c] sm:$0xf]
          %v1595 = vld [vmem:[%s1578 + $0x40] sm:$0xf]
          %v1596 = vld [vmem:[%s1578 + $0x44] sm:$0xf]
          %v1597 = vld [vmem:[%s1578 + $0x48] sm:$0xf]
          %v1598 = vld [vmem:[%s1578 + $0x4c] sm:$0xf]
          %v1599 = vld [vmem:[%s1578 + $0x50] sm:$0xf]
          %v1600 = vld [vmem:[%s1578 + $0x54] sm:$0xf]
          %v1601 = vld [vmem:[%s1578 + $0x58] sm:$0xf]
          %v1602 = vld [vmem:[%s1578 + $0x5c] sm:$0xf]
          %v1603 = vld [vmem:[%s1578 + $0x60] sm:$0xf]
          %v1604 = vld [vmem:[%s1578 + $0x64] sm:$0xf]
          %v1605 = vld [vmem:[%s1578 + $0x68] sm:$0xf]
          %v1606 = vld [vmem:[%s1578 + $0x6c] sm:$0xf]
          %v1607 = vld [vmem:[%s1578 + $0x70] sm:$0xf]
          %v1608 = vld [vmem:[%s1578 + $0x74] sm:$0xf]
          %v1609 = vld [vmem:[%s1578 + $0x78] sm:$0xf]
          %v1610 = vld [vmem:[%s1578 + $0x7c] sm:$0xf]
          %v1611 = vld [vmem:[%s1578 + $0x80] sm:$0xf]
          %v1612 = vld [vmem:[%s1578 + $0x84] sm:$0xf]
          %v1613 = vld [vmem:[%s1578 + $0x88] sm:$0xf]
          %v1614 = vld [vmem:[%s1578 + $0x8c] sm:$0xf]
          %v1615 = vld [vmem:[%s1578 + $0x90] sm:$0xf]
          %v1616 = vld [vmem:[%s1578 + $0x94] sm:$0xf]
          %v1617 = vld [vmem:[%s1578 + $0x98] sm:$0xf]
          %v1618 = vld [vmem:[%s1578 + $0x9c] sm:$0xf]
          %v1619 = vld [vmem:[%s1578 + $0xa0] sm:$0xf]
          %v1620 = vld [vmem:[%s1578 + $0xa4] sm:$0xf]
          %v1621 = vld [vmem:[%s1578 + $0xa8] sm:$0xf]
          %v1622 = vld [vmem:[%s1578 + $0xac] sm:$0xf]
          %v1623 = vld [vmem:[%s1578 + $0xb0] sm:$0xf]
          %v1624 = vld [vmem:[%s1578 + $0xb4] sm:$0xf]
          %v1625 = vld [vmem:[%s1578 + $0xb8] sm:$0xf]
          %v1626 = vld [vmem:[%s1578 + $0xbc] sm:$0xf]
          %v1629 = vunpack.c.l.b16 %v1573
          %v1630 = vunpack.c.h.b16 %v1573
          %v1631 = vunpack.c.l.b16 %v1574
          %v1632 = vpack.c.b16 %v1629, %v1629
          %v1633 = vpack.c.b16 %v1630, %v1630
          %v1634 = vpack.c.b16 %v1631, %v1631
          %v1686 = vunpack.c.l.b16 %v1579
          %v1687 = vunpack.c.l.b16 %v1580
          %v1688 = vunpack.c.l.b16 %v1581
          %v1689 = vunpack.c.l.b16 %v1582
          %v1690 = vunpack.c.l.b16 %v1583
          %v1691 = vunpack.c.l.b16 %v1584
          %v1692 = vunpack.c.l.b16 %v1585
          %v1693 = vunpack.c.l.b16 %v1586
          %v1694 = vunpack.c.l.b16 %v1587
          %v1695 = vunpack.c.l.b16 %v1588
          %v1696 = vunpack.c.l.b16 %v1589
          %v1697 = vunpack.c.l.b16 %v1590
          %v1698 = vunpack.c.l.b16 %v1591
          %v1699 = vunpack.c.l.b16 %v1592
          %v1700 = vunpack.c.l.b16 %v1593
          %v1701 = vunpack.c.l.b16 %v1594
          %v1702 = vunpack.c.l.b16 %v1595
          %v1703 = vunpack.c.l.b16 %v1596
          %v1704 = vunpack.c.l.b16 %v1597
          %v1705 = vunpack.c.l.b16 %v1598
          %v1706 = vunpack.c.l.b16 %v1599
          %v1707 = vunpack.c.l.b16 %v1600
          %v1708 = vunpack.c.l.b16 %v1601
          %v1709 = vunpack.c.l.b16 %v1602
          %v1710 = vunpack.c.l.b16 %v1603
          %v1711 = vunpack.c.l.b16 %v1604
          %v1712 = vunpack.c.l.b16 %v1605
          %v1713 = vunpack.c.l.b16 %v1606
          %v1714 = vunpack.c.l.b16 %v1607
          %v1715 = vunpack.c.l.b16 %v1608
          %v1716 = vunpack.c.l.b16 %v1609
          %v1717 = vunpack.c.l.b16 %v1610
          %v1718 = vunpack.c.l.b16 %v1611
          %v1719 = vunpack.c.l.b16 %v1612
          %v1720 = vunpack.c.l.b16 %v1613
          %v1721 = vunpack.c.l.b16 %v1614
          %v1722 = vunpack.c.l.b16 %v1615
          %v1723 = vunpack.c.l.b16 %v1616
          %v1724 = vunpack.c.l.b16 %v1617
          %v1725 = vunpack.c.l.b16 %v1618
          %v1726 = vunpack.c.l.b16 %v1619
          %v1727 = vunpack.c.l.b16 %v1620
          %v1728 = vunpack.c.l.b16 %v1621
          %v1729 = vunpack.c.l.b16 %v1622
          %v1730 = vunpack.c.l.b16 %v1623
          %v1731 = vunpack.c.l.b16 %v1624
          %v1732 = vunpack.c.l.b16 %v1625
          %v1733 = vunpack.c.l.b16 %v1626
          %v1734 = vpack.c.b16 %v1687, %v1686
          %v1735 = vpack.c.b16 %v1689, %v1688
          %v1736 = vpack.c.b16 %v1691, %v1690
          %v1737 = vpack.c.b16 %v1693, %v1692
          %v1738 = vpack.c.b16 %v1695, %v1694
          %v1739 = vpack.c.b16 %v1697, %v1696
          %v1740 = vpack.c.b16 %v1699, %v1698
          %v1741 = vpack.c.b16 %v1701, %v1700
          %v1742 = vpack.c.b16 %v1703, %v1702
          %v1743 = vpack.c.b16 %v1705, %v1704
          %v1744 = vpack.c.b16 %v1707, %v1706
          %v1745 = vpack.c.b16 %v1709, %v1708
          %v1746 = vpack.c.b16 %v1711, %v1710
          %v1747 = vpack.c.b16 %v1713, %v1712
          %v1748 = vpack.c.b16 %v1715, %v1714
          %v1749 = vpack.c.b16 %v1717, %v1716
          %v1750 = vpack.c.b16 %v1719, %v1718
          %v1751 = vpack.c.b16 %v1721, %v1720
          %v1752 = vpack.c.b16 %v1723, %v1722
          %v1753 = vpack.c.b16 %v1725, %v1724
          %v1754 = vpack.c.b16 %v1727, %v1726
          %v1755 = vpack.c.b16 %v1729, %v1728
          %v1756 = vpack.c.b16 %v1731, %v1730
          %v1757 = vpack.c.b16 %v1733, %v1732
          %1782 = vmatprep.subr.bf16.mxu0 0
          %1783 = vmatpush1.bf16.msra.mxu0 %v1734
          %1784 = vmatprep.subr.bf16.mxu0 0
          %1785 = vmatpush1.bf16.msra.mxu0 %v1735
          %1786 = vmatprep.subr.bf16.mxu0 0
          %1787 = vmatpush1.bf16.msra.mxu0 %v1736
          %1788 = vmatprep.subr.bf16.mxu0 0
          %1789 = vmatpush1.bf16.msra.mxu0 %v1737
          %1790 = vmatprep.subr.bf16.mxu0 0
          %1791 = vmatpush1.bf16.msra.mxu0 %v1738
          %1792 = vmatprep.subr.bf16.mxu0 0
          %1793 = vmatpush1.bf16.msra.mxu0 %v1739
          %1794 = vmatprep.subr.bf16.mxu0 0
          %1795 = vmatpush1.bf16.msra.mxu0 %v1740
          %1796 = vmatprep.subr.bf16.mxu0 0
          %1797 = vmatpush1.bf16.msra.mxu0 %v1741
          %1798 = vmatprep.subr.bf16.mxu0 0
          %1799 = vmatpush1.bf16.msra.mxu0 %v1742
          %1800 = vmatprep.subr.bf16.mxu0 0
          %1801 = vmatpush1.bf16.msra.mxu0 %v1743
          %1802 = vmatprep.subr.bf16.mxu0 0
          %1803 = vmatpush1.bf16.msra.mxu0 %v1744
          %1804 = vmatprep.subr.bf16.mxu0 0
          %1805 = vmatpush1.bf16.msra.mxu0 %v1745
          %1806 = vmatprep.subr.bf16.mxu0 0
          %1807 = vmatpush1.bf16.msra.mxu0 %v1746
          %1808 = vmatprep.subr.bf16.mxu0 0
          %1809 = vmatpush1.bf16.msra.mxu0 %v1747
          %1810 = vmatprep.subr.bf16.mxu0 0
          %1811 = vmatpush1.bf16.msra.mxu0 %v1748
          %1812 = vmatprep.subr.bf16.mxu0 0
          %1813 = vmatpush1.bf16.msra.mxu0 %v1749
          %1814 = vmatprep.mubr.bf16.mxu0 %v1633
          %1815 = vmatmul.mubr.bf16.gmra.mrb[0].mxu0 %v1632
          %v1816 = vpop.f32.mrb[0].mxu0
          %v1817 = vadd.f32 0.0, %v1816
          %v1818 = vpop.f32.mrb[0].mxu0
          %v1819 = vpop.f32.mrb[0].mxu0
          %v1820 = vpop.f32.mrb[0].mxu0
          %1821 = vdwg.mxu0
          %1822 = vmatprep.subr.bf16.mxu0 0
          %1823 = vmatpush1.bf16.msra.mxu0 %v1750
          %1824 = vmatprep.subr.bf16.mxu0 0
          %1825 = vmatpush1.bf16.msra.mxu0 %v1751
          %1826 = vmatprep.subr.bf16.mxu0 0
          %1827 = vmatpush1.bf16.msra.mxu0 %v1752
          %1828 = vmatprep.subr.bf16.mxu0 0
          %1829 = vmatpush1.bf16.msra.mxu0 %v1753
          %1830 = vmatprep.subr.bf16.mxu0 0
          %1831 = vmatpush1.bf16.msra.mxu0 %v1754
          %1832 = vmatprep.subr.bf16.mxu0 0
          %1833 = vmatpush1.bf16.msra.mxu0 %v1755
          %1834 = vmatprep.subr.bf16.mxu0 0
          %1835 = vmatpush1.bf16.msra.mxu0 %v1756
          %1836 = vmatprep.subr.bf16.mxu0 0
          %1837 = vmatpush1.bf16.msra.mxu0 %v1757
          %1838 = vmatprep.subr.bf16.mxu0 0
          %1839 = vmatpush1.bf16.msra.mxu0 0
          %1840 = vmatprep.subr.bf16.mxu0 0
          %1841 = vmatpush1.bf16.msra.mxu0 0
          %1842 = vmatprep.subr.bf16.mxu0 0
          %1843 = vmatpush1.bf16.msra.mxu0 0
          %1844 = vmatprep.subr.bf16.mxu0 0
          %1845 = vmatpush1.bf16.msra.mxu0 0
          %1846 = vmatprep.subr.bf16.mxu0 0
          %1847 = vmatpush1.bf16.msra.mxu0 0
          %1848 = vmatprep.subr.bf16.mxu0 0
          %1849 = vmatpush1.bf16.msra.mxu0 0
          %1850 = vmatprep.subr.bf16.mxu0 0
          %1851 = vmatpush1.bf16.msra.mxu0 0
          %1852 = vmatprep.subr.bf16.mxu0 0
          %1853 = vmatpush1.bf16.msra.mxu0 0
          %1854 = vmatprep.mubr.bf16.mxu0 0
          %1855 = vmatmul.mubr.bf16.gmra.mrb[0].mxu0 %v1634
          %v1856 = vpop.f32.mrb[0].mxu0
          %v1857 = vadd.f32 %v1817, %v1856
          %v1858 = vpop.f32.mrb[0].mxu0
          %v1859 = vpop.f32.mrb[0].mxu0
          %v1860 = vpop.f32.mrb[0].mxu0
          %1861 = vdwg.mxu0
          %v1862 = vadd.f32 %v1565, %v1857
        $region65: #{pos_emb_forward.1} parent=31 // loop_footer
          %s1564 = sadd.s32 1, %s1560
        $region66: #{pos_emb_forward.1} parent=31 // loop_footer_branch
          %1559 = sbr.rel target = $region62
        $region67: #{pos_emb_forward.1} parent=31 // loop_exit
          _
        %s1863 = scalar_lea.vmem %s2, 4
        %v1864 = vld [vmem:[%s1863] sm:$0x1]
        %v1866 = vlaneseq
        %v1867 = vshrl.u32 %v1866, 7
        %v1868 = vsub.s32 0, %v1867
        %v1869 = vrot.slane %v1864, %v1868
        %v1871 = vadd.f32 %v1565, %v1869
        %v1872 = vmul.f32 %v1871, 0.70710677
        %vm1873 = vcmp.ge.f32.partialorder %v1872, 0.0
        %v1874 = vsel %vm1873, 1.0, -1.0
        %v1875 = vand.u32 2147483647, %v1872
        %v1876 = vmul.f32 %v1875, 0.3275911
        %v1877 = vadd.f32 %v1876, 1.0
        %v1878 = vrcp.pop %v1877
        %v1879 = vmul.f32 %v1878, 1.0614054
        %v1880 = vadd.f32 %v1879, -1.4531521
        %v1881 = vmul.f32 %v1880, %v1878
        %v1882 = vadd.f32 %v1881, 1.4214138
        %v1883 = vmul.f32 %v1882, %v1878
        %v1884 = vadd.f32 %v1883, -0.28449672
        %v1885 = vmul.f32 %v1884, %v1878
        %v1886 = vadd.f32 %v1885, 0.2548296
        %v1887 = vmul.f32 %v1886, %v1878
        %v1888 = vsub.f32 0.0, %v1875
        %v1889 = vmul.f32 %v1888, %v1875
        %v1890 = vmul.f32 %v1889, 1.442695
        %v1891 = vpow.pop %v1890
        %v1892 = vmul.f32 %v1887, %v1891
        %v1893 = vsub.f32 1.0, %v1892
        %v1894 = vmul.f32 %v1874, %v1893
        %v1895 = vmul.f32 %v1871, 0.5
        %v1896 = vadd.f32 %v1894, 1.0
        %v1897 = vmul.f32 %v1895, %v1896
        %1899 = vrot.lane.b32.xlu0 %v1897, 64
        %v1900 = vpop.permute.xlu0 %1899
        %vm1902 = vcmask 916992
        %1903 = vst.msk [vmem:[%s177 + $0x8] sm:$0xff] %vm1902, %v1900
        loop: start=0, step=1, limit=16
        $region68: #{pos_emb_forward.1} parent=31 // loop_pre_header
          _
        $region69: #{pos_emb_forward.1} parent=31 // loop_header
          %s1905 = sphi 0, %s1909
          %p1906 = scmp.ge.s32.totalorder %s1905, 16
          %v1910 = vphi 0.0, %v2207
        $region70: #{pos_emb_forward.1} parent=31 // loop_header_branch
          %1908 = sbr.rel (%p1906) target = $region74
        $region71: #{pos_emb_forward.1} parent=31 // loop_body
          %s1911 = smul.u32 %s1905, 8
          %s1912 = sshra.s32 %s1911, 3
          %s1913 = sand.u32 %s1911, 7
          %s1914 = smul.u32 %s1912, 3
          %s1915 = sadd.s32 %s1914, 255
          %s1916 = smul.addr %s1915, 4
          %s1917 = scalar_lea.vmem %s182, %s1916
          %v1918 = vld [vmem:[%s1917] sm:$0xff]
          %v1919 = vld [vmem:[%s1917 + $0x8] sm:$0xf]
          %s1920 = smul.u32 %s1905, 48
          %s1921 = sadd.s32 %s1920, 3840
          %s1922 = smul.addr %s1921, 4
          %s1923 = scalar_lea.vmem %s1, %s1922
          %v1924 = vld [vmem:[%s1923] sm:$0xf]
          %v1925 = vld [vmem:[%s1923 + $0x4] sm:$0xf]
          %v1926 = vld [vmem:[%s1923 + $0x8] sm:$0xf]
          %v1927 = vld [vmem:[%s1923 + $0xc] sm:$0xf]
          %v1928 = vld [vmem:[%s1923 + $0x10] sm:$0xf]
          %v1929 = vld [vmem:[%s1923 + $0x14] sm:$0xf]
          %v1930 = vld [vmem:[%s1923 + $0x18] sm:$0xf]
          %v1931 = vld [vmem:[%s1923 + $0x1c] sm:$0xf]
          %v1932 = vld [vmem:[%s1923 + $0x20] sm:$0xf]
          %v1933 = vld [vmem:[%s1923 + $0x24] sm:$0xf]
          %v1934 = vld [vmem:[%s1923 + $0x28] sm:$0xf]
          %v1935 = vld [vmem:[%s1923 + $0x2c] sm:$0xf]
          %v1936 = vld [vmem:[%s1923 + $0x30] sm:$0xf]
          %v1937 = vld [vmem:[%s1923 + $0x34] sm:$0xf]
          %v1938 = vld [vmem:[%s1923 + $0x38] sm:$0xf]
          %v1939 = vld [vmem:[%s1923 + $0x3c] sm:$0xf]
          %v1940 = vld [vmem:[%s1923 + $0x40] sm:$0xf]
          %v1941 = vld [vmem:[%s1923 + $0x44] sm:$0xf]
          %v1942 = vld [vmem:[%s1923 + $0x48] sm:$0xf]
          %v1943 = vld [vmem:[%s1923 + $0x4c] sm:$0xf]
          %v1944 = vld [vmem:[%s1923 + $0x50] sm:$0xf]
          %v1945 = vld [vmem:[%s1923 + $0x54] sm:$0xf]
          %v1946 = vld [vmem:[%s1923 + $0x58] sm:$0xf]
          %v1947 = vld [vmem:[%s1923 + $0x5c] sm:$0xf]
          %v1948 = vld [vmem:[%s1923 + $0x60] sm:$0xf]
          %v1949 = vld [vmem:[%s1923 + $0x64] sm:$0xf]
          %v1950 = vld [vmem:[%s1923 + $0x68] sm:$0xf]
          %v1951 = vld [vmem:[%s1923 + $0x6c] sm:$0xf]
          %v1952 = vld [vmem:[%s1923 + $0x70] sm:$0xf]
          %v1953 = vld [vmem:[%s1923 + $0x74] sm:$0xf]
          %v1954 = vld [vmem:[%s1923 + $0x78] sm:$0xf]
          %v1955 = vld [vmem:[%s1923 + $0x7c] sm:$0xf]
          %v1956 = vld [vmem:[%s1923 + $0x80] sm:$0xf]
          %v1957 = vld [vmem:[%s1923 + $0x84] sm:$0xf]
          %v1958 = vld [vmem:[%s1923 + $0x88] sm:$0xf]
          %v1959 = vld [vmem:[%s1923 + $0x8c] sm:$0xf]
          %v1960 = vld [vmem:[%s1923 + $0x90] sm:$0xf]
          %v1961 = vld [vmem:[%s1923 + $0x94] sm:$0xf]
          %v1962 = vld [vmem:[%s1923 + $0x98] sm:$0xf]
          %v1963 = vld [vmem:[%s1923 + $0x9c] sm:$0xf]
          %v1964 = vld [vmem:[%s1923 + $0xa0] sm:$0xf]
          %v1965 = vld [vmem:[%s1923 + $0xa4] sm:$0xf]
          %v1966 = vld [vmem:[%s1923 + $0xa8] sm:$0xf]
          %v1967 = vld [vmem:[%s1923 + $0xac] sm:$0xf]
          %v1968 = vld [vmem:[%s1923 + $0xb0] sm:$0xf]
          %v1969 = vld [vmem:[%s1923 + $0xb4] sm:$0xf]
          %v1970 = vld [vmem:[%s1923 + $0xb8] sm:$0xf]
          %v1971 = vld [vmem:[%s1923 + $0xbc] sm:$0xf]
          %v1974 = vunpack.c.l.b16 %v1918
          %v1975 = vunpack.c.h.b16 %v1918
          %v1976 = vunpack.c.l.b16 %v1919
          %v1977 = vpack.c.b16 %v1974, %v1974
          %v1978 = vpack.c.b16 %v1975, %v1975
          %v1979 = vpack.c.b16 %v1976, %v1976
          %v2031 = vunpack.c.l.b16 %v1924
          %v2032 = vunpack.c.l.b16 %v1925
          %v2033 = vunpack.c.l.b16 %v1926
          %v2034 = vunpack.c.l.b16 %v1927
          %v2035 = vunpack.c.l.b16 %v1928
          %v2036 = vunpack.c.l.b16 %v1929
          %v2037 = vunpack.c.l.b16 %v1930
          %v2038 = vunpack.c.l.b16 %v1931
          %v2039 = vunpack.c.l.b16 %v1932
          %v2040 = vunpack.c.l.b16 %v1933
          %v2041 = vunpack.c.l.b16 %v1934
          %v2042 = vunpack.c.l.b16 %v1935
          %v2043 = vunpack.c.l.b16 %v1936
          %v2044 = vunpack.c.l.b16 %v1937
          %v2045 = vunpack.c.l.b16 %v1938
          %v2046 = vunpack.c.l.b16 %v1939
          %v2047 = vunpack.c.l.b16 %v1940
          %v2048 = vunpack.c.l.b16 %v1941
          %v2049 = vunpack.c.l.b16 %v1942
          %v2050 = vunpack.c.l.b16 %v1943
          %v2051 = vunpack.c.l.b16 %v1944
          %v2052 = vunpack.c.l.b16 %v1945
          %v2053 = vunpack.c.l.b16 %v1946
          %v2054 = vunpack.c.l.b16 %v1947
          %v2055 = vunpack.c.l.b16 %v1948
          %v2056 = vunpack.c.l.b16 %v1949
          %v2057 = vunpack.c.l.b16 %v1950
          %v2058 = vunpack.c.l.b16 %v1951
          %v2059 = vunpack.c.l.b16 %v1952
          %v2060 = vunpack.c.l.b16 %v1953
          %v2061 = vunpack.c.l.b16 %v1954
          %v2062 = vunpack.c.l.b16 %v1955
          %v2063 = vunpack.c.l.b16 %v1956
          %v2064 = vunpack.c.l.b16 %v1957
          %v2065 = vunpack.c.l.b16 %v1958
          %v2066 = vunpack.c.l.b16 %v1959
          %v2067 = vunpack.c.l.b16 %v1960
          %v2068 = vunpack.c.l.b16 %v1961
          %v2069 = vunpack.c.l.b16 %v1962
          %v2070 = vunpack.c.l.b16 %v1963
          %v2071 = vunpack.c.l.b16 %v1964
          %v2072 = vunpack.c.l.b16 %v1965
          %v2073 = vunpack.c.l.b16 %v1966
          %v2074 = vunpack.c.l.b16 %v1967
          %v2075 = vunpack.c.l.b16 %v1968
          %v2076 = vunpack.c.l.b16 %v1969
          %v2077 = vunpack.c.l.b16 %v1970
          %v2078 = vunpack.c.l.b16 %v1971
          %v2079 = vpack.c.b16 %v2032, %v2031
          %v2080 = vpack.c.b16 %v2034, %v2033
          %v2081 = vpack.c.b16 %v2036, %v2035
          %v2082 = vpack.c.b16 %v2038, %v2037
          %v2083 = vpack.c.b16 %v2040, %v2039
          %v2084 = vpack.c.b16 %v2042, %v2041
          %v2085 = vpack.c.b16 %v2044, %v2043
          %v2086 = vpack.c.b16 %v2046, %v2045
          %v2087 = vpack.c.b16 %v2048, %v2047
          %v2088 = vpack.c.b16 %v2050, %v2049
          %v2089 = vpack.c.b16 %v2052, %v2051
          %v2090 = vpack.c.b16 %v2054, %v2053
          %v2091 = vpack.c.b16 %v2056, %v2055
          %v2092 = vpack.c.b16 %v2058, %v2057
          %v2093 = vpack.c.b16 %v2060, %v2059
          %v2094 = vpack.c.b16 %v2062, %v2061
          %v2095 = vpack.c.b16 %v2064, %v2063
          %v2096 = vpack.c.b16 %v2066, %v2065
          %v2097 = vpack.c.b16 %v2068, %v2067
          %v2098 = vpack.c.b16 %v2070, %v2069
          %v2099 = vpack.c.b16 %v2072, %v2071
          %v2100 = vpack.c.b16 %v2074, %v2073
          %v2101 = vpack.c.b16 %v2076, %v2075
          %v2102 = vpack.c.b16 %v2078, %v2077
          %2127 = vmatprep.subr.bf16.mxu0 0
          %2128 = vmatpush1.bf16.msra.mxu0 %v2079
          %2129 = vmatprep.subr.bf16.mxu0 0
          %2130 = vmatpush1.bf16.msra.mxu0 %v2080
          %2131 = vmatprep.subr.bf16.mxu0 0
          %2132 = vmatpush1.bf16.msra.mxu0 %v2081
          %2133 = vmatprep.subr.bf16.mxu0 0
          %2134 = vmatpush1.bf16.msra.mxu0 %v2082
          %2135 = vmatprep.subr.bf16.mxu0 0
          %2136 = vmatpush1.bf16.msra.mxu0 %v2083
          %2137 = vmatprep.subr.bf16.mxu0 0
          %2138 = vmatpush1.bf16.msra.mxu0 %v2084
          %2139 = vmatprep.subr.bf16.mxu0 0
          %2140 = vmatpush1.bf16.msra.mxu0 %v2085
          %2141 = vmatprep.subr.bf16.mxu0 0
          %2142 = vmatpush1.bf16.msra.mxu0 %v2086
          %2143 = vmatprep.subr.bf16.mxu0 0
          %2144 = vmatpush1.bf16.msra.mxu0 %v2087
          %2145 = vmatprep.subr.bf16.mxu0 0
          %2146 = vmatpush1.bf16.msra.mxu0 %v2088
          %2147 = vmatprep.subr.bf16.mxu0 0
          %2148 = vmatpush1.bf16.msra.mxu0 %v2089
          %2149 = vmatprep.subr.bf16.mxu0 0
          %2150 = vmatpush1.bf16.msra.mxu0 %v2090
          %2151 = vmatprep.subr.bf16.mxu0 0
          %2152 = vmatpush1.bf16.msra.mxu0 %v2091
          %2153 = vmatprep.subr.bf16.mxu0 0
          %2154 = vmatpush1.bf16.msra.mxu0 %v2092
          %2155 = vmatprep.subr.bf16.mxu0 0
          %2156 = vmatpush1.bf16.msra.mxu0 %v2093
          %2157 = vmatprep.subr.bf16.mxu0 0
          %2158 = vmatpush1.bf16.msra.mxu0 %v2094
          %2159 = vmatprep.mubr.bf16.mxu0 %v1978
          %2160 = vmatmul.mubr.bf16.gmra.mrb[0].mxu0 %v1977
          %v2161 = vpop.f32.mrb[0].mxu0
          %v2162 = vadd.f32 0.0, %v2161
          %v2163 = vpop.f32.mrb[0].mxu0
          %v2164 = vpop.f32.mrb[0].mxu0
          %v2165 = vpop.f32.mrb[0].mxu0
          %2166 = vdwg.mxu0
          %2167 = vmatprep.subr.bf16.mxu0 0
          %2168 = vmatpush1.bf16.msra.mxu0 %v2095
          %2169 = vmatprep.subr.bf16.mxu0 0
          %2170 = vmatpush1.bf16.msra.mxu0 %v2096
          %2171 = vmatprep.subr.bf16.mxu0 0
          %2172 = vmatpush1.bf16.msra.mxu0 %v2097
          %2173 = vmatprep.subr.bf16.mxu0 0
          %2174 = vmatpush1.bf16.msra.mxu0 %v2098
          %2175 = vmatprep.subr.bf16.mxu0 0
          %2176 = vmatpush1.bf16.msra.mxu0 %v2099
          %2177 = vmatprep.subr.bf16.mxu0 0
          %2178 = vmatpush1.bf16.msra.mxu0 %v2100
          %2179 = vmatprep.subr.bf16.mxu0 0
          %2180 = vmatpush1.bf16.msra.mxu0 %v2101
          %2181 = vmatprep.subr.bf16.mxu0 0
          %2182 = vmatpush1.bf16.msra.mxu0 %v2102
          %2183 = vmatprep.subr.bf16.mxu0 0
          %2184 = vmatpush1.bf16.msra.mxu0 0
          %2185 = vmatprep.subr.bf16.mxu0 0
          %2186 = vmatpush1.bf16.msra.mxu0 0
          %2187 = vmatprep.subr.bf16.mxu0 0
          %2188 = vmatpush1.bf16.msra.mxu0 0
          %2189 = vmatprep.subr.bf16.mxu0 0
          %2190 = vmatpush1.bf16.msra.mxu0 0
          %2191 = vmatprep.subr.bf16.mxu0 0
          %2192 = vmatpush1.bf16.msra.mxu0 0
          %2193 = vmatprep.subr.bf16.mxu0 0
          %2194 = vmatpush1.bf16.msra.mxu0 0
          %2195 = vmatprep.subr.bf16.mxu0 0
          %2196 = vmatpush1.bf16.msra.mxu0 0
          %2197 = vmatprep.subr.bf16.mxu0 0
          %2198 = vmatpush1.bf16.msra.mxu0 0
          %2199 = vmatprep.mubr.bf16.mxu0 0
          %2200 = vmatmul.mubr.bf16.gmra.mrb[0].mxu0 %v1979
          %v2201 = vpop.f32.mrb[0].mxu0
          %v2202 = vadd.f32 %v2162, %v2201
          %v2203 = vpop.f32.mrb[0].mxu0
          %v2204 = vpop.f32.mrb[0].mxu0
          %v2205 = vpop.f32.mrb[0].mxu0
          %2206 = vdwg.mxu0
          %v2207 = vadd.f32 %v1910, %v2202
        $region72: #{pos_emb_forward.1} parent=31 // loop_footer
          %s1909 = sadd.s32 1, %s1905
        $region73: #{pos_emb_forward.1} parent=31 // loop_footer_branch
          %1904 = sbr.rel target = $region69
        $region74: #{pos_emb_forward.1} parent=31 // loop_exit
          _
        %s2208 = scalar_lea.vmem %s2, 5
        %v2209 = vld [vmem:[%s2208] sm:$0x1]
        %v2211 = vlaneseq
        %v2212 = vshrl.u32 %v2211, 7
        %v2213 = vsub.s32 0, %v2212
        %v2214 = vrot.slane %v2209, %v2213
        %v2216 = vadd.f32 %v1910, %v2214
        %v2217 = vmul.f32 %v2216, 0.70710677
        %vm2218 = vcmp.ge.f32.partialorder %v2217, 0.0
        %v2219 = vsel %vm2218, 1.0, -1.0
        %v2220 = vand.u32 2147483647, %v2217
        %v2221 = vmul.f32 %v2220, 0.3275911
        %v2222 = vadd.f32 %v2221, 1.0
        %v2223 = vrcp.pop %v2222
        %v2224 = vmul.f32 %v2223, 1.0614054
        %v2225 = vadd.f32 %v2224, -1.4531521
        %v2226 = vmul.f32 %v2225, %v2223
        %v2227 = vadd.f32 %v2226, 1.4214138
        %v2228 = vmul.f32 %v2227, %v2223
        %v2229 = vadd.f32 %v2228, -0.28449672
        %v2230 = vmul.f32 %v2229, %v2223
        %v2231 = vadd.f32 %v2230, 0.2548296
        %v2232 = vmul.f32 %v2231, %v2223
        %v2233 = vsub.f32 0.0, %v2220
        %v2234 = vmul.f32 %v2233, %v2220
        %v2235 = vmul.f32 %v2234, 1.442695
        %v2236 = vpow.pop %v2235
        %v2237 = vmul.f32 %v2232, %v2236
        %v2238 = vsub.f32 1.0, %v2237
        %v2239 = vmul.f32 %v2219, %v2238
        %v2240 = vmul.f32 %v2216, 0.5
        %v2241 = vadd.f32 %v2239, 1.0
        %v2242 = vmul.f32 %v2240, %v2241
        %2244 = vrot.lane.b32.xlu0 %v2242, 112
        %v2245 = vpop.permute.xlu0 %2244
        %vm2247 = vcmask 1048448
        %2248 = vst.msk [vmem:[%s177 + $0x8] sm:$0xff] %vm2247, %v2245
        %vm2249 = vcmask 261120
        %2250 = vst.msk [vmem:[%s177 + $0x10] sm:$0xff] %vm2249, %v2245
        loop: start=0, step=1, limit=16
        $region75: #{pos_emb_forward.1} parent=31 // loop_pre_header
          _
        $region76: #{pos_emb_forward.1} parent=31 // loop_header
          %s2252 = sphi 0, %s2256
          %p2253 = scmp.ge.s32.totalorder %s2252, 16
          %v2257 = vphi 0.0, %v2554
        $region77: #{pos_emb_forward.1} parent=31 // loop_header_branch
          %2255 = sbr.rel (%p2253) target = $region81
        $region78: #{pos_emb_forward.1} parent=31 // loop_body
          %s2258 = smul.u32 %s2252, 8
          %s2259 = sshra.s32 %s2258, 3
          %s2260 = sand.u32 %s2258, 7
          %s2261 = smul.u32 %s2259, 3
          %s2262 = sadd.s32 %s2261, 306
          %s2263 = smul.addr %s2262, 4
          %s2264 = scalar_lea.vmem %s182, %s2263
          %v2265 = vld [vmem:[%s2264] sm:$0xff]
          %v2266 = vld [vmem:[%s2264 + $0x8] sm:$0xf]
          %s2267 = smul.u32 %s2252, 48
          %s2268 = sadd.s32 %s2267, 4608
          %s2269 = smul.addr %s2268, 4
          %s2270 = scalar_lea.vmem %s1, %s2269
          %v2271 = vld [vmem:[%s2270] sm:$0xf]
          %v2272 = vld [vmem:[%s2270 + $0x4] sm:$0xf]
          %v2273 = vld [vmem:[%s2270 + $0x8] sm:$0xf]
          %v2274 = vld [vmem:[%s2270 + $0xc] sm:$0xf]
          %v2275 = vld [vmem:[%s2270 + $0x10] sm:$0xf]
          %v2276 = vld [vmem:[%s2270 + $0x14] sm:$0xf]
          %v2277 = vld [vmem:[%s2270 + $0x18] sm:$0xf]
          %v2278 = vld [vmem:[%s2270 + $0x1c] sm:$0xf]
          %v2279 = vld [vmem:[%s2270 + $0x20] sm:$0xf]
          %v2280 = vld [vmem:[%s2270 + $0x24] sm:$0xf]
          %v2281 = vld [vmem:[%s2270 + $0x28] sm:$0xf]
          %v2282 = vld [vmem:[%s2270 + $0x2c] sm:$0xf]
          %v2283 = vld [vmem:[%s2270 + $0x30] sm:$0xf]
          %v2284 = vld [vmem:[%s2270 + $0x34] sm:$0xf]
          %v2285 = vld [vmem:[%s2270 + $0x38] sm:$0xf]
          %v2286 = vld [vmem:[%s2270 + $0x3c] sm:$0xf]
          %v2287 = vld [vmem:[%s2270 + $0x40] sm:$0xf]
          %v2288 = vld [vmem:[%s2270 + $0x44] sm:$0xf]
          %v2289 = vld [vmem:[%s2270 + $0x48] sm:$0xf]
          %v2290 = vld [vmem:[%s2270 + $0x4c] sm:$0xf]
          %v2291 = vld [vmem:[%s2270 + $0x50] sm:$0xf]
          %v2292 = vld [vmem:[%s2270 + $0x54] sm:$0xf]
          %v2293 = vld [vmem:[%s2270 + $0x58] sm:$0xf]
          %v2294 = vld [vmem:[%s2270 + $0x5c] sm:$0xf]
          %v2295 = vld [vmem:[%s2270 + $0x60] sm:$0xf]
          %v2296 = vld [vmem:[%s2270 + $0x64] sm:$0xf]
          %v2297 = vld [vmem:[%s2270 + $0x68] sm:$0xf]
          %v2298 = vld [vmem:[%s2270 + $0x6c] sm:$0xf]
          %v2299 = vld [vmem:[%s2270 + $0x70] sm:$0xf]
          %v2300 = vld [vmem:[%s2270 + $0x74] sm:$0xf]
          %v2301 = vld [vmem:[%s2270 + $0x78] sm:$0xf]
          %v2302 = vld [vmem:[%s2270 + $0x7c] sm:$0xf]
          %v2303 = vld [vmem:[%s2270 + $0x80] sm:$0xf]
          %v2304 = vld [vmem:[%s2270 + $0x84] sm:$0xf]
          %v2305 = vld [vmem:[%s2270 + $0x88] sm:$0xf]
          %v2306 = vld [vmem:[%s2270 + $0x8c] sm:$0xf]
          %v2307 = vld [vmem:[%s2270 + $0x90] sm:$0xf]
          %v2308 = vld [vmem:[%s2270 + $0x94] sm:$0xf]
          %v2309 = vld [vmem:[%s2270 + $0x98] sm:$0xf]
          %v2310 = vld [vmem:[%s2270 + $0x9c] sm:$0xf]
          %v2311 = vld [vmem:[%s2270 + $0xa0] sm:$0xf]
          %v2312 = vld [vmem:[%s2270 + $0xa4] sm:$0xf]
          %v2313 = vld [vmem:[%s2270 + $0xa8] sm:$0xf]
          %v2314 = vld [vmem:[%s2270 + $0xac] sm:$0xf]
          %v2315 = vld [vmem:[%s2270 + $0xb0] sm:$0xf]
          %v2316 = vld [vmem:[%s2270 + $0xb4] sm:$0xf]
          %v2317 = vld [vmem:[%s2270 + $0xb8] sm:$0xf]
          %v2318 = vld [vmem:[%s2270 + $0xbc] sm:$0xf]
          %v2321 = vunpack.c.l.b16 %v2265
          %v2322 = vunpack.c.h.b16 %v2265
          %v2323 = vunpack.c.l.b16 %v2266
          %v2324 = vpack.c.b16 %v2321, %v2321
          %v2325 = vpack.c.b16 %v2322, %v2322
          %v2326 = vpack.c.b16 %v2323, %v2323
          %v2378 = vunpack.c.l.b16 %v2271
          %v2379 = vunpack.c.l.b16 %v2272
          %v2380 = vunpack.c.l.b16 %v2273
          %v2381 = vunpack.c.l.b16 %v2274
          %v2382 = vunpack.c.l.b16 %v2275
          %v2383 = vunpack.c.l.b16 %v2276
          %v2384 = vunpack.c.l.b16 %v2277
          %v2385 = vunpack.c.l.b16 %v2278
          %v2386 = vunpack.c.l.b16 %v2279
          %v2387 = vunpack.c.l.b16 %v2280
          %v2388 = vunpack.c.l.b16 %v2281
          %v2389 = vunpack.c.l.b16 %v2282
          %v2390 = vunpack.c.l.b16 %v2283
          %v2391 = vunpack.c.l.b16 %v2284
          %v2392 = vunpack.c.l.b16 %v2285
          %v2393 = vunpack.c.l.b16 %v2286
          %v2394 = vunpack.c.l.b16 %v2287
          %v2395 = vunpack.c.l.b16 %v2288
          %v2396 = vunpack.c.l.b16 %v2289
          %v2397 = vunpack.c.l.b16 %v2290
          %v2398 = vunpack.c.l.b16 %v2291
          %v2399 = vunpack.c.l.b16 %v2292
          %v2400 = vunpack.c.l.b16 %v2293
          %v2401 = vunpack.c.l.b16 %v2294
          %v2402 = vunpack.c.l.b16 %v2295
          %v2403 = vunpack.c.l.b16 %v2296
          %v2404 = vunpack.c.l.b16 %v2297
          %v2405 = vunpack.c.l.b16 %v2298
          %v2406 = vunpack.c.l.b16 %v2299
          %v2407 = vunpack.c.l.b16 %v2300
          %v2408 = vunpack.c.l.b16 %v2301
          %v2409 = vunpack.c.l.b16 %v2302
          %v2410 = vunpack.c.l.b16 %v2303
          %v2411 = vunpack.c.l.b16 %v2304
          %v2412 = vunpack.c.l.b16 %v2305
          %v2413 = vunpack.c.l.b16 %v2306
          %v2414 = vunpack.c.l.b16 %v2307
          %v2415 = vunpack.c.l.b16 %v2308
          %v2416 = vunpack.c.l.b16 %v2309
          %v2417 = vunpack.c.l.b16 %v2310
          %v2418 = vunpack.c.l.b16 %v2311
          %v2419 = vunpack.c.l.b16 %v2312
          %v2420 = vunpack.c.l.b16 %v2313
          %v2421 = vunpack.c.l.b16 %v2314
          %v2422 = vunpack.c.l.b16 %v2315
          %v2423 = vunpack.c.l.b16 %v2316
          %v2424 = vunpack.c.l.b16 %v2317
          %v2425 = vunpack.c.l.b16 %v2318
          %v2426 = vpack.c.b16 %v2379, %v2378
          %v2427 = vpack.c.b16 %v2381, %v2380
          %v2428 = vpack.c.b16 %v2383, %v2382
          %v2429 = vpack.c.b16 %v2385, %v2384
          %v2430 = vpack.c.b16 %v2387, %v2386
          %v2431 = vpack.c.b16 %v2389, %v2388
          %v2432 = vpack.c.b16 %v2391, %v2390
          %v2433 = vpack.c.b16 %v2393, %v2392
          %v2434 = vpack.c.b16 %v2395, %v2394
          %v2435 = vpack.c.b16 %v2397, %v2396
          %v2436 = vpack.c.b16 %v2399, %v2398
          %v2437 = vpack.c.b16 %v2401, %v2400
          %v2438 = vpack.c.b16 %v2403, %v2402
          %v2439 = vpack.c.b16 %v2405, %v2404
          %v2440 = vpack.c.b16 %v2407, %v2406
          %v2441 = vpack.c.b16 %v2409, %v2408
          %v2442 = vpack.c.b16 %v2411, %v2410
          %v2443 = vpack.c.b16 %v2413, %v2412
          %v2444 = vpack.c.b16 %v2415, %v2414
          %v2445 = vpack.c.b16 %v2417, %v2416
          %v2446 = vpack.c.b16 %v2419, %v2418
          %v2447 = vpack.c.b16 %v2421, %v2420
          %v2448 = vpack.c.b16 %v2423, %v2422
          %v2449 = vpack.c.b16 %v2425, %v2424
          %2474 = vmatprep.subr.bf16.mxu0 0
          %2475 = vmatpush1.bf16.msra.mxu0 %v2426
          %2476 = vmatprep.subr.bf16.mxu0 0
          %2477 = vmatpush1.bf16.msra.mxu0 %v2427
          %2478 = vmatprep.subr.bf16.mxu0 0
          %2479 = vmatpush1.bf16.msra.mxu0 %v2428
          %2480 = vmatprep.subr.bf16.mxu0 0
          %2481 = vmatpush1.bf16.msra.mxu0 %v2429
          %2482 = vmatprep.subr.bf16.mxu0 0
          %2483 = vmatpush1.bf16.msra.mxu0 %v2430
          %2484 = vmatprep.subr.bf16.mxu0 0
          %2485 = vmatpush1.bf16.msra.mxu0 %v2431
          %2486 = vmatprep.subr.bf16.mxu0 0
          %2487 = vmatpush1.bf16.msra.mxu0 %v2432
          %2488 = vmatprep.subr.bf16.mxu0 0
          %2489 = vmatpush1.bf16.msra.mxu0 %v2433
          %2490 = vmatprep.subr.bf16.mxu0 0
          %2491 = vmatpush1.bf16.msra.mxu0 %v2434
          %2492 = vmatprep.subr.bf16.mxu0 0
          %2493 = vmatpush1.bf16.msra.mxu0 %v2435
          %2494 = vmatprep.subr.bf16.mxu0 0
          %2495 = vmatpush1.bf16.msra.mxu0 %v2436
          %2496 = vmatprep.subr.bf16.mxu0 0
          %2497 = vmatpush1.bf16.msra.mxu0 %v2437
          %2498 = vmatprep.subr.bf16.mxu0 0
          %2499 = vmatpush1.bf16.msra.mxu0 %v2438
          %2500 = vmatprep.subr.bf16.mxu0 0
          %2501 = vmatpush1.bf16.msra.mxu0 %v2439
          %2502 = vmatprep.subr.bf16.mxu0 0
          %2503 = vmatpush1.bf16.msra.mxu0 %v2440
          %2504 = vmatprep.subr.bf16.mxu0 0
          %2505 = vmatpush1.bf16.msra.mxu0 %v2441
          %2506 = vmatprep.mubr.bf16.mxu0 %v2325
          %2507 = vmatmul.mubr.bf16.gmra.mrb[0].mxu0 %v2324
          %v2508 = vpop.f32.mrb[0].mxu0
          %v2509 = vadd.f32 0.0, %v2508
          %v2510 = vpop.f32.mrb[0].mxu0
          %v2511 = vpop.f32.mrb[0].mxu0
          %v2512 = vpop.f32.mrb[0].mxu0
          %2513 = vdwg.mxu0
          %2514 = vmatprep.subr.bf16.mxu0 0
          %2515 = vmatpush1.bf16.msra.mxu0 %v2442
          %2516 = vmatprep.subr.bf16.mxu0 0
          %2517 = vmatpush1.bf16.msra.mxu0 %v2443
          %2518 = vmatprep.subr.bf16.mxu0 0
          %2519 = vmatpush1.bf16.msra.mxu0 %v2444
          %2520 = vmatprep.subr.bf16.mxu0 0
          %2521 = vmatpush1.bf16.msra.mxu0 %v2445
          %2522 = vmatprep.subr.bf16.mxu0 0
          %2523 = vmatpush1.bf16.msra.mxu0 %v2446
          %2524 = vmatprep.subr.bf16.mxu0 0
          %2525 = vmatpush1.bf16.msra.mxu0 %v2447
          %2526 = vmatprep.subr.bf16.mxu0 0
          %2527 = vmatpush1.bf16.msra.mxu0 %v2448
          %2528 = vmatprep.subr.bf16.mxu0 0
          %2529 = vmatpush1.bf16.msra.mxu0 %v2449
          %2530 = vmatprep.subr.bf16.mxu0 0
          %2531 = vmatpush1.bf16.msra.mxu0 0
          %2532 = vmatprep.subr.bf16.mxu0 0
          %2533 = vmatpush1.bf16.msra.mxu0 0
          %2534 = vmatprep.subr.bf16.mxu0 0
          %2535 = vmatpush1.bf16.msra.mxu0 0
          %2536 = vmatprep.subr.bf16.mxu0 0
          %2537 = vmatpush1.bf16.msra.mxu0 0
          %2538 = vmatprep.subr.bf16.mxu0 0
          %2539 = vmatpush1.bf16.msra.mxu0 0
          %2540 = vmatprep.subr.bf16.mxu0 0
          %2541 = vmatpush1.bf16.msra.mxu0 0
          %2542 = vmatprep.subr.bf16.mxu0 0
          %2543 = vmatpush1.bf16.msra.mxu0 0
          %2544 = vmatprep.subr.bf16.mxu0 0
          %2545 = vmatpush1.bf16.msra.mxu0 0
          %2546 = vmatprep.mubr.bf16.mxu0 0
          %2547 = vmatmul.mubr.bf16.gmra.mrb[0].mxu0 %v2326
          %v2548 = vpop.f32.mrb[0].mxu0
          %v2549 = vadd.f32 %v2509, %v2548
          %v2550 = vpop.f32.mrb[0].mxu0
          %v2551 = vpop.f32.mrb[0].mxu0
          %v2552 = vpop.f32.mrb[0].mxu0
          %2553 = vdwg.mxu0
          %v2554 = vadd.f32 %v2257, %v2549
        $region79: #{pos_emb_forward.1} parent=31 // loop_footer
          %s2256 = sadd.s32 1, %s2252
        $region80: #{pos_emb_forward.1} parent=31 // loop_footer_branch
          %2251 = sbr.rel target = $region76
        $region81: #{pos_emb_forward.1} parent=31 // loop_exit
          _
        %s2555 = scalar_lea.vmem %s2, 6
        %v2556 = vld [vmem:[%s2555] sm:$0x1]
        %v2558 = vlaneseq
        %v2559 = vshrl.u32 %v2558, 7
        %v2560 = vsub.s32 0, %v2559
        %v2561 = vrot.slane %v2556, %v2560
        %v2563 = vadd.f32 %v2257, %v2561
        %v2564 = vmul.f32 %v2563, 0.70710677
        %vm2565 = vcmp.ge.f32.partialorder %v2564, 0.0
        %v2566 = vsel %vm2565, 1.0, -1.0
        %v2567 = vand.u32 2147483647, %v2564
        %v2568 = vmul.f32 %v2567, 0.3275911
        %v2569 = vadd.f32 %v2568, 1.0
        %v2570 = vrcp.pop %v2569
        %v2571 = vmul.f32 %v2570, 1.0614054
        %v2572 = vadd.f32 %v2571, -1.4531521
        %v2573 = vmul.f32 %v2572, %v2570
        %v2574 = vadd.f32 %v2573, 1.4214138
        %v2575 = vmul.f32 %v2574, %v2570
        %v2576 = vadd.f32 %v2575, -0.28449672
        %v2577 = vmul.f32 %v2576, %v2570
        %v2578 = vadd.f32 %v2577, 0.2548296
        %v2579 = vmul.f32 %v2578, %v2570
        %v2580 = vsub.f32 0.0, %v2567
        %v2581 = vmul.f32 %v2580, %v2567
        %v2582 = vmul.f32 %v2581, 1.442695
        %v2583 = vpow.pop %v2582
        %v2584 = vmul.f32 %v2579, %v2583
        %v2585 = vsub.f32 1.0, %v2584
        %v2586 = vmul.f32 %v2566, %v2585
        %v2587 = vmul.f32 %v2563, 0.5
        %v2588 = vadd.f32 %v2586, 1.0
        %v2589 = vmul.f32 %v2587, %v2588
        %2591 = vrot.lane.b32.xlu0 %v2589, 32
        %v2592 = vpop.permute.xlu0 %2591
        %vm2594 = vcmask 654592
        %2595 = vst.msk [vmem:[%s177 + $0x10] sm:$0xff] %vm2594, %v2592
        loop: start=0, step=1, limit=16
        $region82: #{pos_emb_forward.1} parent=31 // loop_pre_header
          _
        $region83: #{pos_emb_forward.1} parent=31 // loop_header
          %s2597 = sphi 0, %s2601
          %p2598 = scmp.ge.s32.totalorder %s2597, 16
          %v2602 = vphi 0.0, %v2899
        $region84: #{pos_emb_forward.1} parent=31 // loop_header_branch
          %2600 = sbr.rel (%p2598) target = $region88
        $region85: #{pos_emb_forward.1} parent=31 // loop_body
          %s2603 = smul.u32 %s2597, 8
          %s2604 = sshra.s32 %s2603, 3
          %s2605 = sand.u32 %s2603, 7
          %s2606 = smul.u32 %s2604, 3
          %s2607 = sadd.s32 %s2606, 357
          %s2608 = smul.addr %s2607, 4
          %s2609 = scalar_lea.vmem %s182, %s2608
          %v2610 = vld [vmem:[%s2609] sm:$0xff]
          %v2611 = vld [vmem:[%s2609 + $0x8] sm:$0xf]
          %s2612 = smul.u32 %s2597, 48
          %s2613 = sadd.s32 %s2612, 5376
          %s2614 = smul.addr %s2613, 4
          %s2615 = scalar_lea.vmem %s1, %s2614
          %v2616 = vld [vmem:[%s2615] sm:$0xf]
          %v2617 = vld [vmem:[%s2615 + $0x4] sm:$0xf]
          %v2618 = vld [vmem:[%s2615 + $0x8] sm:$0xf]
          %v2619 = vld [vmem:[%s2615 + $0xc] sm:$0xf]
          %v2620 = vld [vmem:[%s2615 + $0x10] sm:$0xf]
          %v2621 = vld [vmem:[%s2615 + $0x14] sm:$0xf]
          %v2622 = vld [vmem:[%s2615 + $0x18] sm:$0xf]
          %v2623 = vld [vmem:[%s2615 + $0x1c] sm:$0xf]
          %v2624 = vld [vmem:[%s2615 + $0x20] sm:$0xf]
          %v2625 = vld [vmem:[%s2615 + $0x24] sm:$0xf]
          %v2626 = vld [vmem:[%s2615 + $0x28] sm:$0xf]
          %v2627 = vld [vmem:[%s2615 + $0x2c] sm:$0xf]
          %v2628 = vld [vmem:[%s2615 + $0x30] sm:$0xf]
          %v2629 = vld [vmem:[%s2615 + $0x34] sm:$0xf]
          %v2630 = vld [vmem:[%s2615 + $0x38] sm:$0xf]
          %v2631 = vld [vmem:[%s2615 + $0x3c] sm:$0xf]
          %v2632 = vld [vmem:[%s2615 + $0x40] sm:$0xf]
          %v2633 = vld [vmem:[%s2615 + $0x44] sm:$0xf]
          %v2634 = vld [vmem:[%s2615 + $0x48] sm:$0xf]
          %v2635 = vld [vmem:[%s2615 + $0x4c] sm:$0xf]
          %v2636 = vld [vmem:[%s2615 + $0x50] sm:$0xf]
          %v2637 = vld [vmem:[%s2615 + $0x54] sm:$0xf]
          %v2638 = vld [vmem:[%s2615 + $0x58] sm:$0xf]
          %v2639 = vld [vmem:[%s2615 + $0x5c] sm:$0xf]
          %v2640 = vld [vmem:[%s2615 + $0x60] sm:$0xf]
          %v2641 = vld [vmem:[%s2615 + $0x64] sm:$0xf]
          %v2642 = vld [vmem:[%s2615 + $0x68] sm:$0xf]
          %v2643 = vld [vmem:[%s2615 + $0x6c] sm:$0xf]
          %v2644 = vld [vmem:[%s2615 + $0x70] sm:$0xf]
          %v2645 = vld [vmem:[%s2615 + $0x74] sm:$0xf]
          %v2646 = vld [vmem:[%s2615 + $0x78] sm:$0xf]
          %v2647 = vld [vmem:[%s2615 + $0x7c] sm:$0xf]
          %v2648 = vld [vmem:[%s2615 + $0x80] sm:$0xf]
          %v2649 = vld [vmem:[%s2615 + $0x84] sm:$0xf]
          %v2650 = vld [vmem:[%s2615 + $0x88] sm:$0xf]
          %v2651 = vld [vmem:[%s2615 + $0x8c] sm:$0xf]
          %v2652 = vld [vmem:[%s2615 + $0x90] sm:$0xf]
          %v2653 = vld [vmem:[%s2615 + $0x94] sm:$0xf]
          %v2654 = vld [vmem:[%s2615 + $0x98] sm:$0xf]
          %v2655 = vld [vmem:[%s2615 + $0x9c] sm:$0xf]
          %v2656 = vld [vmem:[%s2615 + $0xa0] sm:$0xf]
          %v2657 = vld [vmem:[%s2615 + $0xa4] sm:$0xf]
          %v2658 = vld [vmem:[%s2615 + $0xa8] sm:$0xf]
          %v2659 = vld [vmem:[%s2615 + $0xac] sm:$0xf]
          %v2660 = vld [vmem:[%s2615 + $0xb0] sm:$0xf]
          %v2661 = vld [vmem:[%s2615 + $0xb4] sm:$0xf]
          %v2662 = vld [vmem:[%s2615 + $0xb8] sm:$0xf]
          %v2663 = vld [vmem:[%s2615 + $0xbc] sm:$0xf]
          %v2666 = vunpack.c.l.b16 %v2610
          %v2667 = vunpack.c.h.b16 %v2610
          %v2668 = vunpack.c.l.b16 %v2611
          %v2669 = vpack.c.b16 %v2666, %v2666
          %v2670 = vpack.c.b16 %v2667, %v2667
          %v2671 = vpack.c.b16 %v2668, %v2668
          %v2723 = vunpack.c.l.b16 %v2616
          %v2724 = vunpack.c.l.b16 %v2617
          %v2725 = vunpack.c.l.b16 %v2618
          %v2726 = vunpack.c.l.b16 %v2619
          %v2727 = vunpack.c.l.b16 %v2620
          %v2728 = vunpack.c.l.b16 %v2621
          %v2729 = vunpack.c.l.b16 %v2622
          %v2730 = vunpack.c.l.b16 %v2623
          %v2731 = vunpack.c.l.b16 %v2624
          %v2732 = vunpack.c.l.b16 %v2625
          %v2733 = vunpack.c.l.b16 %v2626
          %v2734 = vunpack.c.l.b16 %v2627
          %v2735 = vunpack.c.l.b16 %v2628
          %v2736 = vunpack.c.l.b16 %v2629
          %v2737 = vunpack.c.l.b16 %v2630
          %v2738 = vunpack.c.l.b16 %v2631
          %v2739 = vunpack.c.l.b16 %v2632
          %v2740 = vunpack.c.l.b16 %v2633
          %v2741 = vunpack.c.l.b16 %v2634
          %v2742 = vunpack.c.l.b16 %v2635
          %v2743 = vunpack.c.l.b16 %v2636
          %v2744 = vunpack.c.l.b16 %v2637
          %v2745 = vunpack.c.l.b16 %v2638
          %v2746 = vunpack.c.l.b16 %v2639
          %v2747 = vunpack.c.l.b16 %v2640
          %v2748 = vunpack.c.l.b16 %v2641
          %v2749 = vunpack.c.l.b16 %v2642
          %v2750 = vunpack.c.l.b16 %v2643
          %v2751 = vunpack.c.l.b16 %v2644
          %v2752 = vunpack.c.l.b16 %v2645
          %v2753 = vunpack.c.l.b16 %v2646
          %v2754 = vunpack.c.l.b16 %v2647
          %v2755 = vunpack.c.l.b16 %v2648
          %v2756 = vunpack.c.l.b16 %v2649
          %v2757 = vunpack.c.l.b16 %v2650
          %v2758 = vunpack.c.l.b16 %v2651
          %v2759 = vunpack.c.l.b16 %v2652
          %v2760 = vunpack.c.l.b16 %v2653
          %v2761 = vunpack.c.l.b16 %v2654
          %v2762 = vunpack.c.l.b16 %v2655
          %v2763 = vunpack.c.l.b16 %v2656
          %v2764 = vunpack.c.l.b16 %v2657
          %v2765 = vunpack.c.l.b16 %v2658
          %v2766 = vunpack.c.l.b16 %v2659
          %v2767 = vunpack.c.l.b16 %v2660
          %v2768 = vunpack.c.l.b16 %v2661
          %v2769 = vunpack.c.l.b16 %v2662
          %v2770 = vunpack.c.l.b16 %v2663
          %v2771 = vpack.c.b16 %v2724, %v2723
          %v2772 = vpack.c.b16 %v2726, %v2725
          %v2773 = vpack.c.b16 %v2728, %v2727
          %v2774 = vpack.c.b16 %v2730, %v2729
          %v2775 = vpack.c.b16 %v2732, %v2731
          %v2776 = vpack.c.b16 %v2734, %v2733
          %v2777 = vpack.c.b16 %v2736, %v2735
          %v2778 = vpack.c.b16 %v2738, %v2737
          %v2779 = vpack.c.b16 %v2740, %v2739
          %v2780 = vpack.c.b16 %v2742, %v2741
          %v2781 = vpack.c.b16 %v2744, %v2743
          %v2782 = vpack.c.b16 %v2746, %v2745
          %v2783 = vpack.c.b16 %v2748, %v2747
          %v2784 = vpack.c.b16 %v2750, %v2749
          %v2785 = vpack.c.b16 %v2752, %v2751
          %v2786 = vpack.c.b16 %v2754, %v2753
          %v2787 = vpack.c.b16 %v2756, %v2755
          %v2788 = vpack.c.b16 %v2758, %v2757
          %v2789 = vpack.c.b16 %v2760, %v2759
          %v2790 = vpack.c.b16 %v2762, %v2761
          %v2791 = vpack.c.b16 %v2764, %v2763
          %v2792 = vpack.c.b16 %v2766, %v2765
          %v2793 = vpack.c.b16 %v2768, %v2767
          %v2794 = vpack.c.b16 %v2770, %v2769
          %2819 = vmatprep.subr.bf16.mxu0 0
          %2820 = vmatpush1.bf16.msra.mxu0 %v2771
          %2821 = vmatprep.subr.bf16.mxu0 0
          %2822 = vmatpush1.bf16.msra.mxu0 %v2772
          %2823 = vmatprep.subr.bf16.mxu0 0
          %2824 = vmatpush1.bf16.msra.mxu0 %v2773
          %2825 = vmatprep.subr.bf16.mxu0 0
          %2826 = vmatpush1.bf16.msra.mxu0 %v2774
          %2827 = vmatprep.subr.bf16.mxu0 0
          %2828 = vmatpush1.bf16.msra.mxu0 %v2775
          %2829 = vmatprep.subr.bf16.mxu0 0
          %2830 = vmatpush1.bf16.msra.mxu0 %v2776
          %2831 = vmatprep.subr.bf16.mxu0 0
          %2832 = vmatpush1.bf16.msra.mxu0 %v2777
          %2833 = vmatprep.subr.bf16.mxu0 0
          %2834 = vmatpush1.bf16.msra.mxu0 %v2778
          %2835 = vmatprep.subr.bf16.mxu0 0
          %2836 = vmatpush1.bf16.msra.mxu0 %v2779
          %2837 = vmatprep.subr.bf16.mxu0 0
          %2838 = vmatpush1.bf16.msra.mxu0 %v2780
          %2839 = vmatprep.subr.bf16.mxu0 0
          %2840 = vmatpush1.bf16.msra.mxu0 %v2781
          %2841 = vmatprep.subr.bf16.mxu0 0
          %2842 = vmatpush1.bf16.msra.mxu0 %v2782
          %2843 = vmatprep.subr.bf16.mxu0 0
          %2844 = vmatpush1.bf16.msra.mxu0 %v2783
          %2845 = vmatprep.subr.bf16.mxu0 0
          %2846 = vmatpush1.bf16.msra.mxu0 %v2784
          %2847 = vmatprep.subr.bf16.mxu0 0
          %2848 = vmatpush1.bf16.msra.mxu0 %v2785
          %2849 = vmatprep.subr.bf16.mxu0 0
          %2850 = vmatpush1.bf16.msra.mxu0 %v2786
          %2851 = vmatprep.mubr.bf16.mxu0 %v2670
          %2852 = vmatmul.mubr.bf16.gmra.mrb[0].mxu0 %v2669
          %v2853 = vpop.f32.mrb[0].mxu0
          %v2854 = vadd.f32 0.0, %v2853
          %v2855 = vpop.f32.mrb[0].mxu0
          %v2856 = vpop.f32.mrb[0].mxu0
          %v2857 = vpop.f32.mrb[0].mxu0
          %2858 = vdwg.mxu0
          %2859 = vmatprep.subr.bf16.mxu0 0
          %2860 = vmatpush1.bf16.msra.mxu0 %v2787
          %2861 = vmatprep.subr.bf16.mxu0 0
          %2862 = vmatpush1.bf16.msra.mxu0 %v2788
          %2863 = vmatprep.subr.bf16.mxu0 0
          %2864 = vmatpush1.bf16.msra.mxu0 %v2789
          %2865 = vmatprep.subr.bf16.mxu0 0
          %2866 = vmatpush1.bf16.msra.mxu0 %v2790
          %2867 = vmatprep.subr.bf16.mxu0 0
          %2868 = vmatpush1.bf16.msra.mxu0 %v2791
          %2869 = vmatprep.subr.bf16.mxu0 0
          %2870 = vmatpush1.bf16.msra.mxu0 %v2792
          %2871 = vmatprep.subr.bf16.mxu0 0
          %2872 = vmatpush1.bf16.msra.mxu0 %v2793
          %2873 = vmatprep.subr.bf16.mxu0 0
          %2874 = vmatpush1.bf16.msra.mxu0 %v2794
          %2875 = vmatprep.subr.bf16.mxu0 0
          %2876 = vmatpush1.bf16.msra.mxu0 0
          %2877 = vmatprep.subr.bf16.mxu0 0
          %2878 = vmatpush1.bf16.msra.mxu0 0
          %2879 = vmatprep.subr.bf16.mxu0 0
          %2880 = vmatpush1.bf16.msra.mxu0 0
          %2881 = vmatprep.subr.bf16.mxu0 0
          %2882 = vmatpush1.bf16.msra.mxu0 0
          %2883 = vmatprep.subr.bf16.mxu0 0
          %2884 = vmatpush1.bf16.msra.mxu0 0
          %2885 = vmatprep.subr.bf16.mxu0 0
          %2886 = vmatpush1.bf16.msra.mxu0 0
          %2887 = vmatprep.subr.bf16.mxu0 0
          %2888 = vmatpush1.bf16.msra.mxu0 0
          %2889 = vmatprep.subr.bf16.mxu0 0
          %2890 = vmatpush1.bf16.msra.mxu0 0
          %2891 = vmatprep.mubr.bf16.mxu0 0
          %2892 = vmatmul.mubr.bf16.gmra.mrb[0].mxu0 %v2671
          %v2893 = vpop.f32.mrb[0].mxu0
          %v2894 = vadd.f32 %v2854, %v2893
          %v2895 = vpop.f32.mrb[0].mxu0
          %v2896 = vpop.f32.mrb[0].mxu0
          %v2897 = vpop.f32.mrb[0].mxu0
          %2898 = vdwg.mxu0
          %v2899 = vadd.f32 %v2602, %v2894
        $region86: #{pos_emb_forward.1} parent=31 // loop_footer
          %s2601 = sadd.s32 1, %s2597
        $region87: #{pos_emb_forward.1} parent=31 // loop_footer_branch
          %2596 = sbr.rel target = $region83
        $region88: #{pos_emb_forward.1} parent=31 // loop_exit
          _
        %s2900 = scalar_lea.vmem %s2, 7
        %v2901 = vld [vmem:[%s2900] sm:$0x1]
        %v2903 = vlaneseq
        %v2904 = vshrl.u32 %v2903, 7
        %v2905 = vsub.s32 0, %v2904
        %v2906 = vrot.slane %v2901, %v2905
        %v2908 = vadd.f32 %v2602, %v2906
        %v2909 = vmul.f32 %v2908, 0.70710677
        %vm2910 = vcmp.ge.f32.partialorder %v2909, 0.0
        %v2911 = vsel %vm2910, 1.0, -1.0
        %v2912 = vand.u32 2147483647, %v2909
        %v2913 = vmul.f32 %v2912, 0.3275911
        %v2914 = vadd.f32 %v2913, 1.0
        %v2915 = vrcp.pop %v2914
        %v2916 = vmul.f32 %v2915, 1.0614054
        %v2917 = vadd.f32 %v2916, -1.4531521
        %v2918 = vmul.f32 %v2917, %v2915
        %v2919 = vadd.f32 %v2918, 1.4214138
        %v2920 = vmul.f32 %v2919, %v2915
        %v2921 = vadd.f32 %v2920, -0.28449672
        %v2922 = vmul.f32 %v2921, %v2915
        %v2923 = vadd.f32 %v2922, 0.2548296
        %v2924 = vmul.f32 %v2923, %v2915
        %v2925 = vsub.f32 0.0, %v2912
        %v2926 = vmul.f32 %v2925, %v2912
        %v2927 = vmul.f32 %v2926, 1.442695
        %v2928 = vpow.pop %v2927
        %v2929 = vmul.f32 %v2924, %v2928
        %v2930 = vsub.f32 1.0, %v2929
        %v2931 = vmul.f32 %v2911, %v2930
        %v2932 = vmul.f32 %v2908, 0.5
        %v2933 = vadd.f32 %v2931, 1.0
        %v2934 = vmul.f32 %v2932, %v2933
        %2936 = vrot.lane.b32.xlu0 %v2934, 80
        %v2937 = vpop.permute.xlu0 %2936
        %vm2939 = vcmask 1048192
        %2940 = vst.msk [vmem:[%s177 + $0x10] sm:$0xff] %vm2939, %v2937
        loop: start=0, step=1, limit=16
        $region89: #{pos_emb_forward.1} parent=31 // loop_pre_header
          _
        $region90: #{pos_emb_forward.1} parent=31 // loop_header
          %s2942 = sphi 0, %s2946
          %p2943 = scmp.ge.s32.totalorder %s2942, 16
          %v2947 = vphi 0.0, %v3244
        $region91: #{pos_emb_forward.1} parent=31 // loop_header_branch
          %2945 = sbr.rel (%p2943) target = $region95
        $region92: #{pos_emb_forward.1} parent=31 // loop_body
          %s2948 = smul.u32 %s2942, 8
          %s2949 = sshra.s32 %s2948, 3
          %s2950 = sand.u32 %s2948, 7
          %s2951 = smul.u32 %s2949, 3
          %s2952 = sadd.s32 %s2951, 408
          %s2953 = smul.addr %s2952, 4
          %s2954 = scalar_lea.vmem %s182, %s2953
          %v2955 = vld [vmem:[%s2954] sm:$0xff]
          %v2956 = vld [vmem:[%s2954 + $0x8] sm:$0xf]
          %s2957 = smul.u32 %s2942, 48
          %s2958 = sadd.s32 %s2957, 6144
          %s2959 = smul.addr %s2958, 4
          %s2960 = scalar_lea.vmem %s1, %s2959
          %v2961 = vld [vmem:[%s2960] sm:$0xf]
          %v2962 = vld [vmem:[%s2960 + $0x4] sm:$0xf]
          %v2963 = vld [vmem:[%s2960 + $0x8] sm:$0xf]
          %v2964 = vld [vmem:[%s2960 + $0xc] sm:$0xf]
          %v2965 = vld [vmem:[%s2960 + $0x10] sm:$0xf]
          %v2966 = vld [vmem:[%s2960 + $0x14] sm:$0xf]
          %v2967 = vld [vmem:[%s2960 + $0x18] sm:$0xf]
          %v2968 = vld [vmem:[%s2960 + $0x1c] sm:$0xf]
          %v2969 = vld [vmem:[%s2960 + $0x20] sm:$0xf]
          %v2970 = vld [vmem:[%s2960 + $0x24] sm:$0xf]
          %v2971 = vld [vmem:[%s2960 + $0x28] sm:$0xf]
          %v2972 = vld [vmem:[%s2960 + $0x2c] sm:$0xf]
          %v2973 = vld [vmem:[%s2960 + $0x30] sm:$0xf]
          %v2974 = vld [vmem:[%s2960 + $0x34] sm:$0xf]
          %v2975 = vld [vmem:[%s2960 + $0x38] sm:$0xf]
          %v2976 = vld [vmem:[%s2960 + $0x3c] sm:$0xf]
          %v2977 = vld [vmem:[%s2960 + $0x40] sm:$0xf]
          %v2978 = vld [vmem:[%s2960 + $0x44] sm:$0xf]
          %v2979 = vld [vmem:[%s2960 + $0x48] sm:$0xf]
          %v2980 = vld [vmem:[%s2960 + $0x4c] sm:$0xf]
          %v2981 = vld [vmem:[%s2960 + $0x50] sm:$0xf]
          %v2982 = vld [vmem:[%s2960 + $0x54] sm:$0xf]
          %v2983 = vld [vmem:[%s2960 + $0x58] sm:$0xf]
          %v2984 = vld [vmem:[%s2960 + $0x5c] sm:$0xf]
          %v2985 = vld [vmem:[%s2960 + $0x60] sm:$0xf]
          %v2986 = vld [vmem:[%s2960 + $0x64] sm:$0xf]
          %v2987 = vld [vmem:[%s2960 + $0x68] sm:$0xf]
          %v2988 = vld [vmem:[%s2960 + $0x6c] sm:$0xf]
          %v2989 = vld [vmem:[%s2960 + $0x70] sm:$0xf]
          %v2990 = vld [vmem:[%s2960 + $0x74] sm:$0xf]
          %v2991 = vld [vmem:[%s2960 + $0x78] sm:$0xf]
          %v2992 = vld [vmem:[%s2960 + $0x7c] sm:$0xf]
          %v2993 = vld [vmem:[%s2960 + $0x80] sm:$0xf]
          %v2994 = vld [vmem:[%s2960 + $0x84] sm:$0xf]
          %v2995 = vld [vmem:[%s2960 + $0x88] sm:$0xf]
          %v2996 = vld [vmem:[%s2960 + $0x8c] sm:$0xf]
          %v2997 = vld [vmem:[%s2960 + $0x90] sm:$0xf]
          %v2998 = vld [vmem:[%s2960 + $0x94] sm:$0xf]
          %v2999 = vld [vmem:[%s2960 + $0x98] sm:$0xf]
          %v3000 = vld [vmem:[%s2960 + $0x9c] sm:$0xf]
          %v3001 = vld [vmem:[%s2960 + $0xa0] sm:$0xf]
          %v3002 = vld [vmem:[%s2960 + $0xa4] sm:$0xf]
          %v3003 = vld [vmem:[%s2960 + $0xa8] sm:$0xf]
          %v3004 = vld [vmem:[%s2960 + $0xac] sm:$0xf]
          %v3005 = vld [vmem:[%s2960 + $0xb0] sm:$0xf]
          %v3006 = vld [vmem:[%s2960 + $0xb4] sm:$0xf]
          %v3007 = vld [vmem:[%s2960 + $0xb8] sm:$0xf]
          %v3008 = vld [vmem:[%s2960 + $0xbc] sm:$0xf]
          %v3011 = vunpack.c.l.b16 %v2955
          %v3012 = vunpack.c.h.b16 %v2955
          %v3013 = vunpack.c.l.b16 %v2956
          %v3014 = vpack.c.b16 %v3011, %v3011
          %v3015 = vpack.c.b16 %v3012, %v3012
          %v3016 = vpack.c.b16 %v3013, %v3013
          %v3068 = vunpack.c.l.b16 %v2961
          %v3069 = vunpack.c.l.b16 %v2962
          %v3070 = vunpack.c.l.b16 %v2963
          %v3071 = vunpack.c.l.b16 %v2964
          %v3072 = vunpack.c.l.b16 %v2965
          %v3073 = vunpack.c.l.b16 %v2966
          %v3074 = vunpack.c.l.b16 %v2967
          %v3075 = vunpack.c.l.b16 %v2968
          %v3076 = vunpack.c.l.b16 %v2969
          %v3077 = vunpack.c.l.b16 %v2970
          %v3078 = vunpack.c.l.b16 %v2971
          %v3079 = vunpack.c.l.b16 %v2972
          %v3080 = vunpack.c.l.b16 %v2973
          %v3081 = vunpack.c.l.b16 %v2974
          %v3082 = vunpack.c.l.b16 %v2975
          %v3083 = vunpack.c.l.b16 %v2976
          %v3084 = vunpack.c.l.b16 %v2977
          %v3085 = vunpack.c.l.b16 %v2978
          %v3086 = vunpack.c.l.b16 %v2979
          %v3087 = vunpack.c.l.b16 %v2980
          %v3088 = vunpack.c.l.b16 %v2981
          %v3089 = vunpack.c.l.b16 %v2982
          %v3090 = vunpack.c.l.b16 %v2983
          %v3091 = vunpack.c.l.b16 %v2984
          %v3092 = vunpack.c.l.b16 %v2985
          %v3093 = vunpack.c.l.b16 %v2986
          %v3094 = vunpack.c.l.b16 %v2987
          %v3095 = vunpack.c.l.b16 %v2988
          %v3096 = vunpack.c.l.b16 %v2989
          %v3097 = vunpack.c.l.b16 %v2990
          %v3098 = vunpack.c.l.b16 %v2991
          %v3099 = vunpack.c.l.b16 %v2992
          %v3100 = vunpack.c.l.b16 %v2993
          %v3101 = vunpack.c.l.b16 %v2994
          %v3102 = vunpack.c.l.b16 %v2995
          %v3103 = vunpack.c.l.b16 %v2996
          %v3104 = vunpack.c.l.b16 %v2997
          %v3105 = vunpack.c.l.b16 %v2998
          %v3106 = vunpack.c.l.b16 %v2999
          %v3107 = vunpack.c.l.b16 %v3000
          %v3108 = vunpack.c.l.b16 %v3001
          %v3109 = vunpack.c.l.b16 %v3002
          %v3110 = vunpack.c.l.b16 %v3003
          %v3111 = vunpack.c.l.b16 %v3004
          %v3112 = vunpack.c.l.b16 %v3005
          %v3113 = vunpack.c.l.b16 %v3006
          %v3114 = vunpack.c.l.b16 %v3007
          %v3115 = vunpack.c.l.b16 %v3008
          %v3116 = vpack.c.b16 %v3069, %v3068
          %v3117 = vpack.c.b16 %v3071, %v3070
          %v3118 = vpack.c.b16 %v3073, %v3072
          %v3119 = vpack.c.b16 %v3075, %v3074
          %v3120 = vpack.c.b16 %v3077, %v3076
          %v3121 = vpack.c.b16 %v3079, %v3078
          %v3122 = vpack.c.b16 %v3081, %v3080
          %v3123 = vpack.c.b16 %v3083, %v3082
          %v3124 = vpack.c.b16 %v3085, %v3084
          %v3125 = vpack.c.b16 %v3087, %v3086
          %v3126 = vpack.c.b16 %v3089, %v3088
          %v3127 = vpack.c.b16 %v3091, %v3090
          %v3128 = vpack.c.b16 %v3093, %v3092
          %v3129 = vpack.c.b16 %v3095, %v3094
          %v3130 = vpack.c.b16 %v3097, %v3096
          %v3131 = vpack.c.b16 %v3099, %v3098
          %v3132 = vpack.c.b16 %v3101, %v3100
          %v3133 = vpack.c.b16 %v3103, %v3102
          %v3134 = vpack.c.b16 %v3105, %v3104
          %v3135 = vpack.c.b16 %v3107, %v3106
          %v3136 = vpack.c.b16 %v3109, %v3108
          %v3137 = vpack.c.b16 %v3111, %v3110
          %v3138 = vpack.c.b16 %v3113, %v3112
          %v3139 = vpack.c.b16 %v3115, %v3114
          %3164 = vmatprep.subr.bf16.mxu0 0
          %3165 = vmatpush1.bf16.msra.mxu0 %v3116
          %3166 = vmatprep.subr.bf16.mxu0 0
          %3167 = vmatpush1.bf16.msra.mxu0 %v3117
          %3168 = vmatprep.subr.bf16.mxu0 0
          %3169 = vmatpush1.bf16.msra.mxu0 %v3118
          %3170 = vmatprep.subr.bf16.mxu0 0
          %3171 = vmatpush1.bf16.msra.mxu0 %v3119
          %3172 = vmatprep.subr.bf16.mxu0 0
          %3173 = vmatpush1.bf16.msra.mxu0 %v3120
          %3174 = vmatprep.subr.bf16.mxu0 0
          %3175 = vmatpush1.bf16.msra.mxu0 %v3121
          %3176 = vmatprep.subr.bf16.mxu0 0
          %3177 = vmatpush1.bf16.msra.mxu0 %v3122
          %3178 = vmatprep.subr.bf16.mxu0 0
          %3179 = vmatpush1.bf16.msra.mxu0 %v3123
          %3180 = vmatprep.subr.bf16.mxu0 0
          %3181 = vmatpush1.bf16.msra.mxu0 %v3124
          %3182 = vmatprep.subr.bf16.mxu0 0
          %3183 = vmatpush1.bf16.msra.mxu0 %v3125
          %3184 = vmatprep.subr.bf16.mxu0 0
          %3185 = vmatpush1.bf16.msra.mxu0 %v3126
          %3186 = vmatprep.subr.bf16.mxu0 0
          %3187 = vmatpush1.bf16.msra.mxu0 %v3127
          %3188 = vmatprep.subr.bf16.mxu0 0
          %3189 = vmatpush1.bf16.msra.mxu0 %v3128
          %3190 = vmatprep.subr.bf16.mxu0 0
          %3191 = vmatpush1.bf16.msra.mxu0 %v3129
          %3192 = vmatprep.subr.bf16.mxu0 0
          %3193 = vmatpush1.bf16.msra.mxu0 %v3130
          %3194 = vmatprep.subr.bf16.mxu0 0
          %3195 = vmatpush1.bf16.msra.mxu0 %v3131
          %3196 = vmatprep.mubr.bf16.mxu0 %v3015
          %3197 = vmatmul.mubr.bf16.gmra.mrb[0].mxu0 %v3014
          %v3198 = vpop.f32.mrb[0].mxu0
          %v3199 = vadd.f32 0.0, %v3198
          %v3200 = vpop.f32.mrb[0].mxu0
          %v3201 = vpop.f32.mrb[0].mxu0
          %v3202 = vpop.f32.mrb[0].mxu0
          %3203 = vdwg.mxu0
          %3204 = vmatprep.subr.bf16.mxu0 0
          %3205 = vmatpush1.bf16.msra.mxu0 %v3132
          %3206 = vmatprep.subr.bf16.mxu0 0
          %3207 = vmatpush1.bf16.msra.mxu0 %v3133
          %3208 = vmatprep.subr.bf16.mxu0 0
          %3209 = vmatpush1.bf16.msra.mxu0 %v3134
          %3210 = vmatprep.subr.bf16.mxu0 0
          %3211 = vmatpush1.bf16.msra.mxu0 %v3135
          %3212 = vmatprep.subr.bf16.mxu0 0
          %3213 = vmatpush1.bf16.msra.mxu0 %v3136
          %3214 = vmatprep.subr.bf16.mxu0 0
          %3215 = vmatpush1.bf16.msra.mxu0 %v3137
          %3216 = vmatprep.subr.bf16.mxu0 0
          %3217 = vmatpush1.bf16.msra.mxu0 %v3138
          %3218 = vmatprep.subr.bf16.mxu0 0
          %3219 = vmatpush1.bf16.msra.mxu0 %v3139
          %3220 = vmatprep.subr.bf16.mxu0 0
          %3221 = vmatpush1.bf16.msra.mxu0 0
          %3222 = vmatprep.subr.bf16.mxu0 0
          %3223 = vmatpush1.bf16.msra.mxu0 0
          %3224 = vmatprep.subr.bf16.mxu0 0
          %3225 = vmatpush1.bf16.msra.mxu0 0
          %3226 = vmatprep.subr.bf16.mxu0 0
          %3227 = vmatpush1.bf16.msra.mxu0 0
          %3228 = vmatprep.subr.bf16.mxu0 0
          %3229 = vmatpush1.bf16.msra.mxu0 0
          %3230 = vmatprep.subr.bf16.mxu0 0
          %3231 = vmatpush1.bf16.msra.mxu0 0
          %3232 = vmatprep.subr.bf16.mxu0 0
          %3233 = vmatpush1.bf16.msra.mxu0 0
          %3234 = vmatprep.subr.bf16.mxu0 0
          %3235 = vmatpush1.bf16.msra.mxu0 0
          %3236 = vmatprep.mubr.bf16.mxu0 0
          %3237 = vmatmul.mubr.bf16.gmra.mrb[0].mxu0 %v3016
          %v3238 = vpop.f32.mrb[0].mxu0
          %v3239 = vadd.f32 %v3199, %v3238
          %v3240 = vpop.f32.mrb[0].mxu0
          %v3241 = vpop.f32.mrb[0].mxu0
          %v3242 = vpop.f32.mrb[0].mxu0
          %3243 = vdwg.mxu0
          %v3244 = vadd.f32 %v2947, %v3239
        $region93: #{pos_emb_forward.1} parent=31 // loop_footer
          %s2946 = sadd.s32 1, %s2942
        $region94: #{pos_emb_forward.1} parent=31 // loop_footer_branch
          %2941 = sbr.rel target = $region90
        $region95: #{pos_emb_forward.1} parent=31 // loop_exit
          _
        %s3245 = scalar_lea.vmem %s2, 8
        %v3246 = vld [vmem:[%s3245] sm:$0x1]
        %v3248 = vlaneseq
        %v3249 = vshrl.u32 %v3248, 7
        %v3250 = vsub.s32 0, %v3249
        %v3251 = vrot.slane %v3246, %v3250
        %v3253 = vadd.f32 %v2947, %v3251
        %v3254 = vmul.f32 %v3253, 0.70710677
        %vm3255 = vcmp.ge.f32.partialorder %v3254, 0.0
        %v3256 = vsel %vm3255, 1.0, -1.0
        %v3257 = vand.u32 2147483647, %v3254
        %v3258 = vmul.f32 %v3257, 0.3275911
        %v3259 = vadd.f32 %v3258, 1.0
        %v3260 = vrcp.pop %v3259
        %v3261 = vmul.f32 %v3260, 1.0614054
        %v3262 = vadd.f32 %v3261, -1.4531521
        %v3263 = vmul.f32 %v3262, %v3260
        %v3264 = vadd.f32 %v3263, 1.4214138
        %v3265 = vmul.f32 %v3264, %v3260
        %v3266 = vadd.f32 %v3265, -0.28449672
        %v3267 = vmul.f32 %v3266, %v3260
        %v3268 = vadd.f32 %v3267, 0.2548296
        %v3269 = vmul.f32 %v3268, %v3260
        %v3270 = vsub.f32 0.0, %v3257
        %v3271 = vmul.f32 %v3270, %v3257
        %v3272 = vmul.f32 %v3271, 1.442695
        %v3273 = vpow.pop %v3272
        %v3274 = vmul.f32 %v3269, %v3273
        %v3275 = vsub.f32 1.0, %v3274
        %v3276 = vmul.f32 %v3256, %v3275
        %v3277 = vmul.f32 %v3253, 0.5
        %v3278 = vadd.f32 %v3276, 1.0
        %v3279 = vmul.f32 %v3277, %v3278
        %3280 = vst.msk [vmem:[%s177 + $0x18] sm:$0xff] %vm520, %v3279
        loop: start=0, step=1, limit=16
        $region96: #{pos_emb_forward.1} parent=31 // loop_pre_header
          _
        $region97: #{pos_emb_forward.1} parent=31 // loop_header
          %s3282 = sphi 0, %s3286
          %p3283 = scmp.ge.s32.totalorder %s3282, 16
          %v3287 = vphi 0.0, %v3584
        $region98: #{pos_emb_forward.1} parent=31 // loop_header_branch
          %3285 = sbr.rel (%p3283) target = $region102
        $region99: #{pos_emb_forward.1} parent=31 // loop_body
          %s3288 = smul.u32 %s3282, 8
          %s3289 = sshra.s32 %s3288, 3
          %s3290 = sand.u32 %s3288, 7
          %s3291 = smul.u32 %s3289, 3
          %s3292 = sadd.s32 %s3291, 459
          %s3293 = smul.addr %s3292, 4
          %s3294 = scalar_lea.vmem %s182, %s3293
          %v3295 = vld [vmem:[%s3294] sm:$0xff]
          %v3296 = vld [vmem:[%s3294 + $0x8] sm:$0xf]
          %s3297 = smul.u32 %s3282, 48
          %s3298 = sadd.s32 %s3297, 6912
          %s3299 = smul.addr %s3298, 4
          %s3300 = scalar_lea.vmem %s1, %s3299
          %v3301 = vld [vmem:[%s3300] sm:$0xf]
          %v3302 = vld [vmem:[%s3300 + $0x4] sm:$0xf]
          %v3303 = vld [vmem:[%s3300 + $0x8] sm:$0xf]
          %v3304 = vld [vmem:[%s3300 + $0xc] sm:$0xf]
          %v3305 = vld [vmem:[%s3300 + $0x10] sm:$0xf]
          %v3306 = vld [vmem:[%s3300 + $0x14] sm:$0xf]
          %v3307 = vld [vmem:[%s3300 + $0x18] sm:$0xf]
          %v3308 = vld [vmem:[%s3300 + $0x1c] sm:$0xf]
          %v3309 = vld [vmem:[%s3300 + $0x20] sm:$0xf]
          %v3310 = vld [vmem:[%s3300 + $0x24] sm:$0xf]
          %v3311 = vld [vmem:[%s3300 + $0x28] sm:$0xf]
          %v3312 = vld [vmem:[%s3300 + $0x2c] sm:$0xf]
          %v3313 = vld [vmem:[%s3300 + $0x30] sm:$0xf]
          %v3314 = vld [vmem:[%s3300 + $0x34] sm:$0xf]
          %v3315 = vld [vmem:[%s3300 + $0x38] sm:$0xf]
          %v3316 = vld [vmem:[%s3300 + $0x3c] sm:$0xf]
          %v3317 = vld [vmem:[%s3300 + $0x40] sm:$0xf]
          %v3318 = vld [vmem:[%s3300 + $0x44] sm:$0xf]
          %v3319 = vld [vmem:[%s3300 + $0x48] sm:$0xf]
          %v3320 = vld [vmem:[%s3300 + $0x4c] sm:$0xf]
          %v3321 = vld [vmem:[%s3300 + $0x50] sm:$0xf]
          %v3322 = vld [vmem:[%s3300 + $0x54] sm:$0xf]
          %v3323 = vld [vmem:[%s3300 + $0x58] sm:$0xf]
          %v3324 = vld [vmem:[%s3300 + $0x5c] sm:$0xf]
          %v3325 = vld [vmem:[%s3300 + $0x60] sm:$0xf]
          %v3326 = vld [vmem:[%s3300 + $0x64] sm:$0xf]
          %v3327 = vld [vmem:[%s3300 + $0x68] sm:$0xf]
          %v3328 = vld [vmem:[%s3300 + $0x6c] sm:$0xf]
          %v3329 = vld [vmem:[%s3300 + $0x70] sm:$0xf]
          %v3330 = vld [vmem:[%s3300 + $0x74] sm:$0xf]
          %v3331 = vld [vmem:[%s3300 + $0x78] sm:$0xf]
          %v3332 = vld [vmem:[%s3300 + $0x7c] sm:$0xf]
          %v3333 = vld [vmem:[%s3300 + $0x80] sm:$0xf]
          %v3334 = vld [vmem:[%s3300 + $0x84] sm:$0xf]
          %v3335 = vld [vmem:[%s3300 + $0x88] sm:$0xf]
          %v3336 = vld [vmem:[%s3300 + $0x8c] sm:$0xf]
          %v3337 = vld [vmem:[%s3300 + $0x90] sm:$0xf]
          %v3338 = vld [vmem:[%s3300 + $0x94] sm:$0xf]
          %v3339 = vld [vmem:[%s3300 + $0x98] sm:$0xf]
          %v3340 = vld [vmem:[%s3300 + $0x9c] sm:$0xf]
          %v3341 = vld [vmem:[%s3300 + $0xa0] sm:$0xf]
          %v3342 = vld [vmem:[%s3300 + $0xa4] sm:$0xf]
          %v3343 = vld [vmem:[%s3300 + $0xa8] sm:$0xf]
          %v3344 = vld [vmem:[%s3300 + $0xac] sm:$0xf]
          %v3345 = vld [vmem:[%s3300 + $0xb0] sm:$0xf]
          %v3346 = vld [vmem:[%s3300 + $0xb4] sm:$0xf]
          %v3347 = vld [vmem:[%s3300 + $0xb8] sm:$0xf]
          %v3348 = vld [vmem:[%s3300 + $0xbc] sm:$0xf]
          %v3351 = vunpack.c.l.b16 %v3295
          %v3352 = vunpack.c.h.b16 %v3295
          %v3353 = vunpack.c.l.b16 %v3296
          %v3354 = vpack.c.b16 %v3351, %v3351
          %v3355 = vpack.c.b16 %v3352, %v3352
          %v3356 = vpack.c.b16 %v3353, %v3353
          %v3408 = vunpack.c.l.b16 %v3301
          %v3409 = vunpack.c.l.b16 %v3302
          %v3410 = vunpack.c.l.b16 %v3303
          %v3411 = vunpack.c.l.b16 %v3304
          %v3412 = vunpack.c.l.b16 %v3305
          %v3413 = vunpack.c.l.b16 %v3306
          %v3414 = vunpack.c.l.b16 %v3307
          %v3415 = vunpack.c.l.b16 %v3308
          %v3416 = vunpack.c.l.b16 %v3309
          %v3417 = vunpack.c.l.b16 %v3310
          %v3418 = vunpack.c.l.b16 %v3311
          %v3419 = vunpack.c.l.b16 %v3312
          %v3420 = vunpack.c.l.b16 %v3313
          %v3421 = vunpack.c.l.b16 %v3314
          %v3422 = vunpack.c.l.b16 %v3315
          %v3423 = vunpack.c.l.b16 %v3316
          %v3424 = vunpack.c.l.b16 %v3317
          %v3425 = vunpack.c.l.b16 %v3318
          %v3426 = vunpack.c.l.b16 %v3319
          %v3427 = vunpack.c.l.b16 %v3320
          %v3428 = vunpack.c.l.b16 %v3321
          %v3429 = vunpack.c.l.b16 %v3322
          %v3430 = vunpack.c.l.b16 %v3323
          %v3431 = vunpack.c.l.b16 %v3324
          %v3432 = vunpack.c.l.b16 %v3325
          %v3433 = vunpack.c.l.b16 %v3326
          %v3434 = vunpack.c.l.b16 %v3327
          %v3435 = vunpack.c.l.b16 %v3328
          %v3436 = vunpack.c.l.b16 %v3329
          %v3437 = vunpack.c.l.b16 %v3330
          %v3438 = vunpack.c.l.b16 %v3331
          %v3439 = vunpack.c.l.b16 %v3332
          %v3440 = vunpack.c.l.b16 %v3333
          %v3441 = vunpack.c.l.b16 %v3334
          %v3442 = vunpack.c.l.b16 %v3335
          %v3443 = vunpack.c.l.b16 %v3336
          %v3444 = vunpack.c.l.b16 %v3337
          %v3445 = vunpack.c.l.b16 %v3338
          %v3446 = vunpack.c.l.b16 %v3339
          %v3447 = vunpack.c.l.b16 %v3340
          %v3448 = vunpack.c.l.b16 %v3341
          %v3449 = vunpack.c.l.b16 %v3342
          %v3450 = vunpack.c.l.b16 %v3343
          %v3451 = vunpack.c.l.b16 %v3344
          %v3452 = vunpack.c.l.b16 %v3345
          %v3453 = vunpack.c.l.b16 %v3346
          %v3454 = vunpack.c.l.b16 %v3347
          %v3455 = vunpack.c.l.b16 %v3348
          %v3456 = vpack.c.b16 %v3409, %v3408
          %v3457 = vpack.c.b16 %v3411, %v3410
          %v3458 = vpack.c.b16 %v3413, %v3412
          %v3459 = vpack.c.b16 %v3415, %v3414
          %v3460 = vpack.c.b16 %v3417, %v3416
          %v3461 = vpack.c.b16 %v3419, %v3418
          %v3462 = vpack.c.b16 %v3421, %v3420
          %v3463 = vpack.c.b16 %v3423, %v3422
          %v3464 = vpack.c.b16 %v3425, %v3424
          %v3465 = vpack.c.b16 %v3427, %v3426
          %v3466 = vpack.c.b16 %v3429, %v3428
          %v3467 = vpack.c.b16 %v3431, %v3430
          %v3468 = vpack.c.b16 %v3433, %v3432
          %v3469 = vpack.c.b16 %v3435, %v3434
          %v3470 = vpack.c.b16 %v3437, %v3436
          %v3471 = vpack.c.b16 %v3439, %v3438
          %v3472 = vpack.c.b16 %v3441, %v3440
          %v3473 = vpack.c.b16 %v3443, %v3442
          %v3474 = vpack.c.b16 %v3445, %v3444
          %v3475 = vpack.c.b16 %v3447, %v3446
          %v3476 = vpack.c.b16 %v3449, %v3448
          %v3477 = vpack.c.b16 %v3451, %v3450
          %v3478 = vpack.c.b16 %v3453, %v3452
          %v3479 = vpack.c.b16 %v3455, %v3454
          %3504 = vmatprep.subr.bf16.mxu0 0
          %3505 = vmatpush1.bf16.msra.mxu0 %v3456
          %3506 = vmatprep.subr.bf16.mxu0 0
          %3507 = vmatpush1.bf16.msra.mxu0 %v3457
          %3508 = vmatprep.subr.bf16.mxu0 0
          %3509 = vmatpush1.bf16.msra.mxu0 %v3458
          %3510 = vmatprep.subr.bf16.mxu0 0
          %3511 = vmatpush1.bf16.msra.mxu0 %v3459
          %3512 = vmatprep.subr.bf16.mxu0 0
          %3513 = vmatpush1.bf16.msra.mxu0 %v3460
          %3514 = vmatprep.subr.bf16.mxu0 0
          %3515 = vmatpush1.bf16.msra.mxu0 %v3461
          %3516 = vmatprep.subr.bf16.mxu0 0
          %3517 = vmatpush1.bf16.msra.mxu0 %v3462
          %3518 = vmatprep.subr.bf16.mxu0 0
          %3519 = vmatpush1.bf16.msra.mxu0 %v3463
          %3520 = vmatprep.subr.bf16.mxu0 0
          %3521 = vmatpush1.bf16.msra.mxu0 %v3464
          %3522 = vmatprep.subr.bf16.mxu0 0
          %3523 = vmatpush1.bf16.msra.mxu0 %v3465
          %3524 = vmatprep.subr.bf16.mxu0 0
          %3525 = vmatpush1.bf16.msra.mxu0 %v3466
          %3526 = vmatprep.subr.bf16.mxu0 0
          %3527 = vmatpush1.bf16.msra.mxu0 %v3467
          %3528 = vmatprep.subr.bf16.mxu0 0
          %3529 = vmatpush1.bf16.msra.mxu0 %v3468
          %3530 = vmatprep.subr.bf16.mxu0 0
          %3531 = vmatpush1.bf16.msra.mxu0 %v3469
          %3532 = vmatprep.subr.bf16.mxu0 0
          %3533 = vmatpush1.bf16.msra.mxu0 %v3470
          %3534 = vmatprep.subr.bf16.mxu0 0
          %3535 = vmatpush1.bf16.msra.mxu0 %v3471
          %3536 = vmatprep.mubr.bf16.mxu0 %v3355
          %3537 = vmatmul.mubr.bf16.gmra.mrb[0].mxu0 %v3354
          %v3538 = vpop.f32.mrb[0].mxu0
          %v3539 = vadd.f32 0.0, %v3538
          %v3540 = vpop.f32.mrb[0].mxu0
          %v3541 = vpop.f32.mrb[0].mxu0
          %v3542 = vpop.f32.mrb[0].mxu0
          %3543 = vdwg.mxu0
          %3544 = vmatprep.subr.bf16.mxu0 0
          %3545 = vmatpush1.bf16.msra.mxu0 %v3472
          %3546 = vmatprep.subr.bf16.mxu0 0
          %3547 = vmatpush1.bf16.msra.mxu0 %v3473
          %3548 = vmatprep.subr.bf16.mxu0 0
          %3549 = vmatpush1.bf16.msra.mxu0 %v3474
          %3550 = vmatprep.subr.bf16.mxu0 0
          %3551 = vmatpush1.bf16.msra.mxu0 %v3475
          %3552 = vmatprep.subr.bf16.mxu0 0
          %3553 = vmatpush1.bf16.msra.mxu0 %v3476
          %3554 = vmatprep.subr.bf16.mxu0 0
          %3555 = vmatpush1.bf16.msra.mxu0 %v3477
          %3556 = vmatprep.subr.bf16.mxu0 0
          %3557 = vmatpush1.bf16.msra.mxu0 %v3478
          %3558 = vmatprep.subr.bf16.mxu0 0
          %3559 = vmatpush1.bf16.msra.mxu0 %v3479
          %3560 = vmatprep.subr.bf16.mxu0 0
          %3561 = vmatpush1.bf16.msra.mxu0 0
          %3562 = vmatprep.subr.bf16.mxu0 0
          %3563 = vmatpush1.bf16.msra.mxu0 0
          %3564 = vmatprep.subr.bf16.mxu0 0
          %3565 = vmatpush1.bf16.msra.mxu0 0
          %3566 = vmatprep.subr.bf16.mxu0 0
          %3567 = vmatpush1.bf16.msra.mxu0 0
          %3568 = vmatprep.subr.bf16.mxu0 0
          %3569 = vmatpush1.bf16.msra.mxu0 0
          %3570 = vmatprep.subr.bf16.mxu0 0
          %3571 = vmatpush1.bf16.msra.mxu0 0
          %3572 = vmatprep.subr.bf16.mxu0 0
          %3573 = vmatpush1.bf16.msra.mxu0 0
          %3574 = vmatprep.subr.bf16.mxu0 0
          %3575 = vmatpush1.bf16.msra.mxu0 0
          %3576 = vmatprep.mubr.bf16.mxu0 0
          %3577 = vmatmul.mubr.bf16.gmra.mrb[0].mxu0 %v3356
          %v3578 = vpop.f32.mrb[0].mxu0
          %v3579 = vadd.f32 %v3539, %v3578
          %v3580 = vpop.f32.mrb[0].mxu0
          %v3581 = vpop.f32.mrb[0].mxu0
          %v3582 = vpop.f32.mrb[0].mxu0
          %3583 = vdwg.mxu0
          %v3584 = vadd.f32 %v3287, %v3579
        $region100: #{pos_emb_forward.1} parent=31 // loop_footer
          %s3286 = sadd.s32 1, %s3282
        $region101: #{pos_emb_forward.1} parent=31 // loop_footer_branch
          %3281 = sbr.rel target = $region97
        $region102: #{pos_emb_forward.1} parent=31 // loop_exit
          _
        %s3585 = scalar_lea.vmem %s2, 9
        %v3586 = vld [vmem:[%s3585] sm:$0x1]
        %v3588 = vlaneseq
        %v3589 = vshrl.u32 %v3588, 7
        %v3590 = vsub.s32 0, %v3589
        %v3591 = vrot.slane %v3586, %v3590
        %v3593 = vadd.f32 %v3287, %v3591
        %v3594 = vmul.f32 %v3593, 0.70710677
        %vm3595 = vcmp.ge.f32.partialorder %v3594, 0.0
        %v3596 = vsel %vm3595, 1.0, -1.0
        %v3597 = vand.u32 2147483647, %v3594
        %v3598 = vmul.f32 %v3597, 0.3275911
        %v3599 = vadd.f32 %v3598, 1.0
        %v3600 = vrcp.pop %v3599
        %v3601 = vmul.f32 %v3600, 1.0614054
        %v3602 = vadd.f32 %v3601, -1.4531521
        %v3603 = vmul.f32 %v3602, %v3600
        %v3604 = vadd.f32 %v3603, 1.4214138
        %v3605 = vmul.f32 %v3604, %v3600
        %v3606 = vadd.f32 %v3605, -0.28449672
        %v3607 = vmul.f32 %v3606, %v3600
        %v3608 = vadd.f32 %v3607, 0.2548296
        %v3609 = vmul.f32 %v3608, %v3600
        %v3610 = vsub.f32 0.0, %v3597
        %v3611 = vmul.f32 %v3610, %v3597
        %v3612 = vmul.f32 %v3611, 1.442695
        %v3613 = vpow.pop %v3612
        %v3614 = vmul.f32 %v3609, %v3613
        %v3615 = vsub.f32 1.0, %v3614
        %v3616 = vmul.f32 %v3596, %v3615
        %v3617 = vmul.f32 %v3593, 0.5
        %v3618 = vadd.f32 %v3616, 1.0
        %v3619 = vmul.f32 %v3617, %v3618
        %3621 = vrot.lane.b32.xlu0 %v3619, 48
        %v3622 = vpop.permute.xlu0 %3621
        %3624 = vst.msk [vmem:[%s177 + $0x18] sm:$0xff] %vm865, %v3622
        loop: start=0, step=1, limit=16
        $region103: #{pos_emb_forward.1} parent=31 // loop_pre_header
          _
        $region104: #{pos_emb_forward.1} parent=31 // loop_header
          %s3626 = sphi 0, %s3630
          %p3627 = scmp.ge.s32.totalorder %s3626, 16
          %v3631 = vphi 0.0, %v3928
        $region105: #{pos_emb_forward.1} parent=31 // loop_header_branch
          %3629 = sbr.rel (%p3627) target = $region109
        $region106: #{pos_emb_forward.1} parent=31 // loop_body
          %s3632 = smul.u32 %s3626, 8
          %s3633 = sshra.s32 %s3632, 3
          %s3634 = sand.u32 %s3632, 7
          %s3635 = smul.u32 %s3633, 3
          %s3636 = sadd.s32 %s3635, 510
          %s3637 = smul.addr %s3636, 4
          %s3638 = scalar_lea.vmem %s182, %s3637
          %v3639 = vld [vmem:[%s3638] sm:$0xff]
          %v3640 = vld [vmem:[%s3638 + $0x8] sm:$0xf]
          %s3641 = smul.u32 %s3626, 48
          %s3642 = sadd.s32 %s3641, 7680
          %s3643 = smul.addr %s3642, 4
          %s3644 = scalar_lea.vmem %s1, %s3643
          %v3645 = vld [vmem:[%s3644] sm:$0xf]
          %v3646 = vld [vmem:[%s3644 + $0x4] sm:$0xf]
          %v3647 = vld [vmem:[%s3644 + $0x8] sm:$0xf]
          %v3648 = vld [vmem:[%s3644 + $0xc] sm:$0xf]
          %v3649 = vld [vmem:[%s3644 + $0x10] sm:$0xf]
          %v3650 = vld [vmem:[%s3644 + $0x14] sm:$0xf]
          %v3651 = vld [vmem:[%s3644 + $0x18] sm:$0xf]
          %v3652 = vld [vmem:[%s3644 + $0x1c] sm:$0xf]
          %v3653 = vld [vmem:[%s3644 + $0x20] sm:$0xf]
          %v3654 = vld [vmem:[%s3644 + $0x24] sm:$0xf]
          %v3655 = vld [vmem:[%s3644 + $0x28] sm:$0xf]
          %v3656 = vld [vmem:[%s3644 + $0x2c] sm:$0xf]
          %v3657 = vld [vmem:[%s3644 + $0x30] sm:$0xf]
          %v3658 = vld [vmem:[%s3644 + $0x34] sm:$0xf]
          %v3659 = vld [vmem:[%s3644 + $0x38] sm:$0xf]
          %v3660 = vld [vmem:[%s3644 + $0x3c] sm:$0xf]
          %v3661 = vld [vmem:[%s3644 + $0x40] sm:$0xf]
          %v3662 = vld [vmem:[%s3644 + $0x44] sm:$0xf]
          %v3663 = vld [vmem:[%s3644 + $0x48] sm:$0xf]
          %v3664 = vld [vmem:[%s3644 + $0x4c] sm:$0xf]
          %v3665 = vld [vmem:[%s3644 + $0x50] sm:$0xf]
          %v3666 = vld [vmem:[%s3644 + $0x54] sm:$0xf]
          %v3667 = vld [vmem:[%s3644 + $0x58] sm:$0xf]
          %v3668 = vld [vmem:[%s3644 + $0x5c] sm:$0xf]
          %v3669 = vld [vmem:[%s3644 + $0x60] sm:$0xf]
          %v3670 = vld [vmem:[%s3644 + $0x64] sm:$0xf]
          %v3671 = vld [vmem:[%s3644 + $0x68] sm:$0xf]
          %v3672 = vld [vmem:[%s3644 + $0x6c] sm:$0xf]
          %v3673 = vld [vmem:[%s3644 + $0x70] sm:$0xf]
          %v3674 = vld [vmem:[%s3644 + $0x74] sm:$0xf]
          %v3675 = vld [vmem:[%s3644 + $0x78] sm:$0xf]
          %v3676 = vld [vmem:[%s3644 + $0x7c] sm:$0xf]
          %v3677 = vld [vmem:[%s3644 + $0x80] sm:$0xf]
          %v3678 = vld [vmem:[%s3644 + $0x84] sm:$0xf]
          %v3679 = vld [vmem:[%s3644 + $0x88] sm:$0xf]
          %v3680 = vld [vmem:[%s3644 + $0x8c] sm:$0xf]
          %v3681 = vld [vmem:[%s3644 + $0x90] sm:$0xf]
          %v3682 = vld [vmem:[%s3644 + $0x94] sm:$0xf]
          %v3683 = vld [vmem:[%s3644 + $0x98] sm:$0xf]
          %v3684 = vld [vmem:[%s3644 + $0x9c] sm:$0xf]
          %v3685 = vld [vmem:[%s3644 + $0xa0] sm:$0xf]
          %v3686 = vld [vmem:[%s3644 + $0xa4] sm:$0xf]
          %v3687 = vld [vmem:[%s3644 + $0xa8] sm:$0xf]
          %v3688 = vld [vmem:[%s3644 + $0xac] sm:$0xf]
          %v3689 = vld [vmem:[%s3644 + $0xb0] sm:$0xf]
          %v3690 = vld [vmem:[%s3644 + $0xb4] sm:$0xf]
          %v3691 = vld [vmem:[%s3644 + $0xb8] sm:$0xf]
          %v3692 = vld [vmem:[%s3644 + $0xbc] sm:$0xf]
          %v3695 = vunpack.c.l.b16 %v3639
          %v3696 = vunpack.c.h.b16 %v3639
          %v3697 = vunpack.c.l.b16 %v3640
          %v3698 = vpack.c.b16 %v3695, %v3695
          %v3699 = vpack.c.b16 %v3696, %v3696
          %v3700 = vpack.c.b16 %v3697, %v3697
          %v3752 = vunpack.c.l.b16 %v3645
          %v3753 = vunpack.c.l.b16 %v3646
          %v3754 = vunpack.c.l.b16 %v3647
          %v3755 = vunpack.c.l.b16 %v3648
          %v3756 = vunpack.c.l.b16 %v3649
          %v3757 = vunpack.c.l.b16 %v3650
          %v3758 = vunpack.c.l.b16 %v3651
          %v3759 = vunpack.c.l.b16 %v3652
          %v3760 = vunpack.c.l.b16 %v3653
          %v3761 = vunpack.c.l.b16 %v3654
          %v3762 = vunpack.c.l.b16 %v3655
          %v3763 = vunpack.c.l.b16 %v3656
          %v3764 = vunpack.c.l.b16 %v3657
          %v3765 = vunpack.c.l.b16 %v3658
          %v3766 = vunpack.c.l.b16 %v3659
          %v3767 = vunpack.c.l.b16 %v3660
          %v3768 = vunpack.c.l.b16 %v3661
          %v3769 = vunpack.c.l.b16 %v3662
          %v3770 = vunpack.c.l.b16 %v3663
          %v3771 = vunpack.c.l.b16 %v3664
          %v3772 = vunpack.c.l.b16 %v3665
          %v3773 = vunpack.c.l.b16 %v3666
          %v3774 = vunpack.c.l.b16 %v3667
          %v3775 = vunpack.c.l.b16 %v3668
          %v3776 = vunpack.c.l.b16 %v3669
          %v3777 = vunpack.c.l.b16 %v3670
          %v3778 = vunpack.c.l.b16 %v3671
          %v3779 = vunpack.c.l.b16 %v3672
          %v3780 = vunpack.c.l.b16 %v3673
          %v3781 = vunpack.c.l.b16 %v3674
          %v3782 = vunpack.c.l.b16 %v3675
          %v3783 = vunpack.c.l.b16 %v3676
          %v3784 = vunpack.c.l.b16 %v3677
          %v3785 = vunpack.c.l.b16 %v3678
          %v3786 = vunpack.c.l.b16 %v3679
          %v3787 = vunpack.c.l.b16 %v3680
          %v3788 = vunpack.c.l.b16 %v3681
          %v3789 = vunpack.c.l.b16 %v3682
          %v3790 = vunpack.c.l.b16 %v3683
          %v3791 = vunpack.c.l.b16 %v3684
          %v3792 = vunpack.c.l.b16 %v3685
          %v3793 = vunpack.c.l.b16 %v3686
          %v3794 = vunpack.c.l.b16 %v3687
          %v3795 = vunpack.c.l.b16 %v3688
          %v3796 = vunpack.c.l.b16 %v3689
          %v3797 = vunpack.c.l.b16 %v3690
          %v3798 = vunpack.c.l.b16 %v3691
          %v3799 = vunpack.c.l.b16 %v3692
          %v3800 = vpack.c.b16 %v3753, %v3752
          %v3801 = vpack.c.b16 %v3755, %v3754
          %v3802 = vpack.c.b16 %v3757, %v3756
          %v3803 = vpack.c.b16 %v3759, %v3758
          %v3804 = vpack.c.b16 %v3761, %v3760
          %v3805 = vpack.c.b16 %v3763, %v3762
          %v3806 = vpack.c.b16 %v3765, %v3764
          %v3807 = vpack.c.b16 %v3767, %v3766
          %v3808 = vpack.c.b16 %v3769, %v3768
          %v3809 = vpack.c.b16 %v3771, %v3770
          %v3810 = vpack.c.b16 %v3773, %v3772
          %v3811 = vpack.c.b16 %v3775, %v3774
          %v3812 = vpack.c.b16 %v3777, %v3776
          %v3813 = vpack.c.b16 %v3779, %v3778
          %v3814 = vpack.c.b16 %v3781, %v3780
          %v3815 = vpack.c.b16 %v3783, %v3782
          %v3816 = vpack.c.b16 %v3785, %v3784
          %v3817 = vpack.c.b16 %v3787, %v3786
          %v3818 = vpack.c.b16 %v3789, %v3788
          %v3819 = vpack.c.b16 %v3791, %v3790
          %v3820 = vpack.c.b16 %v3793, %v3792
          %v3821 = vpack.c.b16 %v3795, %v3794
          %v3822 = vpack.c.b16 %v3797, %v3796
          %v3823 = vpack.c.b16 %v3799, %v3798
          %3848 = vmatprep.subr.bf16.mxu0 0
          %3849 = vmatpush1.bf16.msra.mxu0 %v3800
          %3850 = vmatprep.subr.bf16.mxu0 0
          %3851 = vmatpush1.bf16.msra.mxu0 %v3801
          %3852 = vmatprep.subr.bf16.mxu0 0
          %3853 = vmatpush1.bf16.msra.mxu0 %v3802
          %3854 = vmatprep.subr.bf16.mxu0 0
          %3855 = vmatpush1.bf16.msra.mxu0 %v3803
          %3856 = vmatprep.subr.bf16.mxu0 0
          %3857 = vmatpush1.bf16.msra.mxu0 %v3804
          %3858 = vmatprep.subr.bf16.mxu0 0
          %3859 = vmatpush1.bf16.msra.mxu0 %v3805
          %3860 = vmatprep.subr.bf16.mxu0 0
          %3861 = vmatpush1.bf16.msra.mxu0 %v3806
          %3862 = vmatprep.subr.bf16.mxu0 0
          %3863 = vmatpush1.bf16.msra.mxu0 %v3807
          %3864 = vmatprep.subr.bf16.mxu0 0
          %3865 = vmatpush1.bf16.msra.mxu0 %v3808
          %3866 = vmatprep.subr.bf16.mxu0 0
          %3867 = vmatpush1.bf16.msra.mxu0 %v3809
          %3868 = vmatprep.subr.bf16.mxu0 0
          %3869 = vmatpush1.bf16.msra.mxu0 %v3810
          %3870 = vmatprep.subr.bf16.mxu0 0
          %3871 = vmatpush1.bf16.msra.mxu0 %v3811
          %3872 = vmatprep.subr.bf16.mxu0 0
          %3873 = vmatpush1.bf16.msra.mxu0 %v3812
          %3874 = vmatprep.subr.bf16.mxu0 0
          %3875 = vmatpush1.bf16.msra.mxu0 %v3813
          %3876 = vmatprep.subr.bf16.mxu0 0
          %3877 = vmatpush1.bf16.msra.mxu0 %v3814
          %3878 = vmatprep.subr.bf16.mxu0 0
          %3879 = vmatpush1.bf16.msra.mxu0 %v3815
          %3880 = vmatprep.mubr.bf16.mxu0 %v3699
          %3881 = vmatmul.mubr.bf16.gmra.mrb[0].mxu0 %v3698
          %v3882 = vpop.f32.mrb[0].mxu0
          %v3883 = vadd.f32 0.0, %v3882
          %v3884 = vpop.f32.mrb[0].mxu0
          %v3885 = vpop.f32.mrb[0].mxu0
          %v3886 = vpop.f32.mrb[0].mxu0
          %3887 = vdwg.mxu0
          %3888 = vmatprep.subr.bf16.mxu0 0
          %3889 = vmatpush1.bf16.msra.mxu0 %v3816
          %3890 = vmatprep.subr.bf16.mxu0 0
          %3891 = vmatpush1.bf16.msra.mxu0 %v3817
          %3892 = vmatprep.subr.bf16.mxu0 0
          %3893 = vmatpush1.bf16.msra.mxu0 %v3818
          %3894 = vmatprep.subr.bf16.mxu0 0
          %3895 = vmatpush1.bf16.msra.mxu0 %v3819
          %3896 = vmatprep.subr.bf16.mxu0 0
          %3897 = vmatpush1.bf16.msra.mxu0 %v3820
          %3898 = vmatprep.subr.bf16.mxu0 0
          %3899 = vmatpush1.bf16.msra.mxu0 %v3821
          %3900 = vmatprep.subr.bf16.mxu0 0
          %3901 = vmatpush1.bf16.msra.mxu0 %v3822
          %3902 = vmatprep.subr.bf16.mxu0 0
          %3903 = vmatpush1.bf16.msra.mxu0 %v3823
          %3904 = vmatprep.subr.bf16.mxu0 0
          %3905 = vmatpush1.bf16.msra.mxu0 0
          %3906 = vmatprep.subr.bf16.mxu0 0
          %3907 = vmatpush1.bf16.msra.mxu0 0
          %3908 = vmatprep.subr.bf16.mxu0 0
          %3909 = vmatpush1.bf16.msra.mxu0 0
          %3910 = vmatprep.subr.bf16.mxu0 0
          %3911 = vmatpush1.bf16.msra.mxu0 0
          %3912 = vmatprep.subr.bf16.mxu0 0
          %3913 = vmatpush1.bf16.msra.mxu0 0
          %3914 = vmatprep.subr.bf16.mxu0 0
          %3915 = vmatpush1.bf16.msra.mxu0 0
          %3916 = vmatprep.subr.bf16.mxu0 0
          %3917 = vmatpush1.bf16.msra.mxu0 0
          %3918 = vmatprep.subr.bf16.mxu0 0
          %3919 = vmatpush1.bf16.msra.mxu0 0
          %3920 = vmatprep.mubr.bf16.mxu0 0
          %3921 = vmatmul.mubr.bf16.gmra.mrb[0].mxu0 %v3700
          %v3922 = vpop.f32.mrb[0].mxu0
          %v3923 = vadd.f32 %v3883, %v3922
          %v3924 = vpop.f32.mrb[0].mxu0
          %v3925 = vpop.f32.mrb[0].mxu0
          %v3926 = vpop.f32.mrb[0].mxu0
          %3927 = vdwg.mxu0
          %v3928 = vadd.f32 %v3631, %v3923
        $region107: #{pos_emb_forward.1} parent=31 // loop_footer
          %s3630 = sadd.s32 1, %s3626
        $region108: #{pos_emb_forward.1} parent=31 // loop_footer_branch
          %3625 = sbr.rel target = $region104
        $region109: #{pos_emb_forward.1} parent=31 // loop_exit
          _
        %s3929 = scalar_lea.vmem %s2, 10
        %v3930 = vld [vmem:[%s3929] sm:$0x1]
        %v3932 = vlaneseq
        %v3933 = vshrl.u32 %v3932, 7
        %v3934 = vsub.s32 0, %v3933
        %v3935 = vrot.slane %v3930, %v3934
        %v3937 = vadd.f32 %v3631, %v3935
        %v3938 = vmul.f32 %v3937, 0.70710677
        %vm3939 = vcmp.ge.f32.partialorder %v3938, 0.0
        %v3940 = vsel %vm3939, 1.0, -1.0
        %v3941 = vand.u32 2147483647, %v3938
        %v3942 = vmul.f32 %v3941, 0.3275911
        %v3943 = vadd.f32 %v3942, 1.0
        %v3944 = vrcp.pop %v3943
        %v3945 = vmul.f32 %v3944, 1.0614054
        %v3946 = vadd.f32 %v3945, -1.4531521
        %v3947 = vmul.f32 %v3946, %v3944
        %v3948 = vadd.f32 %v3947, 1.4214138
        %v3949 = vmul.f32 %v3948, %v3944
        %v3950 = vadd.f32 %v3949, -0.28449672
        %v3951 = vmul.f32 %v3950, %v3944
        %v3952 = vadd.f32 %v3951, 0.2548296
        %v3953 = vmul.f32 %v3952, %v3944
        %v3954 = vsub.f32 0.0, %v3941
        %v3955 = vmul.f32 %v3954, %v3941
        %v3956 = vmul.f32 %v3955, 1.442695
        %v3957 = vpow.pop %v3956
        %v3958 = vmul.f32 %v3953, %v3957
        %v3959 = vsub.f32 1.0, %v3958
        %v3960 = vmul.f32 %v3940, %v3959
        %v3961 = vmul.f32 %v3937, 0.5
        %v3962 = vadd.f32 %v3960, 1.0
        %v3963 = vmul.f32 %v3961, %v3962
        %3965 = vrot.lane.b32.xlu0 %v3963, 96
        %v3966 = vpop.permute.xlu0 %3965
        %3968 = vst.msk [vmem:[%s177 + $0x18] sm:$0xff] %vm1210, %v3966
        %3969 = vst.msk [vmem:[%s177 + $0x20] sm:$0xff] %vm1212, %v3966
        loop: start=0, step=1, limit=16
        $region110: #{pos_emb_forward.1} parent=31 // loop_pre_header
          _
        $region111: #{pos_emb_forward.1} parent=31 // loop_header
          %s3971 = sphi 0, %s3975
          %p3972 = scmp.ge.s32.totalorder %s3971, 16
          %v3976 = vphi 0.0, %v4273
        $region112: #{pos_emb_forward.1} parent=31 // loop_header_branch
          %3974 = sbr.rel (%p3972) target = $region116
        $region113: #{pos_emb_forward.1} parent=31 // loop_body
          %s3977 = smul.u32 %s3971, 8
          %s3978 = sshra.s32 %s3977, 3
          %s3979 = sand.u32 %s3977, 7
          %s3980 = smul.u32 %s3978, 3
          %s3981 = sadd.s32 %s3980, 561
          %s3982 = smul.addr %s3981, 4
          %s3983 = scalar_lea.vmem %s182, %s3982
          %v3984 = vld [vmem:[%s3983] sm:$0xff]
          %v3985 = vld [vmem:[%s3983 + $0x8] sm:$0xf]
          %s3986 = smul.u32 %s3971, 48
          %s3987 = sadd.s32 %s3986, 8448
          %s3988 = smul.addr %s3987, 4
          %s3989 = scalar_lea.vmem %s1, %s3988
          %v3990 = vld [vmem:[%s3989] sm:$0xf]
          %v3991 = vld [vmem:[%s3989 + $0x4] sm:$0xf]
          %v3992 = vld [vmem:[%s3989 + $0x8] sm:$0xf]
          %v3993 = vld [vmem:[%s3989 + $0xc] sm:$0xf]
          %v3994 = vld [vmem:[%s3989 + $0x10] sm:$0xf]
          %v3995 = vld [vmem:[%s3989 + $0x14] sm:$0xf]
          %v3996 = vld [vmem:[%s3989 + $0x18] sm:$0xf]
          %v3997 = vld [vmem:[%s3989 + $0x1c] sm:$0xf]
          %v3998 = vld [vmem:[%s3989 + $0x20] sm:$0xf]
          %v3999 = vld [vmem:[%s3989 + $0x24] sm:$0xf]
          %v4000 = vld [vmem:[%s3989 + $0x28] sm:$0xf]
          %v4001 = vld [vmem:[%s3989 + $0x2c] sm:$0xf]
          %v4002 = vld [vmem:[%s3989 + $0x30] sm:$0xf]
          %v4003 = vld [vmem:[%s3989 + $0x34] sm:$0xf]
          %v4004 = vld [vmem:[%s3989 + $0x38] sm:$0xf]
          %v4005 = vld [vmem:[%s3989 + $0x3c] sm:$0xf]
          %v4006 = vld [vmem:[%s3989 + $0x40] sm:$0xf]
          %v4007 = vld [vmem:[%s3989 + $0x44] sm:$0xf]
          %v4008 = vld [vmem:[%s3989 + $0x48] sm:$0xf]
          %v4009 = vld [vmem:[%s3989 + $0x4c] sm:$0xf]
          %v4010 = vld [vmem:[%s3989 + $0x50] sm:$0xf]
          %v4011 = vld [vmem:[%s3989 + $0x54] sm:$0xf]
          %v4012 = vld [vmem:[%s3989 + $0x58] sm:$0xf]
          %v4013 = vld [vmem:[%s3989 + $0x5c] sm:$0xf]
          %v4014 = vld [vmem:[%s3989 + $0x60] sm:$0xf]
          %v4015 = vld [vmem:[%s3989 + $0x64] sm:$0xf]
          %v4016 = vld [vmem:[%s3989 + $0x68] sm:$0xf]
          %v4017 = vld [vmem:[%s3989 + $0x6c] sm:$0xf]
          %v4018 = vld [vmem:[%s3989 + $0x70] sm:$0xf]
          %v4019 = vld [vmem:[%s3989 + $0x74] sm:$0xf]
          %v4020 = vld [vmem:[%s3989 + $0x78] sm:$0xf]
          %v4021 = vld [vmem:[%s3989 + $0x7c] sm:$0xf]
          %v4022 = vld [vmem:[%s3989 + $0x80] sm:$0xf]
          %v4023 = vld [vmem:[%s3989 + $0x84] sm:$0xf]
          %v4024 = vld [vmem:[%s3989 + $0x88] sm:$0xf]
          %v4025 = vld [vmem:[%s3989 + $0x8c] sm:$0xf]
          %v4026 = vld [vmem:[%s3989 + $0x90] sm:$0xf]
          %v4027 = vld [vmem:[%s3989 + $0x94] sm:$0xf]
          %v4028 = vld [vmem:[%s3989 + $0x98] sm:$0xf]
          %v4029 = vld [vmem:[%s3989 + $0x9c] sm:$0xf]
          %v4030 = vld [vmem:[%s3989 + $0xa0] sm:$0xf]
          %v4031 = vld [vmem:[%s3989 + $0xa4] sm:$0xf]
          %v4032 = vld [vmem:[%s3989 + $0xa8] sm:$0xf]
          %v4033 = vld [vmem:[%s3989 + $0xac] sm:$0xf]
          %v4034 = vld [vmem:[%s3989 + $0xb0] sm:$0xf]
          %v4035 = vld [vmem:[%s3989 + $0xb4] sm:$0xf]
          %v4036 = vld [vmem:[%s3989 + $0xb8] sm:$0xf]
          %v4037 = vld [vmem:[%s3989 + $0xbc] sm:$0xf]
          %v4040 = vunpack.c.l.b16 %v3984
          %v4041 = vunpack.c.h.b16 %v3984
          %v4042 = vunpack.c.l.b16 %v3985
          %v4043 = vpack.c.b16 %v4040, %v4040
          %v4044 = vpack.c.b16 %v4041, %v4041
          %v4045 = vpack.c.b16 %v4042, %v4042
          %v4097 = vunpack.c.l.b16 %v3990
          %v4098 = vunpack.c.l.b16 %v3991
          %v4099 = vunpack.c.l.b16 %v3992
          %v4100 = vunpack.c.l.b16 %v3993
          %v4101 = vunpack.c.l.b16 %v3994
          %v4102 = vunpack.c.l.b16 %v3995
          %v4103 = vunpack.c.l.b16 %v3996
          %v4104 = vunpack.c.l.b16 %v3997
          %v4105 = vunpack.c.l.b16 %v3998
          %v4106 = vunpack.c.l.b16 %v3999
          %v4107 = vunpack.c.l.b16 %v4000
          %v4108 = vunpack.c.l.b16 %v4001
          %v4109 = vunpack.c.l.b16 %v4002
          %v4110 = vunpack.c.l.b16 %v4003
          %v4111 = vunpack.c.l.b16 %v4004
          %v4112 = vunpack.c.l.b16 %v4005
          %v4113 = vunpack.c.l.b16 %v4006
          %v4114 = vunpack.c.l.b16 %v4007
          %v4115 = vunpack.c.l.b16 %v4008
          %v4116 = vunpack.c.l.b16 %v4009
          %v4117 = vunpack.c.l.b16 %v4010
          %v4118 = vunpack.c.l.b16 %v4011
          %v4119 = vunpack.c.l.b16 %v4012
          %v4120 = vunpack.c.l.b16 %v4013
          %v4121 = vunpack.c.l.b16 %v4014
          %v4122 = vunpack.c.l.b16 %v4015
          %v4123 = vunpack.c.l.b16 %v4016
          %v4124 = vunpack.c.l.b16 %v4017
          %v4125 = vunpack.c.l.b16 %v4018
          %v4126 = vunpack.c.l.b16 %v4019
          %v4127 = vunpack.c.l.b16 %v4020
          %v4128 = vunpack.c.l.b16 %v4021
          %v4129 = vunpack.c.l.b16 %v4022
          %v4130 = vunpack.c.l.b16 %v4023
          %v4131 = vunpack.c.l.b16 %v4024
          %v4132 = vunpack.c.l.b16 %v4025
          %v4133 = vunpack.c.l.b16 %v4026
          %v4134 = vunpack.c.l.b16 %v4027
          %v4135 = vunpack.c.l.b16 %v4028
          %v4136 = vunpack.c.l.b16 %v4029
          %v4137 = vunpack.c.l.b16 %v4030
          %v4138 = vunpack.c.l.b16 %v4031
          %v4139 = vunpack.c.l.b16 %v4032
          %v4140 = vunpack.c.l.b16 %v4033
          %v4141 = vunpack.c.l.b16 %v4034
          %v4142 = vunpack.c.l.b16 %v4035
          %v4143 = vunpack.c.l.b16 %v4036
          %v4144 = vunpack.c.l.b16 %v4037
          %v4145 = vpack.c.b16 %v4098, %v4097
          %v4146 = vpack.c.b16 %v4100, %v4099
          %v4147 = vpack.c.b16 %v4102, %v4101
          %v4148 = vpack.c.b16 %v4104, %v4103
          %v4149 = vpack.c.b16 %v4106, %v4105
          %v4150 = vpack.c.b16 %v4108, %v4107
          %v4151 = vpack.c.b16 %v4110, %v4109
          %v4152 = vpack.c.b16 %v4112, %v4111
          %v4153 = vpack.c.b16 %v4114, %v4113
          %v4154 = vpack.c.b16 %v4116, %v4115
          %v4155 = vpack.c.b16 %v4118, %v4117
          %v4156 = vpack.c.b16 %v4120, %v4119
          %v4157 = vpack.c.b16 %v4122, %v4121
          %v4158 = vpack.c.b16 %v4124, %v4123
          %v4159 = vpack.c.b16 %v4126, %v4125
          %v4160 = vpack.c.b16 %v4128, %v4127
          %v4161 = vpack.c.b16 %v4130, %v4129
          %v4162 = vpack.c.b16 %v4132, %v4131
          %v4163 = vpack.c.b16 %v4134, %v4133
          %v4164 = vpack.c.b16 %v4136, %v4135
          %v4165 = vpack.c.b16 %v4138, %v4137
          %v4166 = vpack.c.b16 %v4140, %v4139
          %v4167 = vpack.c.b16 %v4142, %v4141
          %v4168 = vpack.c.b16 %v4144, %v4143
          %4193 = vmatprep.subr.bf16.mxu0 0
          %4194 = vmatpush1.bf16.msra.mxu0 %v4145
          %4195 = vmatprep.subr.bf16.mxu0 0
          %4196 = vmatpush1.bf16.msra.mxu0 %v4146
          %4197 = vmatprep.subr.bf16.mxu0 0
          %4198 = vmatpush1.bf16.msra.mxu0 %v4147
          %4199 = vmatprep.subr.bf16.mxu0 0
          %4200 = vmatpush1.bf16.msra.mxu0 %v4148
          %4201 = vmatprep.subr.bf16.mxu0 0
          %4202 = vmatpush1.bf16.msra.mxu0 %v4149
          %4203 = vmatprep.subr.bf16.mxu0 0
          %4204 = vmatpush1.bf16.msra.mxu0 %v4150
          %4205 = vmatprep.subr.bf16.mxu0 0
          %4206 = vmatpush1.bf16.msra.mxu0 %v4151
          %4207 = vmatprep.subr.bf16.mxu0 0
          %4208 = vmatpush1.bf16.msra.mxu0 %v4152
          %4209 = vmatprep.subr.bf16.mxu0 0
          %4210 = vmatpush1.bf16.msra.mxu0 %v4153
          %4211 = vmatprep.subr.bf16.mxu0 0
          %4212 = vmatpush1.bf16.msra.mxu0 %v4154
          %4213 = vmatprep.subr.bf16.mxu0 0
          %4214 = vmatpush1.bf16.msra.mxu0 %v4155
          %4215 = vmatprep.subr.bf16.mxu0 0
          %4216 = vmatpush1.bf16.msra.mxu0 %v4156
          %4217 = vmatprep.subr.bf16.mxu0 0
          %4218 = vmatpush1.bf16.msra.mxu0 %v4157
          %4219 = vmatprep.subr.bf16.mxu0 0
          %4220 = vmatpush1.bf16.msra.mxu0 %v4158
          %4221 = vmatprep.subr.bf16.mxu0 0
          %4222 = vmatpush1.bf16.msra.mxu0 %v4159
          %4223 = vmatprep.subr.bf16.mxu0 0
          %4224 = vmatpush1.bf16.msra.mxu0 %v4160
          %4225 = vmatprep.mubr.bf16.mxu0 %v4044
          %4226 = vmatmul.mubr.bf16.gmra.mrb[0].mxu0 %v4043
          %v4227 = vpop.f32.mrb[0].mxu0
          %v4228 = vadd.f32 0.0, %v4227
          %v4229 = vpop.f32.mrb[0].mxu0
          %v4230 = vpop.f32.mrb[0].mxu0
          %v4231 = vpop.f32.mrb[0].mxu0
          %4232 = vdwg.mxu0
          %4233 = vmatprep.subr.bf16.mxu0 0
          %4234 = vmatpush1.bf16.msra.mxu0 %v4161
          %4235 = vmatprep.subr.bf16.mxu0 0
          %4236 = vmatpush1.bf16.msra.mxu0 %v4162
          %4237 = vmatprep.subr.bf16.mxu0 0
          %4238 = vmatpush1.bf16.msra.mxu0 %v4163
          %4239 = vmatprep.subr.bf16.mxu0 0
          %4240 = vmatpush1.bf16.msra.mxu0 %v4164
          %4241 = vmatprep.subr.bf16.mxu0 0
          %4242 = vmatpush1.bf16.msra.mxu0 %v4165
          %4243 = vmatprep.subr.bf16.mxu0 0
          %4244 = vmatpush1.bf16.msra.mxu0 %v4166
          %4245 = vmatprep.subr.bf16.mxu0 0
          %4246 = vmatpush1.bf16.msra.mxu0 %v4167
          %4247 = vmatprep.subr.bf16.mxu0 0
          %4248 = vmatpush1.bf16.msra.mxu0 %v4168
          %4249 = vmatprep.subr.bf16.mxu0 0
          %4250 = vmatpush1.bf16.msra.mxu0 0
          %4251 = vmatprep.subr.bf16.mxu0 0
          %4252 = vmatpush1.bf16.msra.mxu0 0
          %4253 = vmatprep.subr.bf16.mxu0 0
          %4254 = vmatpush1.bf16.msra.mxu0 0
          %4255 = vmatprep.subr.bf16.mxu0 0
          %4256 = vmatpush1.bf16.msra.mxu0 0
          %4257 = vmatprep.subr.bf16.mxu0 0
          %4258 = vmatpush1.bf16.msra.mxu0 0
          %4259 = vmatprep.subr.bf16.mxu0 0
          %4260 = vmatpush1.bf16.msra.mxu0 0
          %4261 = vmatprep.subr.bf16.mxu0 0
          %4262 = vmatpush1.bf16.msra.mxu0 0
          %4263 = vmatprep.subr.bf16.mxu0 0
          %4264 = vmatpush1.bf16.msra.mxu0 0
          %4265 = vmatprep.mubr.bf16.mxu0 0
          %4266 = vmatmul.mubr.bf16.gmra.mrb[0].mxu0 %v4045
          %v4267 = vpop.f32.mrb[0].mxu0
          %v4268 = vadd.f32 %v4228, %v4267
          %v4269 = vpop.f32.mrb[0].mxu0
          %v4270 = vpop.f32.mrb[0].mxu0
          %v4271 = vpop.f32.mrb[0].mxu0
          %4272 = vdwg.mxu0
          %v4273 = vadd.f32 %v3976, %v4268
        $region114: #{pos_emb_forward.1} parent=31 // loop_footer
          %s3975 = sadd.s32 1, %s3971
        $region115: #{pos_emb_forward.1} parent=31 // loop_footer_branch
          %3970 = sbr.rel target = $region111
        $region116: #{pos_emb_forward.1} parent=31 // loop_exit
          _
        %s4274 = scalar_lea.vmem %s2, 11
        %v4275 = vld [vmem:[%s4274] sm:$0x1]
        %v4277 = vlaneseq
        %v4278 = vshrl.u32 %v4277, 7
        %v4279 = vsub.s32 0, %v4278
        %v4280 = vrot.slane %v4275, %v4279
        %v4282 = vadd.f32 %v3976, %v4280
        %v4283 = vmul.f32 %v4282, 0.70710677
        %vm4284 = vcmp.ge.f32.partialorder %v4283, 0.0
        %v4285 = vsel %vm4284, 1.0, -1.0
        %v4286 = vand.u32 2147483647, %v4283
        %v4287 = vmul.f32 %v4286, 0.3275911
        %v4288 = vadd.f32 %v4287, 1.0
        %v4289 = vrcp.pop %v4288
        %v4290 = vmul.f32 %v4289, 1.0614054
        %v4291 = vadd.f32 %v4290, -1.4531521
        %v4292 = vmul.f32 %v4291, %v4289
        %v4293 = vadd.f32 %v4292, 1.4214138
        %v4294 = vmul.f32 %v4293, %v4289
        %v4295 = vadd.f32 %v4294, -0.28449672
        %v4296 = vmul.f32 %v4295, %v4289
        %v4297 = vadd.f32 %v4296, 0.2548296
        %v4298 = vmul.f32 %v4297, %v4289
        %v4299 = vsub.f32 0.0, %v4286
        %v4300 = vmul.f32 %v4299, %v4286
        %v4301 = vmul.f32 %v4300, 1.442695
        %v4302 = vpow.pop %v4301
        %v4303 = vmul.f32 %v4298, %v4302
        %v4304 = vsub.f32 1.0, %v4303
        %v4305 = vmul.f32 %v4285, %v4304
        %v4306 = vmul.f32 %v4282, 0.5
        %v4307 = vadd.f32 %v4305, 1.0
        %v4308 = vmul.f32 %v4306, %v4307
        %4310 = vrot.lane.b32.xlu0 %v4308, 16
        %v4311 = vpop.permute.xlu0 %4310
        %4313 = vst.msk [vmem:[%s177 + $0x20] sm:$0xff] %vm1557, %v4311
        loop: start=0, step=1, limit=16
        $region117: #{pos_emb_forward.1} parent=31 // loop_pre_header
          _
        $region118: #{pos_emb_forward.1} parent=31 // loop_header
          %s4315 = sphi 0, %s4319
          %p4316 = scmp.ge.s32.totalorder %s4315, 16
          %v4320 = vphi 0.0, %v4617
        $region119: #{pos_emb_forward.1} parent=31 // loop_header_branch
          %4318 = sbr.rel (%p4316) target = $region123
        $region120: #{pos_emb_forward.1} parent=31 // loop_body
          %s4321 = smul.u32 %s4315, 8
          %s4322 = sshra.s32 %s4321, 3
          %s4323 = sand.u32 %s4321, 7
          %s4324 = smul.u32 %s4322, 3
          %s4325 = sadd.s32 %s4324, 612
          %s4326 = smul.addr %s4325, 4
          %s4327 = scalar_lea.vmem %s182, %s4326
          %v4328 = vld [vmem:[%s4327] sm:$0xff]
          %v4329 = vld [vmem:[%s4327 + $0x8] sm:$0xf]
          %s4330 = smul.u32 %s4315, 48
          %s4331 = sadd.s32 %s4330, 9216
          %s4332 = smul.addr %s4331, 4
          %s4333 = scalar_lea.vmem %s1, %s4332
          %v4334 = vld [vmem:[%s4333] sm:$0xf]
          %v4335 = vld [vmem:[%s4333 + $0x4] sm:$0xf]
          %v4336 = vld [vmem:[%s4333 + $0x8] sm:$0xf]
          %v4337 = vld [vmem:[%s4333 + $0xc] sm:$0xf]
          %v4338 = vld [vmem:[%s4333 + $0x10] sm:$0xf]
          %v4339 = vld [vmem:[%s4333 + $0x14] sm:$0xf]
          %v4340 = vld [vmem:[%s4333 + $0x18] sm:$0xf]
          %v4341 = vld [vmem:[%s4333 + $0x1c] sm:$0xf]
          %v4342 = vld [vmem:[%s4333 + $0x20] sm:$0xf]
          %v4343 = vld [vmem:[%s4333 + $0x24] sm:$0xf]
          %v4344 = vld [vmem:[%s4333 + $0x28] sm:$0xf]
          %v4345 = vld [vmem:[%s4333 + $0x2c] sm:$0xf]
          %v4346 = vld [vmem:[%s4333 + $0x30] sm:$0xf]
          %v4347 = vld [vmem:[%s4333 + $0x34] sm:$0xf]
          %v4348 = vld [vmem:[%s4333 + $0x38] sm:$0xf]
          %v4349 = vld [vmem:[%s4333 + $0x3c] sm:$0xf]
          %v4350 = vld [vmem:[%s4333 + $0x40] sm:$0xf]
          %v4351 = vld [vmem:[%s4333 + $0x44] sm:$0xf]
          %v4352 = vld [vmem:[%s4333 + $0x48] sm:$0xf]
          %v4353 = vld [vmem:[%s4333 + $0x4c] sm:$0xf]
          %v4354 = vld [vmem:[%s4333 + $0x50] sm:$0xf]
          %v4355 = vld [vmem:[%s4333 + $0x54] sm:$0xf]
          %v4356 = vld [vmem:[%s4333 + $0x58] sm:$0xf]
          %v4357 = vld [vmem:[%s4333 + $0x5c] sm:$0xf]
          %v4358 = vld [vmem:[%s4333 + $0x60] sm:$0xf]
          %v4359 = vld [vmem:[%s4333 + $0x64] sm:$0xf]
          %v4360 = vld [vmem:[%s4333 + $0x68] sm:$0xf]
          %v4361 = vld [vmem:[%s4333 + $0x6c] sm:$0xf]
          %v4362 = vld [vmem:[%s4333 + $0x70] sm:$0xf]
          %v4363 = vld [vmem:[%s4333 + $0x74] sm:$0xf]
          %v4364 = vld [vmem:[%s4333 + $0x78] sm:$0xf]
          %v4365 = vld [vmem:[%s4333 + $0x7c] sm:$0xf]
          %v4366 = vld [vmem:[%s4333 + $0x80] sm:$0xf]
          %v4367 = vld [vmem:[%s4333 + $0x84] sm:$0xf]
          %v4368 = vld [vmem:[%s4333 + $0x88] sm:$0xf]
          %v4369 = vld [vmem:[%s4333 + $0x8c] sm:$0xf]
          %v4370 = vld [vmem:[%s4333 + $0x90] sm:$0xf]
          %v4371 = vld [vmem:[%s4333 + $0x94] sm:$0xf]
          %v4372 = vld [vmem:[%s4333 + $0x98] sm:$0xf]
          %v4373 = vld [vmem:[%s4333 + $0x9c] sm:$0xf]
          %v4374 = vld [vmem:[%s4333 + $0xa0] sm:$0xf]
          %v4375 = vld [vmem:[%s4333 + $0xa4] sm:$0xf]
          %v4376 = vld [vmem:[%s4333 + $0xa8] sm:$0xf]
          %v4377 = vld [vmem:[%s4333 + $0xac] sm:$0xf]
          %v4378 = vld [vmem:[%s4333 + $0xb0] sm:$0xf]
          %v4379 = vld [vmem:[%s4333 + $0xb4] sm:$0xf]
          %v4380 = vld [vmem:[%s4333 + $0xb8] sm:$0xf]
          %v4381 = vld [vmem:[%s4333 + $0xbc] sm:$0xf]
          %v4384 = vunpack.c.l.b16 %v4328
          %v4385 = vunpack.c.h.b16 %v4328
          %v4386 = vunpack.c.l.b16 %v4329
          %v4387 = vpack.c.b16 %v4384, %v4384
          %v4388 = vpack.c.b16 %v4385, %v4385
          %v4389 = vpack.c.b16 %v4386, %v4386
          %v4441 = vunpack.c.l.b16 %v4334
          %v4442 = vunpack.c.l.b16 %v4335
          %v4443 = vunpack.c.l.b16 %v4336
          %v4444 = vunpack.c.l.b16 %v4337
          %v4445 = vunpack.c.l.b16 %v4338
          %v4446 = vunpack.c.l.b16 %v4339
          %v4447 = vunpack.c.l.b16 %v4340
          %v4448 = vunpack.c.l.b16 %v4341
          %v4449 = vunpack.c.l.b16 %v4342
          %v4450 = vunpack.c.l.b16 %v4343
          %v4451 = vunpack.c.l.b16 %v4344
          %v4452 = vunpack.c.l.b16 %v4345
          %v4453 = vunpack.c.l.b16 %v4346
          %v4454 = vunpack.c.l.b16 %v4347
          %v4455 = vunpack.c.l.b16 %v4348
          %v4456 = vunpack.c.l.b16 %v4349
          %v4457 = vunpack.c.l.b16 %v4350
          %v4458 = vunpack.c.l.b16 %v4351
          %v4459 = vunpack.c.l.b16 %v4352
          %v4460 = vunpack.c.l.b16 %v4353
          %v4461 = vunpack.c.l.b16 %v4354
          %v4462 = vunpack.c.l.b16 %v4355
          %v4463 = vunpack.c.l.b16 %v4356
          %v4464 = vunpack.c.l.b16 %v4357
          %v4465 = vunpack.c.l.b16 %v4358
          %v4466 = vunpack.c.l.b16 %v4359
          %v4467 = vunpack.c.l.b16 %v4360
          %v4468 = vunpack.c.l.b16 %v4361
          %v4469 = vunpack.c.l.b16 %v4362
          %v4470 = vunpack.c.l.b16 %v4363
          %v4471 = vunpack.c.l.b16 %v4364
          %v4472 = vunpack.c.l.b16 %v4365
          %v4473 = vunpack.c.l.b16 %v4366
          %v4474 = vunpack.c.l.b16 %v4367
          %v4475 = vunpack.c.l.b16 %v4368
          %v4476 = vunpack.c.l.b16 %v4369
          %v4477 = vunpack.c.l.b16 %v4370
          %v4478 = vunpack.c.l.b16 %v4371
          %v4479 = vunpack.c.l.b16 %v4372
          %v4480 = vunpack.c.l.b16 %v4373
          %v4481 = vunpack.c.l.b16 %v4374
          %v4482 = vunpack.c.l.b16 %v4375
          %v4483 = vunpack.c.l.b16 %v4376
          %v4484 = vunpack.c.l.b16 %v4377
          %v4485 = vunpack.c.l.b16 %v4378
          %v4486 = vunpack.c.l.b16 %v4379
          %v4487 = vunpack.c.l.b16 %v4380
          %v4488 = vunpack.c.l.b16 %v4381
          %v4489 = vpack.c.b16 %v4442, %v4441
          %v4490 = vpack.c.b16 %v4444, %v4443
          %v4491 = vpack.c.b16 %v4446, %v4445
          %v4492 = vpack.c.b16 %v4448, %v4447
          %v4493 = vpack.c.b16 %v4450, %v4449
          %v4494 = vpack.c.b16 %v4452, %v4451
          %v4495 = vpack.c.b16 %v4454, %v4453
          %v4496 = vpack.c.b16 %v4456, %v4455
          %v4497 = vpack.c.b16 %v4458, %v4457
          %v4498 = vpack.c.b16 %v4460, %v4459
          %v4499 = vpack.c.b16 %v4462, %v4461
          %v4500 = vpack.c.b16 %v4464, %v4463
          %v4501 = vpack.c.b16 %v4466, %v4465
          %v4502 = vpack.c.b16 %v4468, %v4467
          %v4503 = vpack.c.b16 %v4470, %v4469
          %v4504 = vpack.c.b16 %v4472, %v4471
          %v4505 = vpack.c.b16 %v4474, %v4473
          %v4506 = vpack.c.b16 %v4476, %v4475
          %v4507 = vpack.c.b16 %v4478, %v4477
          %v4508 = vpack.c.b16 %v4480, %v4479
          %v4509 = vpack.c.b16 %v4482, %v4481
          %v4510 = vpack.c.b16 %v4484, %v4483
          %v4511 = vpack.c.b16 %v4486, %v4485
          %v4512 = vpack.c.b16 %v4488, %v4487
          %4537 = vmatprep.subr.bf16.mxu0 0
          %4538 = vmatpush1.bf16.msra.mxu0 %v4489
          %4539 = vmatprep.subr.bf16.mxu0 0
          %4540 = vmatpush1.bf16.msra.mxu0 %v4490
          %4541 = vmatprep.subr.bf16.mxu0 0
          %4542 = vmatpush1.bf16.msra.mxu0 %v4491
          %4543 = vmatprep.subr.bf16.mxu0 0
          %4544 = vmatpush1.bf16.msra.mxu0 %v4492
          %4545 = vmatprep.subr.bf16.mxu0 0
          %4546 = vmatpush1.bf16.msra.mxu0 %v4493
          %4547 = vmatprep.subr.bf16.mxu0 0
          %4548 = vmatpush1.bf16.msra.mxu0 %v4494
          %4549 = vmatprep.subr.bf16.mxu0 0
          %4550 = vmatpush1.bf16.msra.mxu0 %v4495
          %4551 = vmatprep.subr.bf16.mxu0 0
          %4552 = vmatpush1.bf16.msra.mxu0 %v4496
          %4553 = vmatprep.subr.bf16.mxu0 0
          %4554 = vmatpush1.bf16.msra.mxu0 %v4497
          %4555 = vmatprep.subr.bf16.mxu0 0
          %4556 = vmatpush1.bf16.msra.mxu0 %v4498
          %4557 = vmatprep.subr.bf16.mxu0 0
          %4558 = vmatpush1.bf16.msra.mxu0 %v4499
          %4559 = vmatprep.subr.bf16.mxu0 0
          %4560 = vmatpush1.bf16.msra.mxu0 %v4500
          %4561 = vmatprep.subr.bf16.mxu0 0
          %4562 = vmatpush1.bf16.msra.mxu0 %v4501
          %4563 = vmatprep.subr.bf16.mxu0 0
          %4564 = vmatpush1.bf16.msra.mxu0 %v4502
          %4565 = vmatprep.subr.bf16.mxu0 0
          %4566 = vmatpush1.bf16.msra.mxu0 %v4503
          %4567 = vmatprep.subr.bf16.mxu0 0
          %4568 = vmatpush1.bf16.msra.mxu0 %v4504
          %4569 = vmatprep.mubr.bf16.mxu0 %v4388
          %4570 = vmatmul.mubr.bf16.gmra.mrb[0].mxu0 %v4387
          %v4571 = vpop.f32.mrb[0].mxu0
          %v4572 = vadd.f32 0.0, %v4571
          %v4573 = vpop.f32.mrb[0].mxu0
          %v4574 = vpop.f32.mrb[0].mxu0
          %v4575 = vpop.f32.mrb[0].mxu0
          %4576 = vdwg.mxu0
          %4577 = vmatprep.subr.bf16.mxu0 0
          %4578 = vmatpush1.bf16.msra.mxu0 %v4505
          %4579 = vmatprep.subr.bf16.mxu0 0
          %4580 = vmatpush1.bf16.msra.mxu0 %v4506
          %4581 = vmatprep.subr.bf16.mxu0 0
          %4582 = vmatpush1.bf16.msra.mxu0 %v4507
          %4583 = vmatprep.subr.bf16.mxu0 0
          %4584 = vmatpush1.bf16.msra.mxu0 %v4508
          %4585 = vmatprep.subr.bf16.mxu0 0
          %4586 = vmatpush1.bf16.msra.mxu0 %v4509
          %4587 = vmatprep.subr.bf16.mxu0 0
          %4588 = vmatpush1.bf16.msra.mxu0 %v4510
          %4589 = vmatprep.subr.bf16.mxu0 0
          %4590 = vmatpush1.bf16.msra.mxu0 %v4511
          %4591 = vmatprep.subr.bf16.mxu0 0
          %4592 = vmatpush1.bf16.msra.mxu0 %v4512
          %4593 = vmatprep.subr.bf16.mxu0 0
          %4594 = vmatpush1.bf16.msra.mxu0 0
          %4595 = vmatprep.subr.bf16.mxu0 0
          %4596 = vmatpush1.bf16.msra.mxu0 0
          %4597 = vmatprep.subr.bf16.mxu0 0
          %4598 = vmatpush1.bf16.msra.mxu0 0
          %4599 = vmatprep.subr.bf16.mxu0 0
          %4600 = vmatpush1.bf16.msra.mxu0 0
          %4601 = vmatprep.subr.bf16.mxu0 0
          %4602 = vmatpush1.bf16.msra.mxu0 0
          %4603 = vmatprep.subr.bf16.mxu0 0
          %4604 = vmatpush1.bf16.msra.mxu0 0
          %4605 = vmatprep.subr.bf16.mxu0 0
          %4606 = vmatpush1.bf16.msra.mxu0 0
          %4607 = vmatprep.subr.bf16.mxu0 0
          %4608 = vmatpush1.bf16.msra.mxu0 0
          %4609 = vmatprep.mubr.bf16.mxu0 0
          %4610 = vmatmul.mubr.bf16.gmra.mrb[0].mxu0 %v4389
          %v4611 = vpop.f32.mrb[0].mxu0
          %v4612 = vadd.f32 %v4572, %v4611
          %v4613 = vpop.f32.mrb[0].mxu0
          %v4614 = vpop.f32.mrb[0].mxu0
          %v4615 = vpop.f32.mrb[0].mxu0
          %4616 = vdwg.mxu0
          %v4617 = vadd.f32 %v4320, %v4612
        $region121: #{pos_emb_forward.1} parent=31 // loop_footer
          %s4319 = sadd.s32 1, %s4315
        $region122: #{pos_emb_forward.1} parent=31 // loop_footer_branch
          %4314 = sbr.rel target = $region118
        $region123: #{pos_emb_forward.1} parent=31 // loop_exit
          _
        %s4618 = scalar_lea.vmem %s2, 12
        %v4619 = vld [vmem:[%s4618] sm:$0x1]
        %v4621 = vlaneseq
        %v4622 = vshrl.u32 %v4621, 7
        %v4623 = vsub.s32 0, %v4622
        %v4624 = vrot.slane %v4619, %v4623
        %v4626 = vadd.f32 %v4320, %v4624
        %v4627 = vmul.f32 %v4626, 0.70710677
        %vm4628 = vcmp.ge.f32.partialorder %v4627, 0.0
        %v4629 = vsel %vm4628, 1.0, -1.0
        %v4630 = vand.u32 2147483647, %v4627
        %v4631 = vmul.f32 %v4630, 0.3275911
        %v4632 = vadd.f32 %v4631, 1.0
        %v4633 = vrcp.pop %v4632
        %v4634 = vmul.f32 %v4633, 1.0614054
        %v4635 = vadd.f32 %v4634, -1.4531521
        %v4636 = vmul.f32 %v4635, %v4633
        %v4637 = vadd.f32 %v4636, 1.4214138
        %v4638 = vmul.f32 %v4637, %v4633
        %v4639 = vadd.f32 %v4638, -0.28449672
        %v4640 = vmul.f32 %v4639, %v4633
        %v4641 = vadd.f32 %v4640, 0.2548296
        %v4642 = vmul.f32 %v4641, %v4633
        %v4643 = vsub.f32 0.0, %v4630
        %v4644 = vmul.f32 %v4643, %v4630
        %v4645 = vmul.f32 %v4644, 1.442695
        %v4646 = vpow.pop %v4645
        %v4647 = vmul.f32 %v4642, %v4646
        %v4648 = vsub.f32 1.0, %v4647
        %v4649 = vmul.f32 %v4629, %v4648
        %v4650 = vmul.f32 %v4626, 0.5
        %v4651 = vadd.f32 %v4649, 1.0
        %v4652 = vmul.f32 %v4650, %v4651
        %4654 = vrot.lane.b32.xlu0 %v4652, 64
        %v4655 = vpop.permute.xlu0 %4654
        %4657 = vst.msk [vmem:[%s177 + $0x20] sm:$0xff] %vm1902, %v4655
        loop: start=0, step=1, limit=16
        $region124: #{pos_emb_forward.1} parent=31 // loop_pre_header
          _
        $region125: #{pos_emb_forward.1} parent=31 // loop_header
          %s4659 = sphi 0, %s4663
          %p4660 = scmp.ge.s32.totalorder %s4659, 16
          %v4664 = vphi 0.0, %v4961
        $region126: #{pos_emb_forward.1} parent=31 // loop_header_branch
          %4662 = sbr.rel (%p4660) target = $region130
        $region127: #{pos_emb_forward.1} parent=31 // loop_body
          %s4665 = smul.u32 %s4659, 8
          %s4666 = sshra.s32 %s4665, 3
          %s4667 = sand.u32 %s4665, 7
          %s4668 = smul.u32 %s4666, 3
          %s4669 = sadd.s32 %s4668, 663
          %s4670 = smul.addr %s4669, 4
          %s4671 = scalar_lea.vmem %s182, %s4670
          %v4672 = vld [vmem:[%s4671] sm:$0xff]
          %v4673 = vld [vmem:[%s4671 + $0x8] sm:$0xf]
          %s4674 = smul.u32 %s4659, 48
          %s4675 = sadd.s32 %s4674, 9984
          %s4676 = smul.addr %s4675, 4
          %s4677 = scalar_lea.vmem %s1, %s4676
          %v4678 = vld [vmem:[%s4677] sm:$0xf]
          %v4679 = vld [vmem:[%s4677 + $0x4] sm:$0xf]
          %v4680 = vld [vmem:[%s4677 + $0x8] sm:$0xf]
          %v4681 = vld [vmem:[%s4677 + $0xc] sm:$0xf]
          %v4682 = vld [vmem:[%s4677 + $0x10] sm:$0xf]
          %v4683 = vld [vmem:[%s4677 + $0x14] sm:$0xf]
          %v4684 = vld [vmem:[%s4677 + $0x18] sm:$0xf]
          %v4685 = vld [vmem:[%s4677 + $0x1c] sm:$0xf]
          %v4686 = vld [vmem:[%s4677 + $0x20] sm:$0xf]
          %v4687 = vld [vmem:[%s4677 + $0x24] sm:$0xf]
          %v4688 = vld [vmem:[%s4677 + $0x28] sm:$0xf]
          %v4689 = vld [vmem:[%s4677 + $0x2c] sm:$0xf]
          %v4690 = vld [vmem:[%s4677 + $0x30] sm:$0xf]
          %v4691 = vld [vmem:[%s4677 + $0x34] sm:$0xf]
          %v4692 = vld [vmem:[%s4677 + $0x38] sm:$0xf]
          %v4693 = vld [vmem:[%s4677 + $0x3c] sm:$0xf]
          %v4694 = vld [vmem:[%s4677 + $0x40] sm:$0xf]
          %v4695 = vld [vmem:[%s4677 + $0x44] sm:$0xf]
          %v4696 = vld [vmem:[%s4677 + $0x48] sm:$0xf]
          %v4697 = vld [vmem:[%s4677 + $0x4c] sm:$0xf]
          %v4698 = vld [vmem:[%s4677 + $0x50] sm:$0xf]
          %v4699 = vld [vmem:[%s4677 + $0x54] sm:$0xf]
          %v4700 = vld [vmem:[%s4677 + $0x58] sm:$0xf]
          %v4701 = vld [vmem:[%s4677 + $0x5c] sm:$0xf]
          %v4702 = vld [vmem:[%s4677 + $0x60] sm:$0xf]
          %v4703 = vld [vmem:[%s4677 + $0x64] sm:$0xf]
          %v4704 = vld [vmem:[%s4677 + $0x68] sm:$0xf]
          %v4705 = vld [vmem:[%s4677 + $0x6c] sm:$0xf]
          %v4706 = vld [vmem:[%s4677 + $0x70] sm:$0xf]
          %v4707 = vld [vmem:[%s4677 + $0x74] sm:$0xf]
          %v4708 = vld [vmem:[%s4677 + $0x78] sm:$0xf]
          %v4709 = vld [vmem:[%s4677 + $0x7c] sm:$0xf]
          %v4710 = vld [vmem:[%s4677 + $0x80] sm:$0xf]
          %v4711 = vld [vmem:[%s4677 + $0x84] sm:$0xf]
          %v4712 = vld [vmem:[%s4677 + $0x88] sm:$0xf]
          %v4713 = vld [vmem:[%s4677 + $0x8c] sm:$0xf]
          %v4714 = vld [vmem:[%s4677 + $0x90] sm:$0xf]
          %v4715 = vld [vmem:[%s4677 + $0x94] sm:$0xf]
          %v4716 = vld [vmem:[%s4677 + $0x98] sm:$0xf]
          %v4717 = vld [vmem:[%s4677 + $0x9c] sm:$0xf]
          %v4718 = vld [vmem:[%s4677 + $0xa0] sm:$0xf]
          %v4719 = vld [vmem:[%s4677 + $0xa4] sm:$0xf]
          %v4720 = vld [vmem:[%s4677 + $0xa8] sm:$0xf]
          %v4721 = vld [vmem:[%s4677 + $0xac] sm:$0xf]
          %v4722 = vld [vmem:[%s4677 + $0xb0] sm:$0xf]
          %v4723 = vld [vmem:[%s4677 + $0xb4] sm:$0xf]
          %v4724 = vld [vmem:[%s4677 + $0xb8] sm:$0xf]
          %v4725 = vld [vmem:[%s4677 + $0xbc] sm:$0xf]
          %v4728 = vunpack.c.l.b16 %v4672
          %v4729 = vunpack.c.h.b16 %v4672
          %v4730 = vunpack.c.l.b16 %v4673
          %v4731 = vpack.c.b16 %v4728, %v4728
          %v4732 = vpack.c.b16 %v4729, %v4729
          %v4733 = vpack.c.b16 %v4730, %v4730
          %v4785 = vunpack.c.l.b16 %v4678
          %v4786 = vunpack.c.l.b16 %v4679
          %v4787 = vunpack.c.l.b16 %v4680
          %v4788 = vunpack.c.l.b16 %v4681
          %v4789 = vunpack.c.l.b16 %v4682
          %v4790 = vunpack.c.l.b16 %v4683
          %v4791 = vunpack.c.l.b16 %v4684
          %v4792 = vunpack.c.l.b16 %v4685
          %v4793 = vunpack.c.l.b16 %v4686
          %v4794 = vunpack.c.l.b16 %v4687
          %v4795 = vunpack.c.l.b16 %v4688
          %v4796 = vunpack.c.l.b16 %v4689
          %v4797 = vunpack.c.l.b16 %v4690
          %v4798 = vunpack.c.l.b16 %v4691
          %v4799 = vunpack.c.l.b16 %v4692
          %v4800 = vunpack.c.l.b16 %v4693
          %v4801 = vunpack.c.l.b16 %v4694
          %v4802 = vunpack.c.l.b16 %v4695
          %v4803 = vunpack.c.l.b16 %v4696
          %v4804 = vunpack.c.l.b16 %v4697
          %v4805 = vunpack.c.l.b16 %v4698
          %v4806 = vunpack.c.l.b16 %v4699
          %v4807 = vunpack.c.l.b16 %v4700
          %v4808 = vunpack.c.l.b16 %v4701
          %v4809 = vunpack.c.l.b16 %v4702
          %v4810 = vunpack.c.l.b16 %v4703
          %v4811 = vunpack.c.l.b16 %v4704
          %v4812 = vunpack.c.l.b16 %v4705
          %v4813 = vunpack.c.l.b16 %v4706
          %v4814 = vunpack.c.l.b16 %v4707
          %v4815 = vunpack.c.l.b16 %v4708
          %v4816 = vunpack.c.l.b16 %v4709
          %v4817 = vunpack.c.l.b16 %v4710
          %v4818 = vunpack.c.l.b16 %v4711
          %v4819 = vunpack.c.l.b16 %v4712
          %v4820 = vunpack.c.l.b16 %v4713
          %v4821 = vunpack.c.l.b16 %v4714
          %v4822 = vunpack.c.l.b16 %v4715
          %v4823 = vunpack.c.l.b16 %v4716
          %v4824 = vunpack.c.l.b16 %v4717
          %v4825 = vunpack.c.l.b16 %v4718
          %v4826 = vunpack.c.l.b16 %v4719
          %v4827 = vunpack.c.l.b16 %v4720
          %v4828 = vunpack.c.l.b16 %v4721
          %v4829 = vunpack.c.l.b16 %v4722
          %v4830 = vunpack.c.l.b16 %v4723
          %v4831 = vunpack.c.l.b16 %v4724
          %v4832 = vunpack.c.l.b16 %v4725
          %v4833 = vpack.c.b16 %v4786, %v4785
          %v4834 = vpack.c.b16 %v4788, %v4787
          %v4835 = vpack.c.b16 %v4790, %v4789
          %v4836 = vpack.c.b16 %v4792, %v4791
          %v4837 = vpack.c.b16 %v4794, %v4793
          %v4838 = vpack.c.b16 %v4796, %v4795
          %v4839 = vpack.c.b16 %v4798, %v4797
          %v4840 = vpack.c.b16 %v4800, %v4799
          %v4841 = vpack.c.b16 %v4802, %v4801
          %v4842 = vpack.c.b16 %v4804, %v4803
          %v4843 = vpack.c.b16 %v4806, %v4805
          %v4844 = vpack.c.b16 %v4808, %v4807
          %v4845 = vpack.c.b16 %v4810, %v4809
          %v4846 = vpack.c.b16 %v4812, %v4811
          %v4847 = vpack.c.b16 %v4814, %v4813
          %v4848 = vpack.c.b16 %v4816, %v4815
          %v4849 = vpack.c.b16 %v4818, %v4817
          %v4850 = vpack.c.b16 %v4820, %v4819
          %v4851 = vpack.c.b16 %v4822, %v4821
          %v4852 = vpack.c.b16 %v4824, %v4823
          %v4853 = vpack.c.b16 %v4826, %v4825
          %v4854 = vpack.c.b16 %v4828, %v4827
          %v4855 = vpack.c.b16 %v4830, %v4829
          %v4856 = vpack.c.b16 %v4832, %v4831
          %4881 = vmatprep.subr.bf16.mxu0 0
          %4882 = vmatpush1.bf16.msra.mxu0 %v4833
          %4883 = vmatprep.subr.bf16.mxu0 0
          %4884 = vmatpush1.bf16.msra.mxu0 %v4834
          %4885 = vmatprep.subr.bf16.mxu0 0
          %4886 = vmatpush1.bf16.msra.mxu0 %v4835
          %4887 = vmatprep.subr.bf16.mxu0 0
          %4888 = vmatpush1.bf16.msra.mxu0 %v4836
          %4889 = vmatprep.subr.bf16.mxu0 0
          %4890 = vmatpush1.bf16.msra.mxu0 %v4837
          %4891 = vmatprep.subr.bf16.mxu0 0
          %4892 = vmatpush1.bf16.msra.mxu0 %v4838
          %4893 = vmatprep.subr.bf16.mxu0 0
          %4894 = vmatpush1.bf16.msra.mxu0 %v4839
          %4895 = vmatprep.subr.bf16.mxu0 0
          %4896 = vmatpush1.bf16.msra.mxu0 %v4840
          %4897 = vmatprep.subr.bf16.mxu0 0
          %4898 = vmatpush1.bf16.msra.mxu0 %v4841
          %4899 = vmatprep.subr.bf16.mxu0 0
          %4900 = vmatpush1.bf16.msra.mxu0 %v4842
          %4901 = vmatprep.subr.bf16.mxu0 0
          %4902 = vmatpush1.bf16.msra.mxu0 %v4843
          %4903 = vmatprep.subr.bf16.mxu0 0
          %4904 = vmatpush1.bf16.msra.mxu0 %v4844
          %4905 = vmatprep.subr.bf16.mxu0 0
          %4906 = vmatpush1.bf16.msra.mxu0 %v4845
          %4907 = vmatprep.subr.bf16.mxu0 0
          %4908 = vmatpush1.bf16.msra.mxu0 %v4846
          %4909 = vmatprep.subr.bf16.mxu0 0
          %4910 = vmatpush1.bf16.msra.mxu0 %v4847
          %4911 = vmatprep.subr.bf16.mxu0 0
          %4912 = vmatpush1.bf16.msra.mxu0 %v4848
          %4913 = vmatprep.mubr.bf16.mxu0 %v4732
          %4914 = vmatmul.mubr.bf16.gmra.mrb[0].mxu0 %v4731
          %v4915 = vpop.f32.mrb[0].mxu0
          %v4916 = vadd.f32 0.0, %v4915
          %v4917 = vpop.f32.mrb[0].mxu0
          %v4918 = vpop.f32.mrb[0].mxu0
          %v4919 = vpop.f32.mrb[0].mxu0
          %4920 = vdwg.mxu0
          %4921 = vmatprep.subr.bf16.mxu0 0
          %4922 = vmatpush1.bf16.msra.mxu0 %v4849
          %4923 = vmatprep.subr.bf16.mxu0 0
          %4924 = vmatpush1.bf16.msra.mxu0 %v4850
          %4925 = vmatprep.subr.bf16.mxu0 0
          %4926 = vmatpush1.bf16.msra.mxu0 %v4851
          %4927 = vmatprep.subr.bf16.mxu0 0
          %4928 = vmatpush1.bf16.msra.mxu0 %v4852
          %4929 = vmatprep.subr.bf16.mxu0 0
          %4930 = vmatpush1.bf16.msra.mxu0 %v4853
          %4931 = vmatprep.subr.bf16.mxu0 0
          %4932 = vmatpush1.bf16.msra.mxu0 %v4854
          %4933 = vmatprep.subr.bf16.mxu0 0
          %4934 = vmatpush1.bf16.msra.mxu0 %v4855
          %4935 = vmatprep.subr.bf16.mxu0 0
          %4936 = vmatpush1.bf16.msra.mxu0 %v4856
          %4937 = vmatprep.subr.bf16.mxu0 0
          %4938 = vmatpush1.bf16.msra.mxu0 0
          %4939 = vmatprep.subr.bf16.mxu0 0
          %4940 = vmatpush1.bf16.msra.mxu0 0
          %4941 = vmatprep.subr.bf16.mxu0 0
          %4942 = vmatpush1.bf16.msra.mxu0 0
          %4943 = vmatprep.subr.bf16.mxu0 0
          %4944 = vmatpush1.bf16.msra.mxu0 0
          %4945 = vmatprep.subr.bf16.mxu0 0
          %4946 = vmatpush1.bf16.msra.mxu0 0
          %4947 = vmatprep.subr.bf16.mxu0 0
          %4948 = vmatpush1.bf16.msra.mxu0 0
          %4949 = vmatprep.subr.bf16.mxu0 0
          %4950 = vmatpush1.bf16.msra.mxu0 0
          %4951 = vmatprep.subr.bf16.mxu0 0
          %4952 = vmatpush1.bf16.msra.mxu0 0
          %4953 = vmatprep.mubr.bf16.mxu0 0
          %4954 = vmatmul.mubr.bf16.gmra.mrb[0].mxu0 %v4733
          %v4955 = vpop.f32.mrb[0].mxu0
          %v4956 = vadd.f32 %v4916, %v4955
          %v4957 = vpop.f32.mrb[0].mxu0
          %v4958 = vpop.f32.mrb[0].mxu0
          %v4959 = vpop.f32.mrb[0].mxu0
          %4960 = vdwg.mxu0
          %v4961 = vadd.f32 %v4664, %v4956
        $region128: #{pos_emb_forward.1} parent=31 // loop_footer
          %s4663 = sadd.s32 1, %s4659
        $region129: #{pos_emb_forward.1} parent=31 // loop_footer_branch
          %4658 = sbr.rel target = $region125
        $region130: #{pos_emb_forward.1} parent=31 // loop_exit
          _
        %s4962 = scalar_lea.vmem %s2, 13
        %v4963 = vld [vmem:[%s4962] sm:$0x1]
        %v4965 = vlaneseq
        %v4966 = vshrl.u32 %v4965, 7
        %v4967 = vsub.s32 0, %v4966
        %v4968 = vrot.slane %v4963, %v4967
        %v4970 = vadd.f32 %v4664, %v4968
        %v4971 = vmul.f32 %v4970, 0.70710677
        %vm4972 = vcmp.ge.f32.partialorder %v4971, 0.0
        %v4973 = vsel %vm4972, 1.0, -1.0
        %v4974 = vand.u32 2147483647, %v4971
        %v4975 = vmul.f32 %v4974, 0.3275911
        %v4976 = vadd.f32 %v4975, 1.0
        %v4977 = vrcp.pop %v4976
        %v4978 = vmul.f32 %v4977, 1.0614054
        %v4979 = vadd.f32 %v4978, -1.4531521
        %v4980 = vmul.f32 %v4979, %v4977
        %v4981 = vadd.f32 %v4980, 1.4214138
        %v4982 = vmul.f32 %v4981, %v4977
        %v4983 = vadd.f32 %v4982, -0.28449672
        %v4984 = vmul.f32 %v4983, %v4977
        %v4985 = vadd.f32 %v4984, 0.2548296
        %v4986 = vmul.f32 %v4985, %v4977
        %v4987 = vsub.f32 0.0, %v4974
        %v4988 = vmul.f32 %v4987, %v4974
        %v4989 = vmul.f32 %v4988, 1.442695
        %v4990 = vpow.pop %v4989
        %v4991 = vmul.f32 %v4986, %v4990
        %v4992 = vsub.f32 1.0, %v4991
        %v4993 = vmul.f32 %v4973, %v4992
        %v4994 = vmul.f32 %v4970, 0.5
        %v4995 = vadd.f32 %v4993, 1.0
        %v4996 = vmul.f32 %v4994, %v4995
        %4998 = vrot.lane.b32.xlu0 %v4996, 112
        %v4999 = vpop.permute.xlu0 %4998
        %5001 = vst.msk [vmem:[%s177 + $0x20] sm:$0xff] %vm2247, %v4999
        %5002 = vst.msk [vmem:[%s177 + $0x28] sm:$0xff] %vm2249, %v4999
        loop: start=0, step=1, limit=16
        $region131: #{pos_emb_forward.1} parent=31 // loop_pre_header
          _
        $region132: #{pos_emb_forward.1} parent=31 // loop_header
          %s5004 = sphi 0, %s5008
          %p5005 = scmp.ge.s32.totalorder %s5004, 16
          %v5009 = vphi 0.0, %v5306
        $region133: #{pos_emb_forward.1} parent=31 // loop_header_branch
          %5007 = sbr.rel (%p5005) target = $region137
        $region134: #{pos_emb_forward.1} parent=31 // loop_body
          %s5010 = smul.u32 %s5004, 8
          %s5011 = sshra.s32 %s5010, 3
          %s5012 = sand.u32 %s5010, 7
          %s5013 = smul.u32 %s5011, 3
          %s5014 = sadd.s32 %s5013, 714
          %s5015 = smul.addr %s5014, 4
          %s5016 = scalar_lea.vmem %s182, %s5015
          %v5017 = vld [vmem:[%s5016] sm:$0xff]
          %v5018 = vld [vmem:[%s5016 + $0x8] sm:$0xf]
          %s5019 = smul.u32 %s5004, 48
          %s5020 = sadd.s32 %s5019, 10752
          %s5021 = smul.addr %s5020, 4
          %s5022 = scalar_lea.vmem %s1, %s5021
          %v5023 = vld [vmem:[%s5022] sm:$0xf]
          %v5024 = vld [vmem:[%s5022 + $0x4] sm:$0xf]
          %v5025 = vld [vmem:[%s5022 + $0x8] sm:$0xf]
          %v5026 = vld [vmem:[%s5022 + $0xc] sm:$0xf]
          %v5027 = vld [vmem:[%s5022 + $0x10] sm:$0xf]
          %v5028 = vld [vmem:[%s5022 + $0x14] sm:$0xf]
          %v5029 = vld [vmem:[%s5022 + $0x18] sm:$0xf]
          %v5030 = vld [vmem:[%s5022 + $0x1c] sm:$0xf]
          %v5031 = vld [vmem:[%s5022 + $0x20] sm:$0xf]
          %v5032 = vld [vmem:[%s5022 + $0x24] sm:$0xf]
          %v5033 = vld [vmem:[%s5022 + $0x28] sm:$0xf]
          %v5034 = vld [vmem:[%s5022 + $0x2c] sm:$0xf]
          %v5035 = vld [vmem:[%s5022 + $0x30] sm:$0xf]
          %v5036 = vld [vmem:[%s5022 + $0x34] sm:$0xf]
          %v5037 = vld [vmem:[%s5022 + $0x38] sm:$0xf]
          %v5038 = vld [vmem:[%s5022 + $0x3c] sm:$0xf]
          %v5039 = vld [vmem:[%s5022 + $0x40] sm:$0xf]
          %v5040 = vld [vmem:[%s5022 + $0x44] sm:$0xf]
          %v5041 = vld [vmem:[%s5022 + $0x48] sm:$0xf]
          %v5042 = vld [vmem:[%s5022 + $0x4c] sm:$0xf]
          %v5043 = vld [vmem:[%s5022 + $0x50] sm:$0xf]
          %v5044 = vld [vmem:[%s5022 + $0x54] sm:$0xf]
          %v5045 = vld [vmem:[%s5022 + $0x58] sm:$0xf]
          %v5046 = vld [vmem:[%s5022 + $0x5c] sm:$0xf]
          %v5047 = vld [vmem:[%s5022 + $0x60] sm:$0xf]
          %v5048 = vld [vmem:[%s5022 + $0x64] sm:$0xf]
          %v5049 = vld [vmem:[%s5022 + $0x68] sm:$0xf]
          %v5050 = vld [vmem:[%s5022 + $0x6c] sm:$0xf]
          %v5051 = vld [vmem:[%s5022 + $0x70] sm:$0xf]
          %v5052 = vld [vmem:[%s5022 + $0x74] sm:$0xf]
          %v5053 = vld [vmem:[%s5022 + $0x78] sm:$0xf]
          %v5054 = vld [vmem:[%s5022 + $0x7c] sm:$0xf]
          %v5055 = vld [vmem:[%s5022 + $0x80] sm:$0xf]
          %v5056 = vld [vmem:[%s5022 + $0x84] sm:$0xf]
          %v5057 = vld [vmem:[%s5022 + $0x88] sm:$0xf]
          %v5058 = vld [vmem:[%s5022 + $0x8c] sm:$0xf]
          %v5059 = vld [vmem:[%s5022 + $0x90] sm:$0xf]
          %v5060 = vld [vmem:[%s5022 + $0x94] sm:$0xf]
          %v5061 = vld [vmem:[%s5022 + $0x98] sm:$0xf]
          %v5062 = vld [vmem:[%s5022 + $0x9c] sm:$0xf]
          %v5063 = vld [vmem:[%s5022 + $0xa0] sm:$0xf]
          %v5064 = vld [vmem:[%s5022 + $0xa4] sm:$0xf]
          %v5065 = vld [vmem:[%s5022 + $0xa8] sm:$0xf]
          %v5066 = vld [vmem:[%s5022 + $0xac] sm:$0xf]
          %v5067 = vld [vmem:[%s5022 + $0xb0] sm:$0xf]
          %v5068 = vld [vmem:[%s5022 + $0xb4] sm:$0xf]
          %v5069 = vld [vmem:[%s5022 + $0xb8] sm:$0xf]
          %v5070 = vld [vmem:[%s5022 + $0xbc] sm:$0xf]
          %v5073 = vunpack.c.l.b16 %v5017
          %v5074 = vunpack.c.h.b16 %v5017
          %v5075 = vunpack.c.l.b16 %v5018
          %v5076 = vpack.c.b16 %v5073, %v5073
          %v5077 = vpack.c.b16 %v5074, %v5074
          %v5078 = vpack.c.b16 %v5075, %v5075
          %v5130 = vunpack.c.l.b16 %v5023
          %v5131 = vunpack.c.l.b16 %v5024
          %v5132 = vunpack.c.l.b16 %v5025
          %v5133 = vunpack.c.l.b16 %v5026
          %v5134 = vunpack.c.l.b16 %v5027
          %v5135 = vunpack.c.l.b16 %v5028
          %v5136 = vunpack.c.l.b16 %v5029
          %v5137 = vunpack.c.l.b16 %v5030
          %v5138 = vunpack.c.l.b16 %v5031
          %v5139 = vunpack.c.l.b16 %v5032
          %v5140 = vunpack.c.l.b16 %v5033
          %v5141 = vunpack.c.l.b16 %v5034
          %v5142 = vunpack.c.l.b16 %v5035
          %v5143 = vunpack.c.l.b16 %v5036
          %v5144 = vunpack.c.l.b16 %v5037
          %v5145 = vunpack.c.l.b16 %v5038
          %v5146 = vunpack.c.l.b16 %v5039
          %v5147 = vunpack.c.l.b16 %v5040
          %v5148 = vunpack.c.l.b16 %v5041
          %v5149 = vunpack.c.l.b16 %v5042
          %v5150 = vunpack.c.l.b16 %v5043
          %v5151 = vunpack.c.l.b16 %v5044
          %v5152 = vunpack.c.l.b16 %v5045
          %v5153 = vunpack.c.l.b16 %v5046
          %v5154 = vunpack.c.l.b16 %v5047
          %v5155 = vunpack.c.l.b16 %v5048
          %v5156 = vunpack.c.l.b16 %v5049
          %v5157 = vunpack.c.l.b16 %v5050
          %v5158 = vunpack.c.l.b16 %v5051
          %v5159 = vunpack.c.l.b16 %v5052
          %v5160 = vunpack.c.l.b16 %v5053
          %v5161 = vunpack.c.l.b16 %v5054
          %v5162 = vunpack.c.l.b16 %v5055
          %v5163 = vunpack.c.l.b16 %v5056
          %v5164 = vunpack.c.l.b16 %v5057
          %v5165 = vunpack.c.l.b16 %v5058
          %v5166 = vunpack.c.l.b16 %v5059
          %v5167 = vunpack.c.l.b16 %v5060
          %v5168 = vunpack.c.l.b16 %v5061
          %v5169 = vunpack.c.l.b16 %v5062
          %v5170 = vunpack.c.l.b16 %v5063
          %v5171 = vunpack.c.l.b16 %v5064
          %v5172 = vunpack.c.l.b16 %v5065
          %v5173 = vunpack.c.l.b16 %v5066
          %v5174 = vunpack.c.l.b16 %v5067
          %v5175 = vunpack.c.l.b16 %v5068
          %v5176 = vunpack.c.l.b16 %v5069
          %v5177 = vunpack.c.l.b16 %v5070
          %v5178 = vpack.c.b16 %v5131, %v5130
          %v5179 = vpack.c.b16 %v5133, %v5132
          %v5180 = vpack.c.b16 %v5135, %v5134
          %v5181 = vpack.c.b16 %v5137, %v5136
          %v5182 = vpack.c.b16 %v5139, %v5138
          %v5183 = vpack.c.b16 %v5141, %v5140
          %v5184 = vpack.c.b16 %v5143, %v5142
          %v5185 = vpack.c.b16 %v5145, %v5144
          %v5186 = vpack.c.b16 %v5147, %v5146
          %v5187 = vpack.c.b16 %v5149, %v5148
          %v5188 = vpack.c.b16 %v5151, %v5150
          %v5189 = vpack.c.b16 %v5153, %v5152
          %v5190 = vpack.c.b16 %v5155, %v5154
          %v5191 = vpack.c.b16 %v5157, %v5156
          %v5192 = vpack.c.b16 %v5159, %v5158
          %v5193 = vpack.c.b16 %v5161, %v5160
          %v5194 = vpack.c.b16 %v5163, %v5162
          %v5195 = vpack.c.b16 %v5165, %v5164
          %v5196 = vpack.c.b16 %v5167, %v5166
          %v5197 = vpack.c.b16 %v5169, %v5168
          %v5198 = vpack.c.b16 %v5171, %v5170
          %v5199 = vpack.c.b16 %v5173, %v5172
          %v5200 = vpack.c.b16 %v5175, %v5174
          %v5201 = vpack.c.b16 %v5177, %v5176
          %5226 = vmatprep.subr.bf16.mxu0 0
          %5227 = vmatpush1.bf16.msra.mxu0 %v5178
          %5228 = vmatprep.subr.bf16.mxu0 0
          %5229 = vmatpush1.bf16.msra.mxu0 %v5179
          %5230 = vmatprep.subr.bf16.mxu0 0
          %5231 = vmatpush1.bf16.msra.mxu0 %v5180
          %5232 = vmatprep.subr.bf16.mxu0 0
          %5233 = vmatpush1.bf16.msra.mxu0 %v5181
          %5234 = vmatprep.subr.bf16.mxu0 0
          %5235 = vmatpush1.bf16.msra.mxu0 %v5182
          %5236 = vmatprep.subr.bf16.mxu0 0
          %5237 = vmatpush1.bf16.msra.mxu0 %v5183
          %5238 = vmatprep.subr.bf16.mxu0 0
          %5239 = vmatpush1.bf16.msra.mxu0 %v5184
          %5240 = vmatprep.subr.bf16.mxu0 0
          %5241 = vmatpush1.bf16.msra.mxu0 %v5185
          %5242 = vmatprep.subr.bf16.mxu0 0
          %5243 = vmatpush1.bf16.msra.mxu0 %v5186
          %5244 = vmatprep.subr.bf16.mxu0 0
          %5245 = vmatpush1.bf16.msra.mxu0 %v5187
          %5246 = vmatprep.subr.bf16.mxu0 0
          %5247 = vmatpush1.bf16.msra.mxu0 %v5188
          %5248 = vmatprep.subr.bf16.mxu0 0
          %5249 = vmatpush1.bf16.msra.mxu0 %v5189
          %5250 = vmatprep.subr.bf16.mxu0 0
          %5251 = vmatpush1.bf16.msra.mxu0 %v5190
          %5252 = vmatprep.subr.bf16.mxu0 0
          %5253 = vmatpush1.bf16.msra.mxu0 %v5191
          %5254 = vmatprep.subr.bf16.mxu0 0
          %5255 = vmatpush1.bf16.msra.mxu0 %v5192
          %5256 = vmatprep.subr.bf16.mxu0 0
          %5257 = vmatpush1.bf16.msra.mxu0 %v5193
          %5258 = vmatprep.mubr.bf16.mxu0 %v5077
          %5259 = vmatmul.mubr.bf16.gmra.mrb[0].mxu0 %v5076
          %v5260 = vpop.f32.mrb[0].mxu0
          %v5261 = vadd.f32 0.0, %v5260
          %v5262 = vpop.f32.mrb[0].mxu0
          %v5263 = vpop.f32.mrb[0].mxu0
          %v5264 = vpop.f32.mrb[0].mxu0
          %5265 = vdwg.mxu0
          %5266 = vmatprep.subr.bf16.mxu0 0
          %5267 = vmatpush1.bf16.msra.mxu0 %v5194
          %5268 = vmatprep.subr.bf16.mxu0 0
          %5269 = vmatpush1.bf16.msra.mxu0 %v5195
          %5270 = vmatprep.subr.bf16.mxu0 0
          %5271 = vmatpush1.bf16.msra.mxu0 %v5196
          %5272 = vmatprep.subr.bf16.mxu0 0
          %5273 = vmatpush1.bf16.msra.mxu0 %v5197
          %5274 = vmatprep.subr.bf16.mxu0 0
          %5275 = vmatpush1.bf16.msra.mxu0 %v5198
          %5276 = vmatprep.subr.bf16.mxu0 0
          %5277 = vmatpush1.bf16.msra.mxu0 %v5199
          %5278 = vmatprep.subr.bf16.mxu0 0
          %5279 = vmatpush1.bf16.msra.mxu0 %v5200
          %5280 = vmatprep.subr.bf16.mxu0 0
          %5281 = vmatpush1.bf16.msra.mxu0 %v5201
          %5282 = vmatprep.subr.bf16.mxu0 0
          %5283 = vmatpush1.bf16.msra.mxu0 0
          %5284 = vmatprep.subr.bf16.mxu0 0
          %5285 = vmatpush1.bf16.msra.mxu0 0
          %5286 = vmatprep.subr.bf16.mxu0 0
          %5287 = vmatpush1.bf16.msra.mxu0 0
          %5288 = vmatprep.subr.bf16.mxu0 0
          %5289 = vmatpush1.bf16.msra.mxu0 0
          %5290 = vmatprep.subr.bf16.mxu0 0
          %5291 = vmatpush1.bf16.msra.mxu0 0
          %5292 = vmatprep.subr.bf16.mxu0 0
          %5293 = vmatpush1.bf16.msra.mxu0 0
          %5294 = vmatprep.subr.bf16.mxu0 0
          %5295 = vmatpush1.bf16.msra.mxu0 0
          %5296 = vmatprep.subr.bf16.mxu0 0
          %5297 = vmatpush1.bf16.msra.mxu0 0
          %5298 = vmatprep.mubr.bf16.mxu0 0
          %5299 = vmatmul.mubr.bf16.gmra.mrb[0].mxu0 %v5078
          %v5300 = vpop.f32.mrb[0].mxu0
          %v5301 = vadd.f32 %v5261, %v5300
          %v5302 = vpop.f32.mrb[0].mxu0
          %v5303 = vpop.f32.mrb[0].mxu0
          %v5304 = vpop.f32.mrb[0].mxu0
          %5305 = vdwg.mxu0
          %v5306 = vadd.f32 %v5009, %v5301
        $region135: #{pos_emb_forward.1} parent=31 // loop_footer
          %s5008 = sadd.s32 1, %s5004
        $region136: #{pos_emb_forward.1} parent=31 // loop_footer_branch
          %5003 = sbr.rel target = $region132
        $region137: #{pos_emb_forward.1} parent=31 // loop_exit
          _
        %s5307 = scalar_lea.vmem %s2, 14
        %v5308 = vld [vmem:[%s5307] sm:$0x1]
        %v5310 = vlaneseq
        %v5311 = vshrl.u32 %v5310, 7
        %v5312 = vsub.s32 0, %v5311
        %v5313 = vrot.slane %v5308, %v5312
        %v5315 = vadd.f32 %v5009, %v5313
        %v5316 = vmul.f32 %v5315, 0.70710677
        %vm5317 = vcmp.ge.f32.partialorder %v5316, 0.0
        %v5318 = vsel %vm5317, 1.0, -1.0
        %v5319 = vand.u32 2147483647, %v5316
        %v5320 = vmul.f32 %v5319, 0.3275911
        %v5321 = vadd.f32 %v5320, 1.0
        %v5322 = vrcp.pop %v5321
        %v5323 = vmul.f32 %v5322, 1.0614054
        %v5324 = vadd.f32 %v5323, -1.4531521
        %v5325 = vmul.f32 %v5324, %v5322
        %v5326 = vadd.f32 %v5325, 1.4214138
        %v5327 = vmul.f32 %v5326, %v5322
        %v5328 = vadd.f32 %v5327, -0.28449672
        %v5329 = vmul.f32 %v5328, %v5322
        %v5330 = vadd.f32 %v5329, 0.2548296
        %v5331 = vmul.f32 %v5330, %v5322
        %v5332 = vsub.f32 0.0, %v5319
        %v5333 = vmul.f32 %v5332, %v5319
        %v5334 = vmul.f32 %v5333, 1.442695
        %v5335 = vpow.pop %v5334
        %v5336 = vmul.f32 %v5331, %v5335
        %v5337 = vsub.f32 1.0, %v5336
        %v5338 = vmul.f32 %v5318, %v5337
        %v5339 = vmul.f32 %v5315, 0.5
        %v5340 = vadd.f32 %v5338, 1.0
        %v5341 = vmul.f32 %v5339, %v5340
        %5343 = vrot.lane.b32.xlu0 %v5341, 32
        %v5344 = vpop.permute.xlu0 %5343
        %5346 = vst.msk [vmem:[%s177 + $0x28] sm:$0xff] %vm2594, %v5344
        loop: start=0, step=1, limit=16
        $region138: #{pos_emb_forward.1} parent=31 // loop_pre_header
          _
        $region139: #{pos_emb_forward.1} parent=31 // loop_header
          %s5348 = sphi 0, %s5352
          %p5349 = scmp.ge.s32.totalorder %s5348, 16
          %v5353 = vphi 0.0, %v5650
        $region140: #{pos_emb_forward.1} parent=31 // loop_header_branch
          %5351 = sbr.rel (%p5349) target = $region144
        $region141: #{pos_emb_forward.1} parent=31 // loop_body
          %s5354 = smul.u32 %s5348, 8
          %s5355 = sshra.s32 %s5354, 3
          %s5356 = sand.u32 %s5354, 7
          %s5357 = smul.u32 %s5355, 3
          %s5358 = sadd.s32 %s5357, 765
          %s5359 = smul.addr %s5358, 4
          %s5360 = scalar_lea.vmem %s182, %s5359
          %v5361 = vld [vmem:[%s5360] sm:$0xff]
          %v5362 = vld [vmem:[%s5360 + $0x8] sm:$0xf]
          %s5363 = smul.u32 %s5348, 48
          %s5364 = sadd.s32 %s5363, 11520
          %s5365 = smul.addr %s5364, 4
          %s5366 = scalar_lea.vmem %s1, %s5365
          %v5367 = vld [vmem:[%s5366] sm:$0xf]
          %v5368 = vld [vmem:[%s5366 + $0x4] sm:$0xf]
          %v5369 = vld [vmem:[%s5366 + $0x8] sm:$0xf]
          %v5370 = vld [vmem:[%s5366 + $0xc] sm:$0xf]
          %v5371 = vld [vmem:[%s5366 + $0x10] sm:$0xf]
          %v5372 = vld [vmem:[%s5366 + $0x14] sm:$0xf]
          %v5373 = vld [vmem:[%s5366 + $0x18] sm:$0xf]
          %v5374 = vld [vmem:[%s5366 + $0x1c] sm:$0xf]
          %v5375 = vld [vmem:[%s5366 + $0x20] sm:$0xf]
          %v5376 = vld [vmem:[%s5366 + $0x24] sm:$0xf]
          %v5377 = vld [vmem:[%s5366 + $0x28] sm:$0xf]
          %v5378 = vld [vmem:[%s5366 + $0x2c] sm:$0xf]
          %v5379 = vld [vmem:[%s5366 + $0x30] sm:$0xf]
          %v5380 = vld [vmem:[%s5366 + $0x34] sm:$0xf]
          %v5381 = vld [vmem:[%s5366 + $0x38] sm:$0xf]
          %v5382 = vld [vmem:[%s5366 + $0x3c] sm:$0xf]
          %v5383 = vld [vmem:[%s5366 + $0x40] sm:$0xf]
          %v5384 = vld [vmem:[%s5366 + $0x44] sm:$0xf]
          %v5385 = vld [vmem:[%s5366 + $0x48] sm:$0xf]
          %v5386 = vld [vmem:[%s5366 + $0x4c] sm:$0xf]
          %v5387 = vld [vmem:[%s5366 + $0x50] sm:$0xf]
          %v5388 = vld [vmem:[%s5366 + $0x54] sm:$0xf]
          %v5389 = vld [vmem:[%s5366 + $0x58] sm:$0xf]
          %v5390 = vld [vmem:[%s5366 + $0x5c] sm:$0xf]
          %v5391 = vld [vmem:[%s5366 + $0x60] sm:$0xf]
          %v5392 = vld [vmem:[%s5366 + $0x64] sm:$0xf]
          %v5393 = vld [vmem:[%s5366 + $0x68] sm:$0xf]
          %v5394 = vld [vmem:[%s5366 + $0x6c] sm:$0xf]
          %v5395 = vld [vmem:[%s5366 + $0x70] sm:$0xf]
          %v5396 = vld [vmem:[%s5366 + $0x74] sm:$0xf]
          %v5397 = vld [vmem:[%s5366 + $0x78] sm:$0xf]
          %v5398 = vld [vmem:[%s5366 + $0x7c] sm:$0xf]
          %v5399 = vld [vmem:[%s5366 + $0x80] sm:$0xf]
          %v5400 = vld [vmem:[%s5366 + $0x84] sm:$0xf]
          %v5401 = vld [vmem:[%s5366 + $0x88] sm:$0xf]
          %v5402 = vld [vmem:[%s5366 + $0x8c] sm:$0xf]
          %v5403 = vld [vmem:[%s5366 + $0x90] sm:$0xf]
          %v5404 = vld [vmem:[%s5366 + $0x94] sm:$0xf]
          %v5405 = vld [vmem:[%s5366 + $0x98] sm:$0xf]
          %v5406 = vld [vmem:[%s5366 + $0x9c] sm:$0xf]
          %v5407 = vld [vmem:[%s5366 + $0xa0] sm:$0xf]
          %v5408 = vld [vmem:[%s5366 + $0xa4] sm:$0xf]
          %v5409 = vld [vmem:[%s5366 + $0xa8] sm:$0xf]
          %v5410 = vld [vmem:[%s5366 + $0xac] sm:$0xf]
          %v5411 = vld [vmem:[%s5366 + $0xb0] sm:$0xf]
          %v5412 = vld [vmem:[%s5366 + $0xb4] sm:$0xf]
          %v5413 = vld [vmem:[%s5366 + $0xb8] sm:$0xf]
          %v5414 = vld [vmem:[%s5366 + $0xbc] sm:$0xf]
          %v5417 = vunpack.c.l.b16 %v5361
          %v5418 = vunpack.c.h.b16 %v5361
          %v5419 = vunpack.c.l.b16 %v5362
          %v5420 = vpack.c.b16 %v5417, %v5417
          %v5421 = vpack.c.b16 %v5418, %v5418
          %v5422 = vpack.c.b16 %v5419, %v5419
          %v5474 = vunpack.c.l.b16 %v5367
          %v5475 = vunpack.c.l.b16 %v5368
          %v5476 = vunpack.c.l.b16 %v5369
          %v5477 = vunpack.c.l.b16 %v5370
          %v5478 = vunpack.c.l.b16 %v5371
          %v5479 = vunpack.c.l.b16 %v5372
          %v5480 = vunpack.c.l.b16 %v5373
          %v5481 = vunpack.c.l.b16 %v5374
          %v5482 = vunpack.c.l.b16 %v5375
          %v5483 = vunpack.c.l.b16 %v5376
          %v5484 = vunpack.c.l.b16 %v5377
          %v5485 = vunpack.c.l.b16 %v5378
          %v5486 = vunpack.c.l.b16 %v5379
          %v5487 = vunpack.c.l.b16 %v5380
          %v5488 = vunpack.c.l.b16 %v5381
          %v5489 = vunpack.c.l.b16 %v5382
          %v5490 = vunpack.c.l.b16 %v5383
          %v5491 = vunpack.c.l.b16 %v5384
          %v5492 = vunpack.c.l.b16 %v5385
          %v5493 = vunpack.c.l.b16 %v5386
          %v5494 = vunpack.c.l.b16 %v5387
          %v5495 = vunpack.c.l.b16 %v5388
          %v5496 = vunpack.c.l.b16 %v5389
          %v5497 = vunpack.c.l.b16 %v5390
          %v5498 = vunpack.c.l.b16 %v5391
          %v5499 = vunpack.c.l.b16 %v5392
          %v5500 = vunpack.c.l.b16 %v5393
          %v5501 = vunpack.c.l.b16 %v5394
          %v5502 = vunpack.c.l.b16 %v5395
          %v5503 = vunpack.c.l.b16 %v5396
          %v5504 = vunpack.c.l.b16 %v5397
          %v5505 = vunpack.c.l.b16 %v5398
          %v5506 = vunpack.c.l.b16 %v5399
          %v5507 = vunpack.c.l.b16 %v5400
          %v5508 = vunpack.c.l.b16 %v5401
          %v5509 = vunpack.c.l.b16 %v5402
          %v5510 = vunpack.c.l.b16 %v5403
          %v5511 = vunpack.c.l.b16 %v5404
          %v5512 = vunpack.c.l.b16 %v5405
          %v5513 = vunpack.c.l.b16 %v5406
          %v5514 = vunpack.c.l.b16 %v5407
          %v5515 = vunpack.c.l.b16 %v5408
          %v5516 = vunpack.c.l.b16 %v5409
          %v5517 = vunpack.c.l.b16 %v5410
          %v5518 = vunpack.c.l.b16 %v5411
          %v5519 = vunpack.c.l.b16 %v5412
          %v5520 = vunpack.c.l.b16 %v5413
          %v5521 = vunpack.c.l.b16 %v5414
          %v5522 = vpack.c.b16 %v5475, %v5474
          %v5523 = vpack.c.b16 %v5477, %v5476
          %v5524 = vpack.c.b16 %v5479, %v5478
          %v5525 = vpack.c.b16 %v5481, %v5480
          %v5526 = vpack.c.b16 %v5483, %v5482
          %v5527 = vpack.c.b16 %v5485, %v5484
          %v5528 = vpack.c.b16 %v5487, %v5486
          %v5529 = vpack.c.b16 %v5489, %v5488
          %v5530 = vpack.c.b16 %v5491, %v5490
          %v5531 = vpack.c.b16 %v5493, %v5492
          %v5532 = vpack.c.b16 %v5495, %v5494
          %v5533 = vpack.c.b16 %v5497, %v5496
          %v5534 = vpack.c.b16 %v5499, %v5498
          %v5535 = vpack.c.b16 %v5501, %v5500
          %v5536 = vpack.c.b16 %v5503, %v5502
          %v5537 = vpack.c.b16 %v5505, %v5504
          %v5538 = vpack.c.b16 %v5507, %v5506
          %v5539 = vpack.c.b16 %v5509, %v5508
          %v5540 = vpack.c.b16 %v5511, %v5510
          %v5541 = vpack.c.b16 %v5513, %v5512
          %v5542 = vpack.c.b16 %v5515, %v5514
          %v5543 = vpack.c.b16 %v5517, %v5516
          %v5544 = vpack.c.b16 %v5519, %v5518
          %v5545 = vpack.c.b16 %v5521, %v5520
          %5570 = vmatprep.subr.bf16.mxu0 0
          %5571 = vmatpush1.bf16.msra.mxu0 %v5522
          %5572 = vmatprep.subr.bf16.mxu0 0
          %5573 = vmatpush1.bf16.msra.mxu0 %v5523
          %5574 = vmatprep.subr.bf16.mxu0 0
          %5575 = vmatpush1.bf16.msra.mxu0 %v5524
          %5576 = vmatprep.subr.bf16.mxu0 0
          %5577 = vmatpush1.bf16.msra.mxu0 %v5525
          %5578 = vmatprep.subr.bf16.mxu0 0
          %5579 = vmatpush1.bf16.msra.mxu0 %v5526
          %5580 = vmatprep.subr.bf16.mxu0 0
          %5581 = vmatpush1.bf16.msra.mxu0 %v5527
          %5582 = vmatprep.subr.bf16.mxu0 0
          %5583 = vmatpush1.bf16.msra.mxu0 %v5528
          %5584 = vmatprep.subr.bf16.mxu0 0
          %5585 = vmatpush1.bf16.msra.mxu0 %v5529
          %5586 = vmatprep.subr.bf16.mxu0 0
          %5587 = vmatpush1.bf16.msra.mxu0 %v5530
          %5588 = vmatprep.subr.bf16.mxu0 0
          %5589 = vmatpush1.bf16.msra.mxu0 %v5531
          %5590 = vmatprep.subr.bf16.mxu0 0
          %5591 = vmatpush1.bf16.msra.mxu0 %v5532
          %5592 = vmatprep.subr.bf16.mxu0 0
          %5593 = vmatpush1.bf16.msra.mxu0 %v5533
          %5594 = vmatprep.subr.bf16.mxu0 0
          %5595 = vmatpush1.bf16.msra.mxu0 %v5534
          %5596 = vmatprep.subr.bf16.mxu0 0
          %5597 = vmatpush1.bf16.msra.mxu0 %v5535
          %5598 = vmatprep.subr.bf16.mxu0 0
          %5599 = vmatpush1.bf16.msra.mxu0 %v5536
          %5600 = vmatprep.subr.bf16.mxu0 0
          %5601 = vmatpush1.bf16.msra.mxu0 %v5537
          %5602 = vmatprep.mubr.bf16.mxu0 %v5421
          %5603 = vmatmul.mubr.bf16.gmra.mrb[0].mxu0 %v5420
          %v5604 = vpop.f32.mrb[0].mxu0
          %v5605 = vadd.f32 0.0, %v5604
          %v5606 = vpop.f32.mrb[0].mxu0
          %v5607 = vpop.f32.mrb[0].mxu0
          %v5608 = vpop.f32.mrb[0].mxu0
          %5609 = vdwg.mxu0
          %5610 = vmatprep.subr.bf16.mxu0 0
          %5611 = vmatpush1.bf16.msra.mxu0 %v5538
          %5612 = vmatprep.subr.bf16.mxu0 0
          %5613 = vmatpush1.bf16.msra.mxu0 %v5539
          %5614 = vmatprep.subr.bf16.mxu0 0
          %5615 = vmatpush1.bf16.msra.mxu0 %v5540
          %5616 = vmatprep.subr.bf16.mxu0 0
          %5617 = vmatpush1.bf16.msra.mxu0 %v5541
          %5618 = vmatprep.subr.bf16.mxu0 0
          %5619 = vmatpush1.bf16.msra.mxu0 %v5542
          %5620 = vmatprep.subr.bf16.mxu0 0
          %5621 = vmatpush1.bf16.msra.mxu0 %v5543
          %5622 = vmatprep.subr.bf16.mxu0 0
          %5623 = vmatpush1.bf16.msra.mxu0 %v5544
          %5624 = vmatprep.subr.bf16.mxu0 0
          %5625 = vmatpush1.bf16.msra.mxu0 %v5545
          %5626 = vmatprep.subr.bf16.mxu0 0
          %5627 = vmatpush1.bf16.msra.mxu0 0
          %5628 = vmatprep.subr.bf16.mxu0 0
          %5629 = vmatpush1.bf16.msra.mxu0 0
          %5630 = vmatprep.subr.bf16.mxu0 0
          %5631 = vmatpush1.bf16.msra.mxu0 0
          %5632 = vmatprep.subr.bf16.mxu0 0
          %5633 = vmatpush1.bf16.msra.mxu0 0
          %5634 = vmatprep.subr.bf16.mxu0 0
          %5635 = vmatpush1.bf16.msra.mxu0 0
          %5636 = vmatprep.subr.bf16.mxu0 0
          %5637 = vmatpush1.bf16.msra.mxu0 0
          %5638 = vmatprep.subr.bf16.mxu0 0
          %5639 = vmatpush1.bf16.msra.mxu0 0
          %5640 = vmatprep.subr.bf16.mxu0 0
          %5641 = vmatpush1.bf16.msra.mxu0 0
          %5642 = vmatprep.mubr.bf16.mxu0 0
          %5643 = vmatmul.mubr.bf16.gmra.mrb[0].mxu0 %v5422
          %v5644 = vpop.f32.mrb[0].mxu0
          %v5645 = vadd.f32 %v5605, %v5644
          %v5646 = vpop.f32.mrb[0].mxu0
          %v5647 = vpop.f32.mrb[0].mxu0
          %v5648 = vpop.f32.mrb[0].mxu0
          %5649 = vdwg.mxu0
          %v5650 = vadd.f32 %v5353, %v5645
        $region142: #{pos_emb_forward.1} parent=31 // loop_footer
          %s5352 = sadd.s32 1, %s5348
        $region143: #{pos_emb_forward.1} parent=31 // loop_footer_branch
          %5347 = sbr.rel target = $region139
        $region144: #{pos_emb_forward.1} parent=31 // loop_exit
          _
        %s5651 = scalar_lea.vmem %s2, 15
        %v5652 = vld [vmem:[%s5651] sm:$0x1]
        %v5654 = vlaneseq
        %v5655 = vshrl.u32 %v5654, 7
        %v5656 = vsub.s32 0, %v5655
        %v5657 = vrot.slane %v5652, %v5656
        %v5659 = vadd.f32 %v5353, %v5657
        %v5660 = vmul.f32 %v5659, 0.70710677
        %vm5661 = vcmp.ge.f32.partialorder %v5660, 0.0
        %v5662 = vsel %vm5661, 1.0, -1.0
        %v5663 = vand.u32 2147483647, %v5660
        %v5664 = vmul.f32 %v5663, 0.3275911
        %v5665 = vadd.f32 %v5664, 1.0
        %v5666 = vrcp.pop %v5665
        %v5667 = vmul.f32 %v5666, 1.0614054
        %v5668 = vadd.f32 %v5667, -1.4531521
        %v5669 = vmul.f32 %v5668, %v5666
        %v5670 = vadd.f32 %v5669, 1.4214138
        %v5671 = vmul.f32 %v5670, %v5666
        %v5672 = vadd.f32 %v5671, -0.28449672
        %v5673 = vmul.f32 %v5672, %v5666
        %v5674 = vadd.f32 %v5673, 0.2548296
        %v5675 = vmul.f32 %v5674, %v5666
        %v5676 = vsub.f32 0.0, %v5663
        %v5677 = vmul.f32 %v5676, %v5663
        %v5678 = vmul.f32 %v5677, 1.442695
        %v5679 = vpow.pop %v5678
        %v5680 = vmul.f32 %v5675, %v5679
        %v5681 = vsub.f32 1.0, %v5680
        %v5682 = vmul.f32 %v5662, %v5681
        %v5683 = vmul.f32 %v5659, 0.5
        %v5684 = vadd.f32 %v5682, 1.0
        %v5685 = vmul.f32 %v5683, %v5684
        %5687 = vrot.lane.b32.xlu0 %v5685, 80
        %v5688 = vpop.permute.xlu0 %5687
        %5690 = vst.msk [vmem:[%s177 + $0x28] sm:$0xff] %vm2939, %v5688
        %s5691 = sand.u32 %s107, 1
        %s5692 = scalar_lea.sflag [#allocation3], %s5691
        %s5693 = sand.u32 %s107, 1
        %s5694 = smul.addr %s5693, 48
        %s5695 = scalar_lea.vmem [#allocation2], %s5694
        // Predicated region
        $region145: #{pos_emb_forward.1} parent=31 // pred_check
          %p5696 = pneg %p117
        $region146: #{pos_emb_forward.1} parent=31 // pred_check_branch
          %5698 = sbr.rel (%p5696) target = $region148
        $region147: #{pos_emb_forward.1} parent=31 // pred_region
          %s5700 = ssub.s32 768, 768
          %5701 = vsyncadd %s5692, %s5700
          %s5702 = smul.addr %s22, 6
          %s5703 = smul.addr %s21, 6
          %s5704 = sadd.s32 %s5702, %s5703
          %s5705 = smul.addr %s5704, 128
          %s5706 = scalar_lea.hbm %s3, %s5705
          %s5708 = sshll.u32 %s5695, 4
          %s5709 = int_to_ptr.vmem [resolvable:$true] %s5708
          %5711 = dma.vmem_to_hbm [thread:$0]  %s5709, 768, %s5706, %s5692
        $region148: #{pos_emb_forward.1} parent=31 // pred_fallthru
          _
      $region32: #{pos_emb_forward.1} parent=5 // pred_fallthru
        _
      %p5712 = scmp.le.s32.totalorder 2, %s12
      // Predicated region
      $region149: #{pos_emb_forward.1} parent=5 // pred_check
        %p5713 = pneg %p5712
      $region150: #{pos_emb_forward.1} parent=5 // pred_check_branch
        %5715 = sbr.rel (%p5713) target = $region152
      $region151: #{pos_emb_forward.1} parent=5 // pred_region
        %s5716 = ssub.s32 %s12, 2
        // Predicated region
        $region153: #{pos_emb_forward.1} parent=151 // pred_check
          %p5717 = pneg %p123
        $region154: #{pos_emb_forward.1} parent=151 // pred_check_branch
          %5719 = sbr.rel (%p5717) target = $region156
        $region155: #{pos_emb_forward.1} parent=151 // pred_region
          %s5720 = sand.u32 %s108, 1
          %s5721 = scalar_lea.sflag [#allocation3], %s5720
          %s5722 = sand.u32 %s108, 1
          %s5723 = smul.addr %s5722, 48
          %s5724 = scalar_lea.vmem [#allocation2], %s5723
          %5725 = dma.done %s5721, 768
        $region156: #{pos_emb_forward.1} parent=151 // pred_fallthru
          _
      $region152: #{pos_emb_forward.1} parent=5 // pred_fallthru
        _
    $region6: #{pos_emb_forward.1} parent=1 // loop_footer
      %s16 = sadd.s32 1, %s12
    $region7: #{pos_emb_forward.1} parent=1 // loop_footer_branch
      %11 = sbr.rel target = $region3
    $region8: #{pos_emb_forward.1} parent=1 // loop_exit
      _
    %5726 = vsyncpa [#allocation3], 1
    %s5727 = scalar_lea.sflag [#allocation3], 1
    %5728 = vsyncpa %s5727, 1

</llo_original>
